<compile_context>
chip_gen: v6e
topology: v6e:2x2x1
jax: 0.10.0
libtpu: 0.0.40
codegen_flags: <defaults>
</compile_context>

<pallas_src>
import jax
import jax.numpy as jnp
from jax.experimental import pallas as pl
from jax.experimental.pallas import tpu as pltpu


# -----------------------------------------------------------------------------
# Kernel: fused conv3x3 + ReLU + conv3x3 + ReLU on one image, channel-major layout
# -----------------------------------------------------------------------------
def _make_kernel(c_out, wp, npad, guard, length):
    # tap t = dy*3 + dx reads the padded slab at lane offset dy*wp + dx
    offsets = [dy * wp + dx for dy in range(3) for dx in range(3)]

    def kernel(fin_ref, w1_ref, b1_ref, w2_ref, b2_ref, mask_ref, o_ref, halo_scr):
        # ---- conv1: 9 accumulated matmuls over shifted views of the padded input ----
        acc = jnp.zeros((c_out, npad), jnp.float32)
        for t, off in enumerate(offsets):
            xt = fin_ref[0, :, off:off + npad]           # (Ct, Npad) static lane slice
            acc = acc + jnp.dot(w1_ref[t], xt, preferred_element_type=jnp.float32)
        y1 = jnp.maximum(acc + b1_ref[...], 0.0)
        # zero the padded border ring so conv2 sees proper zero padding
        y1 = y1 * mask_ref[...]

        # ---- place conv1 output (padded grid) into halo scratch with zero guards ----
        zg = jnp.zeros((c_out, guard), jnp.float32)
        halo_scr[:, 0:guard] = zg
        halo_scr[:, guard + npad:length] = zg
        halo_scr[:, guard:guard + npad] = y1

        # ---- conv2: same 9-tap matmul accumulation on the halo buffer ----
        acc2 = jnp.zeros((c_out, npad), jnp.float32)
        for t, off in enumerate(offsets):
            xt = halo_scr[:, off:off + npad]             # (Cout, Npad)
            acc2 = acc2 + jnp.dot(w2_ref[t], xt, preferred_element_type=jnp.float32)
        o_ref[0, :, :] = jnp.maximum(acc2 + b2_ref[...], 0.0)

    return kernel


# -----------------------------------------------------------------------------
# Wrapper
# -----------------------------------------------------------------------------
def upward_block_2d(x, skip, params):
    B, Cin, H, W = x.shape
    Csk = params["wt"].shape[1]            # ConvTranspose out channels (= skip_channels)
    Cout = params["w1"].shape[0]
    Ct = Cin + Csk                         # conv1 input channels
    Ho, Wo = 2 * H, 2 * W                  # upsampled spatial size
    Hp, Wp = Ho + 2, Wo + 2                # zero-padded grid for the 3x3 convs
    Npad = Hp * Wp
    G = Wp + 1                             # guard band so all 9 tap slices stay in-bounds
    L = Npad + 2 * G

    x = x.astype(jnp.float32)
    skip = skip.astype(jnp.float32)

    # ConvTranspose2d(k=2, s=2): per-pixel (Cin -> 4*Cskip) matmul + 2x interleave.
    u = jnp.einsum("bcij,copq->boipjq", x, params["wt"]).reshape(B, Csk, Ho, Wo)
    u = u + params["bt"][None, :, None, None]

    # concat(skip, x_up), zero-pad the 3x3 halo, flatten spatial, add guard band.
    xcat = jnp.concatenate([skip, u], axis=1)                        # (B, Ct, Ho, Wo)
    xpad = jnp.pad(xcat, ((0, 0), (0, 0), (1, 1), (1, 1)))           # (B, Ct, Hp, Wp)
    fin = jnp.pad(xpad.reshape(B, Ct, Npad), ((0, 0), (0, 0), (G, G)))   # (B, Ct, L)

    # interior mask on the padded grid (zeros on the border ring)
    mask = jnp.pad(jnp.ones((Ho, Wo), jnp.float32), ((1, 1), (1, 1))).reshape(1, Npad)

    # 3x3 conv weights as 9 per-tap (Cout, Cin) matrices, tap index t = dy*3 + dx
    w1_k = jnp.transpose(params["w1"], (2, 3, 0, 1)).reshape(9, Cout, Ct)
    w2_k = jnp.transpose(params["w2"], (2, 3, 0, 1)).reshape(9, Cout, Cout)
    b1 = params["b1"].reshape(Cout, 1)
    b2 = params["b2"].reshape(Cout, 1)

    kernel = _make_kernel(Cout, Wp, Npad, G, L)

    full3 = lambda b: (0, 0, 0)
    full2 = lambda b: (0, 0)
    out_flat = pl.pallas_call(
        kernel,
        out_shape=jax.ShapeDtypeStruct((B, Cout, Npad), jnp.float32),
        grid_spec=pltpu.PrefetchScalarGridSpec(
            num_scalar_prefetch=0,
            grid=(B,),
            in_specs=[
                pl.BlockSpec((1, Ct, L), lambda b: (b, 0, 0)),   # padded features
                pl.BlockSpec((9, Cout, Ct), full3),              # conv1 tap weights
                pl.BlockSpec((Cout, 1), full2),                  # b1
                pl.BlockSpec((9, Cout, Cout), full3),            # conv2 tap weights
                pl.BlockSpec((Cout, 1), full2),                  # b2
                pl.BlockSpec((1, Npad), full2),                  # border mask
            ],
            out_specs=pl.BlockSpec((1, Cout, Npad), lambda b: (b, 0, 0)),
            scratch_shapes=[pltpu.VMEM((Cout, L), jnp.float32)],
        ),
        compiler_params=pltpu.CompilerParams(dimension_semantics=("parallel",)),
    )(fin, w1_k, b1, w2_k, b2, mask)

    # drop the padded border ring -> (B, Cout, 2H, 2W) NCHW
    return out_flat.reshape(B, Cout, Hp, Wp)[:, :, 1:-1, 1:-1]


# -----------------------------------------------------------------------------
# Pure-JAX/XLA reference (mirrors the PyTorch forward, independent conv path)
# -----------------------------------------------------------------------------
def reference(x, skip, params):
    # ConvTranspose2d(k=2, s=2) == fractionally-strided conv with flipped kernel.
    wt_flip = jnp.transpose(params["wt"], (1, 0, 2, 3))[:, :, ::-1, ::-1]    # OIHW
    u = jax.lax.conv_general_dilated(
        x, wt_flip, window_strides=(1, 1), padding=((1, 1), (1, 1)),
        lhs_dilation=(2, 2), dimension_numbers=("NCHW", "OIHW", "NCHW"))
    u = u + params["bt"][None, :, None, None]
    xcat = jnp.concatenate([skip, u], axis=1)

    def conv3x3(z, w, b):
        y = jax.lax.conv_general_dilated(
            z, w, window_strides=(1, 1), padding=((1, 1), (1, 1)),
            dimension_numbers=("NCHW", "OIHW", "NCHW"))
        return y + b[None, :, None, None]

    h = jnp.maximum(conv3x3(xcat, params["w1"], params["b1"]), 0.0)
    return jnp.maximum(conv3x3(h, params["w2"], params["b2"]), 0.0)


# -----------------------------------------------------------------------------
# Main
# -----------------------------------------------------------------------------
if __name__ == "__main__":
    B = 2
    in_channels, skip_channels, out_channels = 8, 4, 8
    H = W = 16                      # x spatial; skip / output spatial is 32x32

    key = jax.random.PRNGKey(0)
    ks = jax.random.split(key, 8)
    params = {
        # torch ConvTranspose2d weight layout: (in_channels, out_channels, kH, kW)
        "wt": 0.3 * jax.random.normal(ks[0], (in_channels, skip_channels, 2, 2), jnp.float32),
        "bt": 0.1 * jax.random.normal(ks[1], (skip_channels,), jnp.float32),
        # torch Conv2d weight layout: (out_channels, in_channels, kH, kW)
        "w1": 0.3 * jax.random.normal(ks[2], (out_channels, in_channels + skip_channels, 3, 3), jnp.float32),
        "b1": 0.1 * jax.random.normal(ks[3], (out_channels,), jnp.float32),
        "w2": 0.3 * jax.random.normal(ks[4], (out_channels, out_channels, 3, 3), jnp.float32),
        "b2": 0.1 * jax.random.normal(ks[5], (out_channels,), jnp.float32),
    }
    x = jax.random.normal(ks[6], (B, in_channels, H, W), jnp.float32)
    skip = jax.random.normal(ks[7], (B, in_channels, 2 * H, 2 * W), jnp.float32)

    out = jax.block_until_ready(upward_block_2d(x, skip, params))
    ref = jax.block_until_ready(reference(x, skip, params))

    assert out.shape == (B, out_channels, 2 * H, 2 * W)
    max_err = float(jnp.max(jnp.abs(out - ref)))
    # tolerance covers MXU-vs-XLA conv matmul precision differences
    assert jnp.allclose(out, ref, rtol=1e-2, atol=2e-2), max_err
    print("KERNEL_OK")
</pallas_src>

<mosaic_0001>
module attributes {stable_mosaic.version = 11 : i64} {
  func.func @kernel(%arg0: i32, %arg1: memref<1x12x1226xf32, #tpu.memory_space<vmem>>, %arg2: memref<9x8x12xf32, #tpu.memory_space<vmem>>, %arg3: memref<8x1xf32, #tpu.memory_space<vmem>>, %arg4: memref<9x8x8xf32, #tpu.memory_space<vmem>>, %arg5: memref<8x1xf32, #tpu.memory_space<vmem>>, %arg6: memref<1x1156xf32, #tpu.memory_space<vmem>>, %arg7: memref<1x8x1156xf32, #tpu.memory_space<vmem>>, %arg8: memref<8x1226xf32, #tpu.memory_space<vmem>>) attributes {dimension_semantics = [#tpu.dimension_semantics<parallel>], iteration_bounds = array<i64: 2>, scalar_prefetch = 0 : i64, scratch_operands = 1 : i64, tpu.core_type = #tpu.core_type<tc>, window_params = [{transform_indices = @transform_0, window_bounds = array<i64: 1, 12, 1226>}, {pipeline_mode = #tpu.pipeline_mode<synchronous>, transform_indices = @transform_1, window_bounds = array<i64: 9, 8, 12>}, {pipeline_mode = #tpu.pipeline_mode<synchronous>, transform_indices = @transform_2, window_bounds = array<i64: 8, 1>}, {pipeline_mode = #tpu.pipeline_mode<synchronous>, transform_indices = @transform_3, window_bounds = array<i64: 9, 8, 8>}, {pipeline_mode = #tpu.pipeline_mode<synchronous>, transform_indices = @transform_4, window_bounds = array<i64: 8, 1>}, {pipeline_mode = #tpu.pipeline_mode<synchronous>, transform_indices = @transform_5, window_bounds = array<i64: 1, 1156>}, {transform_indices = @transform_6, window_bounds = array<i64: 1, 8, 1156>}]} {
    %cst = arith.constant 0.000000e+00 : f32
    %0 = vector.broadcast %cst : f32 to vector<8x1156xf32>
    %c0 = arith.constant 0 : index
    %c0_0 = arith.constant 0 : index
    %c0_1 = arith.constant 0 : index
    %1 = vector.load %arg1[%c0, %c0_0, %c0_1] : memref<1x12x1226xf32, #tpu.memory_space<vmem>>, vector<1x12x1156xf32>
    %2 = vector.shape_cast %1 : vector<1x12x1156xf32> to vector<12x1156xf32>
    %c0_2 = arith.constant 0 : index
    %c0_3 = arith.constant 0 : index
    %c0_4 = arith.constant 0 : index
    %3 = vector.load %arg2[%c0_2, %c0_3, %c0_4] : memref<9x8x12xf32, #tpu.memory_space<vmem>>, vector<1x8x12xf32>
    %4 = vector.shape_cast %3 : vector<1x8x12xf32> to vector<8x12xf32>
    %cst_5 = arith.constant dense<0.000000e+00> : vector<8x1156xf32>
    %5 = tpu.matmul %4, %2, %cst_5 {dimension_numbers = #tpu.dot_dimension_numbers<[1], [0], [0], [1], [0, 0, 1, 1], [], []>} : vector<8x12xf32>, vector<12x1156xf32>, vector<8x1156xf32> -> vector<8x1156xf32>
    %6 = arith.addf %0, %5 : vector<8x1156xf32>
    %c0_6 = arith.constant 0 : index
    %c0_7 = arith.constant 0 : index
    %c1 = arith.constant 1 : index
    %7 = vector.load %arg1[%c0_6, %c0_7, %c1] : memref<1x12x1226xf32, #tpu.memory_space<vmem>>, vector<1x12x1156xf32>
    %8 = vector.shape_cast %7 : vector<1x12x1156xf32> to vector<12x1156xf32>
    %c1_8 = arith.constant 1 : index
    %c0_9 = arith.constant 0 : index
    %c0_10 = arith.constant 0 : index
    %9 = vector.load %arg2[%c1_8, %c0_9, %c0_10] : memref<9x8x12xf32, #tpu.memory_space<vmem>>, vector<1x8x12xf32>
    %10 = vector.shape_cast %9 : vector<1x8x12xf32> to vector<8x12xf32>
    %cst_11 = arith.constant dense<0.000000e+00> : vector<8x1156xf32>
    %11 = tpu.matmul %10, %8, %cst_11 {dimension_numbers = #tpu.dot_dimension_numbers<[1], [0], [0], [1], [0, 0, 1, 1], [], []>} : vector<8x12xf32>, vector<12x1156xf32>, vector<8x1156xf32> -> vector<8x1156xf32>
    %12 = arith.addf %6, %11 : vector<8x1156xf32>
    %c0_12 = arith.constant 0 : index
    %c0_13 = arith.constant 0 : index
    %c2 = arith.constant 2 : index
    %13 = vector.load %arg1[%c0_12, %c0_13, %c2] : memref<1x12x1226xf32, #tpu.memory_space<vmem>>, vector<1x12x1156xf32>
    %14 = vector.shape_cast %13 : vector<1x12x1156xf32> to vector<12x1156xf32>
    %c2_14 = arith.constant 2 : index
    %c0_15 = arith.constant 0 : index
    %c0_16 = arith.constant 0 : index
    %15 = vector.load %arg2[%c2_14, %c0_15, %c0_16] : memref<9x8x12xf32, #tpu.memory_space<vmem>>, vector<1x8x12xf32>
    %16 = vector.shape_cast %15 : vector<1x8x12xf32> to vector<8x12xf32>
    %cst_17 = arith.constant dense<0.000000e+00> : vector<8x1156xf32>
    %17 = tpu.matmul %16, %14, %cst_17 {dimension_numbers = #tpu.dot_dimension_numbers<[1], [0], [0], [1], [0, 0, 1, 1], [], []>} : vector<8x12xf32>, vector<12x1156xf32>, vector<8x1156xf32> -> vector<8x1156xf32>
    %18 = arith.addf %12, %17 : vector<8x1156xf32>
    %c0_18 = arith.constant 0 : index
    %c0_19 = arith.constant 0 : index
    %c34 = arith.constant 34 : index
    %19 = vector.load %arg1[%c0_18, %c0_19, %c34] : memref<1x12x1226xf32, #tpu.memory_space<vmem>>, vector<1x12x1156xf32>
    %20 = vector.shape_cast %19 : vector<1x12x1156xf32> to vector<12x1156xf32>
    %c3 = arith.constant 3 : index
    %c0_20 = arith.constant 0 : index
    %c0_21 = arith.constant 0 : index
    %21 = vector.load %arg2[%c3, %c0_20, %c0_21] : memref<9x8x12xf32, #tpu.memory_space<vmem>>, vector<1x8x12xf32>
    %22 = vector.shape_cast %21 : vector<1x8x12xf32> to vector<8x12xf32>
    %cst_22 = arith.constant dense<0.000000e+00> : vector<8x1156xf32>
    %23 = tpu.matmul %22, %20, %cst_22 {dimension_numbers = #tpu.dot_dimension_numbers<[1], [0], [0], [1], [0, 0, 1, 1], [], []>} : vector<8x12xf32>, vector<12x1156xf32>, vector<8x1156xf32> -> vector<8x1156xf32>
    %24 = arith.addf %18, %23 : vector<8x1156xf32>
    %c0_23 = arith.constant 0 : index
    %c0_24 = arith.constant 0 : index
    %c35 = arith.constant 35 : index
    %25 = vector.load %arg1[%c0_23, %c0_24, %c35] : memref<1x12x1226xf32, #tpu.memory_space<vmem>>, vector<1x12x1156xf32>
    %26 = vector.shape_cast %25 : vector<1x12x1156xf32> to vector<12x1156xf32>
    %c4 = arith.constant 4 : index
    %c0_25 = arith.constant 0 : index
    %c0_26 = arith.constant 0 : index
    %27 = vector.load %arg2[%c4, %c0_25, %c0_26] : memref<9x8x12xf32, #tpu.memory_space<vmem>>, vector<1x8x12xf32>
    %28 = vector.shape_cast %27 : vector<1x8x12xf32> to vector<8x12xf32>
    %cst_27 = arith.constant dense<0.000000e+00> : vector<8x1156xf32>
    %29 = tpu.matmul %28, %26, %cst_27 {dimension_numbers = #tpu.dot_dimension_numbers<[1], [0], [0], [1], [0, 0, 1, 1], [], []>} : vector<8x12xf32>, vector<12x1156xf32>, vector<8x1156xf32> -> vector<8x1156xf32>
    %30 = arith.addf %24, %29 : vector<8x1156xf32>
    %c0_28 = arith.constant 0 : index
    %c0_29 = arith.constant 0 : index
    %c36 = arith.constant 36 : index
    %31 = vector.load %arg1[%c0_28, %c0_29, %c36] : memref<1x12x1226xf32, #tpu.memory_space<vmem>>, vector<1x12x1156xf32>
    %32 = vector.shape_cast %31 : vector<1x12x1156xf32> to vector<12x1156xf32>
    %c5 = arith.constant 5 : index
    %c0_30 = arith.constant 0 : index
    %c0_31 = arith.constant 0 : index
    %33 = vector.load %arg2[%c5, %c0_30, %c0_31] : memref<9x8x12xf32, #tpu.memory_space<vmem>>, vector<1x8x12xf32>
    %34 = vector.shape_cast %33 : vector<1x8x12xf32> to vector<8x12xf32>
    %cst_32 = arith.constant dense<0.000000e+00> : vector<8x1156xf32>
    %35 = tpu.matmul %34, %32, %cst_32 {dimension_numbers = #tpu.dot_dimension_numbers<[1], [0], [0], [1], [0, 0, 1, 1], [], []>} : vector<8x12xf32>, vector<12x1156xf32>, vector<8x1156xf32> -> vector<8x1156xf32>
    %36 = arith.addf %30, %35 : vector<8x1156xf32>
    %c0_33 = arith.constant 0 : index
    %c0_34 = arith.constant 0 : index
    %c68 = arith.constant 68 : index
    %37 = vector.load %arg1[%c0_33, %c0_34, %c68] : memref<1x12x1226xf32, #tpu.memory_space<vmem>>, vector<1x12x1156xf32>
    %38 = vector.shape_cast %37 : vector<1x12x1156xf32> to vector<12x1156xf32>
    %c6 = arith.constant 6 : index
    %c0_35 = arith.constant 0 : index
    %c0_36 = arith.constant 0 : index
    %39 = vector.load %arg2[%c6, %c0_35, %c0_36] : memref<9x8x12xf32, #tpu.memory_space<vmem>>, vector<1x8x12xf32>
    %40 = vector.shape_cast %39 : vector<1x8x12xf32> to vector<8x12xf32>
    %cst_37 = arith.constant dense<0.000000e+00> : vector<8x1156xf32>
    %41 = tpu.matmul %40, %38, %cst_37 {dimension_numbers = #tpu.dot_dimension_numbers<[1], [0], [0], [1], [0, 0, 1, 1], [], []>} : vector<8x12xf32>, vector<12x1156xf32>, vector<8x1156xf32> -> vector<8x1156xf32>
    %42 = arith.addf %36, %41 : vector<8x1156xf32>
    %c0_38 = arith.constant 0 : index
    %c0_39 = arith.constant 0 : index
    %c69 = arith.constant 69 : index
    %43 = vector.load %arg1[%c0_38, %c0_39, %c69] : memref<1x12x1226xf32, #tpu.memory_space<vmem>>, vector<1x12x1156xf32>
    %44 = vector.shape_cast %43 : vector<1x12x1156xf32> to vector<12x1156xf32>
    %c7 = arith.constant 7 : index
    %c0_40 = arith.constant 0 : index
    %c0_41 = arith.constant 0 : index
    %45 = vector.load %arg2[%c7, %c0_40, %c0_41] : memref<9x8x12xf32, #tpu.memory_space<vmem>>, vector<1x8x12xf32>
    %46 = vector.shape_cast %45 : vector<1x8x12xf32> to vector<8x12xf32>
    %cst_42 = arith.constant dense<0.000000e+00> : vector<8x1156xf32>
    %47 = tpu.matmul %46, %44, %cst_42 {dimension_numbers = #tpu.dot_dimension_numbers<[1], [0], [0], [1], [0, 0, 1, 1], [], []>} : vector<8x12xf32>, vector<12x1156xf32>, vector<8x1156xf32> -> vector<8x1156xf32>
    %48 = arith.addf %42, %47 : vector<8x1156xf32>
    %c0_43 = arith.constant 0 : index
    %c0_44 = arith.constant 0 : index
    %c70 = arith.constant 70 : index
    %49 = vector.load %arg1[%c0_43, %c0_44, %c70] : memref<1x12x1226xf32, #tpu.memory_space<vmem>>, vector<1x12x1156xf32>
    %50 = vector.shape_cast %49 : vector<1x12x1156xf32> to vector<12x1156xf32>
    %c8 = arith.constant 8 : index
    %c0_45 = arith.constant 0 : index
    %c0_46 = arith.constant 0 : index
    %51 = vector.load %arg2[%c8, %c0_45, %c0_46] : memref<9x8x12xf32, #tpu.memory_space<vmem>>, vector<1x8x12xf32>
    %52 = vector.shape_cast %51 : vector<1x8x12xf32> to vector<8x12xf32>
    %cst_47 = arith.constant dense<0.000000e+00> : vector<8x1156xf32>
    %53 = tpu.matmul %52, %50, %cst_47 {dimension_numbers = #tpu.dot_dimension_numbers<[1], [0], [0], [1], [0, 0, 1, 1], [], []>} : vector<8x12xf32>, vector<12x1156xf32>, vector<8x1156xf32> -> vector<8x1156xf32>
    %54 = arith.addf %48, %53 : vector<8x1156xf32>
    %c0_48 = arith.constant 0 : index
    %c0_49 = arith.constant 0 : index
    %55 = vector.load %arg3[%c0_48, %c0_49] : memref<8x1xf32, #tpu.memory_space<vmem>>, vector<8x1xf32>
    %56 = vector.broadcast %55 : vector<8x1xf32> to vector<8x1156xf32>
    %57 = arith.addf %54, %56 : vector<8x1156xf32>
    %cst_50 = arith.constant 0.000000e+00 : f32
    %58 = vector.broadcast %cst_50 : f32 to vector<8x1156xf32>
    %59 = arith.maximumf %57, %58 : vector<8x1156xf32>
    %c0_51 = arith.constant 0 : index
    %c0_52 = arith.constant 0 : index
    %60 = vector.load %arg6[%c0_51, %c0_52] : memref<1x1156xf32, #tpu.memory_space<vmem>>, vector<1x1156xf32>
    %61 = vector.broadcast %60 : vector<1x1156xf32> to vector<8x1156xf32>
    %62 = arith.mulf %59, %61 : vector<8x1156xf32>
    %cst_53 = arith.constant 0.000000e+00 : f32
    %63 = vector.broadcast %cst_53 : f32 to vector<8x35xf32>
    %c0_54 = arith.constant 0 : index
    %c0_55 = arith.constant 0 : index
    %64 = vector.load %arg8[%c0_54, %c0_55] : memref<8x1226xf32, #tpu.memory_space<vmem>>, vector<8x35xf32>
    tpu.vector_store %arg8[%c0_54, %c0_55], %63 {strides = array<i32>} : memref<8x1226xf32, #tpu.memory_space<vmem>>, vector<8x35xf32>,
    %c0_56 = arith.constant 0 : index
    %c1191 = arith.constant 1191 : index
    %65 = vector.load %arg8[%c0_56, %c1191] : memref<8x1226xf32, #tpu.memory_space<vmem>>, vector<8x35xf32>
    tpu.vector_store %arg8[%c0_56, %c1191], %63 {strides = array<i32>} : memref<8x1226xf32, #tpu.memory_space<vmem>>, vector<8x35xf32>,
    %c0_57 = arith.constant 0 : index
    %c35_58 = arith.constant 35 : index
    %66 = vector.load %arg8[%c0_57, %c35_58] : memref<8x1226xf32, #tpu.memory_space<vmem>>, vector<8x1156xf32>
    tpu.vector_store %arg8[%c0_57, %c35_58], %62 {strides = array<i32>} : memref<8x1226xf32, #tpu.memory_space<vmem>>, vector<8x1156xf32>,
    %cst_59 = arith.constant 0.000000e+00 : f32
    %67 = vector.broadcast %cst_59 : f32 to vector<8x1156xf32>
    %c0_60 = arith.constant 0 : index
    %c0_61 = arith.constant 0 : index
    %68 = vector.load %arg8[%c0_60, %c0_61] : memref<8x1226xf32, #tpu.memory_space<vmem>>, vector<8x1156xf32>
    %c0_62 = arith.constant 0 : index
    %c0_63 = arith.constant 0 : index
    %c0_64 = arith.constant 0 : index
    %69 = vector.load %arg4[%c0_62, %c0_63, %c0_64] : memref<9x8x8xf32, #tpu.memory_space<vmem>>, vector<1x8x8xf32>
    %70 = vector.shape_cast %69 : vector<1x8x8xf32> to vector<8x8xf32>
    %cst_65 = arith.constant dense<0.000000e+00> : vector<8x1156xf32>
    %71 = tpu.matmul %70, %68, %cst_65 {dimension_numbers = #tpu.dot_dimension_numbers<[1], [0], [0], [1], [0, 0, 1, 1], [], []>} : vector<8x8xf32>, vector<8x1156xf32>, vector<8x1156xf32> -> vector<8x1156xf32>
    %72 = arith.addf %67, %71 : vector<8x1156xf32>
    %c0_66 = arith.constant 0 : index
    %c1_67 = arith.constant 1 : index
    %73 = vector.load %arg8[%c0_66, %c1_67] : memref<8x1226xf32, #tpu.memory_space<vmem>>, vector<8x1156xf32>
    %c1_68 = arith.constant 1 : index
    %c0_69 = arith.constant 0 : index
    %c0_70 = arith.constant 0 : index
    %74 = vector.load %arg4[%c1_68, %c0_69, %c0_70] : memref<9x8x8xf32, #tpu.memory_space<vmem>>, vector<1x8x8xf32>
    %75 = vector.shape_cast %74 : vector<1x8x8xf32> to vector<8x8xf32>
    %cst_71 = arith.constant dense<0.000000e+00> : vector<8x1156xf32>
    %76 = tpu.matmul %75, %73, %cst_71 {dimension_numbers = #tpu.dot_dimension_numbers<[1], [0], [0], [1], [0, 0, 1, 1], [], []>} : vector<8x8xf32>, vector<8x1156xf32>, vector<8x1156xf32> -> vector<8x1156xf32>
    %77 = arith.addf %72, %76 : vector<8x1156xf32>
    %c0_72 = arith.constant 0 : index
    %c2_73 = arith.constant 2 : index
    %78 = vector.load %arg8[%c0_72, %c2_73] : memref<8x1226xf32, #tpu.memory_space<vmem>>, vector<8x1156xf32>
    %c2_74 = arith.constant 2 : index
    %c0_75 = arith.constant 0 : index
    %c0_76 = arith.constant 0 : index
    %79 = vector.load %arg4[%c2_74, %c0_75, %c0_76] : memref<9x8x8xf32, #tpu.memory_space<vmem>>, vector<1x8x8xf32>
    %80 = vector.shape_cast %79 : vector<1x8x8xf32> to vector<8x8xf32>
    %cst_77 = arith.constant dense<0.000000e+00> : vector<8x1156xf32>
    %81 = tpu.matmul %80, %78, %cst_77 {dimension_numbers = #tpu.dot_dimension_numbers<[1], [0], [0], [1], [0, 0, 1, 1], [], []>} : vector<8x8xf32>, vector<8x1156xf32>, vector<8x1156xf32> -> vector<8x1156xf32>
    %82 = arith.addf %77, %81 : vector<8x1156xf32>
    %c0_78 = arith.constant 0 : index
    %c34_79 = arith.constant 34 : index
    %83 = vector.load %arg8[%c0_78, %c34_79] : memref<8x1226xf32, #tpu.memory_space<vmem>>, vector<8x1156xf32>
    %c3_80 = arith.constant 3 : index
    %c0_81 = arith.constant 0 : index
    %c0_82 = arith.constant 0 : index
    %84 = vector.load %arg4[%c3_80, %c0_81, %c0_82] : memref<9x8x8xf32, #tpu.memory_space<vmem>>, vector<1x8x8xf32>
    %85 = vector.shape_cast %84 : vector<1x8x8xf32> to vector<8x8xf32>
    %cst_83 = arith.constant dense<0.000000e+00> : vector<8x1156xf32>
    %86 = tpu.matmul %85, %83, %cst_83 {dimension_numbers = #tpu.dot_dimension_numbers<[1], [0], [0], [1], [0, 0, 1, 1], [], []>} : vector<8x8xf32>, vector<8x1156xf32>, vector<8x1156xf32> -> vector<8x1156xf32>
    %87 = arith.addf %82, %86 : vector<8x1156xf32>
    %c0_84 = arith.constant 0 : index
    %c35_85 = arith.constant 35 : index
    %88 = vector.load %arg8[%c0_84, %c35_85] : memref<8x1226xf32, #tpu.memory_space<vmem>>, vector<8x1156xf32>
    %c4_86 = arith.constant 4 : index
    %c0_87 = arith.constant 0 : index
    %c0_88 = arith.constant 0 : index
    %89 = vector.load %arg4[%c4_86, %c0_87, %c0_88] : memref<9x8x8xf32, #tpu.memory_space<vmem>>, vector<1x8x8xf32>
    %90 = vector.shape_cast %89 : vector<1x8x8xf32> to vector<8x8xf32>
    %cst_89 = arith.constant dense<0.000000e+00> : vector<8x1156xf32>
    %91 = tpu.matmul %90, %88, %cst_89 {dimension_numbers = #tpu.dot_dimension_numbers<[1], [0], [0], [1], [0, 0, 1, 1], [], []>} : vector<8x8xf32>, vector<8x1156xf32>, vector<8x1156xf32> -> vector<8x1156xf32>
    %92 = arith.addf %87, %91 : vector<8x1156xf32>
    %c0_90 = arith.constant 0 : index
    %c36_91 = arith.constant 36 : index
    %93 = vector.load %arg8[%c0_90, %c36_91] : memref<8x1226xf32, #tpu.memory_space<vmem>>, vector<8x1156xf32>
    %c5_92 = arith.constant 5 : index
    %c0_93 = arith.constant 0 : index
    %c0_94 = arith.constant 0 : index
    %94 = vector.load %arg4[%c5_92, %c0_93, %c0_94] : memref<9x8x8xf32, #tpu.memory_space<vmem>>, vector<1x8x8xf32>
    %95 = vector.shape_cast %94 : vector<1x8x8xf32> to vector<8x8xf32>
    %cst_95 = arith.constant dense<0.000000e+00> : vector<8x1156xf32>
    %96 = tpu.matmul %95, %93, %cst_95 {dimension_numbers = #tpu.dot_dimension_numbers<[1], [0], [0], [1], [0, 0, 1, 1], [], []>} : vector<8x8xf32>, vector<8x1156xf32>, vector<8x1156xf32> -> vector<8x1156xf32>
    %97 = arith.addf %92, %96 : vector<8x1156xf32>
    %c0_96 = arith.constant 0 : index
    %c68_97 = arith.constant 68 : index
    %98 = vector.load %arg8[%c0_96, %c68_97] : memref<8x1226xf32, #tpu.memory_space<vmem>>, vector<8x1156xf32>
    %c6_98 = arith.constant 6 : index
    %c0_99 = arith.constant 0 : index
    %c0_100 = arith.constant 0 : index
    %99 = vector.load %arg4[%c6_98, %c0_99, %c0_100] : memref<9x8x8xf32, #tpu.memory_space<vmem>>, vector<1x8x8xf32>
    %100 = vector.shape_cast %99 : vector<1x8x8xf32> to vector<8x8xf32>
    %cst_101 = arith.constant dense<0.000000e+00> : vector<8x1156xf32>
    %101 = tpu.matmul %100, %98, %cst_101 {dimension_numbers = #tpu.dot_dimension_numbers<[1], [0], [0], [1], [0, 0, 1, 1], [], []>} : vector<8x8xf32>, vector<8x1156xf32>, vector<8x1156xf32> -> vector<8x1156xf32>
    %102 = arith.addf %97, %101 : vector<8x1156xf32>
    %c0_102 = arith.constant 0 : index
    %c69_103 = arith.constant 69 : index
    %103 = vector.load %arg8[%c0_102, %c69_103] : memref<8x1226xf32, #tpu.memory_space<vmem>>, vector<8x1156xf32>
    %c7_104 = arith.constant 7 : index
    %c0_105 = arith.constant 0 : index
    %c0_106 = arith.constant 0 : index
    %104 = vector.load %arg4[%c7_104, %c0_105, %c0_106] : memref<9x8x8xf32, #tpu.memory_space<vmem>>, vector<1x8x8xf32>
    %105 = vector.shape_cast %104 : vector<1x8x8xf32> to vector<8x8xf32>
    %cst_107 = arith.constant dense<0.000000e+00> : vector<8x1156xf32>
    %106 = tpu.matmul %105, %103, %cst_107 {dimension_numbers = #tpu.dot_dimension_numbers<[1], [0], [0], [1], [0, 0, 1, 1], [], []>} : vector<8x8xf32>, vector<8x1156xf32>, vector<8x1156xf32> -> vector<8x1156xf32>
    %107 = arith.addf %102, %106 : vector<8x1156xf32>
    %c0_108 = arith.constant 0 : index
    %c70_109 = arith.constant 70 : index
    %108 = vector.load %arg8[%c0_108, %c70_109] : memref<8x1226xf32, #tpu.memory_space<vmem>>, vector<8x1156xf32>
    %c8_110 = arith.constant 8 : index
    %c0_111 = arith.constant 0 : index
    %c0_112 = arith.constant 0 : index
    %109 = vector.load %arg4[%c8_110, %c0_111, %c0_112] : memref<9x8x8xf32, #tpu.memory_space<vmem>>, vector<1x8x8xf32>
    %110 = vector.shape_cast %109 : vector<1x8x8xf32> to vector<8x8xf32>
    %cst_113 = arith.constant dense<0.000000e+00> : vector<8x1156xf32>
    %111 = tpu.matmul %110, %108, %cst_113 {dimension_numbers = #tpu.dot_dimension_numbers<[1], [0], [0], [1], [0, 0, 1, 1], [], []>} : vector<8x8xf32>, vector<8x1156xf32>, vector<8x1156xf32> -> vector<8x1156xf32>
    %112 = arith.addf %107, %111 : vector<8x1156xf32>
    %c0_114 = arith.constant 0 : index
    %c0_115 = arith.constant 0 : index
    %113 = vector.load %arg5[%c0_114, %c0_115] : memref<8x1xf32, #tpu.memory_space<vmem>>, vector<8x1xf32>
    %114 = vector.broadcast %113 : vector<8x1xf32> to vector<8x1156xf32>
    %115 = arith.addf %112, %114 : vector<8x1156xf32>
    %cst_116 = arith.constant 0.000000e+00 : f32
    %116 = vector.broadcast %cst_116 : f32 to vector<8x1156xf32>
    %117 = arith.maximumf %115, %116 : vector<8x1156xf32>
    %c0_117 = arith.constant 0 : index
    %c0_118 = arith.constant 0 : index
    %c0_119 = arith.constant 0 : index
    %118 = vector.load %arg7[%c0_117, %c0_118, %c0_119] : memref<1x8x1156xf32, #tpu.memory_space<vmem>>, vector<1x8x1156xf32>
    %119 = vector.shape_cast %118 : vector<1x8x1156xf32> to vector<8x1156xf32>
    %120 = vector.shape_cast %117 : vector<8x1156xf32> to vector<1x8x1156xf32>
    tpu.vector_store %arg7[%c0_117, %c0_118, %c0_119], %120 {strides = array<i32>} : memref<1x8x1156xf32, #tpu.memory_space<vmem>>, vector<1x8x1156xf32>,
    return
  }
  func.func @transform_0(%arg0: i32) -> (i32, i32, i32) {
    %c0_i32 = arith.constant 0 : i32
    %c0_i32_0 = arith.constant 0 : i32
    %c0_i32_1 = arith.constant 0 : i32
    return %arg0, %c0_i32, %c0_i32_0 : i32, i32, i32
  }
  func.func @transform_1(%arg0: i32) -> (i32, i32, i32) {
    %c0_i32 = arith.constant 0 : i32
    %c0_i32_0 = arith.constant 0 : i32
    %c0_i32_1 = arith.constant 0 : i32
    %c0_i32_2 = arith.constant 0 : i32
    return %c0_i32, %c0_i32_0, %c0_i32_1 : i32, i32, i32
  }
  func.func @transform_2(%arg0: i32) -> (i32, i32) {
    %c0_i32 = arith.constant 0 : i32
    %c0_i32_0 = arith.constant 0 : i32
    %c0_i32_1 = arith.constant 0 : i32
    return %c0_i32, %c0_i32_0 : i32, i32
  }
  func.func @transform_3(%arg0: i32) -> (i32, i32, i32) {
    %c0_i32 = arith.constant 0 : i32
    %c0_i32_0 = arith.constant 0 : i32
    %c0_i32_1 = arith.constant 0 : i32
    %c0_i32_2 = arith.constant 0 : i32
    return %c0_i32, %c0_i32_0, %c0_i32_1 : i32, i32, i32
  }
  func.func @transform_4(%arg0: i32) -> (i32, i32) {
    %c0_i32 = arith.constant 0 : i32
    %c0_i32_0 = arith.constant 0 : i32
    %c0_i32_1 = arith.constant 0 : i32
    return %c0_i32, %c0_i32_0 : i32, i32
  }
  func.func @transform_5(%arg0: i32) -> (i32, i32) {
    %c0_i32 = arith.constant 0 : i32
    %c0_i32_0 = arith.constant 0 : i32
    %c0_i32_1 = arith.constant 0 : i32
    return %c0_i32, %c0_i32_0 : i32, i32
  }
  func.func @transform_6(%arg0: i32) -> (i32, i32, i32) {
    %c0_i32 = arith.constant 0 : i32
    %c0_i32_0 = arith.constant 0 : i32
    %c0_i32_1 = arith.constant 0 : i32
    return %arg0, %c0_i32, %c0_i32_0 : i32, i32, i32
  }
}

</mosaic_0001>

<llo_original>
// kernel: tpu_custom_call.1
$region0: #{tpu_custom_call.1}
  #allocation0 [shape = 'u32[]', space=smem, size = 0x4, offset = 0x4, fixed_abs, tag = 'smem constant byte address 0x4 - core index']
  #allocation1 [shape = 'u32[144,128]{1,0:T(1,128)}', space=vmem, size = 0x12000, scoped, tag = 'internal scratch']
  #allocation2 [shape = 'f32[8,1226]{1,0:T(8,128)}', space=vmem, size = 0xa000, scoped, tag = 'scratch operand']
  %s0 = inlined_call_operand.vmem [shape: f32[2,12,1226], index: 0, kind: input, shape index: {}]
  %s1 = inlined_call_operand.vmem [shape: f32[9,8,12], index: 1, kind: input, shape index: {}]
  %s2 = inlined_call_operand.vmem [shape: f32[8,1], index: 2, kind: input, shape index: {}]
  %s3 = inlined_call_operand.vmem [shape: f32[9,8,8], index: 3, kind: input, shape index: {}]
  %s4 = inlined_call_operand.vmem [shape: f32[8,1], index: 4, kind: input, shape index: {}]
  %s5 = inlined_call_operand.vmem [shape: f32[1,1156], index: 5, kind: input, shape index: {}]
  %s6 = inlined_call_operand.hbm [shape: f32[2,8,1156], index: 6, kind: output, shape index: {}]
  %s7 = sld [smem:[#allocation0]]
  $region57: #{tpu_custom_call.1} parent=0
    _
  %s9 = ssub.s32 1, %s7
  %s10 = scalar_select 0, %s9, %s7
  $region1: #{tpu_custom_call.1} parent=0
    #allocation3 [shape = 'u8[81920]{0}', space=vmem, size = 0x14000, scoped, tag = 'output window, operand 0']
    #allocation4 [shape = 's32[2]{0}', space=sflag, size = 0x8, scoped, tag = 'scoped memory for tpu_custom_call.1']
    %11 = vsyncpa [#allocation4], 0
    %s12 = scalar_lea.sflag [#allocation4], 1
    %13 = vsyncpa %s12, 0
    loop: start=0, step=1, limit=4
    $region2: #{tpu_custom_call.1} parent=1 // loop_pre_header
      _
    $region3: #{tpu_custom_call.1} parent=1 // loop_header
      %s15 = sphi 0, %s19
      %p16 = scmp.ge.s32.totalorder %s15, 4
      %s25 = sphi 0, %s27
      %s28 = sphi 0, %s25
      %s29 = sphi 0, %s28
      %s45 = sphi 0, %s29
      %s49 = sphi 0, %s49
      %s51 = sphi 0, %s49
      %s52 = sphi 0, %s51
      %s66 = sphi 0, %s52
      %s70 = sphi 0, %s70
      %s72 = sphi 0, %s70
      %s73 = sphi 0, %s72
      %s87 = sphi 0, %s73
      %s91 = sphi 0, %s91
      %s93 = sphi 0, %s91
      %s94 = sphi 0, %s93
      %s108 = sphi 0, %s94
      %s112 = sphi 0, %s112
      %s114 = sphi 0, %s112
      %s115 = sphi 0, %s114
      %s129 = sphi 0, %s115
      %s133 = sphi 0, %s133
      %s135 = sphi 0, %s133
      %s136 = sphi 0, %s135
      %s150 = sphi 0, %s136
      %s156 = sphi 0, %s158
      %s159 = sphi 0, %s156
      %s160 = sphi 0, %s159
      %s176 = sphi 0, %s160
    $region4: #{tpu_custom_call.1} parent=1 // loop_header_branch
      %18 = sbr.rel (%p16) target = $region8
    $region5: #{tpu_custom_call.1} parent=1 // loop_body
      %s20 = ssub.s32 %s15, 1
      %s21 = ssub.s32 %s15, 2
      %s22 = sadd.s32 %s15, 1
      %s23 = ssub.s32 %s15, %s22
      %p24 = scmp.eq.s32.totalorder %s23, 0
      %s26 = sadd.s32 %s25, 1
      %s27 = scalar_select %p24, %s25, %s26
      %p30 = pneg %p24
      %p31 = scmp.eq.s32.totalorder %s15, 1
      %p32 = por %p30, %p31
      %p33 = scmp.ne.s32.totalorder %s25, %s28
      %p34 = scmp.eq.s32.totalorder %s15, 0
      %p35 = por %p33, %p34
      %p36 = scmp.ne.s32.totalorder %s25, %s28
      %p37 = scmp.eq.s32.totalorder %s20, 1
      %p38 = por %p36, %p37
      %p39 = scmp.ne.s32.totalorder %s28, %s29
      %p40 = scmp.eq.s32.totalorder %s20, 0
      %p41 = por %p39, %p40
      %p42 = scmp.ne.s32.totalorder %s28, %s29
      %p43 = scmp.eq.s32.totalorder %s21, 1
      %p44 = por %p42, %p43
      %p46 = scmp.ne.s32.totalorder %s29, %s45
      %p47 = scmp.eq.s32.totalorder %s21, 0
      %p48 = por %p46, %p47
      %s50 = sadd.s32 %s49, 1
      %p53 = scmp.eq.s32.totalorder %s15, 1
      %p54 = scmp.ne.s32.totalorder %s49, %s51
      %p55 = scmp.eq.s32.totalorder %s15, 0
      %p56 = por %p54, %p55
      %p57 = scmp.ne.s32.totalorder %s49, %s51
      %p58 = scmp.eq.s32.totalorder %s20, 1
      %p59 = por %p57, %p58
      %p60 = scmp.ne.s32.totalorder %s51, %s52
      %p61 = scmp.eq.s32.totalorder %s20, 0
      %p62 = por %p60, %p61
      %p63 = scmp.ne.s32.totalorder %s51, %s52
      %p64 = scmp.eq.s32.totalorder %s21, 1
      %p65 = por %p63, %p64
      %p67 = scmp.ne.s32.totalorder %s52, %s66
      %p68 = scmp.eq.s32.totalorder %s21, 0
      %p69 = por %p67, %p68
      %s71 = sadd.s32 %s70, 1
      %p74 = scmp.eq.s32.totalorder %s15, 1
      %p75 = scmp.ne.s32.totalorder %s70, %s72
      %p76 = scmp.eq.s32.totalorder %s15, 0
      %p77 = por %p75, %p76
      %p78 = scmp.ne.s32.totalorder %s70, %s72
      %p79 = scmp.eq.s32.totalorder %s20, 1
      %p80 = por %p78, %p79
      %p81 = scmp.ne.s32.totalorder %s72, %s73
      %p82 = scmp.eq.s32.totalorder %s20, 0
      %p83 = por %p81, %p82
      %p84 = scmp.ne.s32.totalorder %s72, %s73
      %p85 = scmp.eq.s32.totalorder %s21, 1
      %p86 = por %p84, %p85
      %p88 = scmp.ne.s32.totalorder %s73, %s87
      %p89 = scmp.eq.s32.totalorder %s21, 0
      %p90 = por %p88, %p89
      %s92 = sadd.s32 %s91, 1
      %p95 = scmp.eq.s32.totalorder %s15, 1
      %p96 = scmp.ne.s32.totalorder %s91, %s93
      %p97 = scmp.eq.s32.totalorder %s15, 0
      %p98 = por %p96, %p97
      %p99 = scmp.ne.s32.totalorder %s91, %s93
      %p100 = scmp.eq.s32.totalorder %s20, 1
      %p101 = por %p99, %p100
      %p102 = scmp.ne.s32.totalorder %s93, %s94
      %p103 = scmp.eq.s32.totalorder %s20, 0
      %p104 = por %p102, %p103
      %p105 = scmp.ne.s32.totalorder %s93, %s94
      %p106 = scmp.eq.s32.totalorder %s21, 1
      %p107 = por %p105, %p106
      %p109 = scmp.ne.s32.totalorder %s94, %s108
      %p110 = scmp.eq.s32.totalorder %s21, 0
      %p111 = por %p109, %p110
      %s113 = sadd.s32 %s112, 1
      %p116 = scmp.eq.s32.totalorder %s15, 1
      %p117 = scmp.ne.s32.totalorder %s112, %s114
      %p118 = scmp.eq.s32.totalorder %s15, 0
      %p119 = por %p117, %p118
      %p120 = scmp.ne.s32.totalorder %s112, %s114
      %p121 = scmp.eq.s32.totalorder %s20, 1
      %p122 = por %p120, %p121
      %p123 = scmp.ne.s32.totalorder %s114, %s115
      %p124 = scmp.eq.s32.totalorder %s20, 0
      %p125 = por %p123, %p124
      %p126 = scmp.ne.s32.totalorder %s114, %s115
      %p127 = scmp.eq.s32.totalorder %s21, 1
      %p128 = por %p126, %p127
      %p130 = scmp.ne.s32.totalorder %s115, %s129
      %p131 = scmp.eq.s32.totalorder %s21, 0
      %p132 = por %p130, %p131
      %s134 = sadd.s32 %s133, 1
      %p137 = scmp.eq.s32.totalorder %s15, 1
      %p138 = scmp.ne.s32.totalorder %s133, %s135
      %p139 = scmp.eq.s32.totalorder %s15, 0
      %p140 = por %p138, %p139
      %p141 = scmp.ne.s32.totalorder %s133, %s135
      %p142 = scmp.eq.s32.totalorder %s20, 1
      %p143 = por %p141, %p142
      %p144 = scmp.ne.s32.totalorder %s135, %s136
      %p145 = scmp.eq.s32.totalorder %s20, 0
      %p146 = por %p144, %p145
      %p147 = scmp.ne.s32.totalorder %s135, %s136
      %p148 = scmp.eq.s32.totalorder %s21, 1
      %p149 = por %p147, %p148
      %p151 = scmp.ne.s32.totalorder %s136, %s150
      %p152 = scmp.eq.s32.totalorder %s21, 0
      %p153 = por %p151, %p152
      %s154 = ssub.s32 %s15, %s22
      %p155 = scmp.eq.s32.totalorder %s154, 0
      %s157 = sadd.s32 %s156, 1
      %s158 = scalar_select %p155, %s156, %s157
      %p161 = pneg %p155
      %p162 = scmp.eq.s32.totalorder %s15, 1
      %p163 = por %p161, %p162
      %p164 = scmp.ne.s32.totalorder %s156, %s159
      %p165 = scmp.eq.s32.totalorder %s15, 0
      %p166 = por %p164, %p165
      %p167 = scmp.ne.s32.totalorder %s156, %s159
      %p168 = scmp.eq.s32.totalorder %s20, 1
      %p169 = por %p167, %p168
      %p170 = scmp.ne.s32.totalorder %s159, %s160
      %p171 = scmp.eq.s32.totalorder %s20, 0
      %p172 = por %p170, %p171
      %p173 = scmp.ne.s32.totalorder %s159, %s160
      %p174 = scmp.eq.s32.totalorder %s21, 1
      %p175 = por %p173, %p174
      %p177 = scmp.ne.s32.totalorder %s160, %s176
      %p178 = scmp.eq.s32.totalorder %s21, 0
      %p179 = por %p177, %p178
      %p180 = scmp.le.s32.totalorder 1, %s15
      %p181 = scmp.lt.s32.totalorder %s15, 3
      %p182 = pnand %p180, %p181
      %p183 = pneg %p182
      // Predicated region
      $region9: #{tpu_custom_call.1} parent=5 // pred_check
        _
      $region10: #{tpu_custom_call.1} parent=5 // pred_check_branch
        %185 = sbr.rel (%p182) target = $region12
      $region11: #{tpu_custom_call.1} parent=5 // pred_region
        %s186 = ssub.s32 %s15, 1
        // Predicated region
        $region13: #{tpu_custom_call.1} parent=11 // pred_check
          %p187 = pneg %p62
        $region14: #{tpu_custom_call.1} parent=11 // pred_check_branch
          %189 = sbr.rel (%p187) target = $region16
        $region15: #{tpu_custom_call.1} parent=11 // pred_region
          _
        $region16: #{tpu_custom_call.1} parent=11 // pred_fallthru
          _
        // Predicated region
        $region17: #{tpu_custom_call.1} parent=11 // pred_check
          %p190 = pneg %p83
        $region18: #{tpu_custom_call.1} parent=11 // pred_check_branch
          %192 = sbr.rel (%p190) target = $region20
        $region19: #{tpu_custom_call.1} parent=11 // pred_region
          _
        $region20: #{tpu_custom_call.1} parent=11 // pred_fallthru
          _
        // Predicated region
        $region21: #{tpu_custom_call.1} parent=11 // pred_check
          %p193 = pneg %p104
        $region22: #{tpu_custom_call.1} parent=11 // pred_check_branch
          %195 = sbr.rel (%p193) target = $region24
        $region23: #{tpu_custom_call.1} parent=11 // pred_region
          _
        $region24: #{tpu_custom_call.1} parent=11 // pred_fallthru
          _
        // Predicated region
        $region25: #{tpu_custom_call.1} parent=11 // pred_check
          %p196 = pneg %p125
        $region26: #{tpu_custom_call.1} parent=11 // pred_check_branch
          %198 = sbr.rel (%p196) target = $region28
        $region27: #{tpu_custom_call.1} parent=11 // pred_region
          _
        $region28: #{tpu_custom_call.1} parent=11 // pred_fallthru
          _
        // Predicated region
        $region29: #{tpu_custom_call.1} parent=11 // pred_check
          %p199 = pneg %p146
        $region30: #{tpu_custom_call.1} parent=11 // pred_check_branch
          %201 = sbr.rel (%p199) target = $region32
        $region31: #{tpu_custom_call.1} parent=11 // pred_region
          _
        $region32: #{tpu_custom_call.1} parent=11 // pred_fallthru
          _
      $region12: #{tpu_custom_call.1} parent=5 // pred_fallthru
        _
      %p202 = scmp.lt.s32.totalorder %s15, 2
      // Predicated region
      $region33: #{tpu_custom_call.1} parent=5 // pred_check
        %p203 = pneg %p202
      $region34: #{tpu_custom_call.1} parent=5 // pred_check_branch
        %205 = sbr.rel (%p203) target = $region36
      $region35: #{tpu_custom_call.1} parent=5 // pred_region
        // Predicated region
        $region37: #{tpu_custom_call.1} parent=35 // pred_check
          %p206 = pneg %p35
        $region38: #{tpu_custom_call.1} parent=35 // pred_check_branch
          %208 = sbr.rel (%p206) target = $region40
        $region39: #{tpu_custom_call.1} parent=35 // pred_region
          %p209 = scmp.lt.s32.totalorder %s15, 1
          %s210 = scalar_select %p209, %s15, 1
          %s211 = smul.addr %s210, 20
          %s212 = smul.addr %s211, 8
          %s213 = scalar_lea.vmem %s0, %s212
        $region40: #{tpu_custom_call.1} parent=35 // pred_fallthru
          _
      $region36: #{tpu_custom_call.1} parent=5 // pred_fallthru
        _
      %p214 = scmp.le.s32.totalorder 1, %s15
      %p215 = scmp.lt.s32.totalorder %s15, 3
      %p216 = pnand %p214, %p215
      %p217 = pneg %p216
      // Predicated region
      $region41: #{tpu_custom_call.1} parent=5 // pred_check
        _
      $region42: #{tpu_custom_call.1} parent=5 // pred_check_branch
        %219 = sbr.rel (%p216) target = $region44
      $region43: #{tpu_custom_call.1} parent=5 // pred_region
        %s220 = ssub.s32 %s15, 1
        %p221 = scmp.lt.s32.totalorder %s20, 1
        %s222 = scalar_select %p221, %s20, 1
        %s223 = smul.addr %s222, 20
        %s224 = smul.addr %s223, 8
        %s225 = scalar_lea.vmem %s0, %s224
        %p226 = pneg %p41
        %p227 = pneg %p38
        %p228 = pneg %p62
        %p229 = pneg %p59
        %p230 = pneg %p83
        %p231 = pneg %p80
        %p232 = pneg %p104
        %p233 = pneg %p101
        %p234 = pneg %p125
        %p235 = pneg %p122
        %p236 = pneg %p146
        %p237 = pneg %p143
        %p238 = pneg %p172
        %p239 = pneg %p169
        %s240 = sand.u32 %s159, 1
        %s241 = scalar_lea.sflag [#allocation4], %s240
        %s242 = sand.u32 %s159, 1
        %s243 = smul.addr %s242, 80
        %s244 = scalar_lea.vmem [#allocation3], %s243
        %p245 = scmp.lt.s32.totalorder %s20, 1
        %s246 = scalar_select %p245, %s20, 1
        %s247 = smul.addr %s246, 20
        %s248 = smul.addr %s247, 8
        %s249 = scalar_lea.vmem %s0, %s248
        %v250 = vld [vmem:[%s249] sm:$0xff]
        %v251 = vld [vmem:[%s249 + $0x8] sm:$0xff]
        %v252 = vld [vmem:[%s249 + $0x10] sm:$0xff]
        %v253 = vld [vmem:[%s249 + $0x18] sm:$0xff]
        %v254 = vld [vmem:[%s249 + $0x20] sm:$0xff]
        %v255 = vld [vmem:[%s249 + $0x28] sm:$0xff]
        %v256 = vld [vmem:[%s249 + $0x30] sm:$0xff]
        %v257 = vld [vmem:[%s249 + $0x38] sm:$0xff]
        %v258 = vld [vmem:[%s249 + $0x40] sm:$0xff]
        %v259 = vld [vmem:[%s249 + $0x48] sm:$0xff]
        %v260 = vld [vmem:[%s249 + $0x50] sm:$0xf]
        %v261 = vld [vmem:[%s249 + $0x58] sm:$0xf]
        %v262 = vld [vmem:[%s249 + $0x60] sm:$0xf]
        %v263 = vld [vmem:[%s249 + $0x68] sm:$0xf]
        %v264 = vld [vmem:[%s249 + $0x70] sm:$0xf]
        %v265 = vld [vmem:[%s249 + $0x78] sm:$0xf]
        %v266 = vld [vmem:[%s249 + $0x80] sm:$0xf]
        %v267 = vld [vmem:[%s249 + $0x88] sm:$0xf]
        %v268 = vld [vmem:[%s249 + $0x90] sm:$0xf]
        %v269 = vld [vmem:[%s249 + $0x98] sm:$0xf]
        %v270 = vld [vmem:[%s1] sm:$0xff]
        %s271 = scalar_lea.vmem %s1, 8
        %v272 = vld [vmem:[%s271] sm:$0xff]
        %293 = vrot.lane.b32.xlu0 %v250, 127
        %v294 = vpop.permute.xlu0 %293
        %295 = vrot.lane.b32.xlu0 %v251, 127
        %v296 = vpop.permute.xlu0 %295
        %297 = vrot.lane.b32.xlu0 %v252, 127
        %v298 = vpop.permute.xlu0 %297
        %299 = vrot.lane.b32.xlu0 %v253, 127
        %v300 = vpop.permute.xlu0 %299
        %301 = vrot.lane.b32.xlu0 %v254, 127
        %v302 = vpop.permute.xlu0 %301
        %303 = vrot.lane.b32.xlu0 %v255, 127
        %v304 = vpop.permute.xlu0 %303
        %305 = vrot.lane.b32.xlu0 %v256, 127
        %v306 = vpop.permute.xlu0 %305
        %307 = vrot.lane.b32.xlu0 %v257, 127
        %v308 = vpop.permute.xlu0 %307
        %309 = vrot.lane.b32.xlu0 %v258, 127
        %v310 = vpop.permute.xlu0 %309
        %311 = vrot.lane.b32.xlu0 %v259, 127
        %v312 = vpop.permute.xlu0 %311
        %313 = vrot.lane.b32.xlu0 %v260, 127
        %v314 = vpop.permute.xlu0 %313
        %315 = vrot.lane.b32.xlu0 %v261, 127
        %v316 = vpop.permute.xlu0 %315
        %317 = vrot.lane.b32.xlu0 %v262, 127
        %v318 = vpop.permute.xlu0 %317
        %319 = vrot.lane.b32.xlu0 %v263, 127
        %v320 = vpop.permute.xlu0 %319
        %321 = vrot.lane.b32.xlu0 %v264, 127
        %v322 = vpop.permute.xlu0 %321
        %323 = vrot.lane.b32.xlu0 %v265, 127
        %v324 = vpop.permute.xlu0 %323
        %325 = vrot.lane.b32.xlu0 %v266, 127
        %v326 = vpop.permute.xlu0 %325
        %327 = vrot.lane.b32.xlu0 %v267, 127
        %v328 = vpop.permute.xlu0 %327
        %329 = vrot.lane.b32.xlu0 %v268, 127
        %v330 = vpop.permute.xlu0 %329
        %331 = vrot.lane.b32.xlu0 %v269, 127
        %v332 = vpop.permute.xlu0 %331
        %vm333 = vcmask 1039360
        %v334 = vsel %vm333, %v294, %v296
        %v335 = vsel %vm333, %v296, %v298
        %v336 = vsel %vm333, %v298, %v300
        %v337 = vsel %vm333, %v300, %v302
        %v338 = vsel %vm333, %v302, %v304
        %v339 = vsel %vm333, %v304, %v306
        %v340 = vsel %vm333, %v306, %v308
        %v341 = vsel %vm333, %v308, %v310
        %v342 = vsel %vm333, %v310, %v312
        %v343 = vsel %vm333, %v314, %v316
        %v344 = vsel %vm333, %v316, %v318
        %v345 = vsel %vm333, %v318, %v320
        %v346 = vsel %vm333, %v320, %v322
        %v347 = vsel %vm333, %v322, %v324
        %v348 = vsel %vm333, %v324, %v326
        %v349 = vsel %vm333, %v326, %v328
        %v350 = vsel %vm333, %v328, %v330
        %v351 = vsel %vm333, %v330, %v332
        %vm362 = vcmask 97280
        %v364 = vsel %vm362, %v272, 0
        %vm366 = vcmask 1043456
        %v367 = vsel %vm366, %v343, 0
        %v369 = vsel %vm366, %v344, 0
        %v371 = vsel %vm366, %v345, 0
        %v373 = vsel %vm366, %v346, 0
        %v375 = vsel %vm366, %v347, 0
        %v377 = vsel %vm366, %v348, 0
        %v379 = vsel %vm366, %v349, 0
        %v381 = vsel %vm366, %v350, 0
        %v383 = vsel %vm366, %v351, 0
        %v385 = vsel %vm366, %v332, 0
        %387 = vmatprep.subr.mxu0 0.0
        %388 = vmatpush1.msra.mxu0 0.0
        %389 = vmatprep.subr.mxu0 0.0
        %390 = vmatpush1.msra.mxu0 0.0
        %391 = vmatprep.subr.mxu0 0.0
        %392 = vmatpush1.msra.mxu0 0.0
        %393 = vmatprep.subr.mxu0 0.0
        %394 = vmatpush1.msra.mxu0 0.0
        %395 = vmatprep.subr.mxu0 0.0
        %396 = vmatpush1.msra.mxu0 0.0
        %397 = vmatprep.subr.mxu0 0.0
        %398 = vmatpush1.msra.mxu0 0.0
        %399 = vmatprep.subr.mxu0 0.0
        %400 = vmatpush1.msra.mxu0 0.0
        %401 = vmatprep.subr.mxu0 0.0
        %402 = vmatpush1.msra.mxu0 0.0
        %403 = vmatprep.subr.mxu0 0.0
        %404 = vmatpush1.msra.mxu0 0.0
        %405 = vmatprep.subr.mxu0 0.0
        %406 = vmatpush1.msra.mxu0 0.0
        %407 = vmatprep.subr.mxu0 0.0
        %408 = vmatpush1.msra.mxu0 0.0
        %409 = vmatprep.subr.mxu0 0.0
        %410 = vmatpush1.msra.mxu0 0.0
        %411 = vmatprep.subr.mxu0 0.0
        %412 = vmatpush1.msra.mxu0 0.0
        %413 = vmatprep.subr.mxu0 0.0
        %414 = vmatpush1.msra.mxu0 0.0
        %415 = vmatprep.subr.mxu0 %v369
        %416 = vmatpush1.msra.mxu0 %v367
        %417 = vmatprep.subr.mxu0 %v335
        %418 = vmatpush1.msra.mxu0 %v334
        %419 = vmatprep.subr.mxu0 0.0
        %420 = vmatpush2.msra.mxu0 0.0
        %421 = vmatprep.subr.mxu0 0.0
        %422 = vmatpush2.msra.mxu0 0.0
        %423 = vmatprep.subr.mxu0 0.0
        %424 = vmatpush2.msra.mxu0 0.0
        %425 = vmatprep.subr.mxu0 0.0
        %426 = vmatpush2.msra.mxu0 0.0
        %427 = vmatprep.subr.mxu0 0.0
        %428 = vmatpush2.msra.mxu0 0.0
        %429 = vmatprep.subr.mxu0 0.0
        %430 = vmatpush2.msra.mxu0 0.0
        %431 = vmatprep.subr.mxu0 0.0
        %432 = vmatpush2.msra.mxu0 0.0
        %433 = vmatprep.subr.mxu0 0.0
        %434 = vmatpush2.msra.mxu0 0.0
        %435 = vmatprep.subr.mxu0 0.0
        %436 = vmatpush2.msra.mxu0 0.0
        %437 = vmatprep.subr.mxu0 0.0
        %438 = vmatpush2.msra.mxu0 0.0
        %439 = vmatprep.subr.mxu0 0.0
        %440 = vmatpush2.msra.mxu0 0.0
        %441 = vmatprep.subr.mxu0 0.0
        %442 = vmatpush2.msra.mxu0 0.0
        %443 = vmatprep.subr.mxu0 0.0
        %444 = vmatpush2.msra.mxu0 0.0
        %445 = vmatprep.subr.mxu0 0.0
        %446 = vmatpush2.msra.mxu0 0.0
        %447 = vmatprep.subr.mxu0 0.0
        %448 = vmatpush2.msra.mxu0 0.0
        %449 = vmatprep.subr.mxu0 0.0
        %450 = vmatpush2.msra.mxu0 0.0
        %451 = vmatprep.mubr.f32.mxu0 0.0
        %452 = vmatmul.mubr.f32.gmra.mxu0 %v364
        %v453 = vpop.f32.mrf.mxu0
        %v454 = vadd.f32 0.0, %v453
        %v455 = vpop.f32.mrf.mxu0
        %v456 = vadd.f32 0.0, %v455
        %457 = vdwg.mxu0
        %458 = vmatprep.subr.mxu0 0.0
        %459 = vmatpush1.msra.mxu0 0.0
        %460 = vmatprep.subr.mxu0 0.0
        %461 = vmatpush1.msra.mxu0 0.0
        %462 = vmatprep.subr.mxu0 0.0
        %463 = vmatpush1.msra.mxu0 0.0
        %464 = vmatprep.subr.mxu0 0.0
        %465 = vmatpush1.msra.mxu0 0.0
        %466 = vmatprep.subr.mxu0 0.0
        %467 = vmatpush1.msra.mxu0 0.0
        %468 = vmatprep.subr.mxu0 0.0
        %469 = vmatpush1.msra.mxu0 0.0
        %470 = vmatprep.subr.mxu0 0.0
        %471 = vmatpush1.msra.mxu0 0.0
        %472 = vmatprep.subr.mxu0 0.0
        %473 = vmatpush1.msra.mxu0 0.0
        %474 = vmatprep.subr.mxu0 0.0
        %475 = vmatpush1.msra.mxu0 0.0
        %476 = vmatprep.subr.mxu0 0.0
        %477 = vmatpush1.msra.mxu0 0.0
        %478 = vmatprep.subr.mxu0 0.0
        %479 = vmatpush1.msra.mxu0 0.0
        %480 = vmatprep.subr.mxu0 0.0
        %481 = vmatpush1.msra.mxu0 0.0
        %482 = vmatprep.subr.mxu0 0.0
        %483 = vmatpush1.msra.mxu0 0.0
        %484 = vmatprep.subr.mxu0 0.0
        %485 = vmatpush1.msra.mxu0 0.0
        %486 = vmatprep.subr.mxu0 %v373
        %487 = vmatpush1.msra.mxu0 %v371
        %488 = vmatprep.subr.mxu0 %v337
        %489 = vmatpush1.msra.mxu0 %v336
        %490 = vmatprep.subr.mxu0 0.0
        %491 = vmatpush2.msra.mxu0 0.0
        %492 = vmatprep.subr.mxu0 0.0
        %493 = vmatpush2.msra.mxu0 0.0
        %494 = vmatprep.subr.mxu0 0.0
        %495 = vmatpush2.msra.mxu0 0.0
        %496 = vmatprep.subr.mxu0 0.0
        %497 = vmatpush2.msra.mxu0 0.0
        %498 = vmatprep.subr.mxu0 0.0
        %499 = vmatpush2.msra.mxu0 0.0
        %500 = vmatprep.subr.mxu0 0.0
        %501 = vmatpush2.msra.mxu0 0.0
        %502 = vmatprep.subr.mxu0 0.0
        %503 = vmatpush2.msra.mxu0 0.0
        %504 = vmatprep.subr.mxu0 0.0
        %505 = vmatpush2.msra.mxu0 0.0
        %506 = vmatprep.subr.mxu0 0.0
        %507 = vmatpush2.msra.mxu0 0.0
        %508 = vmatprep.subr.mxu0 0.0
        %509 = vmatpush2.msra.mxu0 0.0
        %510 = vmatprep.subr.mxu0 0.0
        %511 = vmatpush2.msra.mxu0 0.0
        %512 = vmatprep.subr.mxu0 0.0
        %513 = vmatpush2.msra.mxu0 0.0
        %514 = vmatprep.subr.mxu0 0.0
        %515 = vmatpush2.msra.mxu0 0.0
        %516 = vmatprep.subr.mxu0 0.0
        %517 = vmatpush2.msra.mxu0 0.0
        %518 = vmatprep.subr.mxu0 0.0
        %519 = vmatpush2.msra.mxu0 0.0
        %520 = vmatprep.subr.mxu0 0.0
        %521 = vmatpush2.msra.mxu0 0.0
        %522 = vmatprep.mubr.f32.mxu0 0.0
        %523 = vmatmul.mubr.f32.gmra.mxu0 %v364
        %v524 = vpop.f32.mrf.mxu0
        %v525 = vadd.f32 0.0, %v524
        %v526 = vpop.f32.mrf.mxu0
        %v527 = vadd.f32 0.0, %v526
        %528 = vdwg.mxu0
        %529 = vmatprep.subr.mxu0 0.0
        %530 = vmatpush1.msra.mxu0 0.0
        %531 = vmatprep.subr.mxu0 0.0
        %532 = vmatpush1.msra.mxu0 0.0
        %533 = vmatprep.subr.mxu0 0.0
        %534 = vmatpush1.msra.mxu0 0.0
        %535 = vmatprep.subr.mxu0 0.0
        %536 = vmatpush1.msra.mxu0 0.0
        %537 = vmatprep.subr.mxu0 0.0
        %538 = vmatpush1.msra.mxu0 0.0
        %539 = vmatprep.subr.mxu0 0.0
        %540 = vmatpush1.msra.mxu0 0.0
        %541 = vmatprep.subr.mxu0 0.0
        %542 = vmatpush1.msra.mxu0 0.0
        %543 = vmatprep.subr.mxu0 0.0
        %544 = vmatpush1.msra.mxu0 0.0
        %545 = vmatprep.subr.mxu0 0.0
        %546 = vmatpush1.msra.mxu0 0.0
        %547 = vmatprep.subr.mxu0 0.0
        %548 = vmatpush1.msra.mxu0 0.0
        %549 = vmatprep.subr.mxu0 0.0
        %550 = vmatpush1.msra.mxu0 0.0
        %551 = vmatprep.subr.mxu0 0.0
        %552 = vmatpush1.msra.mxu0 0.0
        %553 = vmatprep.subr.mxu0 0.0
        %554 = vmatpush1.msra.mxu0 0.0
        %555 = vmatprep.subr.mxu0 0.0
        %556 = vmatpush1.msra.mxu0 0.0
        %557 = vmatprep.subr.mxu0 %v377
        %558 = vmatpush1.msra.mxu0 %v375
        %559 = vmatprep.subr.mxu0 %v339
        %560 = vmatpush1.msra.mxu0 %v338
        %561 = vmatprep.subr.mxu0 0.0
        %562 = vmatpush2.msra.mxu0 0.0
        %563 = vmatprep.subr.mxu0 0.0
        %564 = vmatpush2.msra.mxu0 0.0
        %565 = vmatprep.subr.mxu0 0.0
        %566 = vmatpush2.msra.mxu0 0.0
        %567 = vmatprep.subr.mxu0 0.0
        %568 = vmatpush2.msra.mxu0 0.0
        %569 = vmatprep.subr.mxu0 0.0
        %570 = vmatpush2.msra.mxu0 0.0
        %571 = vmatprep.subr.mxu0 0.0
        %572 = vmatpush2.msra.mxu0 0.0
        %573 = vmatprep.subr.mxu0 0.0
        %574 = vmatpush2.msra.mxu0 0.0
        %575 = vmatprep.subr.mxu0 0.0
        %576 = vmatpush2.msra.mxu0 0.0
        %577 = vmatprep.subr.mxu0 0.0
        %578 = vmatpush2.msra.mxu0 0.0
        %579 = vmatprep.subr.mxu0 0.0
        %580 = vmatpush2.msra.mxu0 0.0
        %581 = vmatprep.subr.mxu0 0.0
        %582 = vmatpush2.msra.mxu0 0.0
        %583 = vmatprep.subr.mxu0 0.0
        %584 = vmatpush2.msra.mxu0 0.0
        %585 = vmatprep.subr.mxu0 0.0
        %586 = vmatpush2.msra.mxu0 0.0
        %587 = vmatprep.subr.mxu0 0.0
        %588 = vmatpush2.msra.mxu0 0.0
        %589 = vmatprep.subr.mxu0 0.0
        %590 = vmatpush2.msra.mxu0 0.0
        %591 = vmatprep.subr.mxu0 0.0
        %592 = vmatpush2.msra.mxu0 0.0
        %593 = vmatprep.mubr.f32.mxu0 0.0
        %594 = vmatmul.mubr.f32.gmra.mxu0 %v364
        %v595 = vpop.f32.mrf.mxu0
        %v596 = vadd.f32 0.0, %v595
        %v597 = vpop.f32.mrf.mxu0
        %v598 = vadd.f32 0.0, %v597
        %599 = vdwg.mxu0
        %600 = vmatprep.subr.mxu0 0.0
        %601 = vmatpush1.msra.mxu0 0.0
        %602 = vmatprep.subr.mxu0 0.0
        %603 = vmatpush1.msra.mxu0 0.0
        %604 = vmatprep.subr.mxu0 0.0
        %605 = vmatpush1.msra.mxu0 0.0
        %606 = vmatprep.subr.mxu0 0.0
        %607 = vmatpush1.msra.mxu0 0.0
        %608 = vmatprep.subr.mxu0 0.0
        %609 = vmatpush1.msra.mxu0 0.0
        %610 = vmatprep.subr.mxu0 0.0
        %611 = vmatpush1.msra.mxu0 0.0
        %612 = vmatprep.subr.mxu0 0.0
        %613 = vmatpush1.msra.mxu0 0.0
        %614 = vmatprep.subr.mxu0 0.0
        %615 = vmatpush1.msra.mxu0 0.0
        %616 = vmatprep.subr.mxu0 0.0
        %617 = vmatpush1.msra.mxu0 0.0
        %618 = vmatprep.subr.mxu0 0.0
        %619 = vmatpush1.msra.mxu0 0.0
        %620 = vmatprep.subr.mxu0 0.0
        %621 = vmatpush1.msra.mxu0 0.0
        %622 = vmatprep.subr.mxu0 0.0
        %623 = vmatpush1.msra.mxu0 0.0
        %624 = vmatprep.subr.mxu0 0.0
        %625 = vmatpush1.msra.mxu0 0.0
        %626 = vmatprep.subr.mxu0 0.0
        %627 = vmatpush1.msra.mxu0 0.0
        %628 = vmatprep.subr.mxu0 %v381
        %629 = vmatpush1.msra.mxu0 %v379
        %630 = vmatprep.subr.mxu0 %v341
        %631 = vmatpush1.msra.mxu0 %v340
        %632 = vmatprep.subr.mxu0 0.0
        %633 = vmatpush2.msra.mxu0 0.0
        %634 = vmatprep.subr.mxu0 0.0
        %635 = vmatpush2.msra.mxu0 0.0
        %636 = vmatprep.subr.mxu0 0.0
        %637 = vmatpush2.msra.mxu0 0.0
        %638 = vmatprep.subr.mxu0 0.0
        %639 = vmatpush2.msra.mxu0 0.0
        %640 = vmatprep.subr.mxu0 0.0
        %641 = vmatpush2.msra.mxu0 0.0
        %642 = vmatprep.subr.mxu0 0.0
        %643 = vmatpush2.msra.mxu0 0.0
        %644 = vmatprep.subr.mxu0 0.0
        %645 = vmatpush2.msra.mxu0 0.0
        %646 = vmatprep.subr.mxu0 0.0
        %647 = vmatpush2.msra.mxu0 0.0
        %648 = vmatprep.subr.mxu0 0.0
        %649 = vmatpush2.msra.mxu0 0.0
        %650 = vmatprep.subr.mxu0 0.0
        %651 = vmatpush2.msra.mxu0 0.0
        %652 = vmatprep.subr.mxu0 0.0
        %653 = vmatpush2.msra.mxu0 0.0
        %654 = vmatprep.subr.mxu0 0.0
        %655 = vmatpush2.msra.mxu0 0.0
        %656 = vmatprep.subr.mxu0 0.0
        %657 = vmatpush2.msra.mxu0 0.0
        %658 = vmatprep.subr.mxu0 0.0
        %659 = vmatpush2.msra.mxu0 0.0
        %660 = vmatprep.subr.mxu0 0.0
        %661 = vmatpush2.msra.mxu0 0.0
        %662 = vmatprep.subr.mxu0 0.0
        %663 = vmatpush2.msra.mxu0 0.0
        %664 = vmatprep.mubr.f32.mxu0 0.0
        %665 = vmatmul.mubr.f32.gmra.mxu0 %v364
        %v666 = vpop.f32.mrf.mxu0
        %v667 = vadd.f32 0.0, %v666
        %v668 = vpop.f32.mrf.mxu0
        %v669 = vadd.f32 0.0, %v668
        %670 = vdwg.mxu0
        %671 = vmatprep.subr.mxu0 0.0
        %672 = vmatpush1.msra.mxu0 0.0
        %673 = vmatprep.subr.mxu0 0.0
        %674 = vmatpush1.msra.mxu0 0.0
        %675 = vmatprep.subr.mxu0 0.0
        %676 = vmatpush1.msra.mxu0 0.0
        %677 = vmatprep.subr.mxu0 0.0
        %678 = vmatpush1.msra.mxu0 0.0
        %679 = vmatprep.subr.mxu0 0.0
        %680 = vmatpush1.msra.mxu0 0.0
        %681 = vmatprep.subr.mxu0 0.0
        %682 = vmatpush1.msra.mxu0 0.0
        %683 = vmatprep.subr.mxu0 0.0
        %684 = vmatpush1.msra.mxu0 0.0
        %685 = vmatprep.subr.mxu0 0.0
        %686 = vmatpush1.msra.mxu0 0.0
        %687 = vmatprep.subr.mxu0 0.0
        %688 = vmatpush1.msra.mxu0 0.0
        %689 = vmatprep.subr.mxu0 0.0
        %690 = vmatpush1.msra.mxu0 0.0
        %691 = vmatprep.subr.mxu0 0.0
        %692 = vmatpush1.msra.mxu0 0.0
        %693 = vmatprep.subr.mxu0 0.0
        %694 = vmatpush1.msra.mxu0 0.0
        %695 = vmatprep.subr.mxu0 0.0
        %696 = vmatpush1.msra.mxu0 0.0
        %697 = vmatprep.subr.mxu0 0.0
        %698 = vmatpush1.msra.mxu0 0.0
        %699 = vmatprep.subr.mxu0 %v385
        %700 = vmatpush1.msra.mxu0 %v383
        %701 = vmatprep.subr.mxu0 %v312
        %702 = vmatpush1.msra.mxu0 %v342
        %703 = vmatprep.subr.mxu0 0.0
        %704 = vmatpush2.msra.mxu0 0.0
        %705 = vmatprep.subr.mxu0 0.0
        %706 = vmatpush2.msra.mxu0 0.0
        %707 = vmatprep.subr.mxu0 0.0
        %708 = vmatpush2.msra.mxu0 0.0
        %709 = vmatprep.subr.mxu0 0.0
        %710 = vmatpush2.msra.mxu0 0.0
        %711 = vmatprep.subr.mxu0 0.0
        %712 = vmatpush2.msra.mxu0 0.0
        %713 = vmatprep.subr.mxu0 0.0
        %714 = vmatpush2.msra.mxu0 0.0
        %715 = vmatprep.subr.mxu0 0.0
        %716 = vmatpush2.msra.mxu0 0.0
        %717 = vmatprep.subr.mxu0 0.0
        %718 = vmatpush2.msra.mxu0 0.0
        %719 = vmatprep.subr.mxu0 0.0
        %720 = vmatpush2.msra.mxu0 0.0
        %721 = vmatprep.subr.mxu0 0.0
        %722 = vmatpush2.msra.mxu0 0.0
        %723 = vmatprep.subr.mxu0 0.0
        %724 = vmatpush2.msra.mxu0 0.0
        %725 = vmatprep.subr.mxu0 0.0
        %726 = vmatpush2.msra.mxu0 0.0
        %727 = vmatprep.subr.mxu0 0.0
        %728 = vmatpush2.msra.mxu0 0.0
        %729 = vmatprep.subr.mxu0 0.0
        %730 = vmatpush2.msra.mxu0 0.0
        %731 = vmatprep.subr.mxu0 0.0
        %732 = vmatpush2.msra.mxu0 0.0
        %733 = vmatprep.subr.mxu0 0.0
        %734 = vmatpush2.msra.mxu0 0.0
        %735 = vmatprep.mubr.f32.mxu0 0.0
        %736 = vmatmul.mubr.f32.gmra.mxu0 %v364
        %v737 = vpop.f32.mrf.mxu0
        %v738 = vadd.f32 0.0, %v737
        %v739 = vpop.f32.mrf.mxu0
        %v740 = vadd.f32 0.0, %v739
        %741 = vdwg.mxu0
        %v743 = vsel %vm362, %v270, 0
        %v745 = vsel %vm366, %v260, 0
        %v747 = vsel %vm366, %v261, 0
        %v749 = vsel %vm366, %v262, 0
        %v751 = vsel %vm366, %v263, 0
        %v753 = vsel %vm366, %v264, 0
        %v755 = vsel %vm366, %v265, 0
        %v757 = vsel %vm366, %v266, 0
        %v759 = vsel %vm366, %v267, 0
        %v761 = vsel %vm366, %v268, 0
        %v763 = vsel %vm366, %v269, 0
        %765 = vmatprep.subr.mxu0 0.0
        %766 = vmatpush1.msra.mxu0 0.0
        %767 = vmatprep.subr.mxu0 0.0
        %768 = vmatpush1.msra.mxu0 0.0
        %769 = vmatprep.subr.mxu0 0.0
        %770 = vmatpush1.msra.mxu0 0.0
        %771 = vmatprep.subr.mxu0 0.0
        %772 = vmatpush1.msra.mxu0 0.0
        %773 = vmatprep.subr.mxu0 0.0
        %774 = vmatpush1.msra.mxu0 0.0
        %775 = vmatprep.subr.mxu0 0.0
        %776 = vmatpush1.msra.mxu0 0.0
        %777 = vmatprep.subr.mxu0 0.0
        %778 = vmatpush1.msra.mxu0 0.0
        %779 = vmatprep.subr.mxu0 0.0
        %780 = vmatpush1.msra.mxu0 0.0
        %781 = vmatprep.subr.mxu0 0.0
        %782 = vmatpush1.msra.mxu0 0.0
        %783 = vmatprep.subr.mxu0 0.0
        %784 = vmatpush1.msra.mxu0 0.0
        %785 = vmatprep.subr.mxu0 0.0
        %786 = vmatpush1.msra.mxu0 0.0
        %787 = vmatprep.subr.mxu0 0.0
        %788 = vmatpush1.msra.mxu0 0.0
        %789 = vmatprep.subr.mxu0 0.0
        %790 = vmatpush1.msra.mxu0 0.0
        %791 = vmatprep.subr.mxu0 0.0
        %792 = vmatpush1.msra.mxu0 0.0
        %793 = vmatprep.subr.mxu0 %v747
        %794 = vmatpush1.msra.mxu0 %v745
        %795 = vmatprep.subr.mxu0 %v251
        %796 = vmatpush1.msra.mxu0 %v250
        %797 = vmatprep.subr.mxu0 0.0
        %798 = vmatpush2.msra.mxu0 0.0
        %799 = vmatprep.subr.mxu0 0.0
        %800 = vmatpush2.msra.mxu0 0.0
        %801 = vmatprep.subr.mxu0 0.0
        %802 = vmatpush2.msra.mxu0 0.0
        %803 = vmatprep.subr.mxu0 0.0
        %804 = vmatpush2.msra.mxu0 0.0
        %805 = vmatprep.subr.mxu0 0.0
        %806 = vmatpush2.msra.mxu0 0.0
        %807 = vmatprep.subr.mxu0 0.0
        %808 = vmatpush2.msra.mxu0 0.0
        %809 = vmatprep.subr.mxu0 0.0
        %810 = vmatpush2.msra.mxu0 0.0
        %811 = vmatprep.subr.mxu0 0.0
        %812 = vmatpush2.msra.mxu0 0.0
        %813 = vmatprep.subr.mxu0 0.0
        %814 = vmatpush2.msra.mxu0 0.0
        %815 = vmatprep.subr.mxu0 0.0
        %816 = vmatpush2.msra.mxu0 0.0
        %817 = vmatprep.subr.mxu0 0.0
        %818 = vmatpush2.msra.mxu0 0.0
        %819 = vmatprep.subr.mxu0 0.0
        %820 = vmatpush2.msra.mxu0 0.0
        %821 = vmatprep.subr.mxu0 0.0
        %822 = vmatpush2.msra.mxu0 0.0
        %823 = vmatprep.subr.mxu0 0.0
        %824 = vmatpush2.msra.mxu0 0.0
        %825 = vmatprep.subr.mxu0 0.0
        %826 = vmatpush2.msra.mxu0 0.0
        %827 = vmatprep.subr.mxu0 0.0
        %828 = vmatpush2.msra.mxu0 0.0
        %829 = vmatprep.mubr.f32.mxu0 0.0
        %830 = vmatmul.mubr.f32.gmra.mxu0 %v743
        %v831 = vpop.f32.mrf.mxu0
        %v832 = vadd.f32 %v454, %v831
        %v833 = vpop.f32.mrf.mxu0
        %v834 = vadd.f32 %v456, %v833
        %835 = vdwg.mxu0
        %836 = vmatprep.subr.mxu0 0.0
        %837 = vmatpush1.msra.mxu0 0.0
        %838 = vmatprep.subr.mxu0 0.0
        %839 = vmatpush1.msra.mxu0 0.0
        %840 = vmatprep.subr.mxu0 0.0
        %841 = vmatpush1.msra.mxu0 0.0
        %842 = vmatprep.subr.mxu0 0.0
        %843 = vmatpush1.msra.mxu0 0.0
        %844 = vmatprep.subr.mxu0 0.0
        %845 = vmatpush1.msra.mxu0 0.0
        %846 = vmatprep.subr.mxu0 0.0
        %847 = vmatpush1.msra.mxu0 0.0
        %848 = vmatprep.subr.mxu0 0.0
        %849 = vmatpush1.msra.mxu0 0.0
        %850 = vmatprep.subr.mxu0 0.0
        %851 = vmatpush1.msra.mxu0 0.0
        %852 = vmatprep.subr.mxu0 0.0
        %853 = vmatpush1.msra.mxu0 0.0
        %854 = vmatprep.subr.mxu0 0.0
        %855 = vmatpush1.msra.mxu0 0.0
        %856 = vmatprep.subr.mxu0 0.0
        %857 = vmatpush1.msra.mxu0 0.0
        %858 = vmatprep.subr.mxu0 0.0
        %859 = vmatpush1.msra.mxu0 0.0
        %860 = vmatprep.subr.mxu0 0.0
        %861 = vmatpush1.msra.mxu0 0.0
        %862 = vmatprep.subr.mxu0 0.0
        %863 = vmatpush1.msra.mxu0 0.0
        %864 = vmatprep.subr.mxu0 %v751
        %865 = vmatpush1.msra.mxu0 %v749
        %866 = vmatprep.subr.mxu0 %v253
        %867 = vmatpush1.msra.mxu0 %v252
        %868 = vmatprep.subr.mxu0 0.0
        %869 = vmatpush2.msra.mxu0 0.0
        %870 = vmatprep.subr.mxu0 0.0
        %871 = vmatpush2.msra.mxu0 0.0
        %872 = vmatprep.subr.mxu0 0.0
        %873 = vmatpush2.msra.mxu0 0.0
        %874 = vmatprep.subr.mxu0 0.0
        %875 = vmatpush2.msra.mxu0 0.0
        %876 = vmatprep.subr.mxu0 0.0
        %877 = vmatpush2.msra.mxu0 0.0
        %878 = vmatprep.subr.mxu0 0.0
        %879 = vmatpush2.msra.mxu0 0.0
        %880 = vmatprep.subr.mxu0 0.0
        %881 = vmatpush2.msra.mxu0 0.0
        %882 = vmatprep.subr.mxu0 0.0
        %883 = vmatpush2.msra.mxu0 0.0
        %884 = vmatprep.subr.mxu0 0.0
        %885 = vmatpush2.msra.mxu0 0.0
        %886 = vmatprep.subr.mxu0 0.0
        %887 = vmatpush2.msra.mxu0 0.0
        %888 = vmatprep.subr.mxu0 0.0
        %889 = vmatpush2.msra.mxu0 0.0
        %890 = vmatprep.subr.mxu0 0.0
        %891 = vmatpush2.msra.mxu0 0.0
        %892 = vmatprep.subr.mxu0 0.0
        %893 = vmatpush2.msra.mxu0 0.0
        %894 = vmatprep.subr.mxu0 0.0
        %895 = vmatpush2.msra.mxu0 0.0
        %896 = vmatprep.subr.mxu0 0.0
        %897 = vmatpush2.msra.mxu0 0.0
        %898 = vmatprep.subr.mxu0 0.0
        %899 = vmatpush2.msra.mxu0 0.0
        %900 = vmatprep.mubr.f32.mxu0 0.0
        %901 = vmatmul.mubr.f32.gmra.mxu0 %v743
        %v902 = vpop.f32.mrf.mxu0
        %v903 = vadd.f32 %v525, %v902
        %v904 = vpop.f32.mrf.mxu0
        %v905 = vadd.f32 %v527, %v904
        %906 = vdwg.mxu0
        %907 = vmatprep.subr.mxu0 0.0
        %908 = vmatpush1.msra.mxu0 0.0
        %909 = vmatprep.subr.mxu0 0.0
        %910 = vmatpush1.msra.mxu0 0.0
        %911 = vmatprep.subr.mxu0 0.0
        %912 = vmatpush1.msra.mxu0 0.0
        %913 = vmatprep.subr.mxu0 0.0
        %914 = vmatpush1.msra.mxu0 0.0
        %915 = vmatprep.subr.mxu0 0.0
        %916 = vmatpush1.msra.mxu0 0.0
        %917 = vmatprep.subr.mxu0 0.0
        %918 = vmatpush1.msra.mxu0 0.0
        %919 = vmatprep.subr.mxu0 0.0
        %920 = vmatpush1.msra.mxu0 0.0
        %921 = vmatprep.subr.mxu0 0.0
        %922 = vmatpush1.msra.mxu0 0.0
        %923 = vmatprep.subr.mxu0 0.0
        %924 = vmatpush1.msra.mxu0 0.0
        %925 = vmatprep.subr.mxu0 0.0
        %926 = vmatpush1.msra.mxu0 0.0
        %927 = vmatprep.subr.mxu0 0.0
        %928 = vmatpush1.msra.mxu0 0.0
        %929 = vmatprep.subr.mxu0 0.0
        %930 = vmatpush1.msra.mxu0 0.0
        %931 = vmatprep.subr.mxu0 0.0
        %932 = vmatpush1.msra.mxu0 0.0
        %933 = vmatprep.subr.mxu0 0.0
        %934 = vmatpush1.msra.mxu0 0.0
        %935 = vmatprep.subr.mxu0 %v755
        %936 = vmatpush1.msra.mxu0 %v753
        %937 = vmatprep.subr.mxu0 %v255
        %938 = vmatpush1.msra.mxu0 %v254
        %939 = vmatprep.subr.mxu0 0.0
        %940 = vmatpush2.msra.mxu0 0.0
        %941 = vmatprep.subr.mxu0 0.0
        %942 = vmatpush2.msra.mxu0 0.0
        %943 = vmatprep.subr.mxu0 0.0
        %944 = vmatpush2.msra.mxu0 0.0
        %945 = vmatprep.subr.mxu0 0.0
        %946 = vmatpush2.msra.mxu0 0.0
        %947 = vmatprep.subr.mxu0 0.0
        %948 = vmatpush2.msra.mxu0 0.0
        %949 = vmatprep.subr.mxu0 0.0
        %950 = vmatpush2.msra.mxu0 0.0
        %951 = vmatprep.subr.mxu0 0.0
        %952 = vmatpush2.msra.mxu0 0.0
        %953 = vmatprep.subr.mxu0 0.0
        %954 = vmatpush2.msra.mxu0 0.0
        %955 = vmatprep.subr.mxu0 0.0
        %956 = vmatpush2.msra.mxu0 0.0
        %957 = vmatprep.subr.mxu0 0.0
        %958 = vmatpush2.msra.mxu0 0.0
        %959 = vmatprep.subr.mxu0 0.0
        %960 = vmatpush2.msra.mxu0 0.0
        %961 = vmatprep.subr.mxu0 0.0
        %962 = vmatpush2.msra.mxu0 0.0
        %963 = vmatprep.subr.mxu0 0.0
        %964 = vmatpush2.msra.mxu0 0.0
        %965 = vmatprep.subr.mxu0 0.0
        %966 = vmatpush2.msra.mxu0 0.0
        %967 = vmatprep.subr.mxu0 0.0
        %968 = vmatpush2.msra.mxu0 0.0
        %969 = vmatprep.subr.mxu0 0.0
        %970 = vmatpush2.msra.mxu0 0.0
        %971 = vmatprep.mubr.f32.mxu0 0.0
        %972 = vmatmul.mubr.f32.gmra.mxu0 %v743
        %v973 = vpop.f32.mrf.mxu0
        %v974 = vadd.f32 %v596, %v973
        %v975 = vpop.f32.mrf.mxu0
        %v976 = vadd.f32 %v598, %v975
        %977 = vdwg.mxu0
        %978 = vmatprep.subr.mxu0 0.0
        %979 = vmatpush1.msra.mxu0 0.0
        %980 = vmatprep.subr.mxu0 0.0
        %981 = vmatpush1.msra.mxu0 0.0
        %982 = vmatprep.subr.mxu0 0.0
        %983 = vmatpush1.msra.mxu0 0.0
        %984 = vmatprep.subr.mxu0 0.0
        %985 = vmatpush1.msra.mxu0 0.0
        %986 = vmatprep.subr.mxu0 0.0
        %987 = vmatpush1.msra.mxu0 0.0
        %988 = vmatprep.subr.mxu0 0.0
        %989 = vmatpush1.msra.mxu0 0.0
        %990 = vmatprep.subr.mxu0 0.0
        %991 = vmatpush1.msra.mxu0 0.0
        %992 = vmatprep.subr.mxu0 0.0
        %993 = vmatpush1.msra.mxu0 0.0
        %994 = vmatprep.subr.mxu0 0.0
        %995 = vmatpush1.msra.mxu0 0.0
        %996 = vmatprep.subr.mxu0 0.0
        %997 = vmatpush1.msra.mxu0 0.0
        %998 = vmatprep.subr.mxu0 0.0
        %999 = vmatpush1.msra.mxu0 0.0
        %1000 = vmatprep.subr.mxu0 0.0
        %1001 = vmatpush1.msra.mxu0 0.0
        %1002 = vmatprep.subr.mxu0 0.0
        %1003 = vmatpush1.msra.mxu0 0.0
        %1004 = vmatprep.subr.mxu0 0.0
        %1005 = vmatpush1.msra.mxu0 0.0
        %1006 = vmatprep.subr.mxu0 %v759
        %1007 = vmatpush1.msra.mxu0 %v757
        %1008 = vmatprep.subr.mxu0 %v257
        %1009 = vmatpush1.msra.mxu0 %v256
        %1010 = vmatprep.subr.mxu0 0.0
        %1011 = vmatpush2.msra.mxu0 0.0
        %1012 = vmatprep.subr.mxu0 0.0
        %1013 = vmatpush2.msra.mxu0 0.0
        %1014 = vmatprep.subr.mxu0 0.0
        %1015 = vmatpush2.msra.mxu0 0.0
        %1016 = vmatprep.subr.mxu0 0.0
        %1017 = vmatpush2.msra.mxu0 0.0
        %1018 = vmatprep.subr.mxu0 0.0
        %1019 = vmatpush2.msra.mxu0 0.0
        %1020 = vmatprep.subr.mxu0 0.0
        %1021 = vmatpush2.msra.mxu0 0.0
        %1022 = vmatprep.subr.mxu0 0.0
        %1023 = vmatpush2.msra.mxu0 0.0
        %1024 = vmatprep.subr.mxu0 0.0
        %1025 = vmatpush2.msra.mxu0 0.0
        %1026 = vmatprep.subr.mxu0 0.0
        %1027 = vmatpush2.msra.mxu0 0.0
        %1028 = vmatprep.subr.mxu0 0.0
        %1029 = vmatpush2.msra.mxu0 0.0
        %1030 = vmatprep.subr.mxu0 0.0
        %1031 = vmatpush2.msra.mxu0 0.0
        %1032 = vmatprep.subr.mxu0 0.0
        %1033 = vmatpush2.msra.mxu0 0.0
        %1034 = vmatprep.subr.mxu0 0.0
        %1035 = vmatpush2.msra.mxu0 0.0
        %1036 = vmatprep.subr.mxu0 0.0
        %1037 = vmatpush2.msra.mxu0 0.0
        %1038 = vmatprep.subr.mxu0 0.0
        %1039 = vmatpush2.msra.mxu0 0.0
        %1040 = vmatprep.subr.mxu0 0.0
        %1041 = vmatpush2.msra.mxu0 0.0
        %1042 = vmatprep.mubr.f32.mxu0 0.0
        %1043 = vmatmul.mubr.f32.gmra.mxu0 %v743
        %v1044 = vpop.f32.mrf.mxu0
        %v1045 = vadd.f32 %v667, %v1044
        %v1046 = vpop.f32.mrf.mxu0
        %v1047 = vadd.f32 %v669, %v1046
        %1048 = vdwg.mxu0
        %1049 = vmatprep.subr.mxu0 0.0
        %1050 = vmatpush1.msra.mxu0 0.0
        %1051 = vmatprep.subr.mxu0 0.0
        %1052 = vmatpush1.msra.mxu0 0.0
        %1053 = vmatprep.subr.mxu0 0.0
        %1054 = vmatpush1.msra.mxu0 0.0
        %1055 = vmatprep.subr.mxu0 0.0
        %1056 = vmatpush1.msra.mxu0 0.0
        %1057 = vmatprep.subr.mxu0 0.0
        %1058 = vmatpush1.msra.mxu0 0.0
        %1059 = vmatprep.subr.mxu0 0.0
        %1060 = vmatpush1.msra.mxu0 0.0
        %1061 = vmatprep.subr.mxu0 0.0
        %1062 = vmatpush1.msra.mxu0 0.0
        %1063 = vmatprep.subr.mxu0 0.0
        %1064 = vmatpush1.msra.mxu0 0.0
        %1065 = vmatprep.subr.mxu0 0.0
        %1066 = vmatpush1.msra.mxu0 0.0
        %1067 = vmatprep.subr.mxu0 0.0
        %1068 = vmatpush1.msra.mxu0 0.0
        %1069 = vmatprep.subr.mxu0 0.0
        %1070 = vmatpush1.msra.mxu0 0.0
        %1071 = vmatprep.subr.mxu0 0.0
        %1072 = vmatpush1.msra.mxu0 0.0
        %1073 = vmatprep.subr.mxu0 0.0
        %1074 = vmatpush1.msra.mxu0 0.0
        %1075 = vmatprep.subr.mxu0 0.0
        %1076 = vmatpush1.msra.mxu0 0.0
        %1077 = vmatprep.subr.mxu0 %v763
        %1078 = vmatpush1.msra.mxu0 %v761
        %1079 = vmatprep.subr.mxu0 %v259
        %1080 = vmatpush1.msra.mxu0 %v258
        %1081 = vmatprep.subr.mxu0 0.0
        %1082 = vmatpush2.msra.mxu0 0.0
        %1083 = vmatprep.subr.mxu0 0.0
        %1084 = vmatpush2.msra.mxu0 0.0
        %1085 = vmatprep.subr.mxu0 0.0
        %1086 = vmatpush2.msra.mxu0 0.0
        %1087 = vmatprep.subr.mxu0 0.0
        %1088 = vmatpush2.msra.mxu0 0.0
        %1089 = vmatprep.subr.mxu0 0.0
        %1090 = vmatpush2.msra.mxu0 0.0
        %1091 = vmatprep.subr.mxu0 0.0
        %1092 = vmatpush2.msra.mxu0 0.0
        %1093 = vmatprep.subr.mxu0 0.0
        %1094 = vmatpush2.msra.mxu0 0.0
        %1095 = vmatprep.subr.mxu0 0.0
        %1096 = vmatpush2.msra.mxu0 0.0
        %1097 = vmatprep.subr.mxu0 0.0
        %1098 = vmatpush2.msra.mxu0 0.0
        %1099 = vmatprep.subr.mxu0 0.0
        %1100 = vmatpush2.msra.mxu0 0.0
        %1101 = vmatprep.subr.mxu0 0.0
        %1102 = vmatpush2.msra.mxu0 0.0
        %1103 = vmatprep.subr.mxu0 0.0
        %1104 = vmatpush2.msra.mxu0 0.0
        %1105 = vmatprep.subr.mxu0 0.0
        %1106 = vmatpush2.msra.mxu0 0.0
        %1107 = vmatprep.subr.mxu0 0.0
        %1108 = vmatpush2.msra.mxu0 0.0
        %1109 = vmatprep.subr.mxu0 0.0
        %1110 = vmatpush2.msra.mxu0 0.0
        %1111 = vmatprep.subr.mxu0 0.0
        %1112 = vmatpush2.msra.mxu0 0.0
        %1113 = vmatprep.mubr.f32.mxu0 0.0
        %1114 = vmatmul.mubr.f32.gmra.mxu0 %v743
        %v1115 = vpop.f32.mrf.mxu0
        %v1116 = vadd.f32 %v738, %v1115
        %v1117 = vpop.f32.mrf.mxu0
        %v1118 = vadd.f32 %v740, %v1117
        %1119 = vdwg.mxu0
        %s1120 = scalar_lea.vmem %s1, 16
        %v1121 = vld [vmem:[%s1120] sm:$0xff]
        %1122 = vrot.lane.b32.xlu0 %v250, 126
        %v1123 = vpop.permute.xlu0 %1122
        %1124 = vrot.lane.b32.xlu0 %v251, 126
        %v1125 = vpop.permute.xlu0 %1124
        %1126 = vrot.lane.b32.xlu0 %v252, 126
        %v1127 = vpop.permute.xlu0 %1126
        %1128 = vrot.lane.b32.xlu0 %v253, 126
        %v1129 = vpop.permute.xlu0 %1128
        %1130 = vrot.lane.b32.xlu0 %v254, 126
        %v1131 = vpop.permute.xlu0 %1130
        %1132 = vrot.lane.b32.xlu0 %v255, 126
        %v1133 = vpop.permute.xlu0 %1132
        %1134 = vrot.lane.b32.xlu0 %v256, 126
        %v1135 = vpop.permute.xlu0 %1134
        %1136 = vrot.lane.b32.xlu0 %v257, 126
        %v1137 = vpop.permute.xlu0 %1136
        %1138 = vrot.lane.b32.xlu0 %v258, 126
        %v1139 = vpop.permute.xlu0 %1138
        %1140 = vrot.lane.b32.xlu0 %v259, 126
        %v1141 = vpop.permute.xlu0 %1140
        %1142 = vrot.lane.b32.xlu0 %v260, 126
        %v1143 = vpop.permute.xlu0 %1142
        %1144 = vrot.lane.b32.xlu0 %v261, 126
        %v1145 = vpop.permute.xlu0 %1144
        %1146 = vrot.lane.b32.xlu0 %v262, 126
        %v1147 = vpop.permute.xlu0 %1146
        %1148 = vrot.lane.b32.xlu0 %v263, 126
        %v1149 = vpop.permute.xlu0 %1148
        %1150 = vrot.lane.b32.xlu0 %v264, 126
        %v1151 = vpop.permute.xlu0 %1150
        %1152 = vrot.lane.b32.xlu0 %v265, 126
        %v1153 = vpop.permute.xlu0 %1152
        %1154 = vrot.lane.b32.xlu0 %v266, 126
        %v1155 = vpop.permute.xlu0 %1154
        %1156 = vrot.lane.b32.xlu0 %v267, 126
        %v1157 = vpop.permute.xlu0 %1156
        %1158 = vrot.lane.b32.xlu0 %v268, 126
        %v1159 = vpop.permute.xlu0 %1158
        %1160 = vrot.lane.b32.xlu0 %v269, 126
        %v1161 = vpop.permute.xlu0 %1160
        %vm1162 = vcmask 1031168
        %v1163 = vsel %vm1162, %v1123, %v1125
        %v1164 = vsel %vm1162, %v1125, %v1127
        %v1165 = vsel %vm1162, %v1127, %v1129
        %v1166 = vsel %vm1162, %v1129, %v1131
        %v1167 = vsel %vm1162, %v1131, %v1133
        %v1168 = vsel %vm1162, %v1133, %v1135
        %v1169 = vsel %vm1162, %v1135, %v1137
        %v1170 = vsel %vm1162, %v1137, %v1139
        %v1171 = vsel %vm1162, %v1139, %v1141
        %v1172 = vsel %vm1162, %v1143, %v1145
        %v1173 = vsel %vm1162, %v1145, %v1147
        %v1174 = vsel %vm1162, %v1147, %v1149
        %v1175 = vsel %vm1162, %v1149, %v1151
        %v1176 = vsel %vm1162, %v1151, %v1153
        %v1177 = vsel %vm1162, %v1153, %v1155
        %v1178 = vsel %vm1162, %v1155, %v1157
        %v1179 = vsel %vm1162, %v1157, %v1159
        %v1180 = vsel %vm1162, %v1159, %v1161
        %v1192 = vsel %vm362, %v1121, 0
        %v1194 = vsel %vm366, %v1172, 0
        %v1196 = vsel %vm366, %v1173, 0
        %v1198 = vsel %vm366, %v1174, 0
        %v1200 = vsel %vm366, %v1175, 0
        %v1202 = vsel %vm366, %v1176, 0
        %v1204 = vsel %vm366, %v1177, 0
        %v1206 = vsel %vm366, %v1178, 0
        %v1208 = vsel %vm366, %v1179, 0
        %v1210 = vsel %vm366, %v1180, 0
        %v1212 = vsel %vm366, %v1161, 0
        %1214 = vmatprep.subr.mxu0 0.0
        %1215 = vmatpush1.msra.mxu0 0.0
        %1216 = vmatprep.subr.mxu0 0.0
        %1217 = vmatpush1.msra.mxu0 0.0
        %1218 = vmatprep.subr.mxu0 0.0
        %1219 = vmatpush1.msra.mxu0 0.0
        %1220 = vmatprep.subr.mxu0 0.0
        %1221 = vmatpush1.msra.mxu0 0.0
        %1222 = vmatprep.subr.mxu0 0.0
        %1223 = vmatpush1.msra.mxu0 0.0
        %1224 = vmatprep.subr.mxu0 0.0
        %1225 = vmatpush1.msra.mxu0 0.0
        %1226 = vmatprep.subr.mxu0 0.0
        %1227 = vmatpush1.msra.mxu0 0.0
        %1228 = vmatprep.subr.mxu0 0.0
        %1229 = vmatpush1.msra.mxu0 0.0
        %1230 = vmatprep.subr.mxu0 0.0
        %1231 = vmatpush1.msra.mxu0 0.0
        %1232 = vmatprep.subr.mxu0 0.0
        %1233 = vmatpush1.msra.mxu0 0.0
        %1234 = vmatprep.subr.mxu0 0.0
        %1235 = vmatpush1.msra.mxu0 0.0
        %1236 = vmatprep.subr.mxu0 0.0
        %1237 = vmatpush1.msra.mxu0 0.0
        %1238 = vmatprep.subr.mxu0 0.0
        %1239 = vmatpush1.msra.mxu0 0.0
        %1240 = vmatprep.subr.mxu0 0.0
        %1241 = vmatpush1.msra.mxu0 0.0
        %1242 = vmatprep.subr.mxu0 %v1196
        %1243 = vmatpush1.msra.mxu0 %v1194
        %1244 = vmatprep.subr.mxu0 %v1164
        %1245 = vmatpush1.msra.mxu0 %v1163
        %1246 = vmatprep.subr.mxu0 0.0
        %1247 = vmatpush2.msra.mxu0 0.0
        %1248 = vmatprep.subr.mxu0 0.0
        %1249 = vmatpush2.msra.mxu0 0.0
        %1250 = vmatprep.subr.mxu0 0.0
        %1251 = vmatpush2.msra.mxu0 0.0
        %1252 = vmatprep.subr.mxu0 0.0
        %1253 = vmatpush2.msra.mxu0 0.0
        %1254 = vmatprep.subr.mxu0 0.0
        %1255 = vmatpush2.msra.mxu0 0.0
        %1256 = vmatprep.subr.mxu0 0.0
        %1257 = vmatpush2.msra.mxu0 0.0
        %1258 = vmatprep.subr.mxu0 0.0
        %1259 = vmatpush2.msra.mxu0 0.0
        %1260 = vmatprep.subr.mxu0 0.0
        %1261 = vmatpush2.msra.mxu0 0.0
        %1262 = vmatprep.subr.mxu0 0.0
        %1263 = vmatpush2.msra.mxu0 0.0
        %1264 = vmatprep.subr.mxu0 0.0
        %1265 = vmatpush2.msra.mxu0 0.0
        %1266 = vmatprep.subr.mxu0 0.0
        %1267 = vmatpush2.msra.mxu0 0.0
        %1268 = vmatprep.subr.mxu0 0.0
        %1269 = vmatpush2.msra.mxu0 0.0
        %1270 = vmatprep.subr.mxu0 0.0
        %1271 = vmatpush2.msra.mxu0 0.0
        %1272 = vmatprep.subr.mxu0 0.0
        %1273 = vmatpush2.msra.mxu0 0.0
        %1274 = vmatprep.subr.mxu0 0.0
        %1275 = vmatpush2.msra.mxu0 0.0
        %1276 = vmatprep.subr.mxu0 0.0
        %1277 = vmatpush2.msra.mxu0 0.0
        %1278 = vmatprep.mubr.f32.mxu0 0.0
        %1279 = vmatmul.mubr.f32.gmra.mxu0 %v1192
        %v1280 = vpop.f32.mrf.mxu0
        %v1281 = vadd.f32 0.0, %v1280
        %v1282 = vpop.f32.mrf.mxu0
        %v1283 = vadd.f32 0.0, %v1282
        %1284 = vdwg.mxu0
        %1285 = vmatprep.subr.mxu0 0.0
        %1286 = vmatpush1.msra.mxu0 0.0
        %1287 = vmatprep.subr.mxu0 0.0
        %1288 = vmatpush1.msra.mxu0 0.0
        %1289 = vmatprep.subr.mxu0 0.0
        %1290 = vmatpush1.msra.mxu0 0.0
        %1291 = vmatprep.subr.mxu0 0.0
        %1292 = vmatpush1.msra.mxu0 0.0
        %1293 = vmatprep.subr.mxu0 0.0
        %1294 = vmatpush1.msra.mxu0 0.0
        %1295 = vmatprep.subr.mxu0 0.0
        %1296 = vmatpush1.msra.mxu0 0.0
        %1297 = vmatprep.subr.mxu0 0.0
        %1298 = vmatpush1.msra.mxu0 0.0
        %1299 = vmatprep.subr.mxu0 0.0
        %1300 = vmatpush1.msra.mxu0 0.0
        %1301 = vmatprep.subr.mxu0 0.0
        %1302 = vmatpush1.msra.mxu0 0.0
        %1303 = vmatprep.subr.mxu0 0.0
        %1304 = vmatpush1.msra.mxu0 0.0
        %1305 = vmatprep.subr.mxu0 0.0
        %1306 = vmatpush1.msra.mxu0 0.0
        %1307 = vmatprep.subr.mxu0 0.0
        %1308 = vmatpush1.msra.mxu0 0.0
        %1309 = vmatprep.subr.mxu0 0.0
        %1310 = vmatpush1.msra.mxu0 0.0
        %1311 = vmatprep.subr.mxu0 0.0
        %1312 = vmatpush1.msra.mxu0 0.0
        %1313 = vmatprep.subr.mxu0 %v1200
        %1314 = vmatpush1.msra.mxu0 %v1198
        %1315 = vmatprep.subr.mxu0 %v1166
        %1316 = vmatpush1.msra.mxu0 %v1165
        %1317 = vmatprep.subr.mxu0 0.0
        %1318 = vmatpush2.msra.mxu0 0.0
        %1319 = vmatprep.subr.mxu0 0.0
        %1320 = vmatpush2.msra.mxu0 0.0
        %1321 = vmatprep.subr.mxu0 0.0
        %1322 = vmatpush2.msra.mxu0 0.0
        %1323 = vmatprep.subr.mxu0 0.0
        %1324 = vmatpush2.msra.mxu0 0.0
        %1325 = vmatprep.subr.mxu0 0.0
        %1326 = vmatpush2.msra.mxu0 0.0
        %1327 = vmatprep.subr.mxu0 0.0
        %1328 = vmatpush2.msra.mxu0 0.0
        %1329 = vmatprep.subr.mxu0 0.0
        %1330 = vmatpush2.msra.mxu0 0.0
        %1331 = vmatprep.subr.mxu0 0.0
        %1332 = vmatpush2.msra.mxu0 0.0
        %1333 = vmatprep.subr.mxu0 0.0
        %1334 = vmatpush2.msra.mxu0 0.0
        %1335 = vmatprep.subr.mxu0 0.0
        %1336 = vmatpush2.msra.mxu0 0.0
        %1337 = vmatprep.subr.mxu0 0.0
        %1338 = vmatpush2.msra.mxu0 0.0
        %1339 = vmatprep.subr.mxu0 0.0
        %1340 = vmatpush2.msra.mxu0 0.0
        %1341 = vmatprep.subr.mxu0 0.0
        %1342 = vmatpush2.msra.mxu0 0.0
        %1343 = vmatprep.subr.mxu0 0.0
        %1344 = vmatpush2.msra.mxu0 0.0
        %1345 = vmatprep.subr.mxu0 0.0
        %1346 = vmatpush2.msra.mxu0 0.0
        %1347 = vmatprep.subr.mxu0 0.0
        %1348 = vmatpush2.msra.mxu0 0.0
        %1349 = vmatprep.mubr.f32.mxu0 0.0
        %1350 = vmatmul.mubr.f32.gmra.mxu0 %v1192
        %v1351 = vpop.f32.mrf.mxu0
        %v1352 = vadd.f32 0.0, %v1351
        %v1353 = vpop.f32.mrf.mxu0
        %v1354 = vadd.f32 0.0, %v1353
        %1355 = vdwg.mxu0
        %1356 = vmatprep.subr.mxu0 0.0
        %1357 = vmatpush1.msra.mxu0 0.0
        %1358 = vmatprep.subr.mxu0 0.0
        %1359 = vmatpush1.msra.mxu0 0.0
        %1360 = vmatprep.subr.mxu0 0.0
        %1361 = vmatpush1.msra.mxu0 0.0
        %1362 = vmatprep.subr.mxu0 0.0
        %1363 = vmatpush1.msra.mxu0 0.0
        %1364 = vmatprep.subr.mxu0 0.0
        %1365 = vmatpush1.msra.mxu0 0.0
        %1366 = vmatprep.subr.mxu0 0.0
        %1367 = vmatpush1.msra.mxu0 0.0
        %1368 = vmatprep.subr.mxu0 0.0
        %1369 = vmatpush1.msra.mxu0 0.0
        %1370 = vmatprep.subr.mxu0 0.0
        %1371 = vmatpush1.msra.mxu0 0.0
        %1372 = vmatprep.subr.mxu0 0.0
        %1373 = vmatpush1.msra.mxu0 0.0
        %1374 = vmatprep.subr.mxu0 0.0
        %1375 = vmatpush1.msra.mxu0 0.0
        %1376 = vmatprep.subr.mxu0 0.0
        %1377 = vmatpush1.msra.mxu0 0.0
        %1378 = vmatprep.subr.mxu0 0.0
        %1379 = vmatpush1.msra.mxu0 0.0
        %1380 = vmatprep.subr.mxu0 0.0
        %1381 = vmatpush1.msra.mxu0 0.0
        %1382 = vmatprep.subr.mxu0 0.0
        %1383 = vmatpush1.msra.mxu0 0.0
        %1384 = vmatprep.subr.mxu0 %v1204
        %1385 = vmatpush1.msra.mxu0 %v1202
        %1386 = vmatprep.subr.mxu0 %v1168
        %1387 = vmatpush1.msra.mxu0 %v1167
        %1388 = vmatprep.subr.mxu0 0.0
        %1389 = vmatpush2.msra.mxu0 0.0
        %1390 = vmatprep.subr.mxu0 0.0
        %1391 = vmatpush2.msra.mxu0 0.0
        %1392 = vmatprep.subr.mxu0 0.0
        %1393 = vmatpush2.msra.mxu0 0.0
        %1394 = vmatprep.subr.mxu0 0.0
        %1395 = vmatpush2.msra.mxu0 0.0
        %1396 = vmatprep.subr.mxu0 0.0
        %1397 = vmatpush2.msra.mxu0 0.0
        %1398 = vmatprep.subr.mxu0 0.0
        %1399 = vmatpush2.msra.mxu0 0.0
        %1400 = vmatprep.subr.mxu0 0.0
        %1401 = vmatpush2.msra.mxu0 0.0
        %1402 = vmatprep.subr.mxu0 0.0
        %1403 = vmatpush2.msra.mxu0 0.0
        %1404 = vmatprep.subr.mxu0 0.0
        %1405 = vmatpush2.msra.mxu0 0.0
        %1406 = vmatprep.subr.mxu0 0.0
        %1407 = vmatpush2.msra.mxu0 0.0
        %1408 = vmatprep.subr.mxu0 0.0
        %1409 = vmatpush2.msra.mxu0 0.0
        %1410 = vmatprep.subr.mxu0 0.0
        %1411 = vmatpush2.msra.mxu0 0.0
        %1412 = vmatprep.subr.mxu0 0.0
        %1413 = vmatpush2.msra.mxu0 0.0
        %1414 = vmatprep.subr.mxu0 0.0
        %1415 = vmatpush2.msra.mxu0 0.0
        %1416 = vmatprep.subr.mxu0 0.0
        %1417 = vmatpush2.msra.mxu0 0.0
        %1418 = vmatprep.subr.mxu0 0.0
        %1419 = vmatpush2.msra.mxu0 0.0
        %1420 = vmatprep.mubr.f32.mxu0 0.0
        %1421 = vmatmul.mubr.f32.gmra.mxu0 %v1192
        %v1422 = vpop.f32.mrf.mxu0
        %v1423 = vadd.f32 0.0, %v1422
        %v1424 = vpop.f32.mrf.mxu0
        %v1425 = vadd.f32 0.0, %v1424
        %1426 = vdwg.mxu0
        %1427 = vmatprep.subr.mxu0 0.0
        %1428 = vmatpush1.msra.mxu0 0.0
        %1429 = vmatprep.subr.mxu0 0.0
        %1430 = vmatpush1.msra.mxu0 0.0
        %1431 = vmatprep.subr.mxu0 0.0
        %1432 = vmatpush1.msra.mxu0 0.0
        %1433 = vmatprep.subr.mxu0 0.0
        %1434 = vmatpush1.msra.mxu0 0.0
        %1435 = vmatprep.subr.mxu0 0.0
        %1436 = vmatpush1.msra.mxu0 0.0
        %1437 = vmatprep.subr.mxu0 0.0
        %1438 = vmatpush1.msra.mxu0 0.0
        %1439 = vmatprep.subr.mxu0 0.0
        %1440 = vmatpush1.msra.mxu0 0.0
        %1441 = vmatprep.subr.mxu0 0.0
        %1442 = vmatpush1.msra.mxu0 0.0
        %1443 = vmatprep.subr.mxu0 0.0
        %1444 = vmatpush1.msra.mxu0 0.0
        %1445 = vmatprep.subr.mxu0 0.0
        %1446 = vmatpush1.msra.mxu0 0.0
        %1447 = vmatprep.subr.mxu0 0.0
        %1448 = vmatpush1.msra.mxu0 0.0
        %1449 = vmatprep.subr.mxu0 0.0
        %1450 = vmatpush1.msra.mxu0 0.0
        %1451 = vmatprep.subr.mxu0 0.0
        %1452 = vmatpush1.msra.mxu0 0.0
        %1453 = vmatprep.subr.mxu0 0.0
        %1454 = vmatpush1.msra.mxu0 0.0
        %1455 = vmatprep.subr.mxu0 %v1208
        %1456 = vmatpush1.msra.mxu0 %v1206
        %1457 = vmatprep.subr.mxu0 %v1170
        %1458 = vmatpush1.msra.mxu0 %v1169
        %1459 = vmatprep.subr.mxu0 0.0
        %1460 = vmatpush2.msra.mxu0 0.0
        %1461 = vmatprep.subr.mxu0 0.0
        %1462 = vmatpush2.msra.mxu0 0.0
        %1463 = vmatprep.subr.mxu0 0.0
        %1464 = vmatpush2.msra.mxu0 0.0
        %1465 = vmatprep.subr.mxu0 0.0
        %1466 = vmatpush2.msra.mxu0 0.0
        %1467 = vmatprep.subr.mxu0 0.0
        %1468 = vmatpush2.msra.mxu0 0.0
        %1469 = vmatprep.subr.mxu0 0.0
        %1470 = vmatpush2.msra.mxu0 0.0
        %1471 = vmatprep.subr.mxu0 0.0
        %1472 = vmatpush2.msra.mxu0 0.0
        %1473 = vmatprep.subr.mxu0 0.0
        %1474 = vmatpush2.msra.mxu0 0.0
        %1475 = vmatprep.subr.mxu0 0.0
        %1476 = vmatpush2.msra.mxu0 0.0
        %1477 = vmatprep.subr.mxu0 0.0
        %1478 = vmatpush2.msra.mxu0 0.0
        %1479 = vmatprep.subr.mxu0 0.0
        %1480 = vmatpush2.msra.mxu0 0.0
        %1481 = vmatprep.subr.mxu0 0.0
        %1482 = vmatpush2.msra.mxu0 0.0
        %1483 = vmatprep.subr.mxu0 0.0
        %1484 = vmatpush2.msra.mxu0 0.0
        %1485 = vmatprep.subr.mxu0 0.0
        %1486 = vmatpush2.msra.mxu0 0.0
        %1487 = vmatprep.subr.mxu0 0.0
        %1488 = vmatpush2.msra.mxu0 0.0
        %1489 = vmatprep.subr.mxu0 0.0
        %1490 = vmatpush2.msra.mxu0 0.0
        %1491 = vmatprep.mubr.f32.mxu0 0.0
        %1492 = vmatmul.mubr.f32.gmra.mxu0 %v1192
        %v1493 = vpop.f32.mrf.mxu0
        %v1494 = vadd.f32 0.0, %v1493
        %v1495 = vpop.f32.mrf.mxu0
        %v1496 = vadd.f32 0.0, %v1495
        %1497 = vdwg.mxu0
        %1498 = vmatprep.subr.mxu0 0.0
        %1499 = vmatpush1.msra.mxu0 0.0
        %1500 = vmatprep.subr.mxu0 0.0
        %1501 = vmatpush1.msra.mxu0 0.0
        %1502 = vmatprep.subr.mxu0 0.0
        %1503 = vmatpush1.msra.mxu0 0.0
        %1504 = vmatprep.subr.mxu0 0.0
        %1505 = vmatpush1.msra.mxu0 0.0
        %1506 = vmatprep.subr.mxu0 0.0
        %1507 = vmatpush1.msra.mxu0 0.0
        %1508 = vmatprep.subr.mxu0 0.0
        %1509 = vmatpush1.msra.mxu0 0.0
        %1510 = vmatprep.subr.mxu0 0.0
        %1511 = vmatpush1.msra.mxu0 0.0
        %1512 = vmatprep.subr.mxu0 0.0
        %1513 = vmatpush1.msra.mxu0 0.0
        %1514 = vmatprep.subr.mxu0 0.0
        %1515 = vmatpush1.msra.mxu0 0.0
        %1516 = vmatprep.subr.mxu0 0.0
        %1517 = vmatpush1.msra.mxu0 0.0
        %1518 = vmatprep.subr.mxu0 0.0
        %1519 = vmatpush1.msra.mxu0 0.0
        %1520 = vmatprep.subr.mxu0 0.0
        %1521 = vmatpush1.msra.mxu0 0.0
        %1522 = vmatprep.subr.mxu0 0.0
        %1523 = vmatpush1.msra.mxu0 0.0
        %1524 = vmatprep.subr.mxu0 0.0
        %1525 = vmatpush1.msra.mxu0 0.0
        %1526 = vmatprep.subr.mxu0 %v1212
        %1527 = vmatpush1.msra.mxu0 %v1210
        %1528 = vmatprep.subr.mxu0 %v1141
        %1529 = vmatpush1.msra.mxu0 %v1171
        %1530 = vmatprep.subr.mxu0 0.0
        %1531 = vmatpush2.msra.mxu0 0.0
        %1532 = vmatprep.subr.mxu0 0.0
        %1533 = vmatpush2.msra.mxu0 0.0
        %1534 = vmatprep.subr.mxu0 0.0
        %1535 = vmatpush2.msra.mxu0 0.0
        %1536 = vmatprep.subr.mxu0 0.0
        %1537 = vmatpush2.msra.mxu0 0.0
        %1538 = vmatprep.subr.mxu0 0.0
        %1539 = vmatpush2.msra.mxu0 0.0
        %1540 = vmatprep.subr.mxu0 0.0
        %1541 = vmatpush2.msra.mxu0 0.0
        %1542 = vmatprep.subr.mxu0 0.0
        %1543 = vmatpush2.msra.mxu0 0.0
        %1544 = vmatprep.subr.mxu0 0.0
        %1545 = vmatpush2.msra.mxu0 0.0
        %1546 = vmatprep.subr.mxu0 0.0
        %1547 = vmatpush2.msra.mxu0 0.0
        %1548 = vmatprep.subr.mxu0 0.0
        %1549 = vmatpush2.msra.mxu0 0.0
        %1550 = vmatprep.subr.mxu0 0.0
        %1551 = vmatpush2.msra.mxu0 0.0
        %1552 = vmatprep.subr.mxu0 0.0
        %1553 = vmatpush2.msra.mxu0 0.0
        %1554 = vmatprep.subr.mxu0 0.0
        %1555 = vmatpush2.msra.mxu0 0.0
        %1556 = vmatprep.subr.mxu0 0.0
        %1557 = vmatpush2.msra.mxu0 0.0
        %1558 = vmatprep.subr.mxu0 0.0
        %1559 = vmatpush2.msra.mxu0 0.0
        %1560 = vmatprep.subr.mxu0 0.0
        %1561 = vmatpush2.msra.mxu0 0.0
        %1562 = vmatprep.mubr.f32.mxu0 0.0
        %1563 = vmatmul.mubr.f32.gmra.mxu0 %v1192
        %v1564 = vpop.f32.mrf.mxu0
        %v1565 = vadd.f32 0.0, %v1564
        %v1566 = vpop.f32.mrf.mxu0
        %v1567 = vadd.f32 0.0, %v1566
        %1568 = vdwg.mxu0
        %v1569 = vadd.f32 %v832, %v1281
        %v1570 = vadd.f32 %v834, %v1283
        %v1571 = vadd.f32 %v903, %v1352
        %v1572 = vadd.f32 %v905, %v1354
        %v1573 = vadd.f32 %v974, %v1423
        %v1574 = vadd.f32 %v976, %v1425
        %v1575 = vadd.f32 %v1045, %v1494
        %v1576 = vadd.f32 %v1047, %v1496
        %v1577 = vadd.f32 %v1116, %v1565
        %v1578 = vadd.f32 %v1118, %v1567
        %s1579 = scalar_lea.vmem %s1, 24
        %v1580 = vld [vmem:[%s1579] sm:$0xff]
        %1581 = vrot.lane.b32.xlu0 %v250, 94
        %v1582 = vpop.permute.xlu0 %1581
        %1583 = vrot.lane.b32.xlu0 %v251, 94
        %v1584 = vpop.permute.xlu0 %1583
        %1585 = vrot.lane.b32.xlu0 %v252, 94
        %v1586 = vpop.permute.xlu0 %1585
        %1587 = vrot.lane.b32.xlu0 %v253, 94
        %v1588 = vpop.permute.xlu0 %1587
        %1589 = vrot.lane.b32.xlu0 %v254, 94
        %v1590 = vpop.permute.xlu0 %1589
        %1591 = vrot.lane.b32.xlu0 %v255, 94
        %v1592 = vpop.permute.xlu0 %1591
        %1593 = vrot.lane.b32.xlu0 %v256, 94
        %v1594 = vpop.permute.xlu0 %1593
        %1595 = vrot.lane.b32.xlu0 %v257, 94
        %v1596 = vpop.permute.xlu0 %1595
        %1597 = vrot.lane.b32.xlu0 %v258, 94
        %v1598 = vpop.permute.xlu0 %1597
        %1599 = vrot.lane.b32.xlu0 %v259, 94
        %v1600 = vpop.permute.xlu0 %1599
        %1601 = vrot.lane.b32.xlu0 %v260, 94
        %v1602 = vpop.permute.xlu0 %1601
        %1603 = vrot.lane.b32.xlu0 %v261, 94
        %v1604 = vpop.permute.xlu0 %1603
        %1605 = vrot.lane.b32.xlu0 %v262, 94
        %v1606 = vpop.permute.xlu0 %1605
        %1607 = vrot.lane.b32.xlu0 %v263, 94
        %v1608 = vpop.permute.xlu0 %1607
        %1609 = vrot.lane.b32.xlu0 %v264, 94
        %v1610 = vpop.permute.xlu0 %1609
        %1611 = vrot.lane.b32.xlu0 %v265, 94
        %v1612 = vpop.permute.xlu0 %1611
        %1613 = vrot.lane.b32.xlu0 %v266, 94
        %v1614 = vpop.permute.xlu0 %1613
        %1615 = vrot.lane.b32.xlu0 %v267, 94
        %v1616 = vpop.permute.xlu0 %1615
        %1617 = vrot.lane.b32.xlu0 %v268, 94
        %v1618 = vpop.permute.xlu0 %1617
        %1619 = vrot.lane.b32.xlu0 %v269, 94
        %v1620 = vpop.permute.xlu0 %1619
        %vm1621 = vcmask 769024
        %v1622 = vsel %vm1621, %v1582, %v1584
        %v1623 = vsel %vm1621, %v1584, %v1586
        %v1624 = vsel %vm1621, %v1586, %v1588
        %v1625 = vsel %vm1621, %v1588, %v1590
        %v1626 = vsel %vm1621, %v1590, %v1592
        %v1627 = vsel %vm1621, %v1592, %v1594
        %v1628 = vsel %vm1621, %v1594, %v1596
        %v1629 = vsel %vm1621, %v1596, %v1598
        %v1630 = vsel %vm1621, %v1598, %v1600
        %v1631 = vsel %vm1621, %v1602, %v1604
        %v1632 = vsel %vm1621, %v1604, %v1606
        %v1633 = vsel %vm1621, %v1606, %v1608
        %v1634 = vsel %vm1621, %v1608, %v1610
        %v1635 = vsel %vm1621, %v1610, %v1612
        %v1636 = vsel %vm1621, %v1612, %v1614
        %v1637 = vsel %vm1621, %v1614, %v1616
        %v1638 = vsel %vm1621, %v1616, %v1618
        %v1639 = vsel %vm1621, %v1618, %v1620
        %v1651 = vsel %vm362, %v1580, 0
        %v1653 = vsel %vm366, %v1631, 0
        %v1655 = vsel %vm366, %v1632, 0
        %v1657 = vsel %vm366, %v1633, 0
        %v1659 = vsel %vm366, %v1634, 0
        %v1661 = vsel %vm366, %v1635, 0
        %v1663 = vsel %vm366, %v1636, 0
        %v1665 = vsel %vm366, %v1637, 0
        %v1667 = vsel %vm366, %v1638, 0
        %v1669 = vsel %vm366, %v1639, 0
        %v1671 = vsel %vm366, %v1620, 0
        %1673 = vmatprep.subr.mxu0 0.0
        %1674 = vmatpush1.msra.mxu0 0.0
        %1675 = vmatprep.subr.mxu0 0.0
        %1676 = vmatpush1.msra.mxu0 0.0
        %1677 = vmatprep.subr.mxu0 0.0
        %1678 = vmatpush1.msra.mxu0 0.0
        %1679 = vmatprep.subr.mxu0 0.0
        %1680 = vmatpush1.msra.mxu0 0.0
        %1681 = vmatprep.subr.mxu0 0.0
        %1682 = vmatpush1.msra.mxu0 0.0
        %1683 = vmatprep.subr.mxu0 0.0
        %1684 = vmatpush1.msra.mxu0 0.0
        %1685 = vmatprep.subr.mxu0 0.0
        %1686 = vmatpush1.msra.mxu0 0.0
        %1687 = vmatprep.subr.mxu0 0.0
        %1688 = vmatpush1.msra.mxu0 0.0
        %1689 = vmatprep.subr.mxu0 0.0
        %1690 = vmatpush1.msra.mxu0 0.0
        %1691 = vmatprep.subr.mxu0 0.0
        %1692 = vmatpush1.msra.mxu0 0.0
        %1693 = vmatprep.subr.mxu0 0.0
        %1694 = vmatpush1.msra.mxu0 0.0
        %1695 = vmatprep.subr.mxu0 0.0
        %1696 = vmatpush1.msra.mxu0 0.0
        %1697 = vmatprep.subr.mxu0 0.0
        %1698 = vmatpush1.msra.mxu0 0.0
        %1699 = vmatprep.subr.mxu0 0.0
        %1700 = vmatpush1.msra.mxu0 0.0
        %1701 = vmatprep.subr.mxu0 %v1655
        %1702 = vmatpush1.msra.mxu0 %v1653
        %1703 = vmatprep.subr.mxu0 %v1623
        %1704 = vmatpush1.msra.mxu0 %v1622
        %1705 = vmatprep.subr.mxu0 0.0
        %1706 = vmatpush2.msra.mxu0 0.0
        %1707 = vmatprep.subr.mxu0 0.0
        %1708 = vmatpush2.msra.mxu0 0.0
        %1709 = vmatprep.subr.mxu0 0.0
        %1710 = vmatpush2.msra.mxu0 0.0
        %1711 = vmatprep.subr.mxu0 0.0
        %1712 = vmatpush2.msra.mxu0 0.0
        %1713 = vmatprep.subr.mxu0 0.0
        %1714 = vmatpush2.msra.mxu0 0.0
        %1715 = vmatprep.subr.mxu0 0.0
        %1716 = vmatpush2.msra.mxu0 0.0
        %1717 = vmatprep.subr.mxu0 0.0
        %1718 = vmatpush2.msra.mxu0 0.0
        %1719 = vmatprep.subr.mxu0 0.0
        %1720 = vmatpush2.msra.mxu0 0.0
        %1721 = vmatprep.subr.mxu0 0.0
        %1722 = vmatpush2.msra.mxu0 0.0
        %1723 = vmatprep.subr.mxu0 0.0
        %1724 = vmatpush2.msra.mxu0 0.0
        %1725 = vmatprep.subr.mxu0 0.0
        %1726 = vmatpush2.msra.mxu0 0.0
        %1727 = vmatprep.subr.mxu0 0.0
        %1728 = vmatpush2.msra.mxu0 0.0
        %1729 = vmatprep.subr.mxu0 0.0
        %1730 = vmatpush2.msra.mxu0 0.0
        %1731 = vmatprep.subr.mxu0 0.0
        %1732 = vmatpush2.msra.mxu0 0.0
        %1733 = vmatprep.subr.mxu0 0.0
        %1734 = vmatpush2.msra.mxu0 0.0
        %1735 = vmatprep.subr.mxu0 0.0
        %1736 = vmatpush2.msra.mxu0 0.0
        %1737 = vmatprep.mubr.f32.mxu0 0.0
        %1738 = vmatmul.mubr.f32.gmra.mxu0 %v1651
        %v1739 = vpop.f32.mrf.mxu0
        %v1740 = vadd.f32 0.0, %v1739
        %v1741 = vpop.f32.mrf.mxu0
        %v1742 = vadd.f32 0.0, %v1741
        %1743 = vdwg.mxu0
        %1744 = vmatprep.subr.mxu0 0.0
        %1745 = vmatpush1.msra.mxu0 0.0
        %1746 = vmatprep.subr.mxu0 0.0
        %1747 = vmatpush1.msra.mxu0 0.0
        %1748 = vmatprep.subr.mxu0 0.0
        %1749 = vmatpush1.msra.mxu0 0.0
        %1750 = vmatprep.subr.mxu0 0.0
        %1751 = vmatpush1.msra.mxu0 0.0
        %1752 = vmatprep.subr.mxu0 0.0
        %1753 = vmatpush1.msra.mxu0 0.0
        %1754 = vmatprep.subr.mxu0 0.0
        %1755 = vmatpush1.msra.mxu0 0.0
        %1756 = vmatprep.subr.mxu0 0.0
        %1757 = vmatpush1.msra.mxu0 0.0
        %1758 = vmatprep.subr.mxu0 0.0
        %1759 = vmatpush1.msra.mxu0 0.0
        %1760 = vmatprep.subr.mxu0 0.0
        %1761 = vmatpush1.msra.mxu0 0.0
        %1762 = vmatprep.subr.mxu0 0.0
        %1763 = vmatpush1.msra.mxu0 0.0
        %1764 = vmatprep.subr.mxu0 0.0
        %1765 = vmatpush1.msra.mxu0 0.0
        %1766 = vmatprep.subr.mxu0 0.0
        %1767 = vmatpush1.msra.mxu0 0.0
        %1768 = vmatprep.subr.mxu0 0.0
        %1769 = vmatpush1.msra.mxu0 0.0
        %1770 = vmatprep.subr.mxu0 0.0
        %1771 = vmatpush1.msra.mxu0 0.0
        %1772 = vmatprep.subr.mxu0 %v1659
        %1773 = vmatpush1.msra.mxu0 %v1657
        %1774 = vmatprep.subr.mxu0 %v1625
        %1775 = vmatpush1.msra.mxu0 %v1624
        %1776 = vmatprep.subr.mxu0 0.0
        %1777 = vmatpush2.msra.mxu0 0.0
        %1778 = vmatprep.subr.mxu0 0.0
        %1779 = vmatpush2.msra.mxu0 0.0
        %1780 = vmatprep.subr.mxu0 0.0
        %1781 = vmatpush2.msra.mxu0 0.0
        %1782 = vmatprep.subr.mxu0 0.0
        %1783 = vmatpush2.msra.mxu0 0.0
        %1784 = vmatprep.subr.mxu0 0.0
        %1785 = vmatpush2.msra.mxu0 0.0
        %1786 = vmatprep.subr.mxu0 0.0
        %1787 = vmatpush2.msra.mxu0 0.0
        %1788 = vmatprep.subr.mxu0 0.0
        %1789 = vmatpush2.msra.mxu0 0.0
        %1790 = vmatprep.subr.mxu0 0.0
        %1791 = vmatpush2.msra.mxu0 0.0
        %1792 = vmatprep.subr.mxu0 0.0
        %1793 = vmatpush2.msra.mxu0 0.0
        %1794 = vmatprep.subr.mxu0 0.0
        %1795 = vmatpush2.msra.mxu0 0.0
        %1796 = vmatprep.subr.mxu0 0.0
        %1797 = vmatpush2.msra.mxu0 0.0
        %1798 = vmatprep.subr.mxu0 0.0
        %1799 = vmatpush2.msra.mxu0 0.0
        %1800 = vmatprep.subr.mxu0 0.0
        %1801 = vmatpush2.msra.mxu0 0.0
        %1802 = vmatprep.subr.mxu0 0.0
        %1803 = vmatpush2.msra.mxu0 0.0
        %1804 = vmatprep.subr.mxu0 0.0
        %1805 = vmatpush2.msra.mxu0 0.0
        %1806 = vmatprep.subr.mxu0 0.0
        %1807 = vmatpush2.msra.mxu0 0.0
        %1808 = vmatprep.mubr.f32.mxu0 0.0
        %1809 = vmatmul.mubr.f32.gmra.mxu0 %v1651
        %v1810 = vpop.f32.mrf.mxu0
        %v1811 = vadd.f32 0.0, %v1810
        %v1812 = vpop.f32.mrf.mxu0
        %v1813 = vadd.f32 0.0, %v1812
        %1814 = vdwg.mxu0
        %1815 = vmatprep.subr.mxu0 0.0
        %1816 = vmatpush1.msra.mxu0 0.0
        %1817 = vmatprep.subr.mxu0 0.0
        %1818 = vmatpush1.msra.mxu0 0.0
        %1819 = vmatprep.subr.mxu0 0.0
        %1820 = vmatpush1.msra.mxu0 0.0
        %1821 = vmatprep.subr.mxu0 0.0
        %1822 = vmatpush1.msra.mxu0 0.0
        %1823 = vmatprep.subr.mxu0 0.0
        %1824 = vmatpush1.msra.mxu0 0.0
        %1825 = vmatprep.subr.mxu0 0.0
        %1826 = vmatpush1.msra.mxu0 0.0
        %1827 = vmatprep.subr.mxu0 0.0
        %1828 = vmatpush1.msra.mxu0 0.0
        %1829 = vmatprep.subr.mxu0 0.0
        %1830 = vmatpush1.msra.mxu0 0.0
        %1831 = vmatprep.subr.mxu0 0.0
        %1832 = vmatpush1.msra.mxu0 0.0
        %1833 = vmatprep.subr.mxu0 0.0
        %1834 = vmatpush1.msra.mxu0 0.0
        %1835 = vmatprep.subr.mxu0 0.0
        %1836 = vmatpush1.msra.mxu0 0.0
        %1837 = vmatprep.subr.mxu0 0.0
        %1838 = vmatpush1.msra.mxu0 0.0
        %1839 = vmatprep.subr.mxu0 0.0
        %1840 = vmatpush1.msra.mxu0 0.0
        %1841 = vmatprep.subr.mxu0 0.0
        %1842 = vmatpush1.msra.mxu0 0.0
        %1843 = vmatprep.subr.mxu0 %v1663
        %1844 = vmatpush1.msra.mxu0 %v1661
        %1845 = vmatprep.subr.mxu0 %v1627
        %1846 = vmatpush1.msra.mxu0 %v1626
        %1847 = vmatprep.subr.mxu0 0.0
        %1848 = vmatpush2.msra.mxu0 0.0
        %1849 = vmatprep.subr.mxu0 0.0
        %1850 = vmatpush2.msra.mxu0 0.0
        %1851 = vmatprep.subr.mxu0 0.0
        %1852 = vmatpush2.msra.mxu0 0.0
        %1853 = vmatprep.subr.mxu0 0.0
        %1854 = vmatpush2.msra.mxu0 0.0
        %1855 = vmatprep.subr.mxu0 0.0
        %1856 = vmatpush2.msra.mxu0 0.0
        %1857 = vmatprep.subr.mxu0 0.0
        %1858 = vmatpush2.msra.mxu0 0.0
        %1859 = vmatprep.subr.mxu0 0.0
        %1860 = vmatpush2.msra.mxu0 0.0
        %1861 = vmatprep.subr.mxu0 0.0
        %1862 = vmatpush2.msra.mxu0 0.0
        %1863 = vmatprep.subr.mxu0 0.0
        %1864 = vmatpush2.msra.mxu0 0.0
        %1865 = vmatprep.subr.mxu0 0.0
        %1866 = vmatpush2.msra.mxu0 0.0
        %1867 = vmatprep.subr.mxu0 0.0
        %1868 = vmatpush2.msra.mxu0 0.0
        %1869 = vmatprep.subr.mxu0 0.0
        %1870 = vmatpush2.msra.mxu0 0.0
        %1871 = vmatprep.subr.mxu0 0.0
        %1872 = vmatpush2.msra.mxu0 0.0
        %1873 = vmatprep.subr.mxu0 0.0
        %1874 = vmatpush2.msra.mxu0 0.0
        %1875 = vmatprep.subr.mxu0 0.0
        %1876 = vmatpush2.msra.mxu0 0.0
        %1877 = vmatprep.subr.mxu0 0.0
        %1878 = vmatpush2.msra.mxu0 0.0
        %1879 = vmatprep.mubr.f32.mxu0 0.0
        %1880 = vmatmul.mubr.f32.gmra.mxu0 %v1651
        %v1881 = vpop.f32.mrf.mxu0
        %v1882 = vadd.f32 0.0, %v1881
        %v1883 = vpop.f32.mrf.mxu0
        %v1884 = vadd.f32 0.0, %v1883
        %1885 = vdwg.mxu0
        %1886 = vmatprep.subr.mxu0 0.0
        %1887 = vmatpush1.msra.mxu0 0.0
        %1888 = vmatprep.subr.mxu0 0.0
        %1889 = vmatpush1.msra.mxu0 0.0
        %1890 = vmatprep.subr.mxu0 0.0
        %1891 = vmatpush1.msra.mxu0 0.0
        %1892 = vmatprep.subr.mxu0 0.0
        %1893 = vmatpush1.msra.mxu0 0.0
        %1894 = vmatprep.subr.mxu0 0.0
        %1895 = vmatpush1.msra.mxu0 0.0
        %1896 = vmatprep.subr.mxu0 0.0
        %1897 = vmatpush1.msra.mxu0 0.0
        %1898 = vmatprep.subr.mxu0 0.0
        %1899 = vmatpush1.msra.mxu0 0.0
        %1900 = vmatprep.subr.mxu0 0.0
        %1901 = vmatpush1.msra.mxu0 0.0
        %1902 = vmatprep.subr.mxu0 0.0
        %1903 = vmatpush1.msra.mxu0 0.0
        %1904 = vmatprep.subr.mxu0 0.0
        %1905 = vmatpush1.msra.mxu0 0.0
        %1906 = vmatprep.subr.mxu0 0.0
        %1907 = vmatpush1.msra.mxu0 0.0
        %1908 = vmatprep.subr.mxu0 0.0
        %1909 = vmatpush1.msra.mxu0 0.0
        %1910 = vmatprep.subr.mxu0 0.0
        %1911 = vmatpush1.msra.mxu0 0.0
        %1912 = vmatprep.subr.mxu0 0.0
        %1913 = vmatpush1.msra.mxu0 0.0
        %1914 = vmatprep.subr.mxu0 %v1667
        %1915 = vmatpush1.msra.mxu0 %v1665
        %1916 = vmatprep.subr.mxu0 %v1629
        %1917 = vmatpush1.msra.mxu0 %v1628
        %1918 = vmatprep.subr.mxu0 0.0
        %1919 = vmatpush2.msra.mxu0 0.0
        %1920 = vmatprep.subr.mxu0 0.0
        %1921 = vmatpush2.msra.mxu0 0.0
        %1922 = vmatprep.subr.mxu0 0.0
        %1923 = vmatpush2.msra.mxu0 0.0
        %1924 = vmatprep.subr.mxu0 0.0
        %1925 = vmatpush2.msra.mxu0 0.0
        %1926 = vmatprep.subr.mxu0 0.0
        %1927 = vmatpush2.msra.mxu0 0.0
        %1928 = vmatprep.subr.mxu0 0.0
        %1929 = vmatpush2.msra.mxu0 0.0
        %1930 = vmatprep.subr.mxu0 0.0
        %1931 = vmatpush2.msra.mxu0 0.0
        %1932 = vmatprep.subr.mxu0 0.0
        %1933 = vmatpush2.msra.mxu0 0.0
        %1934 = vmatprep.subr.mxu0 0.0
        %1935 = vmatpush2.msra.mxu0 0.0
        %1936 = vmatprep.subr.mxu0 0.0
        %1937 = vmatpush2.msra.mxu0 0.0
        %1938 = vmatprep.subr.mxu0 0.0
        %1939 = vmatpush2.msra.mxu0 0.0
        %1940 = vmatprep.subr.mxu0 0.0
        %1941 = vmatpush2.msra.mxu0 0.0
        %1942 = vmatprep.subr.mxu0 0.0
        %1943 = vmatpush2.msra.mxu0 0.0
        %1944 = vmatprep.subr.mxu0 0.0
        %1945 = vmatpush2.msra.mxu0 0.0
        %1946 = vmatprep.subr.mxu0 0.0
        %1947 = vmatpush2.msra.mxu0 0.0
        %1948 = vmatprep.subr.mxu0 0.0
        %1949 = vmatpush2.msra.mxu0 0.0
        %1950 = vmatprep.mubr.f32.mxu0 0.0
        %1951 = vmatmul.mubr.f32.gmra.mxu0 %v1651
        %v1952 = vpop.f32.mrf.mxu0
        %v1953 = vadd.f32 0.0, %v1952
        %v1954 = vpop.f32.mrf.mxu0
        %v1955 = vadd.f32 0.0, %v1954
        %1956 = vdwg.mxu0
        %1957 = vmatprep.subr.mxu0 0.0
        %1958 = vmatpush1.msra.mxu0 0.0
        %1959 = vmatprep.subr.mxu0 0.0
        %1960 = vmatpush1.msra.mxu0 0.0
        %1961 = vmatprep.subr.mxu0 0.0
        %1962 = vmatpush1.msra.mxu0 0.0
        %1963 = vmatprep.subr.mxu0 0.0
        %1964 = vmatpush1.msra.mxu0 0.0
        %1965 = vmatprep.subr.mxu0 0.0
        %1966 = vmatpush1.msra.mxu0 0.0
        %1967 = vmatprep.subr.mxu0 0.0
        %1968 = vmatpush1.msra.mxu0 0.0
        %1969 = vmatprep.subr.mxu0 0.0
        %1970 = vmatpush1.msra.mxu0 0.0
        %1971 = vmatprep.subr.mxu0 0.0
        %1972 = vmatpush1.msra.mxu0 0.0
        %1973 = vmatprep.subr.mxu0 0.0
        %1974 = vmatpush1.msra.mxu0 0.0
        %1975 = vmatprep.subr.mxu0 0.0
        %1976 = vmatpush1.msra.mxu0 0.0
        %1977 = vmatprep.subr.mxu0 0.0
        %1978 = vmatpush1.msra.mxu0 0.0
        %1979 = vmatprep.subr.mxu0 0.0
        %1980 = vmatpush1.msra.mxu0 0.0
        %1981 = vmatprep.subr.mxu0 0.0
        %1982 = vmatpush1.msra.mxu0 0.0
        %1983 = vmatprep.subr.mxu0 0.0
        %1984 = vmatpush1.msra.mxu0 0.0
        %1985 = vmatprep.subr.mxu0 %v1671
        %1986 = vmatpush1.msra.mxu0 %v1669
        %1987 = vmatprep.subr.mxu0 %v1600
        %1988 = vmatpush1.msra.mxu0 %v1630
        %1989 = vmatprep.subr.mxu0 0.0
        %1990 = vmatpush2.msra.mxu0 0.0
        %1991 = vmatprep.subr.mxu0 0.0
        %1992 = vmatpush2.msra.mxu0 0.0
        %1993 = vmatprep.subr.mxu0 0.0
        %1994 = vmatpush2.msra.mxu0 0.0
        %1995 = vmatprep.subr.mxu0 0.0
        %1996 = vmatpush2.msra.mxu0 0.0
        %1997 = vmatprep.subr.mxu0 0.0
        %1998 = vmatpush2.msra.mxu0 0.0
        %1999 = vmatprep.subr.mxu0 0.0
        %2000 = vmatpush2.msra.mxu0 0.0
        %2001 = vmatprep.subr.mxu0 0.0
        %2002 = vmatpush2.msra.mxu0 0.0
        %2003 = vmatprep.subr.mxu0 0.0
        %2004 = vmatpush2.msra.mxu0 0.0
        %2005 = vmatprep.subr.mxu0 0.0
        %2006 = vmatpush2.msra.mxu0 0.0
        %2007 = vmatprep.subr.mxu0 0.0
        %2008 = vmatpush2.msra.mxu0 0.0
        %2009 = vmatprep.subr.mxu0 0.0
        %2010 = vmatpush2.msra.mxu0 0.0
        %2011 = vmatprep.subr.mxu0 0.0
        %2012 = vmatpush2.msra.mxu0 0.0
        %2013 = vmatprep.subr.mxu0 0.0
        %2014 = vmatpush2.msra.mxu0 0.0
        %2015 = vmatprep.subr.mxu0 0.0
        %2016 = vmatpush2.msra.mxu0 0.0
        %2017 = vmatprep.subr.mxu0 0.0
        %2018 = vmatpush2.msra.mxu0 0.0
        %2019 = vmatprep.subr.mxu0 0.0
        %2020 = vmatpush2.msra.mxu0 0.0
        %2021 = vmatprep.mubr.f32.mxu0 0.0
        %2022 = vmatmul.mubr.f32.gmra.mxu0 %v1651
        %v2023 = vpop.f32.mrf.mxu0
        %v2024 = vadd.f32 0.0, %v2023
        %v2025 = vpop.f32.mrf.mxu0
        %v2026 = vadd.f32 0.0, %v2025
        %2027 = vdwg.mxu0
        %v2028 = vadd.f32 %v1569, %v1740
        %v2029 = vadd.f32 %v1570, %v1742
        %v2030 = vadd.f32 %v1571, %v1811
        %v2031 = vadd.f32 %v1572, %v1813
        %v2032 = vadd.f32 %v1573, %v1882
        %v2033 = vadd.f32 %v1574, %v1884
        %v2034 = vadd.f32 %v1575, %v1953
        %v2035 = vadd.f32 %v1576, %v1955
        %v2036 = vadd.f32 %v1577, %v2024
        %v2037 = vadd.f32 %v1578, %v2026
        %s2038 = scalar_lea.vmem %s1, 32
        %v2039 = vld [vmem:[%s2038] sm:$0xff]
        %2040 = vrot.lane.b32.xlu0 %v250, 93
        %v2041 = vpop.permute.xlu0 %2040
        %2042 = vrot.lane.b32.xlu0 %v251, 93
        %v2043 = vpop.permute.xlu0 %2042
        %2044 = vrot.lane.b32.xlu0 %v252, 93
        %v2045 = vpop.permute.xlu0 %2044
        %2046 = vrot.lane.b32.xlu0 %v253, 93
        %v2047 = vpop.permute.xlu0 %2046
        %2048 = vrot.lane.b32.xlu0 %v254, 93
        %v2049 = vpop.permute.xlu0 %2048
        %2050 = vrot.lane.b32.xlu0 %v255, 93
        %v2051 = vpop.permute.xlu0 %2050
        %2052 = vrot.lane.b32.xlu0 %v256, 93
        %v2053 = vpop.permute.xlu0 %2052
        %2054 = vrot.lane.b32.xlu0 %v257, 93
        %v2055 = vpop.permute.xlu0 %2054
        %2056 = vrot.lane.b32.xlu0 %v258, 93
        %v2057 = vpop.permute.xlu0 %2056
        %2058 = vrot.lane.b32.xlu0 %v259, 93
        %v2059 = vpop.permute.xlu0 %2058
        %2060 = vrot.lane.b32.xlu0 %v260, 93
        %v2061 = vpop.permute.xlu0 %2060
        %2062 = vrot.lane.b32.xlu0 %v261, 93
        %v2063 = vpop.permute.xlu0 %2062
        %2064 = vrot.lane.b32.xlu0 %v262, 93
        %v2065 = vpop.permute.xlu0 %2064
        %2066 = vrot.lane.b32.xlu0 %v263, 93
        %v2067 = vpop.permute.xlu0 %2066
        %2068 = vrot.lane.b32.xlu0 %v264, 93
        %v2069 = vpop.permute.xlu0 %2068
        %2070 = vrot.lane.b32.xlu0 %v265, 93
        %v2071 = vpop.permute.xlu0 %2070
        %2072 = vrot.lane.b32.xlu0 %v266, 93
        %v2073 = vpop.permute.xlu0 %2072
        %2074 = vrot.lane.b32.xlu0 %v267, 93
        %v2075 = vpop.permute.xlu0 %2074
        %2076 = vrot.lane.b32.xlu0 %v268, 93
        %v2077 = vpop.permute.xlu0 %2076
        %2078 = vrot.lane.b32.xlu0 %v269, 93
        %v2079 = vpop.permute.xlu0 %2078
        %vm2080 = vcmask 760832
        %v2081 = vsel %vm2080, %v2041, %v2043
        %v2082 = vsel %vm2080, %v2043, %v2045
        %v2083 = vsel %vm2080, %v2045, %v2047
        %v2084 = vsel %vm2080, %v2047, %v2049
        %v2085 = vsel %vm2080, %v2049, %v2051
        %v2086 = vsel %vm2080, %v2051, %v2053
        %v2087 = vsel %vm2080, %v2053, %v2055
        %v2088 = vsel %vm2080, %v2055, %v2057
        %v2089 = vsel %vm2080, %v2057, %v2059
        %v2090 = vsel %vm2080, %v2061, %v2063
        %v2091 = vsel %vm2080, %v2063, %v2065
        %v2092 = vsel %vm2080, %v2065, %v2067
        %v2093 = vsel %vm2080, %v2067, %v2069
        %v2094 = vsel %vm2080, %v2069, %v2071
        %v2095 = vsel %vm2080, %v2071, %v2073
        %v2096 = vsel %vm2080, %v2073, %v2075
        %v2097 = vsel %vm2080, %v2075, %v2077
        %v2098 = vsel %vm2080, %v2077, %v2079
        %v2110 = vsel %vm362, %v2039, 0
        %v2112 = vsel %vm366, %v2090, 0
        %v2114 = vsel %vm366, %v2091, 0
        %v2116 = vsel %vm366, %v2092, 0
        %v2118 = vsel %vm366, %v2093, 0
        %v2120 = vsel %vm366, %v2094, 0
        %v2122 = vsel %vm366, %v2095, 0
        %v2124 = vsel %vm366, %v2096, 0
        %v2126 = vsel %vm366, %v2097, 0
        %v2128 = vsel %vm366, %v2098, 0
        %v2130 = vsel %vm366, %v2079, 0
        %2132 = vmatprep.subr.mxu0 0.0
        %2133 = vmatpush1.msra.mxu0 0.0
        %2134 = vmatprep.subr.mxu0 0.0
        %2135 = vmatpush1.msra.mxu0 0.0
        %2136 = vmatprep.subr.mxu0 0.0
        %2137 = vmatpush1.msra.mxu0 0.0
        %2138 = vmatprep.subr.mxu0 0.0
        %2139 = vmatpush1.msra.mxu0 0.0
        %2140 = vmatprep.subr.mxu0 0.0
        %2141 = vmatpush1.msra.mxu0 0.0
        %2142 = vmatprep.subr.mxu0 0.0
        %2143 = vmatpush1.msra.mxu0 0.0
        %2144 = vmatprep.subr.mxu0 0.0
        %2145 = vmatpush1.msra.mxu0 0.0
        %2146 = vmatprep.subr.mxu0 0.0
        %2147 = vmatpush1.msra.mxu0 0.0
        %2148 = vmatprep.subr.mxu0 0.0
        %2149 = vmatpush1.msra.mxu0 0.0
        %2150 = vmatprep.subr.mxu0 0.0
        %2151 = vmatpush1.msra.mxu0 0.0
        %2152 = vmatprep.subr.mxu0 0.0
        %2153 = vmatpush1.msra.mxu0 0.0
        %2154 = vmatprep.subr.mxu0 0.0
        %2155 = vmatpush1.msra.mxu0 0.0
        %2156 = vmatprep.subr.mxu0 0.0
        %2157 = vmatpush1.msra.mxu0 0.0
        %2158 = vmatprep.subr.mxu0 0.0
        %2159 = vmatpush1.msra.mxu0 0.0
        %2160 = vmatprep.subr.mxu0 %v2114
        %2161 = vmatpush1.msra.mxu0 %v2112
        %2162 = vmatprep.subr.mxu0 %v2082
        %2163 = vmatpush1.msra.mxu0 %v2081
        %2164 = vmatprep.subr.mxu0 0.0
        %2165 = vmatpush2.msra.mxu0 0.0
        %2166 = vmatprep.subr.mxu0 0.0
        %2167 = vmatpush2.msra.mxu0 0.0
        %2168 = vmatprep.subr.mxu0 0.0
        %2169 = vmatpush2.msra.mxu0 0.0
        %2170 = vmatprep.subr.mxu0 0.0
        %2171 = vmatpush2.msra.mxu0 0.0
        %2172 = vmatprep.subr.mxu0 0.0
        %2173 = vmatpush2.msra.mxu0 0.0
        %2174 = vmatprep.subr.mxu0 0.0
        %2175 = vmatpush2.msra.mxu0 0.0
        %2176 = vmatprep.subr.mxu0 0.0
        %2177 = vmatpush2.msra.mxu0 0.0
        %2178 = vmatprep.subr.mxu0 0.0
        %2179 = vmatpush2.msra.mxu0 0.0
        %2180 = vmatprep.subr.mxu0 0.0
        %2181 = vmatpush2.msra.mxu0 0.0
        %2182 = vmatprep.subr.mxu0 0.0
        %2183 = vmatpush2.msra.mxu0 0.0
        %2184 = vmatprep.subr.mxu0 0.0
        %2185 = vmatpush2.msra.mxu0 0.0
        %2186 = vmatprep.subr.mxu0 0.0
        %2187 = vmatpush2.msra.mxu0 0.0
        %2188 = vmatprep.subr.mxu0 0.0
        %2189 = vmatpush2.msra.mxu0 0.0
        %2190 = vmatprep.subr.mxu0 0.0
        %2191 = vmatpush2.msra.mxu0 0.0
        %2192 = vmatprep.subr.mxu0 0.0
        %2193 = vmatpush2.msra.mxu0 0.0
        %2194 = vmatprep.subr.mxu0 0.0
        %2195 = vmatpush2.msra.mxu0 0.0
        %2196 = vmatprep.mubr.f32.mxu0 0.0
        %2197 = vmatmul.mubr.f32.gmra.mxu0 %v2110
        %v2198 = vpop.f32.mrf.mxu0
        %v2199 = vadd.f32 0.0, %v2198
        %v2200 = vpop.f32.mrf.mxu0
        %v2201 = vadd.f32 0.0, %v2200
        %2202 = vdwg.mxu0
        %2203 = vmatprep.subr.mxu0 0.0
        %2204 = vmatpush1.msra.mxu0 0.0
        %2205 = vmatprep.subr.mxu0 0.0
        %2206 = vmatpush1.msra.mxu0 0.0
        %2207 = vmatprep.subr.mxu0 0.0
        %2208 = vmatpush1.msra.mxu0 0.0
        %2209 = vmatprep.subr.mxu0 0.0
        %2210 = vmatpush1.msra.mxu0 0.0
        %2211 = vmatprep.subr.mxu0 0.0
        %2212 = vmatpush1.msra.mxu0 0.0
        %2213 = vmatprep.subr.mxu0 0.0
        %2214 = vmatpush1.msra.mxu0 0.0
        %2215 = vmatprep.subr.mxu0 0.0
        %2216 = vmatpush1.msra.mxu0 0.0
        %2217 = vmatprep.subr.mxu0 0.0
        %2218 = vmatpush1.msra.mxu0 0.0
        %2219 = vmatprep.subr.mxu0 0.0
        %2220 = vmatpush1.msra.mxu0 0.0
        %2221 = vmatprep.subr.mxu0 0.0
        %2222 = vmatpush1.msra.mxu0 0.0
        %2223 = vmatprep.subr.mxu0 0.0
        %2224 = vmatpush1.msra.mxu0 0.0
        %2225 = vmatprep.subr.mxu0 0.0
        %2226 = vmatpush1.msra.mxu0 0.0
        %2227 = vmatprep.subr.mxu0 0.0
        %2228 = vmatpush1.msra.mxu0 0.0
        %2229 = vmatprep.subr.mxu0 0.0
        %2230 = vmatpush1.msra.mxu0 0.0
        %2231 = vmatprep.subr.mxu0 %v2118
        %2232 = vmatpush1.msra.mxu0 %v2116
        %2233 = vmatprep.subr.mxu0 %v2084
        %2234 = vmatpush1.msra.mxu0 %v2083
        %2235 = vmatprep.subr.mxu0 0.0
        %2236 = vmatpush2.msra.mxu0 0.0
        %2237 = vmatprep.subr.mxu0 0.0
        %2238 = vmatpush2.msra.mxu0 0.0
        %2239 = vmatprep.subr.mxu0 0.0
        %2240 = vmatpush2.msra.mxu0 0.0
        %2241 = vmatprep.subr.mxu0 0.0
        %2242 = vmatpush2.msra.mxu0 0.0
        %2243 = vmatprep.subr.mxu0 0.0
        %2244 = vmatpush2.msra.mxu0 0.0
        %2245 = vmatprep.subr.mxu0 0.0
        %2246 = vmatpush2.msra.mxu0 0.0
        %2247 = vmatprep.subr.mxu0 0.0
        %2248 = vmatpush2.msra.mxu0 0.0
        %2249 = vmatprep.subr.mxu0 0.0
        %2250 = vmatpush2.msra.mxu0 0.0
        %2251 = vmatprep.subr.mxu0 0.0
        %2252 = vmatpush2.msra.mxu0 0.0
        %2253 = vmatprep.subr.mxu0 0.0
        %2254 = vmatpush2.msra.mxu0 0.0
        %2255 = vmatprep.subr.mxu0 0.0
        %2256 = vmatpush2.msra.mxu0 0.0
        %2257 = vmatprep.subr.mxu0 0.0
        %2258 = vmatpush2.msra.mxu0 0.0
        %2259 = vmatprep.subr.mxu0 0.0
        %2260 = vmatpush2.msra.mxu0 0.0
        %2261 = vmatprep.subr.mxu0 0.0
        %2262 = vmatpush2.msra.mxu0 0.0
        %2263 = vmatprep.subr.mxu0 0.0
        %2264 = vmatpush2.msra.mxu0 0.0
        %2265 = vmatprep.subr.mxu0 0.0
        %2266 = vmatpush2.msra.mxu0 0.0
        %2267 = vmatprep.mubr.f32.mxu0 0.0
        %2268 = vmatmul.mubr.f32.gmra.mxu0 %v2110
        %v2269 = vpop.f32.mrf.mxu0
        %v2270 = vadd.f32 0.0, %v2269
        %v2271 = vpop.f32.mrf.mxu0
        %v2272 = vadd.f32 0.0, %v2271
        %2273 = vdwg.mxu0
        %2274 = vmatprep.subr.mxu0 0.0
        %2275 = vmatpush1.msra.mxu0 0.0
        %2276 = vmatprep.subr.mxu0 0.0
        %2277 = vmatpush1.msra.mxu0 0.0
        %2278 = vmatprep.subr.mxu0 0.0
        %2279 = vmatpush1.msra.mxu0 0.0
        %2280 = vmatprep.subr.mxu0 0.0
        %2281 = vmatpush1.msra.mxu0 0.0
        %2282 = vmatprep.subr.mxu0 0.0
        %2283 = vmatpush1.msra.mxu0 0.0
        %2284 = vmatprep.subr.mxu0 0.0
        %2285 = vmatpush1.msra.mxu0 0.0
        %2286 = vmatprep.subr.mxu0 0.0
        %2287 = vmatpush1.msra.mxu0 0.0
        %2288 = vmatprep.subr.mxu0 0.0
        %2289 = vmatpush1.msra.mxu0 0.0
        %2290 = vmatprep.subr.mxu0 0.0
        %2291 = vmatpush1.msra.mxu0 0.0
        %2292 = vmatprep.subr.mxu0 0.0
        %2293 = vmatpush1.msra.mxu0 0.0
        %2294 = vmatprep.subr.mxu0 0.0
        %2295 = vmatpush1.msra.mxu0 0.0
        %2296 = vmatprep.subr.mxu0 0.0
        %2297 = vmatpush1.msra.mxu0 0.0
        %2298 = vmatprep.subr.mxu0 0.0
        %2299 = vmatpush1.msra.mxu0 0.0
        %2300 = vmatprep.subr.mxu0 0.0
        %2301 = vmatpush1.msra.mxu0 0.0
        %2302 = vmatprep.subr.mxu0 %v2122
        %2303 = vmatpush1.msra.mxu0 %v2120
        %2304 = vmatprep.subr.mxu0 %v2086
        %2305 = vmatpush1.msra.mxu0 %v2085
        %2306 = vmatprep.subr.mxu0 0.0
        %2307 = vmatpush2.msra.mxu0 0.0
        %2308 = vmatprep.subr.mxu0 0.0
        %2309 = vmatpush2.msra.mxu0 0.0
        %2310 = vmatprep.subr.mxu0 0.0
        %2311 = vmatpush2.msra.mxu0 0.0
        %2312 = vmatprep.subr.mxu0 0.0
        %2313 = vmatpush2.msra.mxu0 0.0
        %2314 = vmatprep.subr.mxu0 0.0
        %2315 = vmatpush2.msra.mxu0 0.0
        %2316 = vmatprep.subr.mxu0 0.0
        %2317 = vmatpush2.msra.mxu0 0.0
        %2318 = vmatprep.subr.mxu0 0.0
        %2319 = vmatpush2.msra.mxu0 0.0
        %2320 = vmatprep.subr.mxu0 0.0
        %2321 = vmatpush2.msra.mxu0 0.0
        %2322 = vmatprep.subr.mxu0 0.0
        %2323 = vmatpush2.msra.mxu0 0.0
        %2324 = vmatprep.subr.mxu0 0.0
        %2325 = vmatpush2.msra.mxu0 0.0
        %2326 = vmatprep.subr.mxu0 0.0
        %2327 = vmatpush2.msra.mxu0 0.0
        %2328 = vmatprep.subr.mxu0 0.0
        %2329 = vmatpush2.msra.mxu0 0.0
        %2330 = vmatprep.subr.mxu0 0.0
        %2331 = vmatpush2.msra.mxu0 0.0
        %2332 = vmatprep.subr.mxu0 0.0
        %2333 = vmatpush2.msra.mxu0 0.0
        %2334 = vmatprep.subr.mxu0 0.0
        %2335 = vmatpush2.msra.mxu0 0.0
        %2336 = vmatprep.subr.mxu0 0.0
        %2337 = vmatpush2.msra.mxu0 0.0
        %2338 = vmatprep.mubr.f32.mxu0 0.0
        %2339 = vmatmul.mubr.f32.gmra.mxu0 %v2110
        %v2340 = vpop.f32.mrf.mxu0
        %v2341 = vadd.f32 0.0, %v2340
        %v2342 = vpop.f32.mrf.mxu0
        %v2343 = vadd.f32 0.0, %v2342
        %2344 = vdwg.mxu0
        %2345 = vmatprep.subr.mxu0 0.0
        %2346 = vmatpush1.msra.mxu0 0.0
        %2347 = vmatprep.subr.mxu0 0.0
        %2348 = vmatpush1.msra.mxu0 0.0
        %2349 = vmatprep.subr.mxu0 0.0
        %2350 = vmatpush1.msra.mxu0 0.0
        %2351 = vmatprep.subr.mxu0 0.0
        %2352 = vmatpush1.msra.mxu0 0.0
        %2353 = vmatprep.subr.mxu0 0.0
        %2354 = vmatpush1.msra.mxu0 0.0
        %2355 = vmatprep.subr.mxu0 0.0
        %2356 = vmatpush1.msra.mxu0 0.0
        %2357 = vmatprep.subr.mxu0 0.0
        %2358 = vmatpush1.msra.mxu0 0.0
        %2359 = vmatprep.subr.mxu0 0.0
        %2360 = vmatpush1.msra.mxu0 0.0
        %2361 = vmatprep.subr.mxu0 0.0
        %2362 = vmatpush1.msra.mxu0 0.0
        %2363 = vmatprep.subr.mxu0 0.0
        %2364 = vmatpush1.msra.mxu0 0.0
        %2365 = vmatprep.subr.mxu0 0.0
        %2366 = vmatpush1.msra.mxu0 0.0
        %2367 = vmatprep.subr.mxu0 0.0
        %2368 = vmatpush1.msra.mxu0 0.0
        %2369 = vmatprep.subr.mxu0 0.0
        %2370 = vmatpush1.msra.mxu0 0.0
        %2371 = vmatprep.subr.mxu0 0.0
        %2372 = vmatpush1.msra.mxu0 0.0
        %2373 = vmatprep.subr.mxu0 %v2126
        %2374 = vmatpush1.msra.mxu0 %v2124
        %2375 = vmatprep.subr.mxu0 %v2088
        %2376 = vmatpush1.msra.mxu0 %v2087
        %2377 = vmatprep.subr.mxu0 0.0
        %2378 = vmatpush2.msra.mxu0 0.0
        %2379 = vmatprep.subr.mxu0 0.0
        %2380 = vmatpush2.msra.mxu0 0.0
        %2381 = vmatprep.subr.mxu0 0.0
        %2382 = vmatpush2.msra.mxu0 0.0
        %2383 = vmatprep.subr.mxu0 0.0
        %2384 = vmatpush2.msra.mxu0 0.0
        %2385 = vmatprep.subr.mxu0 0.0
        %2386 = vmatpush2.msra.mxu0 0.0
        %2387 = vmatprep.subr.mxu0 0.0
        %2388 = vmatpush2.msra.mxu0 0.0
        %2389 = vmatprep.subr.mxu0 0.0
        %2390 = vmatpush2.msra.mxu0 0.0
        %2391 = vmatprep.subr.mxu0 0.0
        %2392 = vmatpush2.msra.mxu0 0.0
        %2393 = vmatprep.subr.mxu0 0.0
        %2394 = vmatpush2.msra.mxu0 0.0
        %2395 = vmatprep.subr.mxu0 0.0
        %2396 = vmatpush2.msra.mxu0 0.0
        %2397 = vmatprep.subr.mxu0 0.0
        %2398 = vmatpush2.msra.mxu0 0.0
        %2399 = vmatprep.subr.mxu0 0.0
        %2400 = vmatpush2.msra.mxu0 0.0
        %2401 = vmatprep.subr.mxu0 0.0
        %2402 = vmatpush2.msra.mxu0 0.0
        %2403 = vmatprep.subr.mxu0 0.0
        %2404 = vmatpush2.msra.mxu0 0.0
        %2405 = vmatprep.subr.mxu0 0.0
        %2406 = vmatpush2.msra.mxu0 0.0
        %2407 = vmatprep.subr.mxu0 0.0
        %2408 = vmatpush2.msra.mxu0 0.0
        %2409 = vmatprep.mubr.f32.mxu0 0.0
        %2410 = vmatmul.mubr.f32.gmra.mxu0 %v2110
        %v2411 = vpop.f32.mrf.mxu0
        %v2412 = vadd.f32 0.0, %v2411
        %v2413 = vpop.f32.mrf.mxu0
        %v2414 = vadd.f32 0.0, %v2413
        %2415 = vdwg.mxu0
        %2416 = vmatprep.subr.mxu0 0.0
        %2417 = vmatpush1.msra.mxu0 0.0
        %2418 = vmatprep.subr.mxu0 0.0
        %2419 = vmatpush1.msra.mxu0 0.0
        %2420 = vmatprep.subr.mxu0 0.0
        %2421 = vmatpush1.msra.mxu0 0.0
        %2422 = vmatprep.subr.mxu0 0.0
        %2423 = vmatpush1.msra.mxu0 0.0
        %2424 = vmatprep.subr.mxu0 0.0
        %2425 = vmatpush1.msra.mxu0 0.0
        %2426 = vmatprep.subr.mxu0 0.0
        %2427 = vmatpush1.msra.mxu0 0.0
        %2428 = vmatprep.subr.mxu0 0.0
        %2429 = vmatpush1.msra.mxu0 0.0
        %2430 = vmatprep.subr.mxu0 0.0
        %2431 = vmatpush1.msra.mxu0 0.0
        %2432 = vmatprep.subr.mxu0 0.0
        %2433 = vmatpush1.msra.mxu0 0.0
        %2434 = vmatprep.subr.mxu0 0.0
        %2435 = vmatpush1.msra.mxu0 0.0
        %2436 = vmatprep.subr.mxu0 0.0
        %2437 = vmatpush1.msra.mxu0 0.0
        %2438 = vmatprep.subr.mxu0 0.0
        %2439 = vmatpush1.msra.mxu0 0.0
        %2440 = vmatprep.subr.mxu0 0.0
        %2441 = vmatpush1.msra.mxu0 0.0
        %2442 = vmatprep.subr.mxu0 0.0
        %2443 = vmatpush1.msra.mxu0 0.0
        %2444 = vmatprep.subr.mxu0 %v2130
        %2445 = vmatpush1.msra.mxu0 %v2128
        %2446 = vmatprep.subr.mxu0 %v2059
        %2447 = vmatpush1.msra.mxu0 %v2089
        %2448 = vmatprep.subr.mxu0 0.0
        %2449 = vmatpush2.msra.mxu0 0.0
        %2450 = vmatprep.subr.mxu0 0.0
        %2451 = vmatpush2.msra.mxu0 0.0
        %2452 = vmatprep.subr.mxu0 0.0
        %2453 = vmatpush2.msra.mxu0 0.0
        %2454 = vmatprep.subr.mxu0 0.0
        %2455 = vmatpush2.msra.mxu0 0.0
        %2456 = vmatprep.subr.mxu0 0.0
        %2457 = vmatpush2.msra.mxu0 0.0
        %2458 = vmatprep.subr.mxu0 0.0
        %2459 = vmatpush2.msra.mxu0 0.0
        %2460 = vmatprep.subr.mxu0 0.0
        %2461 = vmatpush2.msra.mxu0 0.0
        %2462 = vmatprep.subr.mxu0 0.0
        %2463 = vmatpush2.msra.mxu0 0.0
        %2464 = vmatprep.subr.mxu0 0.0
        %2465 = vmatpush2.msra.mxu0 0.0
        %2466 = vmatprep.subr.mxu0 0.0
        %2467 = vmatpush2.msra.mxu0 0.0
        %2468 = vmatprep.subr.mxu0 0.0
        %2469 = vmatpush2.msra.mxu0 0.0
        %2470 = vmatprep.subr.mxu0 0.0
        %2471 = vmatpush2.msra.mxu0 0.0
        %2472 = vmatprep.subr.mxu0 0.0
        %2473 = vmatpush2.msra.mxu0 0.0
        %2474 = vmatprep.subr.mxu0 0.0
        %2475 = vmatpush2.msra.mxu0 0.0
        %2476 = vmatprep.subr.mxu0 0.0
        %2477 = vmatpush2.msra.mxu0 0.0
        %2478 = vmatprep.subr.mxu0 0.0
        %2479 = vmatpush2.msra.mxu0 0.0
        %2480 = vmatprep.mubr.f32.mxu0 0.0
        %2481 = vmatmul.mubr.f32.gmra.mxu0 %v2110
        %v2482 = vpop.f32.mrf.mxu0
        %v2483 = vadd.f32 0.0, %v2482
        %v2484 = vpop.f32.mrf.mxu0
        %v2485 = vadd.f32 0.0, %v2484
        %2486 = vdwg.mxu0
        %v2487 = vadd.f32 %v2028, %v2199
        %v2488 = vadd.f32 %v2029, %v2201
        %v2489 = vadd.f32 %v2030, %v2270
        %v2490 = vadd.f32 %v2031, %v2272
        %v2491 = vadd.f32 %v2032, %v2341
        %v2492 = vadd.f32 %v2033, %v2343
        %v2493 = vadd.f32 %v2034, %v2412
        %v2494 = vadd.f32 %v2035, %v2414
        %v2495 = vadd.f32 %v2036, %v2483
        %v2496 = vadd.f32 %v2037, %v2485
        %s2497 = scalar_lea.vmem %s1, 40
        %v2498 = vld [vmem:[%s2497] sm:$0xff]
        %2499 = vrot.lane.b32.xlu0 %v250, 92
        %v2500 = vpop.permute.xlu0 %2499
        %2501 = vrot.lane.b32.xlu0 %v251, 92
        %v2502 = vpop.permute.xlu0 %2501
        %2503 = vrot.lane.b32.xlu0 %v252, 92
        %v2504 = vpop.permute.xlu0 %2503
        %2505 = vrot.lane.b32.xlu0 %v253, 92
        %v2506 = vpop.permute.xlu0 %2505
        %2507 = vrot.lane.b32.xlu0 %v254, 92
        %v2508 = vpop.permute.xlu0 %2507
        %2509 = vrot.lane.b32.xlu0 %v255, 92
        %v2510 = vpop.permute.xlu0 %2509
        %2511 = vrot.lane.b32.xlu0 %v256, 92
        %v2512 = vpop.permute.xlu0 %2511
        %2513 = vrot.lane.b32.xlu0 %v257, 92
        %v2514 = vpop.permute.xlu0 %2513
        %2515 = vrot.lane.b32.xlu0 %v258, 92
        %v2516 = vpop.permute.xlu0 %2515
        %2517 = vrot.lane.b32.xlu0 %v259, 92
        %v2518 = vpop.permute.xlu0 %2517
        %2519 = vrot.lane.b32.xlu0 %v260, 92
        %v2520 = vpop.permute.xlu0 %2519
        %2521 = vrot.lane.b32.xlu0 %v261, 92
        %v2522 = vpop.permute.xlu0 %2521
        %2523 = vrot.lane.b32.xlu0 %v262, 92
        %v2524 = vpop.permute.xlu0 %2523
        %2525 = vrot.lane.b32.xlu0 %v263, 92
        %v2526 = vpop.permute.xlu0 %2525
        %2527 = vrot.lane.b32.xlu0 %v264, 92
        %v2528 = vpop.permute.xlu0 %2527
        %2529 = vrot.lane.b32.xlu0 %v265, 92
        %v2530 = vpop.permute.xlu0 %2529
        %2531 = vrot.lane.b32.xlu0 %v266, 92
        %v2532 = vpop.permute.xlu0 %2531
        %2533 = vrot.lane.b32.xlu0 %v267, 92
        %v2534 = vpop.permute.xlu0 %2533
        %2535 = vrot.lane.b32.xlu0 %v268, 92
        %v2536 = vpop.permute.xlu0 %2535
        %2537 = vrot.lane.b32.xlu0 %v269, 92
        %v2538 = vpop.permute.xlu0 %2537
        %vm2539 = vcmask 752640
        %v2540 = vsel %vm2539, %v2500, %v2502
        %v2541 = vsel %vm2539, %v2502, %v2504
        %v2542 = vsel %vm2539, %v2504, %v2506
        %v2543 = vsel %vm2539, %v2506, %v2508
        %v2544 = vsel %vm2539, %v2508, %v2510
        %v2545 = vsel %vm2539, %v2510, %v2512
        %v2546 = vsel %vm2539, %v2512, %v2514
        %v2547 = vsel %vm2539, %v2514, %v2516
        %v2548 = vsel %vm2539, %v2516, %v2518
        %v2549 = vsel %vm2539, %v2520, %v2522
        %v2550 = vsel %vm2539, %v2522, %v2524
        %v2551 = vsel %vm2539, %v2524, %v2526
        %v2552 = vsel %vm2539, %v2526, %v2528
        %v2553 = vsel %vm2539, %v2528, %v2530
        %v2554 = vsel %vm2539, %v2530, %v2532
        %v2555 = vsel %vm2539, %v2532, %v2534
        %v2556 = vsel %vm2539, %v2534, %v2536
        %v2557 = vsel %vm2539, %v2536, %v2538
        %v2569 = vsel %vm362, %v2498, 0
        %v2571 = vsel %vm366, %v2549, 0
        %v2573 = vsel %vm366, %v2550, 0
        %v2575 = vsel %vm366, %v2551, 0
        %v2577 = vsel %vm366, %v2552, 0
        %v2579 = vsel %vm366, %v2553, 0
        %v2581 = vsel %vm366, %v2554, 0
        %v2583 = vsel %vm366, %v2555, 0
        %v2585 = vsel %vm366, %v2556, 0
        %v2587 = vsel %vm366, %v2557, 0
        %v2589 = vsel %vm366, %v2538, 0
        %2591 = vmatprep.subr.mxu0 0.0
        %2592 = vmatpush1.msra.mxu0 0.0
        %2593 = vmatprep.subr.mxu0 0.0
        %2594 = vmatpush1.msra.mxu0 0.0
        %2595 = vmatprep.subr.mxu0 0.0
        %2596 = vmatpush1.msra.mxu0 0.0
        %2597 = vmatprep.subr.mxu0 0.0
        %2598 = vmatpush1.msra.mxu0 0.0
        %2599 = vmatprep.subr.mxu0 0.0
        %2600 = vmatpush1.msra.mxu0 0.0
        %2601 = vmatprep.subr.mxu0 0.0
        %2602 = vmatpush1.msra.mxu0 0.0
        %2603 = vmatprep.subr.mxu0 0.0
        %2604 = vmatpush1.msra.mxu0 0.0
        %2605 = vmatprep.subr.mxu0 0.0
        %2606 = vmatpush1.msra.mxu0 0.0
        %2607 = vmatprep.subr.mxu0 0.0
        %2608 = vmatpush1.msra.mxu0 0.0
        %2609 = vmatprep.subr.mxu0 0.0
        %2610 = vmatpush1.msra.mxu0 0.0
        %2611 = vmatprep.subr.mxu0 0.0
        %2612 = vmatpush1.msra.mxu0 0.0
        %2613 = vmatprep.subr.mxu0 0.0
        %2614 = vmatpush1.msra.mxu0 0.0
        %2615 = vmatprep.subr.mxu0 0.0
        %2616 = vmatpush1.msra.mxu0 0.0
        %2617 = vmatprep.subr.mxu0 0.0
        %2618 = vmatpush1.msra.mxu0 0.0
        %2619 = vmatprep.subr.mxu0 %v2573
        %2620 = vmatpush1.msra.mxu0 %v2571
        %2621 = vmatprep.subr.mxu0 %v2541
        %2622 = vmatpush1.msra.mxu0 %v2540
        %2623 = vmatprep.subr.mxu0 0.0
        %2624 = vmatpush2.msra.mxu0 0.0
        %2625 = vmatprep.subr.mxu0 0.0
        %2626 = vmatpush2.msra.mxu0 0.0
        %2627 = vmatprep.subr.mxu0 0.0
        %2628 = vmatpush2.msra.mxu0 0.0
        %2629 = vmatprep.subr.mxu0 0.0
        %2630 = vmatpush2.msra.mxu0 0.0
        %2631 = vmatprep.subr.mxu0 0.0
        %2632 = vmatpush2.msra.mxu0 0.0
        %2633 = vmatprep.subr.mxu0 0.0
        %2634 = vmatpush2.msra.mxu0 0.0
        %2635 = vmatprep.subr.mxu0 0.0
        %2636 = vmatpush2.msra.mxu0 0.0
        %2637 = vmatprep.subr.mxu0 0.0
        %2638 = vmatpush2.msra.mxu0 0.0
        %2639 = vmatprep.subr.mxu0 0.0
        %2640 = vmatpush2.msra.mxu0 0.0
        %2641 = vmatprep.subr.mxu0 0.0
        %2642 = vmatpush2.msra.mxu0 0.0
        %2643 = vmatprep.subr.mxu0 0.0
        %2644 = vmatpush2.msra.mxu0 0.0
        %2645 = vmatprep.subr.mxu0 0.0
        %2646 = vmatpush2.msra.mxu0 0.0
        %2647 = vmatprep.subr.mxu0 0.0
        %2648 = vmatpush2.msra.mxu0 0.0
        %2649 = vmatprep.subr.mxu0 0.0
        %2650 = vmatpush2.msra.mxu0 0.0
        %2651 = vmatprep.subr.mxu0 0.0
        %2652 = vmatpush2.msra.mxu0 0.0
        %2653 = vmatprep.subr.mxu0 0.0
        %2654 = vmatpush2.msra.mxu0 0.0
        %2655 = vmatprep.mubr.f32.mxu0 0.0
        %2656 = vmatmul.mubr.f32.gmra.mxu0 %v2569
        %v2657 = vpop.f32.mrf.mxu0
        %v2658 = vadd.f32 0.0, %v2657
        %v2659 = vpop.f32.mrf.mxu0
        %v2660 = vadd.f32 0.0, %v2659
        %2661 = vdwg.mxu0
        %2662 = vmatprep.subr.mxu0 0.0
        %2663 = vmatpush1.msra.mxu0 0.0
        %2664 = vmatprep.subr.mxu0 0.0
        %2665 = vmatpush1.msra.mxu0 0.0
        %2666 = vmatprep.subr.mxu0 0.0
        %2667 = vmatpush1.msra.mxu0 0.0
        %2668 = vmatprep.subr.mxu0 0.0
        %2669 = vmatpush1.msra.mxu0 0.0
        %2670 = vmatprep.subr.mxu0 0.0
        %2671 = vmatpush1.msra.mxu0 0.0
        %2672 = vmatprep.subr.mxu0 0.0
        %2673 = vmatpush1.msra.mxu0 0.0
        %2674 = vmatprep.subr.mxu0 0.0
        %2675 = vmatpush1.msra.mxu0 0.0
        %2676 = vmatprep.subr.mxu0 0.0
        %2677 = vmatpush1.msra.mxu0 0.0
        %2678 = vmatprep.subr.mxu0 0.0
        %2679 = vmatpush1.msra.mxu0 0.0
        %2680 = vmatprep.subr.mxu0 0.0
        %2681 = vmatpush1.msra.mxu0 0.0
        %2682 = vmatprep.subr.mxu0 0.0
        %2683 = vmatpush1.msra.mxu0 0.0
        %2684 = vmatprep.subr.mxu0 0.0
        %2685 = vmatpush1.msra.mxu0 0.0
        %2686 = vmatprep.subr.mxu0 0.0
        %2687 = vmatpush1.msra.mxu0 0.0
        %2688 = vmatprep.subr.mxu0 0.0
        %2689 = vmatpush1.msra.mxu0 0.0
        %2690 = vmatprep.subr.mxu0 %v2577
        %2691 = vmatpush1.msra.mxu0 %v2575
        %2692 = vmatprep.subr.mxu0 %v2543
        %2693 = vmatpush1.msra.mxu0 %v2542
        %2694 = vmatprep.subr.mxu0 0.0
        %2695 = vmatpush2.msra.mxu0 0.0
        %2696 = vmatprep.subr.mxu0 0.0
        %2697 = vmatpush2.msra.mxu0 0.0
        %2698 = vmatprep.subr.mxu0 0.0
        %2699 = vmatpush2.msra.mxu0 0.0
        %2700 = vmatprep.subr.mxu0 0.0
        %2701 = vmatpush2.msra.mxu0 0.0
        %2702 = vmatprep.subr.mxu0 0.0
        %2703 = vmatpush2.msra.mxu0 0.0
        %2704 = vmatprep.subr.mxu0 0.0
        %2705 = vmatpush2.msra.mxu0 0.0
        %2706 = vmatprep.subr.mxu0 0.0
        %2707 = vmatpush2.msra.mxu0 0.0
        %2708 = vmatprep.subr.mxu0 0.0
        %2709 = vmatpush2.msra.mxu0 0.0
        %2710 = vmatprep.subr.mxu0 0.0
        %2711 = vmatpush2.msra.mxu0 0.0
        %2712 = vmatprep.subr.mxu0 0.0
        %2713 = vmatpush2.msra.mxu0 0.0
        %2714 = vmatprep.subr.mxu0 0.0
        %2715 = vmatpush2.msra.mxu0 0.0
        %2716 = vmatprep.subr.mxu0 0.0
        %2717 = vmatpush2.msra.mxu0 0.0
        %2718 = vmatprep.subr.mxu0 0.0
        %2719 = vmatpush2.msra.mxu0 0.0
        %2720 = vmatprep.subr.mxu0 0.0
        %2721 = vmatpush2.msra.mxu0 0.0
        %2722 = vmatprep.subr.mxu0 0.0
        %2723 = vmatpush2.msra.mxu0 0.0
        %2724 = vmatprep.subr.mxu0 0.0
        %2725 = vmatpush2.msra.mxu0 0.0
        %2726 = vmatprep.mubr.f32.mxu0 0.0
        %2727 = vmatmul.mubr.f32.gmra.mxu0 %v2569
        %v2728 = vpop.f32.mrf.mxu0
        %v2729 = vadd.f32 0.0, %v2728
        %v2730 = vpop.f32.mrf.mxu0
        %v2731 = vadd.f32 0.0, %v2730
        %2732 = vdwg.mxu0
        %2733 = vmatprep.subr.mxu0 0.0
        %2734 = vmatpush1.msra.mxu0 0.0
        %2735 = vmatprep.subr.mxu0 0.0
        %2736 = vmatpush1.msra.mxu0 0.0
        %2737 = vmatprep.subr.mxu0 0.0
        %2738 = vmatpush1.msra.mxu0 0.0
        %2739 = vmatprep.subr.mxu0 0.0
        %2740 = vmatpush1.msra.mxu0 0.0
        %2741 = vmatprep.subr.mxu0 0.0
        %2742 = vmatpush1.msra.mxu0 0.0
        %2743 = vmatprep.subr.mxu0 0.0
        %2744 = vmatpush1.msra.mxu0 0.0
        %2745 = vmatprep.subr.mxu0 0.0
        %2746 = vmatpush1.msra.mxu0 0.0
        %2747 = vmatprep.subr.mxu0 0.0
        %2748 = vmatpush1.msra.mxu0 0.0
        %2749 = vmatprep.subr.mxu0 0.0
        %2750 = vmatpush1.msra.mxu0 0.0
        %2751 = vmatprep.subr.mxu0 0.0
        %2752 = vmatpush1.msra.mxu0 0.0
        %2753 = vmatprep.subr.mxu0 0.0
        %2754 = vmatpush1.msra.mxu0 0.0
        %2755 = vmatprep.subr.mxu0 0.0
        %2756 = vmatpush1.msra.mxu0 0.0
        %2757 = vmatprep.subr.mxu0 0.0
        %2758 = vmatpush1.msra.mxu0 0.0
        %2759 = vmatprep.subr.mxu0 0.0
        %2760 = vmatpush1.msra.mxu0 0.0
        %2761 = vmatprep.subr.mxu0 %v2581
        %2762 = vmatpush1.msra.mxu0 %v2579
        %2763 = vmatprep.subr.mxu0 %v2545
        %2764 = vmatpush1.msra.mxu0 %v2544
        %2765 = vmatprep.subr.mxu0 0.0
        %2766 = vmatpush2.msra.mxu0 0.0
        %2767 = vmatprep.subr.mxu0 0.0
        %2768 = vmatpush2.msra.mxu0 0.0
        %2769 = vmatprep.subr.mxu0 0.0
        %2770 = vmatpush2.msra.mxu0 0.0
        %2771 = vmatprep.subr.mxu0 0.0
        %2772 = vmatpush2.msra.mxu0 0.0
        %2773 = vmatprep.subr.mxu0 0.0
        %2774 = vmatpush2.msra.mxu0 0.0
        %2775 = vmatprep.subr.mxu0 0.0
        %2776 = vmatpush2.msra.mxu0 0.0
        %2777 = vmatprep.subr.mxu0 0.0
        %2778 = vmatpush2.msra.mxu0 0.0
        %2779 = vmatprep.subr.mxu0 0.0
        %2780 = vmatpush2.msra.mxu0 0.0
        %2781 = vmatprep.subr.mxu0 0.0
        %2782 = vmatpush2.msra.mxu0 0.0
        %2783 = vmatprep.subr.mxu0 0.0
        %2784 = vmatpush2.msra.mxu0 0.0
        %2785 = vmatprep.subr.mxu0 0.0
        %2786 = vmatpush2.msra.mxu0 0.0
        %2787 = vmatprep.subr.mxu0 0.0
        %2788 = vmatpush2.msra.mxu0 0.0
        %2789 = vmatprep.subr.mxu0 0.0
        %2790 = vmatpush2.msra.mxu0 0.0
        %2791 = vmatprep.subr.mxu0 0.0
        %2792 = vmatpush2.msra.mxu0 0.0
        %2793 = vmatprep.subr.mxu0 0.0
        %2794 = vmatpush2.msra.mxu0 0.0
        %2795 = vmatprep.subr.mxu0 0.0
        %2796 = vmatpush2.msra.mxu0 0.0
        %2797 = vmatprep.mubr.f32.mxu0 0.0
        %2798 = vmatmul.mubr.f32.gmra.mxu0 %v2569
        %v2799 = vpop.f32.mrf.mxu0
        %v2800 = vadd.f32 0.0, %v2799
        %v2801 = vpop.f32.mrf.mxu0
        %v2802 = vadd.f32 0.0, %v2801
        %2803 = vdwg.mxu0
        %2804 = vmatprep.subr.mxu0 0.0
        %2805 = vmatpush1.msra.mxu0 0.0
        %2806 = vmatprep.subr.mxu0 0.0
        %2807 = vmatpush1.msra.mxu0 0.0
        %2808 = vmatprep.subr.mxu0 0.0
        %2809 = vmatpush1.msra.mxu0 0.0
        %2810 = vmatprep.subr.mxu0 0.0
        %2811 = vmatpush1.msra.mxu0 0.0
        %2812 = vmatprep.subr.mxu0 0.0
        %2813 = vmatpush1.msra.mxu0 0.0
        %2814 = vmatprep.subr.mxu0 0.0
        %2815 = vmatpush1.msra.mxu0 0.0
        %2816 = vmatprep.subr.mxu0 0.0
        %2817 = vmatpush1.msra.mxu0 0.0
        %2818 = vmatprep.subr.mxu0 0.0
        %2819 = vmatpush1.msra.mxu0 0.0
        %2820 = vmatprep.subr.mxu0 0.0
        %2821 = vmatpush1.msra.mxu0 0.0
        %2822 = vmatprep.subr.mxu0 0.0
        %2823 = vmatpush1.msra.mxu0 0.0
        %2824 = vmatprep.subr.mxu0 0.0
        %2825 = vmatpush1.msra.mxu0 0.0
        %2826 = vmatprep.subr.mxu0 0.0
        %2827 = vmatpush1.msra.mxu0 0.0
        %2828 = vmatprep.subr.mxu0 0.0
        %2829 = vmatpush1.msra.mxu0 0.0
        %2830 = vmatprep.subr.mxu0 0.0
        %2831 = vmatpush1.msra.mxu0 0.0
        %2832 = vmatprep.subr.mxu0 %v2585
        %2833 = vmatpush1.msra.mxu0 %v2583
        %2834 = vmatprep.subr.mxu0 %v2547
        %2835 = vmatpush1.msra.mxu0 %v2546
        %2836 = vmatprep.subr.mxu0 0.0
        %2837 = vmatpush2.msra.mxu0 0.0
        %2838 = vmatprep.subr.mxu0 0.0
        %2839 = vmatpush2.msra.mxu0 0.0
        %2840 = vmatprep.subr.mxu0 0.0
        %2841 = vmatpush2.msra.mxu0 0.0
        %2842 = vmatprep.subr.mxu0 0.0
        %2843 = vmatpush2.msra.mxu0 0.0
        %2844 = vmatprep.subr.mxu0 0.0
        %2845 = vmatpush2.msra.mxu0 0.0
        %2846 = vmatprep.subr.mxu0 0.0
        %2847 = vmatpush2.msra.mxu0 0.0
        %2848 = vmatprep.subr.mxu0 0.0
        %2849 = vmatpush2.msra.mxu0 0.0
        %2850 = vmatprep.subr.mxu0 0.0
        %2851 = vmatpush2.msra.mxu0 0.0
        %2852 = vmatprep.subr.mxu0 0.0
        %2853 = vmatpush2.msra.mxu0 0.0
        %2854 = vmatprep.subr.mxu0 0.0
        %2855 = vmatpush2.msra.mxu0 0.0
        %2856 = vmatprep.subr.mxu0 0.0
        %2857 = vmatpush2.msra.mxu0 0.0
        %2858 = vmatprep.subr.mxu0 0.0
        %2859 = vmatpush2.msra.mxu0 0.0
        %2860 = vmatprep.subr.mxu0 0.0
        %2861 = vmatpush2.msra.mxu0 0.0
        %2862 = vmatprep.subr.mxu0 0.0
        %2863 = vmatpush2.msra.mxu0 0.0
        %2864 = vmatprep.subr.mxu0 0.0
        %2865 = vmatpush2.msra.mxu0 0.0
        %2866 = vmatprep.subr.mxu0 0.0
        %2867 = vmatpush2.msra.mxu0 0.0
        %2868 = vmatprep.mubr.f32.mxu0 0.0
        %2869 = vmatmul.mubr.f32.gmra.mxu0 %v2569
        %v2870 = vpop.f32.mrf.mxu0
        %v2871 = vadd.f32 0.0, %v2870
        %v2872 = vpop.f32.mrf.mxu0
        %v2873 = vadd.f32 0.0, %v2872
        %2874 = vdwg.mxu0
        %2875 = vmatprep.subr.mxu0 0.0
        %2876 = vmatpush1.msra.mxu0 0.0
        %2877 = vmatprep.subr.mxu0 0.0
        %2878 = vmatpush1.msra.mxu0 0.0
        %2879 = vmatprep.subr.mxu0 0.0
        %2880 = vmatpush1.msra.mxu0 0.0
        %2881 = vmatprep.subr.mxu0 0.0
        %2882 = vmatpush1.msra.mxu0 0.0
        %2883 = vmatprep.subr.mxu0 0.0
        %2884 = vmatpush1.msra.mxu0 0.0
        %2885 = vmatprep.subr.mxu0 0.0
        %2886 = vmatpush1.msra.mxu0 0.0
        %2887 = vmatprep.subr.mxu0 0.0
        %2888 = vmatpush1.msra.mxu0 0.0
        %2889 = vmatprep.subr.mxu0 0.0
        %2890 = vmatpush1.msra.mxu0 0.0
        %2891 = vmatprep.subr.mxu0 0.0
        %2892 = vmatpush1.msra.mxu0 0.0
        %2893 = vmatprep.subr.mxu0 0.0
        %2894 = vmatpush1.msra.mxu0 0.0
        %2895 = vmatprep.subr.mxu0 0.0
        %2896 = vmatpush1.msra.mxu0 0.0
        %2897 = vmatprep.subr.mxu0 0.0
        %2898 = vmatpush1.msra.mxu0 0.0
        %2899 = vmatprep.subr.mxu0 0.0
        %2900 = vmatpush1.msra.mxu0 0.0
        %2901 = vmatprep.subr.mxu0 0.0
        %2902 = vmatpush1.msra.mxu0 0.0
        %2903 = vmatprep.subr.mxu0 %v2589
        %2904 = vmatpush1.msra.mxu0 %v2587
        %2905 = vmatprep.subr.mxu0 %v2518
        %2906 = vmatpush1.msra.mxu0 %v2548
        %2907 = vmatprep.subr.mxu0 0.0
        %2908 = vmatpush2.msra.mxu0 0.0
        %2909 = vmatprep.subr.mxu0 0.0
        %2910 = vmatpush2.msra.mxu0 0.0
        %2911 = vmatprep.subr.mxu0 0.0
        %2912 = vmatpush2.msra.mxu0 0.0
        %2913 = vmatprep.subr.mxu0 0.0
        %2914 = vmatpush2.msra.mxu0 0.0
        %2915 = vmatprep.subr.mxu0 0.0
        %2916 = vmatpush2.msra.mxu0 0.0
        %2917 = vmatprep.subr.mxu0 0.0
        %2918 = vmatpush2.msra.mxu0 0.0
        %2919 = vmatprep.subr.mxu0 0.0
        %2920 = vmatpush2.msra.mxu0 0.0
        %2921 = vmatprep.subr.mxu0 0.0
        %2922 = vmatpush2.msra.mxu0 0.0
        %2923 = vmatprep.subr.mxu0 0.0
        %2924 = vmatpush2.msra.mxu0 0.0
        %2925 = vmatprep.subr.mxu0 0.0
        %2926 = vmatpush2.msra.mxu0 0.0
        %2927 = vmatprep.subr.mxu0 0.0
        %2928 = vmatpush2.msra.mxu0 0.0
        %2929 = vmatprep.subr.mxu0 0.0
        %2930 = vmatpush2.msra.mxu0 0.0
        %2931 = vmatprep.subr.mxu0 0.0
        %2932 = vmatpush2.msra.mxu0 0.0
        %2933 = vmatprep.subr.mxu0 0.0
        %2934 = vmatpush2.msra.mxu0 0.0
        %2935 = vmatprep.subr.mxu0 0.0
        %2936 = vmatpush2.msra.mxu0 0.0
        %2937 = vmatprep.subr.mxu0 0.0
        %2938 = vmatpush2.msra.mxu0 0.0
        %2939 = vmatprep.mubr.f32.mxu0 0.0
        %2940 = vmatmul.mubr.f32.gmra.mxu0 %v2569
        %v2941 = vpop.f32.mrf.mxu0
        %v2942 = vadd.f32 0.0, %v2941
        %v2943 = vpop.f32.mrf.mxu0
        %v2944 = vadd.f32 0.0, %v2943
        %2945 = vdwg.mxu0
        %v2946 = vadd.f32 %v2487, %v2658
        %v2947 = vadd.f32 %v2488, %v2660
        %v2948 = vadd.f32 %v2489, %v2729
        %v2949 = vadd.f32 %v2490, %v2731
        %v2950 = vadd.f32 %v2491, %v2800
        %v2951 = vadd.f32 %v2492, %v2802
        %v2952 = vadd.f32 %v2493, %v2871
        %v2953 = vadd.f32 %v2494, %v2873
        %v2954 = vadd.f32 %v2495, %v2942
        %v2955 = vadd.f32 %v2496, %v2944
        %s2956 = scalar_lea.vmem %s1, 48
        %v2957 = vld [vmem:[%s2956] sm:$0xff]
        %2958 = vrot.lane.b32.xlu0 %v250, 60
        %v2959 = vpop.permute.xlu0 %2958
        %2960 = vrot.lane.b32.xlu0 %v251, 60
        %v2961 = vpop.permute.xlu0 %2960
        %2962 = vrot.lane.b32.xlu0 %v252, 60
        %v2963 = vpop.permute.xlu0 %2962
        %2964 = vrot.lane.b32.xlu0 %v253, 60
        %v2965 = vpop.permute.xlu0 %2964
        %2966 = vrot.lane.b32.xlu0 %v254, 60
        %v2967 = vpop.permute.xlu0 %2966
        %2968 = vrot.lane.b32.xlu0 %v255, 60
        %v2969 = vpop.permute.xlu0 %2968
        %2970 = vrot.lane.b32.xlu0 %v256, 60
        %v2971 = vpop.permute.xlu0 %2970
        %2972 = vrot.lane.b32.xlu0 %v257, 60
        %v2973 = vpop.permute.xlu0 %2972
        %2974 = vrot.lane.b32.xlu0 %v258, 60
        %v2975 = vpop.permute.xlu0 %2974
        %2976 = vrot.lane.b32.xlu0 %v259, 60
        %v2977 = vpop.permute.xlu0 %2976
        %2978 = vrot.lane.b32.xlu0 %v260, 60
        %v2979 = vpop.permute.xlu0 %2978
        %2980 = vrot.lane.b32.xlu0 %v261, 60
        %v2981 = vpop.permute.xlu0 %2980
        %2982 = vrot.lane.b32.xlu0 %v262, 60
        %v2983 = vpop.permute.xlu0 %2982
        %2984 = vrot.lane.b32.xlu0 %v263, 60
        %v2985 = vpop.permute.xlu0 %2984
        %2986 = vrot.lane.b32.xlu0 %v264, 60
        %v2987 = vpop.permute.xlu0 %2986
        %2988 = vrot.lane.b32.xlu0 %v265, 60
        %v2989 = vpop.permute.xlu0 %2988
        %2990 = vrot.lane.b32.xlu0 %v266, 60
        %v2991 = vpop.permute.xlu0 %2990
        %2992 = vrot.lane.b32.xlu0 %v267, 60
        %v2993 = vpop.permute.xlu0 %2992
        %2994 = vrot.lane.b32.xlu0 %v268, 60
        %v2995 = vpop.permute.xlu0 %2994
        %2996 = vrot.lane.b32.xlu0 %v269, 60
        %v2997 = vpop.permute.xlu0 %2996
        %vm2998 = vcmask 490496
        %v2999 = vsel %vm2998, %v2959, %v2961
        %v3000 = vsel %vm2998, %v2961, %v2963
        %v3001 = vsel %vm2998, %v2963, %v2965
        %v3002 = vsel %vm2998, %v2965, %v2967
        %v3003 = vsel %vm2998, %v2967, %v2969
        %v3004 = vsel %vm2998, %v2969, %v2971
        %v3005 = vsel %vm2998, %v2971, %v2973
        %v3006 = vsel %vm2998, %v2973, %v2975
        %v3007 = vsel %vm2998, %v2975, %v2977
        %v3008 = vsel %vm2998, %v2979, %v2981
        %v3009 = vsel %vm2998, %v2981, %v2983
        %v3010 = vsel %vm2998, %v2983, %v2985
        %v3011 = vsel %vm2998, %v2985, %v2987
        %v3012 = vsel %vm2998, %v2987, %v2989
        %v3013 = vsel %vm2998, %v2989, %v2991
        %v3014 = vsel %vm2998, %v2991, %v2993
        %v3015 = vsel %vm2998, %v2993, %v2995
        %v3016 = vsel %vm2998, %v2995, %v2997
        %v3028 = vsel %vm362, %v2957, 0
        %v3030 = vsel %vm366, %v3008, 0
        %v3032 = vsel %vm366, %v3009, 0
        %v3034 = vsel %vm366, %v3010, 0
        %v3036 = vsel %vm366, %v3011, 0
        %v3038 = vsel %vm366, %v3012, 0
        %v3040 = vsel %vm366, %v3013, 0
        %v3042 = vsel %vm366, %v3014, 0
        %v3044 = vsel %vm366, %v3015, 0
        %v3046 = vsel %vm366, %v3016, 0
        %v3048 = vsel %vm366, %v2997, 0
        %3050 = vmatprep.subr.mxu0 0.0
        %3051 = vmatpush1.msra.mxu0 0.0
        %3052 = vmatprep.subr.mxu0 0.0
        %3053 = vmatpush1.msra.mxu0 0.0
        %3054 = vmatprep.subr.mxu0 0.0
        %3055 = vmatpush1.msra.mxu0 0.0
        %3056 = vmatprep.subr.mxu0 0.0
        %3057 = vmatpush1.msra.mxu0 0.0
        %3058 = vmatprep.subr.mxu0 0.0
        %3059 = vmatpush1.msra.mxu0 0.0
        %3060 = vmatprep.subr.mxu0 0.0
        %3061 = vmatpush1.msra.mxu0 0.0
        %3062 = vmatprep.subr.mxu0 0.0
        %3063 = vmatpush1.msra.mxu0 0.0
        %3064 = vmatprep.subr.mxu0 0.0
        %3065 = vmatpush1.msra.mxu0 0.0
        %3066 = vmatprep.subr.mxu0 0.0
        %3067 = vmatpush1.msra.mxu0 0.0
        %3068 = vmatprep.subr.mxu0 0.0
        %3069 = vmatpush1.msra.mxu0 0.0
        %3070 = vmatprep.subr.mxu0 0.0
        %3071 = vmatpush1.msra.mxu0 0.0
        %3072 = vmatprep.subr.mxu0 0.0
        %3073 = vmatpush1.msra.mxu0 0.0
        %3074 = vmatprep.subr.mxu0 0.0
        %3075 = vmatpush1.msra.mxu0 0.0
        %3076 = vmatprep.subr.mxu0 0.0
        %3077 = vmatpush1.msra.mxu0 0.0
        %3078 = vmatprep.subr.mxu0 %v3032
        %3079 = vmatpush1.msra.mxu0 %v3030
        %3080 = vmatprep.subr.mxu0 %v3000
        %3081 = vmatpush1.msra.mxu0 %v2999
        %3082 = vmatprep.subr.mxu0 0.0
        %3083 = vmatpush2.msra.mxu0 0.0
        %3084 = vmatprep.subr.mxu0 0.0
        %3085 = vmatpush2.msra.mxu0 0.0
        %3086 = vmatprep.subr.mxu0 0.0
        %3087 = vmatpush2.msra.mxu0 0.0
        %3088 = vmatprep.subr.mxu0 0.0
        %3089 = vmatpush2.msra.mxu0 0.0
        %3090 = vmatprep.subr.mxu0 0.0
        %3091 = vmatpush2.msra.mxu0 0.0
        %3092 = vmatprep.subr.mxu0 0.0
        %3093 = vmatpush2.msra.mxu0 0.0
        %3094 = vmatprep.subr.mxu0 0.0
        %3095 = vmatpush2.msra.mxu0 0.0
        %3096 = vmatprep.subr.mxu0 0.0
        %3097 = vmatpush2.msra.mxu0 0.0
        %3098 = vmatprep.subr.mxu0 0.0
        %3099 = vmatpush2.msra.mxu0 0.0
        %3100 = vmatprep.subr.mxu0 0.0
        %3101 = vmatpush2.msra.mxu0 0.0
        %3102 = vmatprep.subr.mxu0 0.0
        %3103 = vmatpush2.msra.mxu0 0.0
        %3104 = vmatprep.subr.mxu0 0.0
        %3105 = vmatpush2.msra.mxu0 0.0
        %3106 = vmatprep.subr.mxu0 0.0
        %3107 = vmatpush2.msra.mxu0 0.0
        %3108 = vmatprep.subr.mxu0 0.0
        %3109 = vmatpush2.msra.mxu0 0.0
        %3110 = vmatprep.subr.mxu0 0.0
        %3111 = vmatpush2.msra.mxu0 0.0
        %3112 = vmatprep.subr.mxu0 0.0
        %3113 = vmatpush2.msra.mxu0 0.0
        %3114 = vmatprep.mubr.f32.mxu0 0.0
        %3115 = vmatmul.mubr.f32.gmra.mxu0 %v3028
        %v3116 = vpop.f32.mrf.mxu0
        %v3117 = vadd.f32 0.0, %v3116
        %v3118 = vpop.f32.mrf.mxu0
        %v3119 = vadd.f32 0.0, %v3118
        %3120 = vdwg.mxu0
        %3121 = vmatprep.subr.mxu0 0.0
        %3122 = vmatpush1.msra.mxu0 0.0
        %3123 = vmatprep.subr.mxu0 0.0
        %3124 = vmatpush1.msra.mxu0 0.0
        %3125 = vmatprep.subr.mxu0 0.0
        %3126 = vmatpush1.msra.mxu0 0.0
        %3127 = vmatprep.subr.mxu0 0.0
        %3128 = vmatpush1.msra.mxu0 0.0
        %3129 = vmatprep.subr.mxu0 0.0
        %3130 = vmatpush1.msra.mxu0 0.0
        %3131 = vmatprep.subr.mxu0 0.0
        %3132 = vmatpush1.msra.mxu0 0.0
        %3133 = vmatprep.subr.mxu0 0.0
        %3134 = vmatpush1.msra.mxu0 0.0
        %3135 = vmatprep.subr.mxu0 0.0
        %3136 = vmatpush1.msra.mxu0 0.0
        %3137 = vmatprep.subr.mxu0 0.0
        %3138 = vmatpush1.msra.mxu0 0.0
        %3139 = vmatprep.subr.mxu0 0.0
        %3140 = vmatpush1.msra.mxu0 0.0
        %3141 = vmatprep.subr.mxu0 0.0
        %3142 = vmatpush1.msra.mxu0 0.0
        %3143 = vmatprep.subr.mxu0 0.0
        %3144 = vmatpush1.msra.mxu0 0.0
        %3145 = vmatprep.subr.mxu0 0.0
        %3146 = vmatpush1.msra.mxu0 0.0
        %3147 = vmatprep.subr.mxu0 0.0
        %3148 = vmatpush1.msra.mxu0 0.0
        %3149 = vmatprep.subr.mxu0 %v3036
        %3150 = vmatpush1.msra.mxu0 %v3034
        %3151 = vmatprep.subr.mxu0 %v3002
        %3152 = vmatpush1.msra.mxu0 %v3001
        %3153 = vmatprep.subr.mxu0 0.0
        %3154 = vmatpush2.msra.mxu0 0.0
        %3155 = vmatprep.subr.mxu0 0.0
        %3156 = vmatpush2.msra.mxu0 0.0
        %3157 = vmatprep.subr.mxu0 0.0
        %3158 = vmatpush2.msra.mxu0 0.0
        %3159 = vmatprep.subr.mxu0 0.0
        %3160 = vmatpush2.msra.mxu0 0.0
        %3161 = vmatprep.subr.mxu0 0.0
        %3162 = vmatpush2.msra.mxu0 0.0
        %3163 = vmatprep.subr.mxu0 0.0
        %3164 = vmatpush2.msra.mxu0 0.0
        %3165 = vmatprep.subr.mxu0 0.0
        %3166 = vmatpush2.msra.mxu0 0.0
        %3167 = vmatprep.subr.mxu0 0.0
        %3168 = vmatpush2.msra.mxu0 0.0
        %3169 = vmatprep.subr.mxu0 0.0
        %3170 = vmatpush2.msra.mxu0 0.0
        %3171 = vmatprep.subr.mxu0 0.0
        %3172 = vmatpush2.msra.mxu0 0.0
        %3173 = vmatprep.subr.mxu0 0.0
        %3174 = vmatpush2.msra.mxu0 0.0
        %3175 = vmatprep.subr.mxu0 0.0
        %3176 = vmatpush2.msra.mxu0 0.0
        %3177 = vmatprep.subr.mxu0 0.0
        %3178 = vmatpush2.msra.mxu0 0.0
        %3179 = vmatprep.subr.mxu0 0.0
        %3180 = vmatpush2.msra.mxu0 0.0
        %3181 = vmatprep.subr.mxu0 0.0
        %3182 = vmatpush2.msra.mxu0 0.0
        %3183 = vmatprep.subr.mxu0 0.0
        %3184 = vmatpush2.msra.mxu0 0.0
        %3185 = vmatprep.mubr.f32.mxu0 0.0
        %3186 = vmatmul.mubr.f32.gmra.mxu0 %v3028
        %v3187 = vpop.f32.mrf.mxu0
        %v3188 = vadd.f32 0.0, %v3187
        %v3189 = vpop.f32.mrf.mxu0
        %v3190 = vadd.f32 0.0, %v3189
        %3191 = vdwg.mxu0
        %3192 = vmatprep.subr.mxu0 0.0
        %3193 = vmatpush1.msra.mxu0 0.0
        %3194 = vmatprep.subr.mxu0 0.0
        %3195 = vmatpush1.msra.mxu0 0.0
        %3196 = vmatprep.subr.mxu0 0.0
        %3197 = vmatpush1.msra.mxu0 0.0
        %3198 = vmatprep.subr.mxu0 0.0
        %3199 = vmatpush1.msra.mxu0 0.0
        %3200 = vmatprep.subr.mxu0 0.0
        %3201 = vmatpush1.msra.mxu0 0.0
        %3202 = vmatprep.subr.mxu0 0.0
        %3203 = vmatpush1.msra.mxu0 0.0
        %3204 = vmatprep.subr.mxu0 0.0
        %3205 = vmatpush1.msra.mxu0 0.0
        %3206 = vmatprep.subr.mxu0 0.0
        %3207 = vmatpush1.msra.mxu0 0.0
        %3208 = vmatprep.subr.mxu0 0.0
        %3209 = vmatpush1.msra.mxu0 0.0
        %3210 = vmatprep.subr.mxu0 0.0
        %3211 = vmatpush1.msra.mxu0 0.0
        %3212 = vmatprep.subr.mxu0 0.0
        %3213 = vmatpush1.msra.mxu0 0.0
        %3214 = vmatprep.subr.mxu0 0.0
        %3215 = vmatpush1.msra.mxu0 0.0
        %3216 = vmatprep.subr.mxu0 0.0
        %3217 = vmatpush1.msra.mxu0 0.0
        %3218 = vmatprep.subr.mxu0 0.0
        %3219 = vmatpush1.msra.mxu0 0.0
        %3220 = vmatprep.subr.mxu0 %v3040
        %3221 = vmatpush1.msra.mxu0 %v3038
        %3222 = vmatprep.subr.mxu0 %v3004
        %3223 = vmatpush1.msra.mxu0 %v3003
        %3224 = vmatprep.subr.mxu0 0.0
        %3225 = vmatpush2.msra.mxu0 0.0
        %3226 = vmatprep.subr.mxu0 0.0
        %3227 = vmatpush2.msra.mxu0 0.0
        %3228 = vmatprep.subr.mxu0 0.0
        %3229 = vmatpush2.msra.mxu0 0.0
        %3230 = vmatprep.subr.mxu0 0.0
        %3231 = vmatpush2.msra.mxu0 0.0
        %3232 = vmatprep.subr.mxu0 0.0
        %3233 = vmatpush2.msra.mxu0 0.0
        %3234 = vmatprep.subr.mxu0 0.0
        %3235 = vmatpush2.msra.mxu0 0.0
        %3236 = vmatprep.subr.mxu0 0.0
        %3237 = vmatpush2.msra.mxu0 0.0
        %3238 = vmatprep.subr.mxu0 0.0
        %3239 = vmatpush2.msra.mxu0 0.0
        %3240 = vmatprep.subr.mxu0 0.0
        %3241 = vmatpush2.msra.mxu0 0.0
        %3242 = vmatprep.subr.mxu0 0.0
        %3243 = vmatpush2.msra.mxu0 0.0
        %3244 = vmatprep.subr.mxu0 0.0
        %3245 = vmatpush2.msra.mxu0 0.0
        %3246 = vmatprep.subr.mxu0 0.0
        %3247 = vmatpush2.msra.mxu0 0.0
        %3248 = vmatprep.subr.mxu0 0.0
        %3249 = vmatpush2.msra.mxu0 0.0
        %3250 = vmatprep.subr.mxu0 0.0
        %3251 = vmatpush2.msra.mxu0 0.0
        %3252 = vmatprep.subr.mxu0 0.0
        %3253 = vmatpush2.msra.mxu0 0.0
        %3254 = vmatprep.subr.mxu0 0.0
        %3255 = vmatpush2.msra.mxu0 0.0
        %3256 = vmatprep.mubr.f32.mxu0 0.0
        %3257 = vmatmul.mubr.f32.gmra.mxu0 %v3028
        %v3258 = vpop.f32.mrf.mxu0
        %v3259 = vadd.f32 0.0, %v3258
        %v3260 = vpop.f32.mrf.mxu0
        %v3261 = vadd.f32 0.0, %v3260
        %3262 = vdwg.mxu0
        %3263 = vmatprep.subr.mxu0 0.0
        %3264 = vmatpush1.msra.mxu0 0.0
        %3265 = vmatprep.subr.mxu0 0.0
        %3266 = vmatpush1.msra.mxu0 0.0
        %3267 = vmatprep.subr.mxu0 0.0
        %3268 = vmatpush1.msra.mxu0 0.0
        %3269 = vmatprep.subr.mxu0 0.0
        %3270 = vmatpush1.msra.mxu0 0.0
        %3271 = vmatprep.subr.mxu0 0.0
        %3272 = vmatpush1.msra.mxu0 0.0
        %3273 = vmatprep.subr.mxu0 0.0
        %3274 = vmatpush1.msra.mxu0 0.0
        %3275 = vmatprep.subr.mxu0 0.0
        %3276 = vmatpush1.msra.mxu0 0.0
        %3277 = vmatprep.subr.mxu0 0.0
        %3278 = vmatpush1.msra.mxu0 0.0
        %3279 = vmatprep.subr.mxu0 0.0
        %3280 = vmatpush1.msra.mxu0 0.0
        %3281 = vmatprep.subr.mxu0 0.0
        %3282 = vmatpush1.msra.mxu0 0.0
        %3283 = vmatprep.subr.mxu0 0.0
        %3284 = vmatpush1.msra.mxu0 0.0
        %3285 = vmatprep.subr.mxu0 0.0
        %3286 = vmatpush1.msra.mxu0 0.0
        %3287 = vmatprep.subr.mxu0 0.0
        %3288 = vmatpush1.msra.mxu0 0.0
        %3289 = vmatprep.subr.mxu0 0.0
        %3290 = vmatpush1.msra.mxu0 0.0
        %3291 = vmatprep.subr.mxu0 %v3044
        %3292 = vmatpush1.msra.mxu0 %v3042
        %3293 = vmatprep.subr.mxu0 %v3006
        %3294 = vmatpush1.msra.mxu0 %v3005
        %3295 = vmatprep.subr.mxu0 0.0
        %3296 = vmatpush2.msra.mxu0 0.0
        %3297 = vmatprep.subr.mxu0 0.0
        %3298 = vmatpush2.msra.mxu0 0.0
        %3299 = vmatprep.subr.mxu0 0.0
        %3300 = vmatpush2.msra.mxu0 0.0
        %3301 = vmatprep.subr.mxu0 0.0
        %3302 = vmatpush2.msra.mxu0 0.0
        %3303 = vmatprep.subr.mxu0 0.0
        %3304 = vmatpush2.msra.mxu0 0.0
        %3305 = vmatprep.subr.mxu0 0.0
        %3306 = vmatpush2.msra.mxu0 0.0
        %3307 = vmatprep.subr.mxu0 0.0
        %3308 = vmatpush2.msra.mxu0 0.0
        %3309 = vmatprep.subr.mxu0 0.0
        %3310 = vmatpush2.msra.mxu0 0.0
        %3311 = vmatprep.subr.mxu0 0.0
        %3312 = vmatpush2.msra.mxu0 0.0
        %3313 = vmatprep.subr.mxu0 0.0
        %3314 = vmatpush2.msra.mxu0 0.0
        %3315 = vmatprep.subr.mxu0 0.0
        %3316 = vmatpush2.msra.mxu0 0.0
        %3317 = vmatprep.subr.mxu0 0.0
        %3318 = vmatpush2.msra.mxu0 0.0
        %3319 = vmatprep.subr.mxu0 0.0
        %3320 = vmatpush2.msra.mxu0 0.0
        %3321 = vmatprep.subr.mxu0 0.0
        %3322 = vmatpush2.msra.mxu0 0.0
        %3323 = vmatprep.subr.mxu0 0.0
        %3324 = vmatpush2.msra.mxu0 0.0
        %3325 = vmatprep.subr.mxu0 0.0
        %3326 = vmatpush2.msra.mxu0 0.0
        %3327 = vmatprep.mubr.f32.mxu0 0.0
        %3328 = vmatmul.mubr.f32.gmra.mxu0 %v3028
        %v3329 = vpop.f32.mrf.mxu0
        %v3330 = vadd.f32 0.0, %v3329
        %v3331 = vpop.f32.mrf.mxu0
        %v3332 = vadd.f32 0.0, %v3331
        %3333 = vdwg.mxu0
        %3334 = vmatprep.subr.mxu0 0.0
        %3335 = vmatpush1.msra.mxu0 0.0
        %3336 = vmatprep.subr.mxu0 0.0
        %3337 = vmatpush1.msra.mxu0 0.0
        %3338 = vmatprep.subr.mxu0 0.0
        %3339 = vmatpush1.msra.mxu0 0.0
        %3340 = vmatprep.subr.mxu0 0.0
        %3341 = vmatpush1.msra.mxu0 0.0
        %3342 = vmatprep.subr.mxu0 0.0
        %3343 = vmatpush1.msra.mxu0 0.0
        %3344 = vmatprep.subr.mxu0 0.0
        %3345 = vmatpush1.msra.mxu0 0.0
        %3346 = vmatprep.subr.mxu0 0.0
        %3347 = vmatpush1.msra.mxu0 0.0
        %3348 = vmatprep.subr.mxu0 0.0
        %3349 = vmatpush1.msra.mxu0 0.0
        %3350 = vmatprep.subr.mxu0 0.0
        %3351 = vmatpush1.msra.mxu0 0.0
        %3352 = vmatprep.subr.mxu0 0.0
        %3353 = vmatpush1.msra.mxu0 0.0
        %3354 = vmatprep.subr.mxu0 0.0
        %3355 = vmatpush1.msra.mxu0 0.0
        %3356 = vmatprep.subr.mxu0 0.0
        %3357 = vmatpush1.msra.mxu0 0.0
        %3358 = vmatprep.subr.mxu0 0.0
        %3359 = vmatpush1.msra.mxu0 0.0
        %3360 = vmatprep.subr.mxu0 0.0
        %3361 = vmatpush1.msra.mxu0 0.0
        %3362 = vmatprep.subr.mxu0 %v3048
        %3363 = vmatpush1.msra.mxu0 %v3046
        %3364 = vmatprep.subr.mxu0 %v2977
        %3365 = vmatpush1.msra.mxu0 %v3007
        %3366 = vmatprep.subr.mxu0 0.0
        %3367 = vmatpush2.msra.mxu0 0.0
        %3368 = vmatprep.subr.mxu0 0.0
        %3369 = vmatpush2.msra.mxu0 0.0
        %3370 = vmatprep.subr.mxu0 0.0
        %3371 = vmatpush2.msra.mxu0 0.0
        %3372 = vmatprep.subr.mxu0 0.0
        %3373 = vmatpush2.msra.mxu0 0.0
        %3374 = vmatprep.subr.mxu0 0.0
        %3375 = vmatpush2.msra.mxu0 0.0
        %3376 = vmatprep.subr.mxu0 0.0
        %3377 = vmatpush2.msra.mxu0 0.0
        %3378 = vmatprep.subr.mxu0 0.0
        %3379 = vmatpush2.msra.mxu0 0.0
        %3380 = vmatprep.subr.mxu0 0.0
        %3381 = vmatpush2.msra.mxu0 0.0
        %3382 = vmatprep.subr.mxu0 0.0
        %3383 = vmatpush2.msra.mxu0 0.0
        %3384 = vmatprep.subr.mxu0 0.0
        %3385 = vmatpush2.msra.mxu0 0.0
        %3386 = vmatprep.subr.mxu0 0.0
        %3387 = vmatpush2.msra.mxu0 0.0
        %3388 = vmatprep.subr.mxu0 0.0
        %3389 = vmatpush2.msra.mxu0 0.0
        %3390 = vmatprep.subr.mxu0 0.0
        %3391 = vmatpush2.msra.mxu0 0.0
        %3392 = vmatprep.subr.mxu0 0.0
        %3393 = vmatpush2.msra.mxu0 0.0
        %3394 = vmatprep.subr.mxu0 0.0
        %3395 = vmatpush2.msra.mxu0 0.0
        %3396 = vmatprep.subr.mxu0 0.0
        %3397 = vmatpush2.msra.mxu0 0.0
        %3398 = vmatprep.mubr.f32.mxu0 0.0
        %3399 = vmatmul.mubr.f32.gmra.mxu0 %v3028
        %v3400 = vpop.f32.mrf.mxu0
        %v3401 = vadd.f32 0.0, %v3400
        %v3402 = vpop.f32.mrf.mxu0
        %v3403 = vadd.f32 0.0, %v3402
        %3404 = vdwg.mxu0
        %v3405 = vadd.f32 %v2946, %v3117
        %v3406 = vadd.f32 %v2947, %v3119
        %v3407 = vadd.f32 %v2948, %v3188
        %v3408 = vadd.f32 %v2949, %v3190
        %v3409 = vadd.f32 %v2950, %v3259
        %v3410 = vadd.f32 %v2951, %v3261
        %v3411 = vadd.f32 %v2952, %v3330
        %v3412 = vadd.f32 %v2953, %v3332
        %v3413 = vadd.f32 %v2954, %v3401
        %v3414 = vadd.f32 %v2955, %v3403
        %s3415 = scalar_lea.vmem %s1, 56
        %v3416 = vld [vmem:[%s3415] sm:$0xff]
        %3417 = vrot.lane.b32.xlu0 %v250, 59
        %v3418 = vpop.permute.xlu0 %3417
        %3419 = vrot.lane.b32.xlu0 %v251, 59
        %v3420 = vpop.permute.xlu0 %3419
        %3421 = vrot.lane.b32.xlu0 %v252, 59
        %v3422 = vpop.permute.xlu0 %3421
        %3423 = vrot.lane.b32.xlu0 %v253, 59
        %v3424 = vpop.permute.xlu0 %3423
        %3425 = vrot.lane.b32.xlu0 %v254, 59
        %v3426 = vpop.permute.xlu0 %3425
        %3427 = vrot.lane.b32.xlu0 %v255, 59
        %v3428 = vpop.permute.xlu0 %3427
        %3429 = vrot.lane.b32.xlu0 %v256, 59
        %v3430 = vpop.permute.xlu0 %3429
        %3431 = vrot.lane.b32.xlu0 %v257, 59
        %v3432 = vpop.permute.xlu0 %3431
        %3433 = vrot.lane.b32.xlu0 %v258, 59
        %v3434 = vpop.permute.xlu0 %3433
        %3435 = vrot.lane.b32.xlu0 %v259, 59
        %v3436 = vpop.permute.xlu0 %3435
        %3437 = vrot.lane.b32.xlu0 %v260, 59
        %v3438 = vpop.permute.xlu0 %3437
        %3439 = vrot.lane.b32.xlu0 %v261, 59
        %v3440 = vpop.permute.xlu0 %3439
        %3441 = vrot.lane.b32.xlu0 %v262, 59
        %v3442 = vpop.permute.xlu0 %3441
        %3443 = vrot.lane.b32.xlu0 %v263, 59
        %v3444 = vpop.permute.xlu0 %3443
        %3445 = vrot.lane.b32.xlu0 %v264, 59
        %v3446 = vpop.permute.xlu0 %3445
        %3447 = vrot.lane.b32.xlu0 %v265, 59
        %v3448 = vpop.permute.xlu0 %3447
        %3449 = vrot.lane.b32.xlu0 %v266, 59
        %v3450 = vpop.permute.xlu0 %3449
        %3451 = vrot.lane.b32.xlu0 %v267, 59
        %v3452 = vpop.permute.xlu0 %3451
        %3453 = vrot.lane.b32.xlu0 %v268, 59
        %v3454 = vpop.permute.xlu0 %3453
        %3455 = vrot.lane.b32.xlu0 %v269, 59
        %v3456 = vpop.permute.xlu0 %3455
        %vm3457 = vcmask 482304
        %v3458 = vsel %vm3457, %v3418, %v3420
        %v3459 = vsel %vm3457, %v3420, %v3422
        %v3460 = vsel %vm3457, %v3422, %v3424
        %v3461 = vsel %vm3457, %v3424, %v3426
        %v3462 = vsel %vm3457, %v3426, %v3428
        %v3463 = vsel %vm3457, %v3428, %v3430
        %v3464 = vsel %vm3457, %v3430, %v3432
        %v3465 = vsel %vm3457, %v3432, %v3434
        %v3466 = vsel %vm3457, %v3434, %v3436
        %v3467 = vsel %vm3457, %v3438, %v3440
        %v3468 = vsel %vm3457, %v3440, %v3442
        %v3469 = vsel %vm3457, %v3442, %v3444
        %v3470 = vsel %vm3457, %v3444, %v3446
        %v3471 = vsel %vm3457, %v3446, %v3448
        %v3472 = vsel %vm3457, %v3448, %v3450
        %v3473 = vsel %vm3457, %v3450, %v3452
        %v3474 = vsel %vm3457, %v3452, %v3454
        %v3475 = vsel %vm3457, %v3454, %v3456
        %v3487 = vsel %vm362, %v3416, 0
        %v3489 = vsel %vm366, %v3467, 0
        %v3491 = vsel %vm366, %v3468, 0
        %v3493 = vsel %vm366, %v3469, 0
        %v3495 = vsel %vm366, %v3470, 0
        %v3497 = vsel %vm366, %v3471, 0
        %v3499 = vsel %vm366, %v3472, 0
        %v3501 = vsel %vm366, %v3473, 0
        %v3503 = vsel %vm366, %v3474, 0
        %v3505 = vsel %vm366, %v3475, 0
        %v3507 = vsel %vm366, %v3456, 0
        %3509 = vmatprep.subr.mxu0 0.0
        %3510 = vmatpush1.msra.mxu0 0.0
        %3511 = vmatprep.subr.mxu0 0.0
        %3512 = vmatpush1.msra.mxu0 0.0
        %3513 = vmatprep.subr.mxu0 0.0
        %3514 = vmatpush1.msra.mxu0 0.0
        %3515 = vmatprep.subr.mxu0 0.0
        %3516 = vmatpush1.msra.mxu0 0.0
        %3517 = vmatprep.subr.mxu0 0.0
        %3518 = vmatpush1.msra.mxu0 0.0
        %3519 = vmatprep.subr.mxu0 0.0
        %3520 = vmatpush1.msra.mxu0 0.0
        %3521 = vmatprep.subr.mxu0 0.0
        %3522 = vmatpush1.msra.mxu0 0.0
        %3523 = vmatprep.subr.mxu0 0.0
        %3524 = vmatpush1.msra.mxu0 0.0
        %3525 = vmatprep.subr.mxu0 0.0
        %3526 = vmatpush1.msra.mxu0 0.0
        %3527 = vmatprep.subr.mxu0 0.0
        %3528 = vmatpush1.msra.mxu0 0.0
        %3529 = vmatprep.subr.mxu0 0.0
        %3530 = vmatpush1.msra.mxu0 0.0
        %3531 = vmatprep.subr.mxu0 0.0
        %3532 = vmatpush1.msra.mxu0 0.0
        %3533 = vmatprep.subr.mxu0 0.0
        %3534 = vmatpush1.msra.mxu0 0.0
        %3535 = vmatprep.subr.mxu0 0.0
        %3536 = vmatpush1.msra.mxu0 0.0
        %3537 = vmatprep.subr.mxu0 %v3491
        %3538 = vmatpush1.msra.mxu0 %v3489
        %3539 = vmatprep.subr.mxu0 %v3459
        %3540 = vmatpush1.msra.mxu0 %v3458
        %3541 = vmatprep.subr.mxu0 0.0
        %3542 = vmatpush2.msra.mxu0 0.0
        %3543 = vmatprep.subr.mxu0 0.0
        %3544 = vmatpush2.msra.mxu0 0.0
        %3545 = vmatprep.subr.mxu0 0.0
        %3546 = vmatpush2.msra.mxu0 0.0
        %3547 = vmatprep.subr.mxu0 0.0
        %3548 = vmatpush2.msra.mxu0 0.0
        %3549 = vmatprep.subr.mxu0 0.0
        %3550 = vmatpush2.msra.mxu0 0.0
        %3551 = vmatprep.subr.mxu0 0.0
        %3552 = vmatpush2.msra.mxu0 0.0
        %3553 = vmatprep.subr.mxu0 0.0
        %3554 = vmatpush2.msra.mxu0 0.0
        %3555 = vmatprep.subr.mxu0 0.0
        %3556 = vmatpush2.msra.mxu0 0.0
        %3557 = vmatprep.subr.mxu0 0.0
        %3558 = vmatpush2.msra.mxu0 0.0
        %3559 = vmatprep.subr.mxu0 0.0
        %3560 = vmatpush2.msra.mxu0 0.0
        %3561 = vmatprep.subr.mxu0 0.0
        %3562 = vmatpush2.msra.mxu0 0.0
        %3563 = vmatprep.subr.mxu0 0.0
        %3564 = vmatpush2.msra.mxu0 0.0
        %3565 = vmatprep.subr.mxu0 0.0
        %3566 = vmatpush2.msra.mxu0 0.0
        %3567 = vmatprep.subr.mxu0 0.0
        %3568 = vmatpush2.msra.mxu0 0.0
        %3569 = vmatprep.subr.mxu0 0.0
        %3570 = vmatpush2.msra.mxu0 0.0
        %3571 = vmatprep.subr.mxu0 0.0
        %3572 = vmatpush2.msra.mxu0 0.0
        %3573 = vmatprep.mubr.f32.mxu0 0.0
        %3574 = vmatmul.mubr.f32.gmra.mxu0 %v3487
        %v3575 = vpop.f32.mrf.mxu0
        %v3576 = vadd.f32 0.0, %v3575
        %v3577 = vpop.f32.mrf.mxu0
        %v3578 = vadd.f32 0.0, %v3577
        %3579 = vdwg.mxu0
        %3580 = vmatprep.subr.mxu0 0.0
        %3581 = vmatpush1.msra.mxu0 0.0
        %3582 = vmatprep.subr.mxu0 0.0
        %3583 = vmatpush1.msra.mxu0 0.0
        %3584 = vmatprep.subr.mxu0 0.0
        %3585 = vmatpush1.msra.mxu0 0.0
        %3586 = vmatprep.subr.mxu0 0.0
        %3587 = vmatpush1.msra.mxu0 0.0
        %3588 = vmatprep.subr.mxu0 0.0
        %3589 = vmatpush1.msra.mxu0 0.0
        %3590 = vmatprep.subr.mxu0 0.0
        %3591 = vmatpush1.msra.mxu0 0.0
        %3592 = vmatprep.subr.mxu0 0.0
        %3593 = vmatpush1.msra.mxu0 0.0
        %3594 = vmatprep.subr.mxu0 0.0
        %3595 = vmatpush1.msra.mxu0 0.0
        %3596 = vmatprep.subr.mxu0 0.0
        %3597 = vmatpush1.msra.mxu0 0.0
        %3598 = vmatprep.subr.mxu0 0.0
        %3599 = vmatpush1.msra.mxu0 0.0
        %3600 = vmatprep.subr.mxu0 0.0
        %3601 = vmatpush1.msra.mxu0 0.0
        %3602 = vmatprep.subr.mxu0 0.0
        %3603 = vmatpush1.msra.mxu0 0.0
        %3604 = vmatprep.subr.mxu0 0.0
        %3605 = vmatpush1.msra.mxu0 0.0
        %3606 = vmatprep.subr.mxu0 0.0
        %3607 = vmatpush1.msra.mxu0 0.0
        %3608 = vmatprep.subr.mxu0 %v3495
        %3609 = vmatpush1.msra.mxu0 %v3493
        %3610 = vmatprep.subr.mxu0 %v3461
        %3611 = vmatpush1.msra.mxu0 %v3460
        %3612 = vmatprep.subr.mxu0 0.0
        %3613 = vmatpush2.msra.mxu0 0.0
        %3614 = vmatprep.subr.mxu0 0.0
        %3615 = vmatpush2.msra.mxu0 0.0
        %3616 = vmatprep.subr.mxu0 0.0
        %3617 = vmatpush2.msra.mxu0 0.0
        %3618 = vmatprep.subr.mxu0 0.0
        %3619 = vmatpush2.msra.mxu0 0.0
        %3620 = vmatprep.subr.mxu0 0.0
        %3621 = vmatpush2.msra.mxu0 0.0
        %3622 = vmatprep.subr.mxu0 0.0
        %3623 = vmatpush2.msra.mxu0 0.0
        %3624 = vmatprep.subr.mxu0 0.0
        %3625 = vmatpush2.msra.mxu0 0.0
        %3626 = vmatprep.subr.mxu0 0.0
        %3627 = vmatpush2.msra.mxu0 0.0
        %3628 = vmatprep.subr.mxu0 0.0
        %3629 = vmatpush2.msra.mxu0 0.0
        %3630 = vmatprep.subr.mxu0 0.0
        %3631 = vmatpush2.msra.mxu0 0.0
        %3632 = vmatprep.subr.mxu0 0.0
        %3633 = vmatpush2.msra.mxu0 0.0
        %3634 = vmatprep.subr.mxu0 0.0
        %3635 = vmatpush2.msra.mxu0 0.0
        %3636 = vmatprep.subr.mxu0 0.0
        %3637 = vmatpush2.msra.mxu0 0.0
        %3638 = vmatprep.subr.mxu0 0.0
        %3639 = vmatpush2.msra.mxu0 0.0
        %3640 = vmatprep.subr.mxu0 0.0
        %3641 = vmatpush2.msra.mxu0 0.0
        %3642 = vmatprep.subr.mxu0 0.0
        %3643 = vmatpush2.msra.mxu0 0.0
        %3644 = vmatprep.mubr.f32.mxu0 0.0
        %3645 = vmatmul.mubr.f32.gmra.mxu0 %v3487
        %v3646 = vpop.f32.mrf.mxu0
        %v3647 = vadd.f32 0.0, %v3646
        %v3648 = vpop.f32.mrf.mxu0
        %v3649 = vadd.f32 0.0, %v3648
        %3650 = vdwg.mxu0
        %3651 = vmatprep.subr.mxu0 0.0
        %3652 = vmatpush1.msra.mxu0 0.0
        %3653 = vmatprep.subr.mxu0 0.0
        %3654 = vmatpush1.msra.mxu0 0.0
        %3655 = vmatprep.subr.mxu0 0.0
        %3656 = vmatpush1.msra.mxu0 0.0
        %3657 = vmatprep.subr.mxu0 0.0
        %3658 = vmatpush1.msra.mxu0 0.0
        %3659 = vmatprep.subr.mxu0 0.0
        %3660 = vmatpush1.msra.mxu0 0.0
        %3661 = vmatprep.subr.mxu0 0.0
        %3662 = vmatpush1.msra.mxu0 0.0
        %3663 = vmatprep.subr.mxu0 0.0
        %3664 = vmatpush1.msra.mxu0 0.0
        %3665 = vmatprep.subr.mxu0 0.0
        %3666 = vmatpush1.msra.mxu0 0.0
        %3667 = vmatprep.subr.mxu0 0.0
        %3668 = vmatpush1.msra.mxu0 0.0
        %3669 = vmatprep.subr.mxu0 0.0
        %3670 = vmatpush1.msra.mxu0 0.0
        %3671 = vmatprep.subr.mxu0 0.0
        %3672 = vmatpush1.msra.mxu0 0.0
        %3673 = vmatprep.subr.mxu0 0.0
        %3674 = vmatpush1.msra.mxu0 0.0
        %3675 = vmatprep.subr.mxu0 0.0
        %3676 = vmatpush1.msra.mxu0 0.0
        %3677 = vmatprep.subr.mxu0 0.0
        %3678 = vmatpush1.msra.mxu0 0.0
        %3679 = vmatprep.subr.mxu0 %v3499
        %3680 = vmatpush1.msra.mxu0 %v3497
        %3681 = vmatprep.subr.mxu0 %v3463
        %3682 = vmatpush1.msra.mxu0 %v3462
        %3683 = vmatprep.subr.mxu0 0.0
        %3684 = vmatpush2.msra.mxu0 0.0
        %3685 = vmatprep.subr.mxu0 0.0
        %3686 = vmatpush2.msra.mxu0 0.0
        %3687 = vmatprep.subr.mxu0 0.0
        %3688 = vmatpush2.msra.mxu0 0.0
        %3689 = vmatprep.subr.mxu0 0.0
        %3690 = vmatpush2.msra.mxu0 0.0
        %3691 = vmatprep.subr.mxu0 0.0
        %3692 = vmatpush2.msra.mxu0 0.0
        %3693 = vmatprep.subr.mxu0 0.0
        %3694 = vmatpush2.msra.mxu0 0.0
        %3695 = vmatprep.subr.mxu0 0.0
        %3696 = vmatpush2.msra.mxu0 0.0
        %3697 = vmatprep.subr.mxu0 0.0
        %3698 = vmatpush2.msra.mxu0 0.0
        %3699 = vmatprep.subr.mxu0 0.0
        %3700 = vmatpush2.msra.mxu0 0.0
        %3701 = vmatprep.subr.mxu0 0.0
        %3702 = vmatpush2.msra.mxu0 0.0
        %3703 = vmatprep.subr.mxu0 0.0
        %3704 = vmatpush2.msra.mxu0 0.0
        %3705 = vmatprep.subr.mxu0 0.0
        %3706 = vmatpush2.msra.mxu0 0.0
        %3707 = vmatprep.subr.mxu0 0.0
        %3708 = vmatpush2.msra.mxu0 0.0
        %3709 = vmatprep.subr.mxu0 0.0
        %3710 = vmatpush2.msra.mxu0 0.0
        %3711 = vmatprep.subr.mxu0 0.0
        %3712 = vmatpush2.msra.mxu0 0.0
        %3713 = vmatprep.subr.mxu0 0.0
        %3714 = vmatpush2.msra.mxu0 0.0
        %3715 = vmatprep.mubr.f32.mxu0 0.0
        %3716 = vmatmul.mubr.f32.gmra.mxu0 %v3487
        %v3717 = vpop.f32.mrf.mxu0
        %v3718 = vadd.f32 0.0, %v3717
        %v3719 = vpop.f32.mrf.mxu0
        %v3720 = vadd.f32 0.0, %v3719
        %3721 = vdwg.mxu0
        %3722 = vmatprep.subr.mxu0 0.0
        %3723 = vmatpush1.msra.mxu0 0.0
        %3724 = vmatprep.subr.mxu0 0.0
        %3725 = vmatpush1.msra.mxu0 0.0
        %3726 = vmatprep.subr.mxu0 0.0
        %3727 = vmatpush1.msra.mxu0 0.0
        %3728 = vmatprep.subr.mxu0 0.0
        %3729 = vmatpush1.msra.mxu0 0.0
        %3730 = vmatprep.subr.mxu0 0.0
        %3731 = vmatpush1.msra.mxu0 0.0
        %3732 = vmatprep.subr.mxu0 0.0
        %3733 = vmatpush1.msra.mxu0 0.0
        %3734 = vmatprep.subr.mxu0 0.0
        %3735 = vmatpush1.msra.mxu0 0.0
        %3736 = vmatprep.subr.mxu0 0.0
        %3737 = vmatpush1.msra.mxu0 0.0
        %3738 = vmatprep.subr.mxu0 0.0
        %3739 = vmatpush1.msra.mxu0 0.0
        %3740 = vmatprep.subr.mxu0 0.0
        %3741 = vmatpush1.msra.mxu0 0.0
        %3742 = vmatprep.subr.mxu0 0.0
        %3743 = vmatpush1.msra.mxu0 0.0
        %3744 = vmatprep.subr.mxu0 0.0
        %3745 = vmatpush1.msra.mxu0 0.0
        %3746 = vmatprep.subr.mxu0 0.0
        %3747 = vmatpush1.msra.mxu0 0.0
        %3748 = vmatprep.subr.mxu0 0.0
        %3749 = vmatpush1.msra.mxu0 0.0
        %3750 = vmatprep.subr.mxu0 %v3503
        %3751 = vmatpush1.msra.mxu0 %v3501
        %3752 = vmatprep.subr.mxu0 %v3465
        %3753 = vmatpush1.msra.mxu0 %v3464
        %3754 = vmatprep.subr.mxu0 0.0
        %3755 = vmatpush2.msra.mxu0 0.0
        %3756 = vmatprep.subr.mxu0 0.0
        %3757 = vmatpush2.msra.mxu0 0.0
        %3758 = vmatprep.subr.mxu0 0.0
        %3759 = vmatpush2.msra.mxu0 0.0
        %3760 = vmatprep.subr.mxu0 0.0
        %3761 = vmatpush2.msra.mxu0 0.0
        %3762 = vmatprep.subr.mxu0 0.0
        %3763 = vmatpush2.msra.mxu0 0.0
        %3764 = vmatprep.subr.mxu0 0.0
        %3765 = vmatpush2.msra.mxu0 0.0
        %3766 = vmatprep.subr.mxu0 0.0
        %3767 = vmatpush2.msra.mxu0 0.0
        %3768 = vmatprep.subr.mxu0 0.0
        %3769 = vmatpush2.msra.mxu0 0.0
        %3770 = vmatprep.subr.mxu0 0.0
        %3771 = vmatpush2.msra.mxu0 0.0
        %3772 = vmatprep.subr.mxu0 0.0
        %3773 = vmatpush2.msra.mxu0 0.0
        %3774 = vmatprep.subr.mxu0 0.0
        %3775 = vmatpush2.msra.mxu0 0.0
        %3776 = vmatprep.subr.mxu0 0.0
        %3777 = vmatpush2.msra.mxu0 0.0
        %3778 = vmatprep.subr.mxu0 0.0
        %3779 = vmatpush2.msra.mxu0 0.0
        %3780 = vmatprep.subr.mxu0 0.0
        %3781 = vmatpush2.msra.mxu0 0.0
        %3782 = vmatprep.subr.mxu0 0.0
        %3783 = vmatpush2.msra.mxu0 0.0
        %3784 = vmatprep.subr.mxu0 0.0
        %3785 = vmatpush2.msra.mxu0 0.0
        %3786 = vmatprep.mubr.f32.mxu0 0.0
        %3787 = vmatmul.mubr.f32.gmra.mxu0 %v3487
        %v3788 = vpop.f32.mrf.mxu0
        %v3789 = vadd.f32 0.0, %v3788
        %v3790 = vpop.f32.mrf.mxu0
        %v3791 = vadd.f32 0.0, %v3790
        %3792 = vdwg.mxu0
        %3793 = vmatprep.subr.mxu0 0.0
        %3794 = vmatpush1.msra.mxu0 0.0
        %3795 = vmatprep.subr.mxu0 0.0
        %3796 = vmatpush1.msra.mxu0 0.0
        %3797 = vmatprep.subr.mxu0 0.0
        %3798 = vmatpush1.msra.mxu0 0.0
        %3799 = vmatprep.subr.mxu0 0.0
        %3800 = vmatpush1.msra.mxu0 0.0
        %3801 = vmatprep.subr.mxu0 0.0
        %3802 = vmatpush1.msra.mxu0 0.0
        %3803 = vmatprep.subr.mxu0 0.0
        %3804 = vmatpush1.msra.mxu0 0.0
        %3805 = vmatprep.subr.mxu0 0.0
        %3806 = vmatpush1.msra.mxu0 0.0
        %3807 = vmatprep.subr.mxu0 0.0
        %3808 = vmatpush1.msra.mxu0 0.0
        %3809 = vmatprep.subr.mxu0 0.0
        %3810 = vmatpush1.msra.mxu0 0.0
        %3811 = vmatprep.subr.mxu0 0.0
        %3812 = vmatpush1.msra.mxu0 0.0
        %3813 = vmatprep.subr.mxu0 0.0
        %3814 = vmatpush1.msra.mxu0 0.0
        %3815 = vmatprep.subr.mxu0 0.0
        %3816 = vmatpush1.msra.mxu0 0.0
        %3817 = vmatprep.subr.mxu0 0.0
        %3818 = vmatpush1.msra.mxu0 0.0
        %3819 = vmatprep.subr.mxu0 0.0
        %3820 = vmatpush1.msra.mxu0 0.0
        %3821 = vmatprep.subr.mxu0 %v3507
        %3822 = vmatpush1.msra.mxu0 %v3505
        %3823 = vmatprep.subr.mxu0 %v3436
        %3824 = vmatpush1.msra.mxu0 %v3466
        %3825 = vmatprep.subr.mxu0 0.0
        %3826 = vmatpush2.msra.mxu0 0.0
        %3827 = vmatprep.subr.mxu0 0.0
        %3828 = vmatpush2.msra.mxu0 0.0
        %3829 = vmatprep.subr.mxu0 0.0
        %3830 = vmatpush2.msra.mxu0 0.0
        %3831 = vmatprep.subr.mxu0 0.0
        %3832 = vmatpush2.msra.mxu0 0.0
        %3833 = vmatprep.subr.mxu0 0.0
        %3834 = vmatpush2.msra.mxu0 0.0
        %3835 = vmatprep.subr.mxu0 0.0
        %3836 = vmatpush2.msra.mxu0 0.0
        %3837 = vmatprep.subr.mxu0 0.0
        %3838 = vmatpush2.msra.mxu0 0.0
        %3839 = vmatprep.subr.mxu0 0.0
        %3840 = vmatpush2.msra.mxu0 0.0
        %3841 = vmatprep.subr.mxu0 0.0
        %3842 = vmatpush2.msra.mxu0 0.0
        %3843 = vmatprep.subr.mxu0 0.0
        %3844 = vmatpush2.msra.mxu0 0.0
        %3845 = vmatprep.subr.mxu0 0.0
        %3846 = vmatpush2.msra.mxu0 0.0
        %3847 = vmatprep.subr.mxu0 0.0
        %3848 = vmatpush2.msra.mxu0 0.0
        %3849 = vmatprep.subr.mxu0 0.0
        %3850 = vmatpush2.msra.mxu0 0.0
        %3851 = vmatprep.subr.mxu0 0.0
        %3852 = vmatpush2.msra.mxu0 0.0
        %3853 = vmatprep.subr.mxu0 0.0
        %3854 = vmatpush2.msra.mxu0 0.0
        %3855 = vmatprep.subr.mxu0 0.0
        %3856 = vmatpush2.msra.mxu0 0.0
        %3857 = vmatprep.mubr.f32.mxu0 0.0
        %3858 = vmatmul.mubr.f32.gmra.mxu0 %v3487
        %v3859 = vpop.f32.mrf.mxu0
        %v3860 = vadd.f32 0.0, %v3859
        %v3861 = vpop.f32.mrf.mxu0
        %v3862 = vadd.f32 0.0, %v3861
        %3863 = vdwg.mxu0
        %v3864 = vadd.f32 %v3405, %v3576
        %v3865 = vadd.f32 %v3406, %v3578
        %v3866 = vadd.f32 %v3407, %v3647
        %v3867 = vadd.f32 %v3408, %v3649
        %v3868 = vadd.f32 %v3409, %v3718
        %v3869 = vadd.f32 %v3410, %v3720
        %v3870 = vadd.f32 %v3411, %v3789
        %v3871 = vadd.f32 %v3412, %v3791
        %v3872 = vadd.f32 %v3413, %v3860
        %v3873 = vadd.f32 %v3414, %v3862
        %s3874 = scalar_lea.vmem %s1, 64
        %v3875 = vld [vmem:[%s3874] sm:$0xff]
        %3876 = vrot.lane.b32.xlu0 %v250, 58
        %v3877 = vpop.permute.xlu0 %3876
        %3878 = vrot.lane.b32.xlu0 %v251, 58
        %v3879 = vpop.permute.xlu0 %3878
        %3880 = vrot.lane.b32.xlu0 %v252, 58
        %v3881 = vpop.permute.xlu0 %3880
        %3882 = vrot.lane.b32.xlu0 %v253, 58
        %v3883 = vpop.permute.xlu0 %3882
        %3884 = vrot.lane.b32.xlu0 %v254, 58
        %v3885 = vpop.permute.xlu0 %3884
        %3886 = vrot.lane.b32.xlu0 %v255, 58
        %v3887 = vpop.permute.xlu0 %3886
        %3888 = vrot.lane.b32.xlu0 %v256, 58
        %v3889 = vpop.permute.xlu0 %3888
        %3890 = vrot.lane.b32.xlu0 %v257, 58
        %v3891 = vpop.permute.xlu0 %3890
        %3892 = vrot.lane.b32.xlu0 %v258, 58
        %v3893 = vpop.permute.xlu0 %3892
        %3894 = vrot.lane.b32.xlu0 %v259, 58
        %v3895 = vpop.permute.xlu0 %3894
        %3896 = vrot.lane.b32.xlu0 %v260, 58
        %v3897 = vpop.permute.xlu0 %3896
        %3898 = vrot.lane.b32.xlu0 %v261, 58
        %v3899 = vpop.permute.xlu0 %3898
        %3900 = vrot.lane.b32.xlu0 %v262, 58
        %v3901 = vpop.permute.xlu0 %3900
        %3902 = vrot.lane.b32.xlu0 %v263, 58
        %v3903 = vpop.permute.xlu0 %3902
        %3904 = vrot.lane.b32.xlu0 %v264, 58
        %v3905 = vpop.permute.xlu0 %3904
        %3906 = vrot.lane.b32.xlu0 %v265, 58
        %v3907 = vpop.permute.xlu0 %3906
        %3908 = vrot.lane.b32.xlu0 %v266, 58
        %v3909 = vpop.permute.xlu0 %3908
        %3910 = vrot.lane.b32.xlu0 %v267, 58
        %v3911 = vpop.permute.xlu0 %3910
        %3912 = vrot.lane.b32.xlu0 %v268, 58
        %v3913 = vpop.permute.xlu0 %3912
        %3914 = vrot.lane.b32.xlu0 %v269, 58
        %v3915 = vpop.permute.xlu0 %3914
        %vm3916 = vcmask 474112
        %v3917 = vsel %vm3916, %v3877, %v3879
        %v3918 = vsel %vm3916, %v3879, %v3881
        %v3919 = vsel %vm3916, %v3881, %v3883
        %v3920 = vsel %vm3916, %v3883, %v3885
        %v3921 = vsel %vm3916, %v3885, %v3887
        %v3922 = vsel %vm3916, %v3887, %v3889
        %v3923 = vsel %vm3916, %v3889, %v3891
        %v3924 = vsel %vm3916, %v3891, %v3893
        %v3925 = vsel %vm3916, %v3893, %v3895
        %v3926 = vsel %vm3916, %v3897, %v3899
        %v3927 = vsel %vm3916, %v3899, %v3901
        %v3928 = vsel %vm3916, %v3901, %v3903
        %v3929 = vsel %vm3916, %v3903, %v3905
        %v3930 = vsel %vm3916, %v3905, %v3907
        %v3931 = vsel %vm3916, %v3907, %v3909
        %v3932 = vsel %vm3916, %v3909, %v3911
        %v3933 = vsel %vm3916, %v3911, %v3913
        %v3934 = vsel %vm3916, %v3913, %v3915
        %v3946 = vsel %vm362, %v3875, 0
        %v3948 = vsel %vm366, %v3926, 0
        %v3950 = vsel %vm366, %v3927, 0
        %v3952 = vsel %vm366, %v3928, 0
        %v3954 = vsel %vm366, %v3929, 0
        %v3956 = vsel %vm366, %v3930, 0
        %v3958 = vsel %vm366, %v3931, 0
        %v3960 = vsel %vm366, %v3932, 0
        %v3962 = vsel %vm366, %v3933, 0
        %v3964 = vsel %vm366, %v3934, 0
        %v3966 = vsel %vm366, %v3915, 0
        %3968 = vmatprep.subr.mxu0 0.0
        %3969 = vmatpush1.msra.mxu0 0.0
        %3970 = vmatprep.subr.mxu0 0.0
        %3971 = vmatpush1.msra.mxu0 0.0
        %3972 = vmatprep.subr.mxu0 0.0
        %3973 = vmatpush1.msra.mxu0 0.0
        %3974 = vmatprep.subr.mxu0 0.0
        %3975 = vmatpush1.msra.mxu0 0.0
        %3976 = vmatprep.subr.mxu0 0.0
        %3977 = vmatpush1.msra.mxu0 0.0
        %3978 = vmatprep.subr.mxu0 0.0
        %3979 = vmatpush1.msra.mxu0 0.0
        %3980 = vmatprep.subr.mxu0 0.0
        %3981 = vmatpush1.msra.mxu0 0.0
        %3982 = vmatprep.subr.mxu0 0.0
        %3983 = vmatpush1.msra.mxu0 0.0
        %3984 = vmatprep.subr.mxu0 0.0
        %3985 = vmatpush1.msra.mxu0 0.0
        %3986 = vmatprep.subr.mxu0 0.0
        %3987 = vmatpush1.msra.mxu0 0.0
        %3988 = vmatprep.subr.mxu0 0.0
        %3989 = vmatpush1.msra.mxu0 0.0
        %3990 = vmatprep.subr.mxu0 0.0
        %3991 = vmatpush1.msra.mxu0 0.0
        %3992 = vmatprep.subr.mxu0 0.0
        %3993 = vmatpush1.msra.mxu0 0.0
        %3994 = vmatprep.subr.mxu0 0.0
        %3995 = vmatpush1.msra.mxu0 0.0
        %3996 = vmatprep.subr.mxu0 %v3950
        %3997 = vmatpush1.msra.mxu0 %v3948
        %3998 = vmatprep.subr.mxu0 %v3918
        %3999 = vmatpush1.msra.mxu0 %v3917
        %4000 = vmatprep.subr.mxu0 0.0
        %4001 = vmatpush2.msra.mxu0 0.0
        %4002 = vmatprep.subr.mxu0 0.0
        %4003 = vmatpush2.msra.mxu0 0.0
        %4004 = vmatprep.subr.mxu0 0.0
        %4005 = vmatpush2.msra.mxu0 0.0
        %4006 = vmatprep.subr.mxu0 0.0
        %4007 = vmatpush2.msra.mxu0 0.0
        %4008 = vmatprep.subr.mxu0 0.0
        %4009 = vmatpush2.msra.mxu0 0.0
        %4010 = vmatprep.subr.mxu0 0.0
        %4011 = vmatpush2.msra.mxu0 0.0
        %4012 = vmatprep.subr.mxu0 0.0
        %4013 = vmatpush2.msra.mxu0 0.0
        %4014 = vmatprep.subr.mxu0 0.0
        %4015 = vmatpush2.msra.mxu0 0.0
        %4016 = vmatprep.subr.mxu0 0.0
        %4017 = vmatpush2.msra.mxu0 0.0
        %4018 = vmatprep.subr.mxu0 0.0
        %4019 = vmatpush2.msra.mxu0 0.0
        %4020 = vmatprep.subr.mxu0 0.0
        %4021 = vmatpush2.msra.mxu0 0.0
        %4022 = vmatprep.subr.mxu0 0.0
        %4023 = vmatpush2.msra.mxu0 0.0
        %4024 = vmatprep.subr.mxu0 0.0
        %4025 = vmatpush2.msra.mxu0 0.0
        %4026 = vmatprep.subr.mxu0 0.0
        %4027 = vmatpush2.msra.mxu0 0.0
        %4028 = vmatprep.subr.mxu0 0.0
        %4029 = vmatpush2.msra.mxu0 0.0
        %4030 = vmatprep.subr.mxu0 0.0
        %4031 = vmatpush2.msra.mxu0 0.0
        %4032 = vmatprep.mubr.f32.mxu0 0.0
        %4033 = vmatmul.mubr.f32.gmra.mxu0 %v3946
        %v4034 = vpop.f32.mrf.mxu0
        %v4035 = vadd.f32 0.0, %v4034
        %v4036 = vpop.f32.mrf.mxu0
        %v4037 = vadd.f32 0.0, %v4036
        %4038 = vdwg.mxu0
        %4039 = vmatprep.subr.mxu0 0.0
        %4040 = vmatpush1.msra.mxu0 0.0
        %4041 = vmatprep.subr.mxu0 0.0
        %4042 = vmatpush1.msra.mxu0 0.0
        %4043 = vmatprep.subr.mxu0 0.0
        %4044 = vmatpush1.msra.mxu0 0.0
        %4045 = vmatprep.subr.mxu0 0.0
        %4046 = vmatpush1.msra.mxu0 0.0
        %4047 = vmatprep.subr.mxu0 0.0
        %4048 = vmatpush1.msra.mxu0 0.0
        %4049 = vmatprep.subr.mxu0 0.0
        %4050 = vmatpush1.msra.mxu0 0.0
        %4051 = vmatprep.subr.mxu0 0.0
        %4052 = vmatpush1.msra.mxu0 0.0
        %4053 = vmatprep.subr.mxu0 0.0
        %4054 = vmatpush1.msra.mxu0 0.0
        %4055 = vmatprep.subr.mxu0 0.0
        %4056 = vmatpush1.msra.mxu0 0.0
        %4057 = vmatprep.subr.mxu0 0.0
        %4058 = vmatpush1.msra.mxu0 0.0
        %4059 = vmatprep.subr.mxu0 0.0
        %4060 = vmatpush1.msra.mxu0 0.0
        %4061 = vmatprep.subr.mxu0 0.0
        %4062 = vmatpush1.msra.mxu0 0.0
        %4063 = vmatprep.subr.mxu0 0.0
        %4064 = vmatpush1.msra.mxu0 0.0
        %4065 = vmatprep.subr.mxu0 0.0
        %4066 = vmatpush1.msra.mxu0 0.0
        %4067 = vmatprep.subr.mxu0 %v3954
        %4068 = vmatpush1.msra.mxu0 %v3952
        %4069 = vmatprep.subr.mxu0 %v3920
        %4070 = vmatpush1.msra.mxu0 %v3919
        %4071 = vmatprep.subr.mxu0 0.0
        %4072 = vmatpush2.msra.mxu0 0.0
        %4073 = vmatprep.subr.mxu0 0.0
        %4074 = vmatpush2.msra.mxu0 0.0
        %4075 = vmatprep.subr.mxu0 0.0
        %4076 = vmatpush2.msra.mxu0 0.0
        %4077 = vmatprep.subr.mxu0 0.0
        %4078 = vmatpush2.msra.mxu0 0.0
        %4079 = vmatprep.subr.mxu0 0.0
        %4080 = vmatpush2.msra.mxu0 0.0
        %4081 = vmatprep.subr.mxu0 0.0
        %4082 = vmatpush2.msra.mxu0 0.0
        %4083 = vmatprep.subr.mxu0 0.0
        %4084 = vmatpush2.msra.mxu0 0.0
        %4085 = vmatprep.subr.mxu0 0.0
        %4086 = vmatpush2.msra.mxu0 0.0
        %4087 = vmatprep.subr.mxu0 0.0
        %4088 = vmatpush2.msra.mxu0 0.0
        %4089 = vmatprep.subr.mxu0 0.0
        %4090 = vmatpush2.msra.mxu0 0.0
        %4091 = vmatprep.subr.mxu0 0.0
        %4092 = vmatpush2.msra.mxu0 0.0
        %4093 = vmatprep.subr.mxu0 0.0
        %4094 = vmatpush2.msra.mxu0 0.0
        %4095 = vmatprep.subr.mxu0 0.0
        %4096 = vmatpush2.msra.mxu0 0.0
        %4097 = vmatprep.subr.mxu0 0.0
        %4098 = vmatpush2.msra.mxu0 0.0
        %4099 = vmatprep.subr.mxu0 0.0
        %4100 = vmatpush2.msra.mxu0 0.0
        %4101 = vmatprep.subr.mxu0 0.0
        %4102 = vmatpush2.msra.mxu0 0.0
        %4103 = vmatprep.mubr.f32.mxu0 0.0
        %4104 = vmatmul.mubr.f32.gmra.mxu0 %v3946
        %v4105 = vpop.f32.mrf.mxu0
        %v4106 = vadd.f32 0.0, %v4105
        %v4107 = vpop.f32.mrf.mxu0
        %v4108 = vadd.f32 0.0, %v4107
        %4109 = vdwg.mxu0
        %4110 = vmatprep.subr.mxu0 0.0
        %4111 = vmatpush1.msra.mxu0 0.0
        %4112 = vmatprep.subr.mxu0 0.0
        %4113 = vmatpush1.msra.mxu0 0.0
        %4114 = vmatprep.subr.mxu0 0.0
        %4115 = vmatpush1.msra.mxu0 0.0
        %4116 = vmatprep.subr.mxu0 0.0
        %4117 = vmatpush1.msra.mxu0 0.0
        %4118 = vmatprep.subr.mxu0 0.0
        %4119 = vmatpush1.msra.mxu0 0.0
        %4120 = vmatprep.subr.mxu0 0.0
        %4121 = vmatpush1.msra.mxu0 0.0
        %4122 = vmatprep.subr.mxu0 0.0
        %4123 = vmatpush1.msra.mxu0 0.0
        %4124 = vmatprep.subr.mxu0 0.0
        %4125 = vmatpush1.msra.mxu0 0.0
        %4126 = vmatprep.subr.mxu0 0.0
        %4127 = vmatpush1.msra.mxu0 0.0
        %4128 = vmatprep.subr.mxu0 0.0
        %4129 = vmatpush1.msra.mxu0 0.0
        %4130 = vmatprep.subr.mxu0 0.0
        %4131 = vmatpush1.msra.mxu0 0.0
        %4132 = vmatprep.subr.mxu0 0.0
        %4133 = vmatpush1.msra.mxu0 0.0
        %4134 = vmatprep.subr.mxu0 0.0
        %4135 = vmatpush1.msra.mxu0 0.0
        %4136 = vmatprep.subr.mxu0 0.0
        %4137 = vmatpush1.msra.mxu0 0.0
        %4138 = vmatprep.subr.mxu0 %v3958
        %4139 = vmatpush1.msra.mxu0 %v3956
        %4140 = vmatprep.subr.mxu0 %v3922
        %4141 = vmatpush1.msra.mxu0 %v3921
        %4142 = vmatprep.subr.mxu0 0.0
        %4143 = vmatpush2.msra.mxu0 0.0
        %4144 = vmatprep.subr.mxu0 0.0
        %4145 = vmatpush2.msra.mxu0 0.0
        %4146 = vmatprep.subr.mxu0 0.0
        %4147 = vmatpush2.msra.mxu0 0.0
        %4148 = vmatprep.subr.mxu0 0.0
        %4149 = vmatpush2.msra.mxu0 0.0
        %4150 = vmatprep.subr.mxu0 0.0
        %4151 = vmatpush2.msra.mxu0 0.0
        %4152 = vmatprep.subr.mxu0 0.0
        %4153 = vmatpush2.msra.mxu0 0.0
        %4154 = vmatprep.subr.mxu0 0.0
        %4155 = vmatpush2.msra.mxu0 0.0
        %4156 = vmatprep.subr.mxu0 0.0
        %4157 = vmatpush2.msra.mxu0 0.0
        %4158 = vmatprep.subr.mxu0 0.0
        %4159 = vmatpush2.msra.mxu0 0.0
        %4160 = vmatprep.subr.mxu0 0.0
        %4161 = vmatpush2.msra.mxu0 0.0
        %4162 = vmatprep.subr.mxu0 0.0
        %4163 = vmatpush2.msra.mxu0 0.0
        %4164 = vmatprep.subr.mxu0 0.0
        %4165 = vmatpush2.msra.mxu0 0.0
        %4166 = vmatprep.subr.mxu0 0.0
        %4167 = vmatpush2.msra.mxu0 0.0
        %4168 = vmatprep.subr.mxu0 0.0
        %4169 = vmatpush2.msra.mxu0 0.0
        %4170 = vmatprep.subr.mxu0 0.0
        %4171 = vmatpush2.msra.mxu0 0.0
        %4172 = vmatprep.subr.mxu0 0.0
        %4173 = vmatpush2.msra.mxu0 0.0
        %4174 = vmatprep.mubr.f32.mxu0 0.0
        %4175 = vmatmul.mubr.f32.gmra.mxu0 %v3946
        %v4176 = vpop.f32.mrf.mxu0
        %v4177 = vadd.f32 0.0, %v4176
        %v4178 = vpop.f32.mrf.mxu0
        %v4179 = vadd.f32 0.0, %v4178
        %4180 = vdwg.mxu0
        %4181 = vmatprep.subr.mxu0 0.0
        %4182 = vmatpush1.msra.mxu0 0.0
        %4183 = vmatprep.subr.mxu0 0.0
        %4184 = vmatpush1.msra.mxu0 0.0
        %4185 = vmatprep.subr.mxu0 0.0
        %4186 = vmatpush1.msra.mxu0 0.0
        %4187 = vmatprep.subr.mxu0 0.0
        %4188 = vmatpush1.msra.mxu0 0.0
        %4189 = vmatprep.subr.mxu0 0.0
        %4190 = vmatpush1.msra.mxu0 0.0
        %4191 = vmatprep.subr.mxu0 0.0
        %4192 = vmatpush1.msra.mxu0 0.0
        %4193 = vmatprep.subr.mxu0 0.0
        %4194 = vmatpush1.msra.mxu0 0.0
        %4195 = vmatprep.subr.mxu0 0.0
        %4196 = vmatpush1.msra.mxu0 0.0
        %4197 = vmatprep.subr.mxu0 0.0
        %4198 = vmatpush1.msra.mxu0 0.0
        %4199 = vmatprep.subr.mxu0 0.0
        %4200 = vmatpush1.msra.mxu0 0.0
        %4201 = vmatprep.subr.mxu0 0.0
        %4202 = vmatpush1.msra.mxu0 0.0
        %4203 = vmatprep.subr.mxu0 0.0
        %4204 = vmatpush1.msra.mxu0 0.0
        %4205 = vmatprep.subr.mxu0 0.0
        %4206 = vmatpush1.msra.mxu0 0.0
        %4207 = vmatprep.subr.mxu0 0.0
        %4208 = vmatpush1.msra.mxu0 0.0
        %4209 = vmatprep.subr.mxu0 %v3962
        %4210 = vmatpush1.msra.mxu0 %v3960
        %4211 = vmatprep.subr.mxu0 %v3924
        %4212 = vmatpush1.msra.mxu0 %v3923
        %4213 = vmatprep.subr.mxu0 0.0
        %4214 = vmatpush2.msra.mxu0 0.0
        %4215 = vmatprep.subr.mxu0 0.0
        %4216 = vmatpush2.msra.mxu0 0.0
        %4217 = vmatprep.subr.mxu0 0.0
        %4218 = vmatpush2.msra.mxu0 0.0
        %4219 = vmatprep.subr.mxu0 0.0
        %4220 = vmatpush2.msra.mxu0 0.0
        %4221 = vmatprep.subr.mxu0 0.0
        %4222 = vmatpush2.msra.mxu0 0.0
        %4223 = vmatprep.subr.mxu0 0.0
        %4224 = vmatpush2.msra.mxu0 0.0
        %4225 = vmatprep.subr.mxu0 0.0
        %4226 = vmatpush2.msra.mxu0 0.0
        %4227 = vmatprep.subr.mxu0 0.0
        %4228 = vmatpush2.msra.mxu0 0.0
        %4229 = vmatprep.subr.mxu0 0.0
        %4230 = vmatpush2.msra.mxu0 0.0
        %4231 = vmatprep.subr.mxu0 0.0
        %4232 = vmatpush2.msra.mxu0 0.0
        %4233 = vmatprep.subr.mxu0 0.0
        %4234 = vmatpush2.msra.mxu0 0.0
        %4235 = vmatprep.subr.mxu0 0.0
        %4236 = vmatpush2.msra.mxu0 0.0
        %4237 = vmatprep.subr.mxu0 0.0
        %4238 = vmatpush2.msra.mxu0 0.0
        %4239 = vmatprep.subr.mxu0 0.0
        %4240 = vmatpush2.msra.mxu0 0.0
        %4241 = vmatprep.subr.mxu0 0.0
        %4242 = vmatpush2.msra.mxu0 0.0
        %4243 = vmatprep.subr.mxu0 0.0
        %4244 = vmatpush2.msra.mxu0 0.0
        %4245 = vmatprep.mubr.f32.mxu0 0.0
        %4246 = vmatmul.mubr.f32.gmra.mxu0 %v3946
        %v4247 = vpop.f32.mrf.mxu0
        %v4248 = vadd.f32 0.0, %v4247
        %v4249 = vpop.f32.mrf.mxu0
        %v4250 = vadd.f32 0.0, %v4249
        %4251 = vdwg.mxu0
        %4252 = vmatprep.subr.mxu0 0.0
        %4253 = vmatpush1.msra.mxu0 0.0
        %4254 = vmatprep.subr.mxu0 0.0
        %4255 = vmatpush1.msra.mxu0 0.0
        %4256 = vmatprep.subr.mxu0 0.0
        %4257 = vmatpush1.msra.mxu0 0.0
        %4258 = vmatprep.subr.mxu0 0.0
        %4259 = vmatpush1.msra.mxu0 0.0
        %4260 = vmatprep.subr.mxu0 0.0
        %4261 = vmatpush1.msra.mxu0 0.0
        %4262 = vmatprep.subr.mxu0 0.0
        %4263 = vmatpush1.msra.mxu0 0.0
        %4264 = vmatprep.subr.mxu0 0.0
        %4265 = vmatpush1.msra.mxu0 0.0
        %4266 = vmatprep.subr.mxu0 0.0
        %4267 = vmatpush1.msra.mxu0 0.0
        %4268 = vmatprep.subr.mxu0 0.0
        %4269 = vmatpush1.msra.mxu0 0.0
        %4270 = vmatprep.subr.mxu0 0.0
        %4271 = vmatpush1.msra.mxu0 0.0
        %4272 = vmatprep.subr.mxu0 0.0
        %4273 = vmatpush1.msra.mxu0 0.0
        %4274 = vmatprep.subr.mxu0 0.0
        %4275 = vmatpush1.msra.mxu0 0.0
        %4276 = vmatprep.subr.mxu0 0.0
        %4277 = vmatpush1.msra.mxu0 0.0
        %4278 = vmatprep.subr.mxu0 0.0
        %4279 = vmatpush1.msra.mxu0 0.0
        %4280 = vmatprep.subr.mxu0 %v3966
        %4281 = vmatpush1.msra.mxu0 %v3964
        %4282 = vmatprep.subr.mxu0 %v3895
        %4283 = vmatpush1.msra.mxu0 %v3925
        %4284 = vmatprep.subr.mxu0 0.0
        %4285 = vmatpush2.msra.mxu0 0.0
        %4286 = vmatprep.subr.mxu0 0.0
        %4287 = vmatpush2.msra.mxu0 0.0
        %4288 = vmatprep.subr.mxu0 0.0
        %4289 = vmatpush2.msra.mxu0 0.0
        %4290 = vmatprep.subr.mxu0 0.0
        %4291 = vmatpush2.msra.mxu0 0.0
        %4292 = vmatprep.subr.mxu0 0.0
        %4293 = vmatpush2.msra.mxu0 0.0
        %4294 = vmatprep.subr.mxu0 0.0
        %4295 = vmatpush2.msra.mxu0 0.0
        %4296 = vmatprep.subr.mxu0 0.0
        %4297 = vmatpush2.msra.mxu0 0.0
        %4298 = vmatprep.subr.mxu0 0.0
        %4299 = vmatpush2.msra.mxu0 0.0
        %4300 = vmatprep.subr.mxu0 0.0
        %4301 = vmatpush2.msra.mxu0 0.0
        %4302 = vmatprep.subr.mxu0 0.0
        %4303 = vmatpush2.msra.mxu0 0.0
        %4304 = vmatprep.subr.mxu0 0.0
        %4305 = vmatpush2.msra.mxu0 0.0
        %4306 = vmatprep.subr.mxu0 0.0
        %4307 = vmatpush2.msra.mxu0 0.0
        %4308 = vmatprep.subr.mxu0 0.0
        %4309 = vmatpush2.msra.mxu0 0.0
        %4310 = vmatprep.subr.mxu0 0.0
        %4311 = vmatpush2.msra.mxu0 0.0
        %4312 = vmatprep.subr.mxu0 0.0
        %4313 = vmatpush2.msra.mxu0 0.0
        %4314 = vmatprep.subr.mxu0 0.0
        %4315 = vmatpush2.msra.mxu0 0.0
        %4316 = vmatprep.mubr.f32.mxu0 0.0
        %4317 = vmatmul.mubr.f32.gmra.mxu0 %v3946
        %v4318 = vpop.f32.mrf.mxu0
        %v4319 = vadd.f32 0.0, %v4318
        %v4320 = vpop.f32.mrf.mxu0
        %v4321 = vadd.f32 0.0, %v4320
        %4322 = vdwg.mxu0
        %v4323 = vadd.f32 %v3864, %v4035
        %v4324 = vadd.f32 %v3865, %v4037
        %v4325 = vadd.f32 %v3866, %v4106
        %v4326 = vadd.f32 %v3867, %v4108
        %v4327 = vadd.f32 %v3868, %v4177
        %v4328 = vadd.f32 %v3869, %v4179
        %v4329 = vadd.f32 %v3870, %v4248
        %v4330 = vadd.f32 %v3871, %v4250
        %v4331 = vadd.f32 %v3872, %v4319
        %v4332 = vadd.f32 %v3873, %v4321
        %v4333 = vld [vmem:[%s2] sm:$0xff]
        %4335 = vset.pattern.permute.xlu0 0
        %4336 = vperm.xlu0 %4335, %v4333
        %v4337 = vpop.permute.xlu0 %4336
        %v4339 = vadd.f32 %v4323, %v4337
        %v4340 = vadd.f32 %v4324, %v4337
        %v4341 = vadd.f32 %v4325, %v4337
        %v4342 = vadd.f32 %v4326, %v4337
        %v4343 = vadd.f32 %v4327, %v4337
        %v4344 = vadd.f32 %v4328, %v4337
        %v4345 = vadd.f32 %v4329, %v4337
        %v4346 = vadd.f32 %v4330, %v4337
        %v4347 = vadd.f32 %v4331, %v4337
        %v4348 = vadd.f32 %v4332, %v4337
        %v4349 = vmax.f32 %v4339, 0.0
        %v4350 = vmax.f32 %v4340, 0.0
        %v4351 = vmax.f32 %v4341, 0.0
        %v4352 = vmax.f32 %v4342, 0.0
        %v4353 = vmax.f32 %v4343, 0.0
        %v4354 = vmax.f32 %v4344, 0.0
        %v4355 = vmax.f32 %v4345, 0.0
        %v4356 = vmax.f32 %v4346, 0.0
        %v4357 = vmax.f32 %v4347, 0.0
        %v4358 = vmax.f32 %v4348, 0.0
        %v4359 = vld [vmem:[%s5] sm:$0xff]
        %v4360 = vld [vmem:[%s5 + $0x8] sm:$0x3]
        %v4363 = vlaneseq
        %v4364 = vshrl.u32 %v4363, 7
        %v4365 = vsub.s32 0, %v4364
        %v4366 = vrot.slane %v4359, %v4365
        %v4367 = vlaneseq
        %v4368 = vshrl.u32 %v4367, 7
        %v4369 = vsub.s32 1, %v4368
        %v4370 = vrot.slane %v4359, %v4369
        %v4371 = vlaneseq
        %v4372 = vshrl.u32 %v4371, 7
        %v4373 = vsub.s32 2, %v4372
        %v4374 = vrot.slane %v4359, %v4373
        %v4375 = vlaneseq
        %v4376 = vshrl.u32 %v4375, 7
        %v4377 = vsub.s32 3, %v4376
        %v4378 = vrot.slane %v4359, %v4377
        %v4379 = vlaneseq
        %v4380 = vshrl.u32 %v4379, 7
        %v4381 = vsub.s32 4, %v4380
        %v4382 = vrot.slane %v4359, %v4381
        %v4383 = vlaneseq
        %v4384 = vshrl.u32 %v4383, 7
        %v4385 = vsub.s32 5, %v4384
        %v4386 = vrot.slane %v4359, %v4385
        %v4387 = vlaneseq
        %v4388 = vshrl.u32 %v4387, 7
        %v4389 = vsub.s32 6, %v4388
        %v4390 = vrot.slane %v4359, %v4389
        %v4391 = vlaneseq
        %v4392 = vshrl.u32 %v4391, 7
        %v4393 = vsub.s32 7, %v4392
        %v4394 = vrot.slane %v4359, %v4393
        %v4395 = vlaneseq
        %v4396 = vshrl.u32 %v4395, 7
        %v4397 = vsub.s32 0, %v4396
        %v4398 = vrot.slane %v4360, %v4397
        %v4399 = vlaneseq
        %v4400 = vshrl.u32 %v4399, 7
        %v4401 = vsub.s32 1, %v4400
        %v4402 = vrot.slane %v4360, %v4401
        %v4413 = vmul.f32 %v4349, %v4366
        %v4414 = vmul.f32 %v4350, %v4370
        %v4415 = vmul.f32 %v4351, %v4374
        %v4416 = vmul.f32 %v4352, %v4378
        %v4417 = vmul.f32 %v4353, %v4382
        %v4418 = vmul.f32 %v4354, %v4386
        %v4419 = vmul.f32 %v4355, %v4390
        %v4420 = vmul.f32 %v4356, %v4394
        %v4421 = vmul.f32 %v4357, %v4398
        %v4422 = vmul.f32 %v4358, %v4402
        %vm4423 = vcmask 285696
        %4424 = vst.msk [vmem:[#allocation2] sm:$0xff] %vm4423, 0.0
        %vm4425 = vcmask 605496
        %4426 = vst.msk [vmem:[#allocation2 + $0x48] sm:$0xff] %vm4425, 0.0
        %4437 = vrot.lane.b32.xlu0 %v4413, 35
        %v4438 = vpop.permute.xlu0 %4437
        %4439 = vrot.lane.b32.xlu0 %v4414, 35
        %v4440 = vpop.permute.xlu0 %4439
        %4441 = vrot.lane.b32.xlu0 %v4415, 35
        %v4442 = vpop.permute.xlu0 %4441
        %4443 = vrot.lane.b32.xlu0 %v4416, 35
        %v4444 = vpop.permute.xlu0 %4443
        %4445 = vrot.lane.b32.xlu0 %v4417, 35
        %v4446 = vpop.permute.xlu0 %4445
        %4447 = vrot.lane.b32.xlu0 %v4418, 35
        %v4448 = vpop.permute.xlu0 %4447
        %4449 = vrot.lane.b32.xlu0 %v4419, 35
        %v4450 = vpop.permute.xlu0 %4449
        %4451 = vrot.lane.b32.xlu0 %v4420, 35
        %v4452 = vpop.permute.xlu0 %4451
        %4453 = vrot.lane.b32.xlu0 %v4421, 35
        %v4454 = vpop.permute.xlu0 %4453
        %4455 = vrot.lane.b32.xlu0 %v4422, 35
        %v4456 = vpop.permute.xlu0 %4455
        %v4457 = vsel %vm4423, %v4438, %v4440
        %v4458 = vsel %vm4423, %v4440, %v4442
        %v4459 = vsel %vm4423, %v4442, %v4444
        %v4460 = vsel %vm4423, %v4444, %v4446
        %v4461 = vsel %vm4423, %v4446, %v4448
        %v4462 = vsel %vm4423, %v4448, %v4450
        %v4463 = vsel %vm4423, %v4450, %v4452
        %v4464 = vsel %vm4423, %v4452, %v4454
        %v4465 = vsel %vm4423, %v4454, %v4456
        %vm4476 = vcmask 1047832
        %4477 = vst.msk [vmem:[#allocation2] sm:$0xff] %vm4476, %v4438
        %4478 = vst [vmem:[#allocation2 + $0x8] sm:$0xff] %v4457
        %4479 = vst [vmem:[#allocation2 + $0x10] sm:$0xff] %v4458
        %4480 = vst [vmem:[#allocation2 + $0x18] sm:$0xff] %v4459
        %4481 = vst [vmem:[#allocation2 + $0x20] sm:$0xff] %v4460
        %4482 = vst [vmem:[#allocation2 + $0x28] sm:$0xff] %v4461
        %4483 = vst [vmem:[#allocation2 + $0x30] sm:$0xff] %v4462
        %4484 = vst [vmem:[#allocation2 + $0x38] sm:$0xff] %v4463
        %4485 = vst [vmem:[#allocation2 + $0x40] sm:$0xff] %v4464
        %vm4486 = vcmask 318464
        %4487 = vst.msk [vmem:[#allocation2 + $0x48] sm:$0xff] %vm4486, %v4465
        %v4488 = vld [vmem:[#allocation2] sm:$0xff]
        %v4489 = vld [vmem:[#allocation2 + $0x8] sm:$0xff]
        %v4490 = vld [vmem:[#allocation2 + $0x10] sm:$0xff]
        %v4491 = vld [vmem:[#allocation2 + $0x18] sm:$0xff]
        %v4492 = vld [vmem:[#allocation2 + $0x20] sm:$0xff]
        %v4493 = vld [vmem:[#allocation2 + $0x28] sm:$0xff]
        %v4494 = vld [vmem:[#allocation2 + $0x30] sm:$0xff]
        %v4495 = vld [vmem:[#allocation2 + $0x38] sm:$0xff]
        %v4496 = vld [vmem:[#allocation2 + $0x40] sm:$0xff]
        %v4497 = vld [vmem:[#allocation2 + $0x48] sm:$0xff]
        %v4498 = vld [vmem:[%s3] sm:$0xff]
        %s4499 = scalar_lea.vmem %s3, 8
        %v4500 = vld [vmem:[%s4499] sm:$0xff]
        %4511 = vrot.lane.b32.xlu0 %v4488, 127
        %v4512 = vpop.permute.xlu0 %4511
        %4513 = vrot.lane.b32.xlu0 %v4489, 127
        %v4514 = vpop.permute.xlu0 %4513
        %4515 = vrot.lane.b32.xlu0 %v4490, 127
        %v4516 = vpop.permute.xlu0 %4515
        %4517 = vrot.lane.b32.xlu0 %v4491, 127
        %v4518 = vpop.permute.xlu0 %4517
        %4519 = vrot.lane.b32.xlu0 %v4492, 127
        %v4520 = vpop.permute.xlu0 %4519
        %4521 = vrot.lane.b32.xlu0 %v4493, 127
        %v4522 = vpop.permute.xlu0 %4521
        %4523 = vrot.lane.b32.xlu0 %v4494, 127
        %v4524 = vpop.permute.xlu0 %4523
        %4525 = vrot.lane.b32.xlu0 %v4495, 127
        %v4526 = vpop.permute.xlu0 %4525
        %4527 = vrot.lane.b32.xlu0 %v4496, 127
        %v4528 = vpop.permute.xlu0 %4527
        %4529 = vrot.lane.b32.xlu0 %v4497, 127
        %v4530 = vpop.permute.xlu0 %4529
        %v4531 = vsel %vm333, %v4512, %v4514
        %v4532 = vsel %vm333, %v4514, %v4516
        %v4533 = vsel %vm333, %v4516, %v4518
        %v4534 = vsel %vm333, %v4518, %v4520
        %v4535 = vsel %vm333, %v4520, %v4522
        %v4536 = vsel %vm333, %v4522, %v4524
        %v4537 = vsel %vm333, %v4524, %v4526
        %v4538 = vsel %vm333, %v4526, %v4528
        %v4539 = vsel %vm333, %v4528, %v4530
        %vm4550 = vcmask 64512
        %v4552 = vsel %vm4550, %v4500, 0
        %4554 = vmatprep.subr.mxu0 0.0
        %4555 = vmatpush1.msra.mxu0 0.0
        %4556 = vmatprep.subr.mxu0 0.0
        %4557 = vmatpush1.msra.mxu0 0.0
        %4558 = vmatprep.subr.mxu0 0.0
        %4559 = vmatpush1.msra.mxu0 0.0
        %4560 = vmatprep.subr.mxu0 0.0
        %4561 = vmatpush1.msra.mxu0 0.0
        %4562 = vmatprep.subr.mxu0 0.0
        %4563 = vmatpush1.msra.mxu0 0.0
        %4564 = vmatprep.subr.mxu0 0.0
        %4565 = vmatpush1.msra.mxu0 0.0
        %4566 = vmatprep.subr.mxu0 0.0
        %4567 = vmatpush1.msra.mxu0 0.0
        %4568 = vmatprep.subr.mxu0 0.0
        %4569 = vmatpush1.msra.mxu0 0.0
        %4570 = vmatprep.subr.mxu0 0.0
        %4571 = vmatpush1.msra.mxu0 0.0
        %4572 = vmatprep.subr.mxu0 0.0
        %4573 = vmatpush1.msra.mxu0 0.0
        %4574 = vmatprep.subr.mxu0 0.0
        %4575 = vmatpush1.msra.mxu0 0.0
        %4576 = vmatprep.subr.mxu0 0.0
        %4577 = vmatpush1.msra.mxu0 0.0
        %4578 = vmatprep.subr.mxu0 0.0
        %4579 = vmatpush1.msra.mxu0 0.0
        %4580 = vmatprep.subr.mxu0 0.0
        %4581 = vmatpush1.msra.mxu0 0.0
        %4582 = vmatprep.subr.mxu0 0.0
        %4583 = vmatpush1.msra.mxu0 0.0
        %4584 = vmatprep.subr.mxu0 %v4532
        %4585 = vmatpush1.msra.mxu0 %v4531
        %4586 = vmatprep.subr.mxu0 0.0
        %4587 = vmatpush2.msra.mxu0 0.0
        %4588 = vmatprep.subr.mxu0 0.0
        %4589 = vmatpush2.msra.mxu0 0.0
        %4590 = vmatprep.subr.mxu0 0.0
        %4591 = vmatpush2.msra.mxu0 0.0
        %4592 = vmatprep.subr.mxu0 0.0
        %4593 = vmatpush2.msra.mxu0 0.0
        %4594 = vmatprep.subr.mxu0 0.0
        %4595 = vmatpush2.msra.mxu0 0.0
        %4596 = vmatprep.subr.mxu0 0.0
        %4597 = vmatpush2.msra.mxu0 0.0
        %4598 = vmatprep.subr.mxu0 0.0
        %4599 = vmatpush2.msra.mxu0 0.0
        %4600 = vmatprep.subr.mxu0 0.0
        %4601 = vmatpush2.msra.mxu0 0.0
        %4602 = vmatprep.subr.mxu0 0.0
        %4603 = vmatpush2.msra.mxu0 0.0
        %4604 = vmatprep.subr.mxu0 0.0
        %4605 = vmatpush2.msra.mxu0 0.0
        %4606 = vmatprep.subr.mxu0 0.0
        %4607 = vmatpush2.msra.mxu0 0.0
        %4608 = vmatprep.subr.mxu0 0.0
        %4609 = vmatpush2.msra.mxu0 0.0
        %4610 = vmatprep.subr.mxu0 0.0
        %4611 = vmatpush2.msra.mxu0 0.0
        %4612 = vmatprep.subr.mxu0 0.0
        %4613 = vmatpush2.msra.mxu0 0.0
        %4614 = vmatprep.subr.mxu0 0.0
        %4615 = vmatpush2.msra.mxu0 0.0
        %4616 = vmatprep.subr.mxu0 0.0
        %4617 = vmatpush2.msra.mxu0 0.0
        %4618 = vmatprep.mubr.f32.mxu0 0.0
        %4619 = vmatmul.mubr.f32.gmra.mxu0 %v4552
        %v4620 = vpop.f32.mrf.mxu0
        %v4621 = vadd.f32 0.0, %v4620
        %v4622 = vpop.f32.mrf.mxu0
        %v4623 = vadd.f32 0.0, %v4622
        %4624 = vdwg.mxu0
        %4625 = vmatprep.subr.mxu0 0.0
        %4626 = vmatpush1.msra.mxu0 0.0
        %4627 = vmatprep.subr.mxu0 0.0
        %4628 = vmatpush1.msra.mxu0 0.0
        %4629 = vmatprep.subr.mxu0 0.0
        %4630 = vmatpush1.msra.mxu0 0.0
        %4631 = vmatprep.subr.mxu0 0.0
        %4632 = vmatpush1.msra.mxu0 0.0
        %4633 = vmatprep.subr.mxu0 0.0
        %4634 = vmatpush1.msra.mxu0 0.0
        %4635 = vmatprep.subr.mxu0 0.0
        %4636 = vmatpush1.msra.mxu0 0.0
        %4637 = vmatprep.subr.mxu0 0.0
        %4638 = vmatpush1.msra.mxu0 0.0
        %4639 = vmatprep.subr.mxu0 0.0
        %4640 = vmatpush1.msra.mxu0 0.0
        %4641 = vmatprep.subr.mxu0 0.0
        %4642 = vmatpush1.msra.mxu0 0.0
        %4643 = vmatprep.subr.mxu0 0.0
        %4644 = vmatpush1.msra.mxu0 0.0
        %4645 = vmatprep.subr.mxu0 0.0
        %4646 = vmatpush1.msra.mxu0 0.0
        %4647 = vmatprep.subr.mxu0 0.0
        %4648 = vmatpush1.msra.mxu0 0.0
        %4649 = vmatprep.subr.mxu0 0.0
        %4650 = vmatpush1.msra.mxu0 0.0
        %4651 = vmatprep.subr.mxu0 0.0
        %4652 = vmatpush1.msra.mxu0 0.0
        %4653 = vmatprep.subr.mxu0 0.0
        %4654 = vmatpush1.msra.mxu0 0.0
        %4655 = vmatprep.subr.mxu0 %v4534
        %4656 = vmatpush1.msra.mxu0 %v4533
        %4657 = vmatprep.subr.mxu0 0.0
        %4658 = vmatpush2.msra.mxu0 0.0
        %4659 = vmatprep.subr.mxu0 0.0
        %4660 = vmatpush2.msra.mxu0 0.0
        %4661 = vmatprep.subr.mxu0 0.0
        %4662 = vmatpush2.msra.mxu0 0.0
        %4663 = vmatprep.subr.mxu0 0.0
        %4664 = vmatpush2.msra.mxu0 0.0
        %4665 = vmatprep.subr.mxu0 0.0
        %4666 = vmatpush2.msra.mxu0 0.0
        %4667 = vmatprep.subr.mxu0 0.0
        %4668 = vmatpush2.msra.mxu0 0.0
        %4669 = vmatprep.subr.mxu0 0.0
        %4670 = vmatpush2.msra.mxu0 0.0
        %4671 = vmatprep.subr.mxu0 0.0
        %4672 = vmatpush2.msra.mxu0 0.0
        %4673 = vmatprep.subr.mxu0 0.0
        %4674 = vmatpush2.msra.mxu0 0.0
        %4675 = vmatprep.subr.mxu0 0.0
        %4676 = vmatpush2.msra.mxu0 0.0
        %4677 = vmatprep.subr.mxu0 0.0
        %4678 = vmatpush2.msra.mxu0 0.0
        %4679 = vmatprep.subr.mxu0 0.0
        %4680 = vmatpush2.msra.mxu0 0.0
        %4681 = vmatprep.subr.mxu0 0.0
        %4682 = vmatpush2.msra.mxu0 0.0
        %4683 = vmatprep.subr.mxu0 0.0
        %4684 = vmatpush2.msra.mxu0 0.0
        %4685 = vmatprep.subr.mxu0 0.0
        %4686 = vmatpush2.msra.mxu0 0.0
        %4687 = vmatprep.subr.mxu0 0.0
        %4688 = vmatpush2.msra.mxu0 0.0
        %4689 = vmatprep.mubr.f32.mxu0 0.0
        %4690 = vmatmul.mubr.f32.gmra.mxu0 %v4552
        %v4691 = vpop.f32.mrf.mxu0
        %v4692 = vadd.f32 0.0, %v4691
        %v4693 = vpop.f32.mrf.mxu0
        %v4694 = vadd.f32 0.0, %v4693
        %4695 = vdwg.mxu0
        %4696 = vmatprep.subr.mxu0 0.0
        %4697 = vmatpush1.msra.mxu0 0.0
        %4698 = vmatprep.subr.mxu0 0.0
        %4699 = vmatpush1.msra.mxu0 0.0
        %4700 = vmatprep.subr.mxu0 0.0
        %4701 = vmatpush1.msra.mxu0 0.0
        %4702 = vmatprep.subr.mxu0 0.0
        %4703 = vmatpush1.msra.mxu0 0.0
        %4704 = vmatprep.subr.mxu0 0.0
        %4705 = vmatpush1.msra.mxu0 0.0
        %4706 = vmatprep.subr.mxu0 0.0
        %4707 = vmatpush1.msra.mxu0 0.0
        %4708 = vmatprep.subr.mxu0 0.0
        %4709 = vmatpush1.msra.mxu0 0.0
        %4710 = vmatprep.subr.mxu0 0.0
        %4711 = vmatpush1.msra.mxu0 0.0
        %4712 = vmatprep.subr.mxu0 0.0
        %4713 = vmatpush1.msra.mxu0 0.0
        %4714 = vmatprep.subr.mxu0 0.0
        %4715 = vmatpush1.msra.mxu0 0.0
        %4716 = vmatprep.subr.mxu0 0.0
        %4717 = vmatpush1.msra.mxu0 0.0
        %4718 = vmatprep.subr.mxu0 0.0
        %4719 = vmatpush1.msra.mxu0 0.0
        %4720 = vmatprep.subr.mxu0 0.0
        %4721 = vmatpush1.msra.mxu0 0.0
        %4722 = vmatprep.subr.mxu0 0.0
        %4723 = vmatpush1.msra.mxu0 0.0
        %4724 = vmatprep.subr.mxu0 0.0
        %4725 = vmatpush1.msra.mxu0 0.0
        %4726 = vmatprep.subr.mxu0 %v4536
        %4727 = vmatpush1.msra.mxu0 %v4535
        %4728 = vmatprep.subr.mxu0 0.0
        %4729 = vmatpush2.msra.mxu0 0.0
        %4730 = vmatprep.subr.mxu0 0.0
        %4731 = vmatpush2.msra.mxu0 0.0
        %4732 = vmatprep.subr.mxu0 0.0
        %4733 = vmatpush2.msra.mxu0 0.0
        %4734 = vmatprep.subr.mxu0 0.0
        %4735 = vmatpush2.msra.mxu0 0.0
        %4736 = vmatprep.subr.mxu0 0.0
        %4737 = vmatpush2.msra.mxu0 0.0
        %4738 = vmatprep.subr.mxu0 0.0
        %4739 = vmatpush2.msra.mxu0 0.0
        %4740 = vmatprep.subr.mxu0 0.0
        %4741 = vmatpush2.msra.mxu0 0.0
        %4742 = vmatprep.subr.mxu0 0.0
        %4743 = vmatpush2.msra.mxu0 0.0
        %4744 = vmatprep.subr.mxu0 0.0
        %4745 = vmatpush2.msra.mxu0 0.0
        %4746 = vmatprep.subr.mxu0 0.0
        %4747 = vmatpush2.msra.mxu0 0.0
        %4748 = vmatprep.subr.mxu0 0.0
        %4749 = vmatpush2.msra.mxu0 0.0
        %4750 = vmatprep.subr.mxu0 0.0
        %4751 = vmatpush2.msra.mxu0 0.0
        %4752 = vmatprep.subr.mxu0 0.0
        %4753 = vmatpush2.msra.mxu0 0.0
        %4754 = vmatprep.subr.mxu0 0.0
        %4755 = vmatpush2.msra.mxu0 0.0
        %4756 = vmatprep.subr.mxu0 0.0
        %4757 = vmatpush2.msra.mxu0 0.0
        %4758 = vmatprep.subr.mxu0 0.0
        %4759 = vmatpush2.msra.mxu0 0.0
        %4760 = vmatprep.mubr.f32.mxu0 0.0
        %4761 = vmatmul.mubr.f32.gmra.mxu0 %v4552
        %v4762 = vpop.f32.mrf.mxu0
        %v4763 = vadd.f32 0.0, %v4762
        %v4764 = vpop.f32.mrf.mxu0
        %v4765 = vadd.f32 0.0, %v4764
        %4766 = vdwg.mxu0
        %4767 = vmatprep.subr.mxu0 0.0
        %4768 = vmatpush1.msra.mxu0 0.0
        %4769 = vmatprep.subr.mxu0 0.0
        %4770 = vmatpush1.msra.mxu0 0.0
        %4771 = vmatprep.subr.mxu0 0.0
        %4772 = vmatpush1.msra.mxu0 0.0
        %4773 = vmatprep.subr.mxu0 0.0
        %4774 = vmatpush1.msra.mxu0 0.0
        %4775 = vmatprep.subr.mxu0 0.0
        %4776 = vmatpush1.msra.mxu0 0.0
        %4777 = vmatprep.subr.mxu0 0.0
        %4778 = vmatpush1.msra.mxu0 0.0
        %4779 = vmatprep.subr.mxu0 0.0
        %4780 = vmatpush1.msra.mxu0 0.0
        %4781 = vmatprep.subr.mxu0 0.0
        %4782 = vmatpush1.msra.mxu0 0.0
        %4783 = vmatprep.subr.mxu0 0.0
        %4784 = vmatpush1.msra.mxu0 0.0
        %4785 = vmatprep.subr.mxu0 0.0
        %4786 = vmatpush1.msra.mxu0 0.0
        %4787 = vmatprep.subr.mxu0 0.0
        %4788 = vmatpush1.msra.mxu0 0.0
        %4789 = vmatprep.subr.mxu0 0.0
        %4790 = vmatpush1.msra.mxu0 0.0
        %4791 = vmatprep.subr.mxu0 0.0
        %4792 = vmatpush1.msra.mxu0 0.0
        %4793 = vmatprep.subr.mxu0 0.0
        %4794 = vmatpush1.msra.mxu0 0.0
        %4795 = vmatprep.subr.mxu0 0.0
        %4796 = vmatpush1.msra.mxu0 0.0
        %4797 = vmatprep.subr.mxu0 %v4538
        %4798 = vmatpush1.msra.mxu0 %v4537
        %4799 = vmatprep.subr.mxu0 0.0
        %4800 = vmatpush2.msra.mxu0 0.0
        %4801 = vmatprep.subr.mxu0 0.0
        %4802 = vmatpush2.msra.mxu0 0.0
        %4803 = vmatprep.subr.mxu0 0.0
        %4804 = vmatpush2.msra.mxu0 0.0
        %4805 = vmatprep.subr.mxu0 0.0
        %4806 = vmatpush2.msra.mxu0 0.0
        %4807 = vmatprep.subr.mxu0 0.0
        %4808 = vmatpush2.msra.mxu0 0.0
        %4809 = vmatprep.subr.mxu0 0.0
        %4810 = vmatpush2.msra.mxu0 0.0
        %4811 = vmatprep.subr.mxu0 0.0
        %4812 = vmatpush2.msra.mxu0 0.0
        %4813 = vmatprep.subr.mxu0 0.0
        %4814 = vmatpush2.msra.mxu0 0.0
        %4815 = vmatprep.subr.mxu0 0.0
        %4816 = vmatpush2.msra.mxu0 0.0
        %4817 = vmatprep.subr.mxu0 0.0
        %4818 = vmatpush2.msra.mxu0 0.0
        %4819 = vmatprep.subr.mxu0 0.0
        %4820 = vmatpush2.msra.mxu0 0.0
        %4821 = vmatprep.subr.mxu0 0.0
        %4822 = vmatpush2.msra.mxu0 0.0
        %4823 = vmatprep.subr.mxu0 0.0
        %4824 = vmatpush2.msra.mxu0 0.0
        %4825 = vmatprep.subr.mxu0 0.0
        %4826 = vmatpush2.msra.mxu0 0.0
        %4827 = vmatprep.subr.mxu0 0.0
        %4828 = vmatpush2.msra.mxu0 0.0
        %4829 = vmatprep.subr.mxu0 0.0
        %4830 = vmatpush2.msra.mxu0 0.0
        %4831 = vmatprep.mubr.f32.mxu0 0.0
        %4832 = vmatmul.mubr.f32.gmra.mxu0 %v4552
        %v4833 = vpop.f32.mrf.mxu0
        %v4834 = vadd.f32 0.0, %v4833
        %v4835 = vpop.f32.mrf.mxu0
        %v4836 = vadd.f32 0.0, %v4835
        %4837 = vdwg.mxu0
        %4838 = vmatprep.subr.mxu0 0.0
        %4839 = vmatpush1.msra.mxu0 0.0
        %4840 = vmatprep.subr.mxu0 0.0
        %4841 = vmatpush1.msra.mxu0 0.0
        %4842 = vmatprep.subr.mxu0 0.0
        %4843 = vmatpush1.msra.mxu0 0.0
        %4844 = vmatprep.subr.mxu0 0.0
        %4845 = vmatpush1.msra.mxu0 0.0
        %4846 = vmatprep.subr.mxu0 0.0
        %4847 = vmatpush1.msra.mxu0 0.0
        %4848 = vmatprep.subr.mxu0 0.0
        %4849 = vmatpush1.msra.mxu0 0.0
        %4850 = vmatprep.subr.mxu0 0.0
        %4851 = vmatpush1.msra.mxu0 0.0
        %4852 = vmatprep.subr.mxu0 0.0
        %4853 = vmatpush1.msra.mxu0 0.0
        %4854 = vmatprep.subr.mxu0 0.0
        %4855 = vmatpush1.msra.mxu0 0.0
        %4856 = vmatprep.subr.mxu0 0.0
        %4857 = vmatpush1.msra.mxu0 0.0
        %4858 = vmatprep.subr.mxu0 0.0
        %4859 = vmatpush1.msra.mxu0 0.0
        %4860 = vmatprep.subr.mxu0 0.0
        %4861 = vmatpush1.msra.mxu0 0.0
        %4862 = vmatprep.subr.mxu0 0.0
        %4863 = vmatpush1.msra.mxu0 0.0
        %4864 = vmatprep.subr.mxu0 0.0
        %4865 = vmatpush1.msra.mxu0 0.0
        %4866 = vmatprep.subr.mxu0 0.0
        %4867 = vmatpush1.msra.mxu0 0.0
        %4868 = vmatprep.subr.mxu0 %v4530
        %4869 = vmatpush1.msra.mxu0 %v4539
        %4870 = vmatprep.subr.mxu0 0.0
        %4871 = vmatpush2.msra.mxu0 0.0
        %4872 = vmatprep.subr.mxu0 0.0
        %4873 = vmatpush2.msra.mxu0 0.0
        %4874 = vmatprep.subr.mxu0 0.0
        %4875 = vmatpush2.msra.mxu0 0.0
        %4876 = vmatprep.subr.mxu0 0.0
        %4877 = vmatpush2.msra.mxu0 0.0
        %4878 = vmatprep.subr.mxu0 0.0
        %4879 = vmatpush2.msra.mxu0 0.0
        %4880 = vmatprep.subr.mxu0 0.0
        %4881 = vmatpush2.msra.mxu0 0.0
        %4882 = vmatprep.subr.mxu0 0.0
        %4883 = vmatpush2.msra.mxu0 0.0
        %4884 = vmatprep.subr.mxu0 0.0
        %4885 = vmatpush2.msra.mxu0 0.0
        %4886 = vmatprep.subr.mxu0 0.0
        %4887 = vmatpush2.msra.mxu0 0.0
        %4888 = vmatprep.subr.mxu0 0.0
        %4889 = vmatpush2.msra.mxu0 0.0
        %4890 = vmatprep.subr.mxu0 0.0
        %4891 = vmatpush2.msra.mxu0 0.0
        %4892 = vmatprep.subr.mxu0 0.0
        %4893 = vmatpush2.msra.mxu0 0.0
        %4894 = vmatprep.subr.mxu0 0.0
        %4895 = vmatpush2.msra.mxu0 0.0
        %4896 = vmatprep.subr.mxu0 0.0
        %4897 = vmatpush2.msra.mxu0 0.0
        %4898 = vmatprep.subr.mxu0 0.0
        %4899 = vmatpush2.msra.mxu0 0.0
        %4900 = vmatprep.subr.mxu0 0.0
        %4901 = vmatpush2.msra.mxu0 0.0
        %4902 = vmatprep.mubr.f32.mxu0 0.0
        %4903 = vmatmul.mubr.f32.gmra.mxu0 %v4552
        %v4904 = vpop.f32.mrf.mxu0
        %v4905 = vadd.f32 0.0, %v4904
        %v4906 = vpop.f32.mrf.mxu0
        %v4907 = vadd.f32 0.0, %v4906
        %4908 = vdwg.mxu0
        %v4910 = vsel %vm4550, %v4498, 0
        %4912 = vmatprep.subr.mxu0 0.0
        %4913 = vmatpush1.msra.mxu0 0.0
        %4914 = vmatprep.subr.mxu0 0.0
        %4915 = vmatpush1.msra.mxu0 0.0
        %4916 = vmatprep.subr.mxu0 0.0
        %4917 = vmatpush1.msra.mxu0 0.0
        %4918 = vmatprep.subr.mxu0 0.0
        %4919 = vmatpush1.msra.mxu0 0.0
        %4920 = vmatprep.subr.mxu0 0.0
        %4921 = vmatpush1.msra.mxu0 0.0
        %4922 = vmatprep.subr.mxu0 0.0
        %4923 = vmatpush1.msra.mxu0 0.0
        %4924 = vmatprep.subr.mxu0 0.0
        %4925 = vmatpush1.msra.mxu0 0.0
        %4926 = vmatprep.subr.mxu0 0.0
        %4927 = vmatpush1.msra.mxu0 0.0
        %4928 = vmatprep.subr.mxu0 0.0
        %4929 = vmatpush1.msra.mxu0 0.0
        %4930 = vmatprep.subr.mxu0 0.0
        %4931 = vmatpush1.msra.mxu0 0.0
        %4932 = vmatprep.subr.mxu0 0.0
        %4933 = vmatpush1.msra.mxu0 0.0
        %4934 = vmatprep.subr.mxu0 0.0
        %4935 = vmatpush1.msra.mxu0 0.0
        %4936 = vmatprep.subr.mxu0 0.0
        %4937 = vmatpush1.msra.mxu0 0.0
        %4938 = vmatprep.subr.mxu0 0.0
        %4939 = vmatpush1.msra.mxu0 0.0
        %4940 = vmatprep.subr.mxu0 0.0
        %4941 = vmatpush1.msra.mxu0 0.0
        %4942 = vmatprep.subr.mxu0 %v4489
        %4943 = vmatpush1.msra.mxu0 %v4488
        %4944 = vmatprep.subr.mxu0 0.0
        %4945 = vmatpush2.msra.mxu0 0.0
        %4946 = vmatprep.subr.mxu0 0.0
        %4947 = vmatpush2.msra.mxu0 0.0
        %4948 = vmatprep.subr.mxu0 0.0
        %4949 = vmatpush2.msra.mxu0 0.0
        %4950 = vmatprep.subr.mxu0 0.0
        %4951 = vmatpush2.msra.mxu0 0.0
        %4952 = vmatprep.subr.mxu0 0.0
        %4953 = vmatpush2.msra.mxu0 0.0
        %4954 = vmatprep.subr.mxu0 0.0
        %4955 = vmatpush2.msra.mxu0 0.0
        %4956 = vmatprep.subr.mxu0 0.0
        %4957 = vmatpush2.msra.mxu0 0.0
        %4958 = vmatprep.subr.mxu0 0.0
        %4959 = vmatpush2.msra.mxu0 0.0
        %4960 = vmatprep.subr.mxu0 0.0
        %4961 = vmatpush2.msra.mxu0 0.0
        %4962 = vmatprep.subr.mxu0 0.0
        %4963 = vmatpush2.msra.mxu0 0.0
        %4964 = vmatprep.subr.mxu0 0.0
        %4965 = vmatpush2.msra.mxu0 0.0
        %4966 = vmatprep.subr.mxu0 0.0
        %4967 = vmatpush2.msra.mxu0 0.0
        %4968 = vmatprep.subr.mxu0 0.0
        %4969 = vmatpush2.msra.mxu0 0.0
        %4970 = vmatprep.subr.mxu0 0.0
        %4971 = vmatpush2.msra.mxu0 0.0
        %4972 = vmatprep.subr.mxu0 0.0
        %4973 = vmatpush2.msra.mxu0 0.0
        %4974 = vmatprep.subr.mxu0 0.0
        %4975 = vmatpush2.msra.mxu0 0.0
        %4976 = vmatprep.mubr.f32.mxu0 0.0
        %4977 = vmatmul.mubr.f32.gmra.mxu0 %v4910
        %v4978 = vpop.f32.mrf.mxu0
        %v4979 = vadd.f32 %v4621, %v4978
        %v4980 = vpop.f32.mrf.mxu0
        %v4981 = vadd.f32 %v4623, %v4980
        %4982 = vdwg.mxu0
        %4983 = vmatprep.subr.mxu0 0.0
        %4984 = vmatpush1.msra.mxu0 0.0
        %4985 = vmatprep.subr.mxu0 0.0
        %4986 = vmatpush1.msra.mxu0 0.0
        %4987 = vmatprep.subr.mxu0 0.0
        %4988 = vmatpush1.msra.mxu0 0.0
        %4989 = vmatprep.subr.mxu0 0.0
        %4990 = vmatpush1.msra.mxu0 0.0
        %4991 = vmatprep.subr.mxu0 0.0
        %4992 = vmatpush1.msra.mxu0 0.0
        %4993 = vmatprep.subr.mxu0 0.0
        %4994 = vmatpush1.msra.mxu0 0.0
        %4995 = vmatprep.subr.mxu0 0.0
        %4996 = vmatpush1.msra.mxu0 0.0
        %4997 = vmatprep.subr.mxu0 0.0
        %4998 = vmatpush1.msra.mxu0 0.0
        %4999 = vmatprep.subr.mxu0 0.0
        %5000 = vmatpush1.msra.mxu0 0.0
        %5001 = vmatprep.subr.mxu0 0.0
        %5002 = vmatpush1.msra.mxu0 0.0
        %5003 = vmatprep.subr.mxu0 0.0
        %5004 = vmatpush1.msra.mxu0 0.0
        %5005 = vmatprep.subr.mxu0 0.0
        %5006 = vmatpush1.msra.mxu0 0.0
        %5007 = vmatprep.subr.mxu0 0.0
        %5008 = vmatpush1.msra.mxu0 0.0
        %5009 = vmatprep.subr.mxu0 0.0
        %5010 = vmatpush1.msra.mxu0 0.0
        %5011 = vmatprep.subr.mxu0 0.0
        %5012 = vmatpush1.msra.mxu0 0.0
        %5013 = vmatprep.subr.mxu0 %v4491
        %5014 = vmatpush1.msra.mxu0 %v4490
        %5015 = vmatprep.subr.mxu0 0.0
        %5016 = vmatpush2.msra.mxu0 0.0
        %5017 = vmatprep.subr.mxu0 0.0
        %5018 = vmatpush2.msra.mxu0 0.0
        %5019 = vmatprep.subr.mxu0 0.0
        %5020 = vmatpush2.msra.mxu0 0.0
        %5021 = vmatprep.subr.mxu0 0.0
        %5022 = vmatpush2.msra.mxu0 0.0
        %5023 = vmatprep.subr.mxu0 0.0
        %5024 = vmatpush2.msra.mxu0 0.0
        %5025 = vmatprep.subr.mxu0 0.0
        %5026 = vmatpush2.msra.mxu0 0.0
        %5027 = vmatprep.subr.mxu0 0.0
        %5028 = vmatpush2.msra.mxu0 0.0
        %5029 = vmatprep.subr.mxu0 0.0
        %5030 = vmatpush2.msra.mxu0 0.0
        %5031 = vmatprep.subr.mxu0 0.0
        %5032 = vmatpush2.msra.mxu0 0.0
        %5033 = vmatprep.subr.mxu0 0.0
        %5034 = vmatpush2.msra.mxu0 0.0
        %5035 = vmatprep.subr.mxu0 0.0
        %5036 = vmatpush2.msra.mxu0 0.0
        %5037 = vmatprep.subr.mxu0 0.0
        %5038 = vmatpush2.msra.mxu0 0.0
        %5039 = vmatprep.subr.mxu0 0.0
        %5040 = vmatpush2.msra.mxu0 0.0
        %5041 = vmatprep.subr.mxu0 0.0
        %5042 = vmatpush2.msra.mxu0 0.0
        %5043 = vmatprep.subr.mxu0 0.0
        %5044 = vmatpush2.msra.mxu0 0.0
        %5045 = vmatprep.subr.mxu0 0.0
        %5046 = vmatpush2.msra.mxu0 0.0
        %5047 = vmatprep.mubr.f32.mxu0 0.0
        %5048 = vmatmul.mubr.f32.gmra.mxu0 %v4910
        %v5049 = vpop.f32.mrf.mxu0
        %v5050 = vadd.f32 %v4692, %v5049
        %v5051 = vpop.f32.mrf.mxu0
        %v5052 = vadd.f32 %v4694, %v5051
        %5053 = vdwg.mxu0
        %5054 = vmatprep.subr.mxu0 0.0
        %5055 = vmatpush1.msra.mxu0 0.0
        %5056 = vmatprep.subr.mxu0 0.0
        %5057 = vmatpush1.msra.mxu0 0.0
        %5058 = vmatprep.subr.mxu0 0.0
        %5059 = vmatpush1.msra.mxu0 0.0
        %5060 = vmatprep.subr.mxu0 0.0
        %5061 = vmatpush1.msra.mxu0 0.0
        %5062 = vmatprep.subr.mxu0 0.0
        %5063 = vmatpush1.msra.mxu0 0.0
        %5064 = vmatprep.subr.mxu0 0.0
        %5065 = vmatpush1.msra.mxu0 0.0
        %5066 = vmatprep.subr.mxu0 0.0
        %5067 = vmatpush1.msra.mxu0 0.0
        %5068 = vmatprep.subr.mxu0 0.0
        %5069 = vmatpush1.msra.mxu0 0.0
        %5070 = vmatprep.subr.mxu0 0.0
        %5071 = vmatpush1.msra.mxu0 0.0
        %5072 = vmatprep.subr.mxu0 0.0
        %5073 = vmatpush1.msra.mxu0 0.0
        %5074 = vmatprep.subr.mxu0 0.0
        %5075 = vmatpush1.msra.mxu0 0.0
        %5076 = vmatprep.subr.mxu0 0.0
        %5077 = vmatpush1.msra.mxu0 0.0
        %5078 = vmatprep.subr.mxu0 0.0
        %5079 = vmatpush1.msra.mxu0 0.0
        %5080 = vmatprep.subr.mxu0 0.0
        %5081 = vmatpush1.msra.mxu0 0.0
        %5082 = vmatprep.subr.mxu0 0.0
        %5083 = vmatpush1.msra.mxu0 0.0
        %5084 = vmatprep.subr.mxu0 %v4493
        %5085 = vmatpush1.msra.mxu0 %v4492
        %5086 = vmatprep.subr.mxu0 0.0
        %5087 = vmatpush2.msra.mxu0 0.0
        %5088 = vmatprep.subr.mxu0 0.0
        %5089 = vmatpush2.msra.mxu0 0.0
        %5090 = vmatprep.subr.mxu0 0.0
        %5091 = vmatpush2.msra.mxu0 0.0
        %5092 = vmatprep.subr.mxu0 0.0
        %5093 = vmatpush2.msra.mxu0 0.0
        %5094 = vmatprep.subr.mxu0 0.0
        %5095 = vmatpush2.msra.mxu0 0.0
        %5096 = vmatprep.subr.mxu0 0.0
        %5097 = vmatpush2.msra.mxu0 0.0
        %5098 = vmatprep.subr.mxu0 0.0
        %5099 = vmatpush2.msra.mxu0 0.0
        %5100 = vmatprep.subr.mxu0 0.0
        %5101 = vmatpush2.msra.mxu0 0.0
        %5102 = vmatprep.subr.mxu0 0.0
        %5103 = vmatpush2.msra.mxu0 0.0
        %5104 = vmatprep.subr.mxu0 0.0
        %5105 = vmatpush2.msra.mxu0 0.0
        %5106 = vmatprep.subr.mxu0 0.0
        %5107 = vmatpush2.msra.mxu0 0.0
        %5108 = vmatprep.subr.mxu0 0.0
        %5109 = vmatpush2.msra.mxu0 0.0
        %5110 = vmatprep.subr.mxu0 0.0
        %5111 = vmatpush2.msra.mxu0 0.0
        %5112 = vmatprep.subr.mxu0 0.0
        %5113 = vmatpush2.msra.mxu0 0.0
        %5114 = vmatprep.subr.mxu0 0.0
        %5115 = vmatpush2.msra.mxu0 0.0
        %5116 = vmatprep.subr.mxu0 0.0
        %5117 = vmatpush2.msra.mxu0 0.0
        %5118 = vmatprep.mubr.f32.mxu0 0.0
        %5119 = vmatmul.mubr.f32.gmra.mxu0 %v4910
        %v5120 = vpop.f32.mrf.mxu0
        %v5121 = vadd.f32 %v4763, %v5120
        %v5122 = vpop.f32.mrf.mxu0
        %v5123 = vadd.f32 %v4765, %v5122
        %5124 = vdwg.mxu0
        %5125 = vmatprep.subr.mxu0 0.0
        %5126 = vmatpush1.msra.mxu0 0.0
        %5127 = vmatprep.subr.mxu0 0.0
        %5128 = vmatpush1.msra.mxu0 0.0
        %5129 = vmatprep.subr.mxu0 0.0
        %5130 = vmatpush1.msra.mxu0 0.0
        %5131 = vmatprep.subr.mxu0 0.0
        %5132 = vmatpush1.msra.mxu0 0.0
        %5133 = vmatprep.subr.mxu0 0.0
        %5134 = vmatpush1.msra.mxu0 0.0
        %5135 = vmatprep.subr.mxu0 0.0
        %5136 = vmatpush1.msra.mxu0 0.0
        %5137 = vmatprep.subr.mxu0 0.0
        %5138 = vmatpush1.msra.mxu0 0.0
        %5139 = vmatprep.subr.mxu0 0.0
        %5140 = vmatpush1.msra.mxu0 0.0
        %5141 = vmatprep.subr.mxu0 0.0
        %5142 = vmatpush1.msra.mxu0 0.0
        %5143 = vmatprep.subr.mxu0 0.0
        %5144 = vmatpush1.msra.mxu0 0.0
        %5145 = vmatprep.subr.mxu0 0.0
        %5146 = vmatpush1.msra.mxu0 0.0
        %5147 = vmatprep.subr.mxu0 0.0
        %5148 = vmatpush1.msra.mxu0 0.0
        %5149 = vmatprep.subr.mxu0 0.0
        %5150 = vmatpush1.msra.mxu0 0.0
        %5151 = vmatprep.subr.mxu0 0.0
        %5152 = vmatpush1.msra.mxu0 0.0
        %5153 = vmatprep.subr.mxu0 0.0
        %5154 = vmatpush1.msra.mxu0 0.0
        %5155 = vmatprep.subr.mxu0 %v4495
        %5156 = vmatpush1.msra.mxu0 %v4494
        %5157 = vmatprep.subr.mxu0 0.0
        %5158 = vmatpush2.msra.mxu0 0.0
        %5159 = vmatprep.subr.mxu0 0.0
        %5160 = vmatpush2.msra.mxu0 0.0
        %5161 = vmatprep.subr.mxu0 0.0
        %5162 = vmatpush2.msra.mxu0 0.0
        %5163 = vmatprep.subr.mxu0 0.0
        %5164 = vmatpush2.msra.mxu0 0.0
        %5165 = vmatprep.subr.mxu0 0.0
        %5166 = vmatpush2.msra.mxu0 0.0
        %5167 = vmatprep.subr.mxu0 0.0
        %5168 = vmatpush2.msra.mxu0 0.0
        %5169 = vmatprep.subr.mxu0 0.0
        %5170 = vmatpush2.msra.mxu0 0.0
        %5171 = vmatprep.subr.mxu0 0.0
        %5172 = vmatpush2.msra.mxu0 0.0
        %5173 = vmatprep.subr.mxu0 0.0
        %5174 = vmatpush2.msra.mxu0 0.0
        %5175 = vmatprep.subr.mxu0 0.0
        %5176 = vmatpush2.msra.mxu0 0.0
        %5177 = vmatprep.subr.mxu0 0.0
        %5178 = vmatpush2.msra.mxu0 0.0
        %5179 = vmatprep.subr.mxu0 0.0
        %5180 = vmatpush2.msra.mxu0 0.0
        %5181 = vmatprep.subr.mxu0 0.0
        %5182 = vmatpush2.msra.mxu0 0.0
        %5183 = vmatprep.subr.mxu0 0.0
        %5184 = vmatpush2.msra.mxu0 0.0
        %5185 = vmatprep.subr.mxu0 0.0
        %5186 = vmatpush2.msra.mxu0 0.0
        %5187 = vmatprep.subr.mxu0 0.0
        %5188 = vmatpush2.msra.mxu0 0.0
        %5189 = vmatprep.mubr.f32.mxu0 0.0
        %5190 = vmatmul.mubr.f32.gmra.mxu0 %v4910
        %v5191 = vpop.f32.mrf.mxu0
        %v5192 = vadd.f32 %v4834, %v5191
        %v5193 = vpop.f32.mrf.mxu0
        %v5194 = vadd.f32 %v4836, %v5193
        %5195 = vdwg.mxu0
        %5196 = vmatprep.subr.mxu0 0.0
        %5197 = vmatpush1.msra.mxu0 0.0
        %5198 = vmatprep.subr.mxu0 0.0
        %5199 = vmatpush1.msra.mxu0 0.0
        %5200 = vmatprep.subr.mxu0 0.0
        %5201 = vmatpush1.msra.mxu0 0.0
        %5202 = vmatprep.subr.mxu0 0.0
        %5203 = vmatpush1.msra.mxu0 0.0
        %5204 = vmatprep.subr.mxu0 0.0
        %5205 = vmatpush1.msra.mxu0 0.0
        %5206 = vmatprep.subr.mxu0 0.0
        %5207 = vmatpush1.msra.mxu0 0.0
        %5208 = vmatprep.subr.mxu0 0.0
        %5209 = vmatpush1.msra.mxu0 0.0
        %5210 = vmatprep.subr.mxu0 0.0
        %5211 = vmatpush1.msra.mxu0 0.0
        %5212 = vmatprep.subr.mxu0 0.0
        %5213 = vmatpush1.msra.mxu0 0.0
        %5214 = vmatprep.subr.mxu0 0.0
        %5215 = vmatpush1.msra.mxu0 0.0
        %5216 = vmatprep.subr.mxu0 0.0
        %5217 = vmatpush1.msra.mxu0 0.0
        %5218 = vmatprep.subr.mxu0 0.0
        %5219 = vmatpush1.msra.mxu0 0.0
        %5220 = vmatprep.subr.mxu0 0.0
        %5221 = vmatpush1.msra.mxu0 0.0
        %5222 = vmatprep.subr.mxu0 0.0
        %5223 = vmatpush1.msra.mxu0 0.0
        %5224 = vmatprep.subr.mxu0 0.0
        %5225 = vmatpush1.msra.mxu0 0.0
        %5226 = vmatprep.subr.mxu0 %v4497
        %5227 = vmatpush1.msra.mxu0 %v4496
        %5228 = vmatprep.subr.mxu0 0.0
        %5229 = vmatpush2.msra.mxu0 0.0
        %5230 = vmatprep.subr.mxu0 0.0
        %5231 = vmatpush2.msra.mxu0 0.0
        %5232 = vmatprep.subr.mxu0 0.0
        %5233 = vmatpush2.msra.mxu0 0.0
        %5234 = vmatprep.subr.mxu0 0.0
        %5235 = vmatpush2.msra.mxu0 0.0
        %5236 = vmatprep.subr.mxu0 0.0
        %5237 = vmatpush2.msra.mxu0 0.0
        %5238 = vmatprep.subr.mxu0 0.0
        %5239 = vmatpush2.msra.mxu0 0.0
        %5240 = vmatprep.subr.mxu0 0.0
        %5241 = vmatpush2.msra.mxu0 0.0
        %5242 = vmatprep.subr.mxu0 0.0
        %5243 = vmatpush2.msra.mxu0 0.0
        %5244 = vmatprep.subr.mxu0 0.0
        %5245 = vmatpush2.msra.mxu0 0.0
        %5246 = vmatprep.subr.mxu0 0.0
        %5247 = vmatpush2.msra.mxu0 0.0
        %5248 = vmatprep.subr.mxu0 0.0
        %5249 = vmatpush2.msra.mxu0 0.0
        %5250 = vmatprep.subr.mxu0 0.0
        %5251 = vmatpush2.msra.mxu0 0.0
        %5252 = vmatprep.subr.mxu0 0.0
        %5253 = vmatpush2.msra.mxu0 0.0
        %5254 = vmatprep.subr.mxu0 0.0
        %5255 = vmatpush2.msra.mxu0 0.0
        %5256 = vmatprep.subr.mxu0 0.0
        %5257 = vmatpush2.msra.mxu0 0.0
        %5258 = vmatprep.subr.mxu0 0.0
        %5259 = vmatpush2.msra.mxu0 0.0
        %5260 = vmatprep.mubr.f32.mxu0 0.0
        %5261 = vmatmul.mubr.f32.gmra.mxu0 %v4910
        %v5262 = vpop.f32.mrf.mxu0
        %v5263 = vadd.f32 %v4905, %v5262
        %v5264 = vpop.f32.mrf.mxu0
        %v5265 = vadd.f32 %v4907, %v5264
        %5266 = vdwg.mxu0
        %s5267 = scalar_lea.vmem %s3, 16
        %v5268 = vld [vmem:[%s5267] sm:$0xff]
        %5269 = vrot.lane.b32.xlu0 %v4488, 126
        %v5270 = vpop.permute.xlu0 %5269
        %5271 = vrot.lane.b32.xlu0 %v4489, 126
        %v5272 = vpop.permute.xlu0 %5271
        %5273 = vrot.lane.b32.xlu0 %v4490, 126
        %v5274 = vpop.permute.xlu0 %5273
        %5275 = vrot.lane.b32.xlu0 %v4491, 126
        %v5276 = vpop.permute.xlu0 %5275
        %5277 = vrot.lane.b32.xlu0 %v4492, 126
        %v5278 = vpop.permute.xlu0 %5277
        %5279 = vrot.lane.b32.xlu0 %v4493, 126
        %v5280 = vpop.permute.xlu0 %5279
        %5281 = vrot.lane.b32.xlu0 %v4494, 126
        %v5282 = vpop.permute.xlu0 %5281
        %5283 = vrot.lane.b32.xlu0 %v4495, 126
        %v5284 = vpop.permute.xlu0 %5283
        %5285 = vrot.lane.b32.xlu0 %v4496, 126
        %v5286 = vpop.permute.xlu0 %5285
        %5287 = vrot.lane.b32.xlu0 %v4497, 126
        %v5288 = vpop.permute.xlu0 %5287
        %v5289 = vsel %vm1162, %v5270, %v5272
        %v5290 = vsel %vm1162, %v5272, %v5274
        %v5291 = vsel %vm1162, %v5274, %v5276
        %v5292 = vsel %vm1162, %v5276, %v5278
        %v5293 = vsel %vm1162, %v5278, %v5280
        %v5294 = vsel %vm1162, %v5280, %v5282
        %v5295 = vsel %vm1162, %v5282, %v5284
        %v5296 = vsel %vm1162, %v5284, %v5286
        %v5297 = vsel %vm1162, %v5286, %v5288
        %v5309 = vsel %vm4550, %v5268, 0
        %5311 = vmatprep.subr.mxu0 0.0
        %5312 = vmatpush1.msra.mxu0 0.0
        %5313 = vmatprep.subr.mxu0 0.0
        %5314 = vmatpush1.msra.mxu0 0.0
        %5315 = vmatprep.subr.mxu0 0.0
        %5316 = vmatpush1.msra.mxu0 0.0
        %5317 = vmatprep.subr.mxu0 0.0
        %5318 = vmatpush1.msra.mxu0 0.0
        %5319 = vmatprep.subr.mxu0 0.0
        %5320 = vmatpush1.msra.mxu0 0.0
        %5321 = vmatprep.subr.mxu0 0.0
        %5322 = vmatpush1.msra.mxu0 0.0
        %5323 = vmatprep.subr.mxu0 0.0
        %5324 = vmatpush1.msra.mxu0 0.0
        %5325 = vmatprep.subr.mxu0 0.0
        %5326 = vmatpush1.msra.mxu0 0.0
        %5327 = vmatprep.subr.mxu0 0.0
        %5328 = vmatpush1.msra.mxu0 0.0
        %5329 = vmatprep.subr.mxu0 0.0
        %5330 = vmatpush1.msra.mxu0 0.0
        %5331 = vmatprep.subr.mxu0 0.0
        %5332 = vmatpush1.msra.mxu0 0.0
        %5333 = vmatprep.subr.mxu0 0.0
        %5334 = vmatpush1.msra.mxu0 0.0
        %5335 = vmatprep.subr.mxu0 0.0
        %5336 = vmatpush1.msra.mxu0 0.0
        %5337 = vmatprep.subr.mxu0 0.0
        %5338 = vmatpush1.msra.mxu0 0.0
        %5339 = vmatprep.subr.mxu0 0.0
        %5340 = vmatpush1.msra.mxu0 0.0
        %5341 = vmatprep.subr.mxu0 %v5290
        %5342 = vmatpush1.msra.mxu0 %v5289
        %5343 = vmatprep.subr.mxu0 0.0
        %5344 = vmatpush2.msra.mxu0 0.0
        %5345 = vmatprep.subr.mxu0 0.0
        %5346 = vmatpush2.msra.mxu0 0.0
        %5347 = vmatprep.subr.mxu0 0.0
        %5348 = vmatpush2.msra.mxu0 0.0
        %5349 = vmatprep.subr.mxu0 0.0
        %5350 = vmatpush2.msra.mxu0 0.0
        %5351 = vmatprep.subr.mxu0 0.0
        %5352 = vmatpush2.msra.mxu0 0.0
        %5353 = vmatprep.subr.mxu0 0.0
        %5354 = vmatpush2.msra.mxu0 0.0
        %5355 = vmatprep.subr.mxu0 0.0
        %5356 = vmatpush2.msra.mxu0 0.0
        %5357 = vmatprep.subr.mxu0 0.0
        %5358 = vmatpush2.msra.mxu0 0.0
        %5359 = vmatprep.subr.mxu0 0.0
        %5360 = vmatpush2.msra.mxu0 0.0
        %5361 = vmatprep.subr.mxu0 0.0
        %5362 = vmatpush2.msra.mxu0 0.0
        %5363 = vmatprep.subr.mxu0 0.0
        %5364 = vmatpush2.msra.mxu0 0.0
        %5365 = vmatprep.subr.mxu0 0.0
        %5366 = vmatpush2.msra.mxu0 0.0
        %5367 = vmatprep.subr.mxu0 0.0
        %5368 = vmatpush2.msra.mxu0 0.0
        %5369 = vmatprep.subr.mxu0 0.0
        %5370 = vmatpush2.msra.mxu0 0.0
        %5371 = vmatprep.subr.mxu0 0.0
        %5372 = vmatpush2.msra.mxu0 0.0
        %5373 = vmatprep.subr.mxu0 0.0
        %5374 = vmatpush2.msra.mxu0 0.0
        %5375 = vmatprep.mubr.f32.mxu0 0.0
        %5376 = vmatmul.mubr.f32.gmra.mxu0 %v5309
        %v5377 = vpop.f32.mrf.mxu0
        %v5378 = vadd.f32 0.0, %v5377
        %v5379 = vpop.f32.mrf.mxu0
        %v5380 = vadd.f32 0.0, %v5379
        %5381 = vdwg.mxu0
        %5382 = vmatprep.subr.mxu0 0.0
        %5383 = vmatpush1.msra.mxu0 0.0
        %5384 = vmatprep.subr.mxu0 0.0
        %5385 = vmatpush1.msra.mxu0 0.0
        %5386 = vmatprep.subr.mxu0 0.0
        %5387 = vmatpush1.msra.mxu0 0.0
        %5388 = vmatprep.subr.mxu0 0.0
        %5389 = vmatpush1.msra.mxu0 0.0
        %5390 = vmatprep.subr.mxu0 0.0
        %5391 = vmatpush1.msra.mxu0 0.0
        %5392 = vmatprep.subr.mxu0 0.0
        %5393 = vmatpush1.msra.mxu0 0.0
        %5394 = vmatprep.subr.mxu0 0.0
        %5395 = vmatpush1.msra.mxu0 0.0
        %5396 = vmatprep.subr.mxu0 0.0
        %5397 = vmatpush1.msra.mxu0 0.0
        %5398 = vmatprep.subr.mxu0 0.0
        %5399 = vmatpush1.msra.mxu0 0.0
        %5400 = vmatprep.subr.mxu0 0.0
        %5401 = vmatpush1.msra.mxu0 0.0
        %5402 = vmatprep.subr.mxu0 0.0
        %5403 = vmatpush1.msra.mxu0 0.0
        %5404 = vmatprep.subr.mxu0 0.0
        %5405 = vmatpush1.msra.mxu0 0.0
        %5406 = vmatprep.subr.mxu0 0.0
        %5407 = vmatpush1.msra.mxu0 0.0
        %5408 = vmatprep.subr.mxu0 0.0
        %5409 = vmatpush1.msra.mxu0 0.0
        %5410 = vmatprep.subr.mxu0 0.0
        %5411 = vmatpush1.msra.mxu0 0.0
        %5412 = vmatprep.subr.mxu0 %v5292
        %5413 = vmatpush1.msra.mxu0 %v5291
        %5414 = vmatprep.subr.mxu0 0.0
        %5415 = vmatpush2.msra.mxu0 0.0
        %5416 = vmatprep.subr.mxu0 0.0
        %5417 = vmatpush2.msra.mxu0 0.0
        %5418 = vmatprep.subr.mxu0 0.0
        %5419 = vmatpush2.msra.mxu0 0.0
        %5420 = vmatprep.subr.mxu0 0.0
        %5421 = vmatpush2.msra.mxu0 0.0
        %5422 = vmatprep.subr.mxu0 0.0
        %5423 = vmatpush2.msra.mxu0 0.0
        %5424 = vmatprep.subr.mxu0 0.0
        %5425 = vmatpush2.msra.mxu0 0.0
        %5426 = vmatprep.subr.mxu0 0.0
        %5427 = vmatpush2.msra.mxu0 0.0
        %5428 = vmatprep.subr.mxu0 0.0
        %5429 = vmatpush2.msra.mxu0 0.0
        %5430 = vmatprep.subr.mxu0 0.0
        %5431 = vmatpush2.msra.mxu0 0.0
        %5432 = vmatprep.subr.mxu0 0.0
        %5433 = vmatpush2.msra.mxu0 0.0
        %5434 = vmatprep.subr.mxu0 0.0
        %5435 = vmatpush2.msra.mxu0 0.0
        %5436 = vmatprep.subr.mxu0 0.0
        %5437 = vmatpush2.msra.mxu0 0.0
        %5438 = vmatprep.subr.mxu0 0.0
        %5439 = vmatpush2.msra.mxu0 0.0
        %5440 = vmatprep.subr.mxu0 0.0
        %5441 = vmatpush2.msra.mxu0 0.0
        %5442 = vmatprep.subr.mxu0 0.0
        %5443 = vmatpush2.msra.mxu0 0.0
        %5444 = vmatprep.subr.mxu0 0.0
        %5445 = vmatpush2.msra.mxu0 0.0
        %5446 = vmatprep.mubr.f32.mxu0 0.0
        %5447 = vmatmul.mubr.f32.gmra.mxu0 %v5309
        %v5448 = vpop.f32.mrf.mxu0
        %v5449 = vadd.f32 0.0, %v5448
        %v5450 = vpop.f32.mrf.mxu0
        %v5451 = vadd.f32 0.0, %v5450
        %5452 = vdwg.mxu0
        %5453 = vmatprep.subr.mxu0 0.0
        %5454 = vmatpush1.msra.mxu0 0.0
        %5455 = vmatprep.subr.mxu0 0.0
        %5456 = vmatpush1.msra.mxu0 0.0
        %5457 = vmatprep.subr.mxu0 0.0
        %5458 = vmatpush1.msra.mxu0 0.0
        %5459 = vmatprep.subr.mxu0 0.0
        %5460 = vmatpush1.msra.mxu0 0.0
        %5461 = vmatprep.subr.mxu0 0.0
        %5462 = vmatpush1.msra.mxu0 0.0
        %5463 = vmatprep.subr.mxu0 0.0
        %5464 = vmatpush1.msra.mxu0 0.0
        %5465 = vmatprep.subr.mxu0 0.0
        %5466 = vmatpush1.msra.mxu0 0.0
        %5467 = vmatprep.subr.mxu0 0.0
        %5468 = vmatpush1.msra.mxu0 0.0
        %5469 = vmatprep.subr.mxu0 0.0
        %5470 = vmatpush1.msra.mxu0 0.0
        %5471 = vmatprep.subr.mxu0 0.0
        %5472 = vmatpush1.msra.mxu0 0.0
        %5473 = vmatprep.subr.mxu0 0.0
        %5474 = vmatpush1.msra.mxu0 0.0
        %5475 = vmatprep.subr.mxu0 0.0
        %5476 = vmatpush1.msra.mxu0 0.0
        %5477 = vmatprep.subr.mxu0 0.0
        %5478 = vmatpush1.msra.mxu0 0.0
        %5479 = vmatprep.subr.mxu0 0.0
        %5480 = vmatpush1.msra.mxu0 0.0
        %5481 = vmatprep.subr.mxu0 0.0
        %5482 = vmatpush1.msra.mxu0 0.0
        %5483 = vmatprep.subr.mxu0 %v5294
        %5484 = vmatpush1.msra.mxu0 %v5293
        %5485 = vmatprep.subr.mxu0 0.0
        %5486 = vmatpush2.msra.mxu0 0.0
        %5487 = vmatprep.subr.mxu0 0.0
        %5488 = vmatpush2.msra.mxu0 0.0
        %5489 = vmatprep.subr.mxu0 0.0
        %5490 = vmatpush2.msra.mxu0 0.0
        %5491 = vmatprep.subr.mxu0 0.0
        %5492 = vmatpush2.msra.mxu0 0.0
        %5493 = vmatprep.subr.mxu0 0.0
        %5494 = vmatpush2.msra.mxu0 0.0
        %5495 = vmatprep.subr.mxu0 0.0
        %5496 = vmatpush2.msra.mxu0 0.0
        %5497 = vmatprep.subr.mxu0 0.0
        %5498 = vmatpush2.msra.mxu0 0.0
        %5499 = vmatprep.subr.mxu0 0.0
        %5500 = vmatpush2.msra.mxu0 0.0
        %5501 = vmatprep.subr.mxu0 0.0
        %5502 = vmatpush2.msra.mxu0 0.0
        %5503 = vmatprep.subr.mxu0 0.0
        %5504 = vmatpush2.msra.mxu0 0.0
        %5505 = vmatprep.subr.mxu0 0.0
        %5506 = vmatpush2.msra.mxu0 0.0
        %5507 = vmatprep.subr.mxu0 0.0
        %5508 = vmatpush2.msra.mxu0 0.0
        %5509 = vmatprep.subr.mxu0 0.0
        %5510 = vmatpush2.msra.mxu0 0.0
        %5511 = vmatprep.subr.mxu0 0.0
        %5512 = vmatpush2.msra.mxu0 0.0
        %5513 = vmatprep.subr.mxu0 0.0
        %5514 = vmatpush2.msra.mxu0 0.0
        %5515 = vmatprep.subr.mxu0 0.0
        %5516 = vmatpush2.msra.mxu0 0.0
        %5517 = vmatprep.mubr.f32.mxu0 0.0
        %5518 = vmatmul.mubr.f32.gmra.mxu0 %v5309
        %v5519 = vpop.f32.mrf.mxu0
        %v5520 = vadd.f32 0.0, %v5519
        %v5521 = vpop.f32.mrf.mxu0
        %v5522 = vadd.f32 0.0, %v5521
        %5523 = vdwg.mxu0
        %5524 = vmatprep.subr.mxu0 0.0
        %5525 = vmatpush1.msra.mxu0 0.0
        %5526 = vmatprep.subr.mxu0 0.0
        %5527 = vmatpush1.msra.mxu0 0.0
        %5528 = vmatprep.subr.mxu0 0.0
        %5529 = vmatpush1.msra.mxu0 0.0
        %5530 = vmatprep.subr.mxu0 0.0
        %5531 = vmatpush1.msra.mxu0 0.0
        %5532 = vmatprep.subr.mxu0 0.0
        %5533 = vmatpush1.msra.mxu0 0.0
        %5534 = vmatprep.subr.mxu0 0.0
        %5535 = vmatpush1.msra.mxu0 0.0
        %5536 = vmatprep.subr.mxu0 0.0
        %5537 = vmatpush1.msra.mxu0 0.0
        %5538 = vmatprep.subr.mxu0 0.0
        %5539 = vmatpush1.msra.mxu0 0.0
        %5540 = vmatprep.subr.mxu0 0.0
        %5541 = vmatpush1.msra.mxu0 0.0
        %5542 = vmatprep.subr.mxu0 0.0
        %5543 = vmatpush1.msra.mxu0 0.0
        %5544 = vmatprep.subr.mxu0 0.0
        %5545 = vmatpush1.msra.mxu0 0.0
        %5546 = vmatprep.subr.mxu0 0.0
        %5547 = vmatpush1.msra.mxu0 0.0
        %5548 = vmatprep.subr.mxu0 0.0
        %5549 = vmatpush1.msra.mxu0 0.0
        %5550 = vmatprep.subr.mxu0 0.0
        %5551 = vmatpush1.msra.mxu0 0.0
        %5552 = vmatprep.subr.mxu0 0.0
        %5553 = vmatpush1.msra.mxu0 0.0
        %5554 = vmatprep.subr.mxu0 %v5296
        %5555 = vmatpush1.msra.mxu0 %v5295
        %5556 = vmatprep.subr.mxu0 0.0
        %5557 = vmatpush2.msra.mxu0 0.0
        %5558 = vmatprep.subr.mxu0 0.0
        %5559 = vmatpush2.msra.mxu0 0.0
        %5560 = vmatprep.subr.mxu0 0.0
        %5561 = vmatpush2.msra.mxu0 0.0
        %5562 = vmatprep.subr.mxu0 0.0
        %5563 = vmatpush2.msra.mxu0 0.0
        %5564 = vmatprep.subr.mxu0 0.0
        %5565 = vmatpush2.msra.mxu0 0.0
        %5566 = vmatprep.subr.mxu0 0.0
        %5567 = vmatpush2.msra.mxu0 0.0
        %5568 = vmatprep.subr.mxu0 0.0
        %5569 = vmatpush2.msra.mxu0 0.0
        %5570 = vmatprep.subr.mxu0 0.0
        %5571 = vmatpush2.msra.mxu0 0.0
        %5572 = vmatprep.subr.mxu0 0.0
        %5573 = vmatpush2.msra.mxu0 0.0
        %5574 = vmatprep.subr.mxu0 0.0
        %5575 = vmatpush2.msra.mxu0 0.0
        %5576 = vmatprep.subr.mxu0 0.0
        %5577 = vmatpush2.msra.mxu0 0.0
        %5578 = vmatprep.subr.mxu0 0.0
        %5579 = vmatpush2.msra.mxu0 0.0
        %5580 = vmatprep.subr.mxu0 0.0
        %5581 = vmatpush2.msra.mxu0 0.0
        %5582 = vmatprep.subr.mxu0 0.0
        %5583 = vmatpush2.msra.mxu0 0.0
        %5584 = vmatprep.subr.mxu0 0.0
        %5585 = vmatpush2.msra.mxu0 0.0
        %5586 = vmatprep.subr.mxu0 0.0
        %5587 = vmatpush2.msra.mxu0 0.0
        %5588 = vmatprep.mubr.f32.mxu0 0.0
        %5589 = vmatmul.mubr.f32.gmra.mxu0 %v5309
        %v5590 = vpop.f32.mrf.mxu0
        %v5591 = vadd.f32 0.0, %v5590
        %v5592 = vpop.f32.mrf.mxu0
        %v5593 = vadd.f32 0.0, %v5592
        %5594 = vdwg.mxu0
        %5595 = vmatprep.subr.mxu0 0.0
        %5596 = vmatpush1.msra.mxu0 0.0
        %5597 = vmatprep.subr.mxu0 0.0
        %5598 = vmatpush1.msra.mxu0 0.0
        %5599 = vmatprep.subr.mxu0 0.0
        %5600 = vmatpush1.msra.mxu0 0.0
        %5601 = vmatprep.subr.mxu0 0.0
        %5602 = vmatpush1.msra.mxu0 0.0
        %5603 = vmatprep.subr.mxu0 0.0
        %5604 = vmatpush1.msra.mxu0 0.0
        %5605 = vmatprep.subr.mxu0 0.0
        %5606 = vmatpush1.msra.mxu0 0.0
        %5607 = vmatprep.subr.mxu0 0.0
        %5608 = vmatpush1.msra.mxu0 0.0
        %5609 = vmatprep.subr.mxu0 0.0
        %5610 = vmatpush1.msra.mxu0 0.0
        %5611 = vmatprep.subr.mxu0 0.0
        %5612 = vmatpush1.msra.mxu0 0.0
        %5613 = vmatprep.subr.mxu0 0.0
        %5614 = vmatpush1.msra.mxu0 0.0
        %5615 = vmatprep.subr.mxu0 0.0
        %5616 = vmatpush1.msra.mxu0 0.0
        %5617 = vmatprep.subr.mxu0 0.0
        %5618 = vmatpush1.msra.mxu0 0.0
        %5619 = vmatprep.subr.mxu0 0.0
        %5620 = vmatpush1.msra.mxu0 0.0
        %5621 = vmatprep.subr.mxu0 0.0
        %5622 = vmatpush1.msra.mxu0 0.0
        %5623 = vmatprep.subr.mxu0 0.0
        %5624 = vmatpush1.msra.mxu0 0.0
        %5625 = vmatprep.subr.mxu0 %v5288
        %5626 = vmatpush1.msra.mxu0 %v5297
        %5627 = vmatprep.subr.mxu0 0.0
        %5628 = vmatpush2.msra.mxu0 0.0
        %5629 = vmatprep.subr.mxu0 0.0
        %5630 = vmatpush2.msra.mxu0 0.0
        %5631 = vmatprep.subr.mxu0 0.0
        %5632 = vmatpush2.msra.mxu0 0.0
        %5633 = vmatprep.subr.mxu0 0.0
        %5634 = vmatpush2.msra.mxu0 0.0
        %5635 = vmatprep.subr.mxu0 0.0
        %5636 = vmatpush2.msra.mxu0 0.0
        %5637 = vmatprep.subr.mxu0 0.0
        %5638 = vmatpush2.msra.mxu0 0.0
        %5639 = vmatprep.subr.mxu0 0.0
        %5640 = vmatpush2.msra.mxu0 0.0
        %5641 = vmatprep.subr.mxu0 0.0
        %5642 = vmatpush2.msra.mxu0 0.0
        %5643 = vmatprep.subr.mxu0 0.0
        %5644 = vmatpush2.msra.mxu0 0.0
        %5645 = vmatprep.subr.mxu0 0.0
        %5646 = vmatpush2.msra.mxu0 0.0
        %5647 = vmatprep.subr.mxu0 0.0
        %5648 = vmatpush2.msra.mxu0 0.0
        %5649 = vmatprep.subr.mxu0 0.0
        %5650 = vmatpush2.msra.mxu0 0.0
        %5651 = vmatprep.subr.mxu0 0.0
        %5652 = vmatpush2.msra.mxu0 0.0
        %5653 = vmatprep.subr.mxu0 0.0
        %5654 = vmatpush2.msra.mxu0 0.0
        %5655 = vmatprep.subr.mxu0 0.0
        %5656 = vmatpush2.msra.mxu0 0.0
        %5657 = vmatprep.subr.mxu0 0.0
        %5658 = vmatpush2.msra.mxu0 0.0
        %5659 = vmatprep.mubr.f32.mxu0 0.0
        %5660 = vmatmul.mubr.f32.gmra.mxu0 %v5309
        %v5661 = vpop.f32.mrf.mxu0
        %v5662 = vadd.f32 0.0, %v5661
        %v5663 = vpop.f32.mrf.mxu0
        %v5664 = vadd.f32 0.0, %v5663
        %5665 = vdwg.mxu0
        %v5666 = vadd.f32 %v4979, %v5378
        %v5667 = vadd.f32 %v4981, %v5380
        %v5668 = vadd.f32 %v5050, %v5449
        %v5669 = vadd.f32 %v5052, %v5451
        %v5670 = vadd.f32 %v5121, %v5520
        %v5671 = vadd.f32 %v5123, %v5522
        %v5672 = vadd.f32 %v5192, %v5591
        %v5673 = vadd.f32 %v5194, %v5593
        %v5674 = vadd.f32 %v5263, %v5662
        %v5675 = vadd.f32 %v5265, %v5664
        %s5676 = scalar_lea.vmem %s3, 24
        %v5677 = vld [vmem:[%s5676] sm:$0xff]
        %5678 = vrot.lane.b32.xlu0 %v4488, 94
        %v5679 = vpop.permute.xlu0 %5678
        %5680 = vrot.lane.b32.xlu0 %v4489, 94
        %v5681 = vpop.permute.xlu0 %5680
        %5682 = vrot.lane.b32.xlu0 %v4490, 94
        %v5683 = vpop.permute.xlu0 %5682
        %5684 = vrot.lane.b32.xlu0 %v4491, 94
        %v5685 = vpop.permute.xlu0 %5684
        %5686 = vrot.lane.b32.xlu0 %v4492, 94
        %v5687 = vpop.permute.xlu0 %5686
        %5688 = vrot.lane.b32.xlu0 %v4493, 94
        %v5689 = vpop.permute.xlu0 %5688
        %5690 = vrot.lane.b32.xlu0 %v4494, 94
        %v5691 = vpop.permute.xlu0 %5690
        %5692 = vrot.lane.b32.xlu0 %v4495, 94
        %v5693 = vpop.permute.xlu0 %5692
        %5694 = vrot.lane.b32.xlu0 %v4496, 94
        %v5695 = vpop.permute.xlu0 %5694
        %5696 = vrot.lane.b32.xlu0 %v4497, 94
        %v5697 = vpop.permute.xlu0 %5696
        %v5698 = vsel %vm1621, %v5679, %v5681
        %v5699 = vsel %vm1621, %v5681, %v5683
        %v5700 = vsel %vm1621, %v5683, %v5685
        %v5701 = vsel %vm1621, %v5685, %v5687
        %v5702 = vsel %vm1621, %v5687, %v5689
        %v5703 = vsel %vm1621, %v5689, %v5691
        %v5704 = vsel %vm1621, %v5691, %v5693
        %v5705 = vsel %vm1621, %v5693, %v5695
        %v5706 = vsel %vm1621, %v5695, %v5697
        %v5718 = vsel %vm4550, %v5677, 0
        %5720 = vmatprep.subr.mxu0 0.0
        %5721 = vmatpush1.msra.mxu0 0.0
        %5722 = vmatprep.subr.mxu0 0.0
        %5723 = vmatpush1.msra.mxu0 0.0
        %5724 = vmatprep.subr.mxu0 0.0
        %5725 = vmatpush1.msra.mxu0 0.0
        %5726 = vmatprep.subr.mxu0 0.0
        %5727 = vmatpush1.msra.mxu0 0.0
        %5728 = vmatprep.subr.mxu0 0.0
        %5729 = vmatpush1.msra.mxu0 0.0
        %5730 = vmatprep.subr.mxu0 0.0
        %5731 = vmatpush1.msra.mxu0 0.0
        %5732 = vmatprep.subr.mxu0 0.0
        %5733 = vmatpush1.msra.mxu0 0.0
        %5734 = vmatprep.subr.mxu0 0.0
        %5735 = vmatpush1.msra.mxu0 0.0
        %5736 = vmatprep.subr.mxu0 0.0
        %5737 = vmatpush1.msra.mxu0 0.0
        %5738 = vmatprep.subr.mxu0 0.0
        %5739 = vmatpush1.msra.mxu0 0.0
        %5740 = vmatprep.subr.mxu0 0.0
        %5741 = vmatpush1.msra.mxu0 0.0
        %5742 = vmatprep.subr.mxu0 0.0
        %5743 = vmatpush1.msra.mxu0 0.0
        %5744 = vmatprep.subr.mxu0 0.0
        %5745 = vmatpush1.msra.mxu0 0.0
        %5746 = vmatprep.subr.mxu0 0.0
        %5747 = vmatpush1.msra.mxu0 0.0
        %5748 = vmatprep.subr.mxu0 0.0
        %5749 = vmatpush1.msra.mxu0 0.0
        %5750 = vmatprep.subr.mxu0 %v5699
        %5751 = vmatpush1.msra.mxu0 %v5698
        %5752 = vmatprep.subr.mxu0 0.0
        %5753 = vmatpush2.msra.mxu0 0.0
        %5754 = vmatprep.subr.mxu0 0.0
        %5755 = vmatpush2.msra.mxu0 0.0
        %5756 = vmatprep.subr.mxu0 0.0
        %5757 = vmatpush2.msra.mxu0 0.0
        %5758 = vmatprep.subr.mxu0 0.0
        %5759 = vmatpush2.msra.mxu0 0.0
        %5760 = vmatprep.subr.mxu0 0.0
        %5761 = vmatpush2.msra.mxu0 0.0
        %5762 = vmatprep.subr.mxu0 0.0
        %5763 = vmatpush2.msra.mxu0 0.0
        %5764 = vmatprep.subr.mxu0 0.0
        %5765 = vmatpush2.msra.mxu0 0.0
        %5766 = vmatprep.subr.mxu0 0.0
        %5767 = vmatpush2.msra.mxu0 0.0
        %5768 = vmatprep.subr.mxu0 0.0
        %5769 = vmatpush2.msra.mxu0 0.0
        %5770 = vmatprep.subr.mxu0 0.0
        %5771 = vmatpush2.msra.mxu0 0.0
        %5772 = vmatprep.subr.mxu0 0.0
        %5773 = vmatpush2.msra.mxu0 0.0
        %5774 = vmatprep.subr.mxu0 0.0
        %5775 = vmatpush2.msra.mxu0 0.0
        %5776 = vmatprep.subr.mxu0 0.0
        %5777 = vmatpush2.msra.mxu0 0.0
        %5778 = vmatprep.subr.mxu0 0.0
        %5779 = vmatpush2.msra.mxu0 0.0
        %5780 = vmatprep.subr.mxu0 0.0
        %5781 = vmatpush2.msra.mxu0 0.0
        %5782 = vmatprep.subr.mxu0 0.0
        %5783 = vmatpush2.msra.mxu0 0.0
        %5784 = vmatprep.mubr.f32.mxu0 0.0
        %5785 = vmatmul.mubr.f32.gmra.mxu0 %v5718
        %v5786 = vpop.f32.mrf.mxu0
        %v5787 = vadd.f32 0.0, %v5786
        %v5788 = vpop.f32.mrf.mxu0
        %v5789 = vadd.f32 0.0, %v5788
        %5790 = vdwg.mxu0
        %5791 = vmatprep.subr.mxu0 0.0
        %5792 = vmatpush1.msra.mxu0 0.0
        %5793 = vmatprep.subr.mxu0 0.0
        %5794 = vmatpush1.msra.mxu0 0.0
        %5795 = vmatprep.subr.mxu0 0.0
        %5796 = vmatpush1.msra.mxu0 0.0
        %5797 = vmatprep.subr.mxu0 0.0
        %5798 = vmatpush1.msra.mxu0 0.0
        %5799 = vmatprep.subr.mxu0 0.0
        %5800 = vmatpush1.msra.mxu0 0.0
        %5801 = vmatprep.subr.mxu0 0.0
        %5802 = vmatpush1.msra.mxu0 0.0
        %5803 = vmatprep.subr.mxu0 0.0
        %5804 = vmatpush1.msra.mxu0 0.0
        %5805 = vmatprep.subr.mxu0 0.0
        %5806 = vmatpush1.msra.mxu0 0.0
        %5807 = vmatprep.subr.mxu0 0.0
        %5808 = vmatpush1.msra.mxu0 0.0
        %5809 = vmatprep.subr.mxu0 0.0
        %5810 = vmatpush1.msra.mxu0 0.0
        %5811 = vmatprep.subr.mxu0 0.0
        %5812 = vmatpush1.msra.mxu0 0.0
        %5813 = vmatprep.subr.mxu0 0.0
        %5814 = vmatpush1.msra.mxu0 0.0
        %5815 = vmatprep.subr.mxu0 0.0
        %5816 = vmatpush1.msra.mxu0 0.0
        %5817 = vmatprep.subr.mxu0 0.0
        %5818 = vmatpush1.msra.mxu0 0.0
        %5819 = vmatprep.subr.mxu0 0.0
        %5820 = vmatpush1.msra.mxu0 0.0
        %5821 = vmatprep.subr.mxu0 %v5701
        %5822 = vmatpush1.msra.mxu0 %v5700
        %5823 = vmatprep.subr.mxu0 0.0
        %5824 = vmatpush2.msra.mxu0 0.0
        %5825 = vmatprep.subr.mxu0 0.0
        %5826 = vmatpush2.msra.mxu0 0.0
        %5827 = vmatprep.subr.mxu0 0.0
        %5828 = vmatpush2.msra.mxu0 0.0
        %5829 = vmatprep.subr.mxu0 0.0
        %5830 = vmatpush2.msra.mxu0 0.0
        %5831 = vmatprep.subr.mxu0 0.0
        %5832 = vmatpush2.msra.mxu0 0.0
        %5833 = vmatprep.subr.mxu0 0.0
        %5834 = vmatpush2.msra.mxu0 0.0
        %5835 = vmatprep.subr.mxu0 0.0
        %5836 = vmatpush2.msra.mxu0 0.0
        %5837 = vmatprep.subr.mxu0 0.0
        %5838 = vmatpush2.msra.mxu0 0.0
        %5839 = vmatprep.subr.mxu0 0.0
        %5840 = vmatpush2.msra.mxu0 0.0
        %5841 = vmatprep.subr.mxu0 0.0
        %5842 = vmatpush2.msra.mxu0 0.0
        %5843 = vmatprep.subr.mxu0 0.0
        %5844 = vmatpush2.msra.mxu0 0.0
        %5845 = vmatprep.subr.mxu0 0.0
        %5846 = vmatpush2.msra.mxu0 0.0
        %5847 = vmatprep.subr.mxu0 0.0
        %5848 = vmatpush2.msra.mxu0 0.0
        %5849 = vmatprep.subr.mxu0 0.0
        %5850 = vmatpush2.msra.mxu0 0.0
        %5851 = vmatprep.subr.mxu0 0.0
        %5852 = vmatpush2.msra.mxu0 0.0
        %5853 = vmatprep.subr.mxu0 0.0
        %5854 = vmatpush2.msra.mxu0 0.0
        %5855 = vmatprep.mubr.f32.mxu0 0.0
        %5856 = vmatmul.mubr.f32.gmra.mxu0 %v5718
        %v5857 = vpop.f32.mrf.mxu0
        %v5858 = vadd.f32 0.0, %v5857
        %v5859 = vpop.f32.mrf.mxu0
        %v5860 = vadd.f32 0.0, %v5859
        %5861 = vdwg.mxu0
        %5862 = vmatprep.subr.mxu0 0.0
        %5863 = vmatpush1.msra.mxu0 0.0
        %5864 = vmatprep.subr.mxu0 0.0
        %5865 = vmatpush1.msra.mxu0 0.0
        %5866 = vmatprep.subr.mxu0 0.0
        %5867 = vmatpush1.msra.mxu0 0.0
        %5868 = vmatprep.subr.mxu0 0.0
        %5869 = vmatpush1.msra.mxu0 0.0
        %5870 = vmatprep.subr.mxu0 0.0
        %5871 = vmatpush1.msra.mxu0 0.0
        %5872 = vmatprep.subr.mxu0 0.0
        %5873 = vmatpush1.msra.mxu0 0.0
        %5874 = vmatprep.subr.mxu0 0.0
        %5875 = vmatpush1.msra.mxu0 0.0
        %5876 = vmatprep.subr.mxu0 0.0
        %5877 = vmatpush1.msra.mxu0 0.0
        %5878 = vmatprep.subr.mxu0 0.0
        %5879 = vmatpush1.msra.mxu0 0.0
        %5880 = vmatprep.subr.mxu0 0.0
        %5881 = vmatpush1.msra.mxu0 0.0
        %5882 = vmatprep.subr.mxu0 0.0
        %5883 = vmatpush1.msra.mxu0 0.0
        %5884 = vmatprep.subr.mxu0 0.0
        %5885 = vmatpush1.msra.mxu0 0.0
        %5886 = vmatprep.subr.mxu0 0.0
        %5887 = vmatpush1.msra.mxu0 0.0
        %5888 = vmatprep.subr.mxu0 0.0
        %5889 = vmatpush1.msra.mxu0 0.0
        %5890 = vmatprep.subr.mxu0 0.0
        %5891 = vmatpush1.msra.mxu0 0.0
        %5892 = vmatprep.subr.mxu0 %v5703
        %5893 = vmatpush1.msra.mxu0 %v5702
        %5894 = vmatprep.subr.mxu0 0.0
        %5895 = vmatpush2.msra.mxu0 0.0
        %5896 = vmatprep.subr.mxu0 0.0
        %5897 = vmatpush2.msra.mxu0 0.0
        %5898 = vmatprep.subr.mxu0 0.0
        %5899 = vmatpush2.msra.mxu0 0.0
        %5900 = vmatprep.subr.mxu0 0.0
        %5901 = vmatpush2.msra.mxu0 0.0
        %5902 = vmatprep.subr.mxu0 0.0
        %5903 = vmatpush2.msra.mxu0 0.0
        %5904 = vmatprep.subr.mxu0 0.0
        %5905 = vmatpush2.msra.mxu0 0.0
        %5906 = vmatprep.subr.mxu0 0.0
        %5907 = vmatpush2.msra.mxu0 0.0
        %5908 = vmatprep.subr.mxu0 0.0
        %5909 = vmatpush2.msra.mxu0 0.0
        %5910 = vmatprep.subr.mxu0 0.0
        %5911 = vmatpush2.msra.mxu0 0.0
        %5912 = vmatprep.subr.mxu0 0.0
        %5913 = vmatpush2.msra.mxu0 0.0
        %5914 = vmatprep.subr.mxu0 0.0
        %5915 = vmatpush2.msra.mxu0 0.0
        %5916 = vmatprep.subr.mxu0 0.0
        %5917 = vmatpush2.msra.mxu0 0.0
        %5918 = vmatprep.subr.mxu0 0.0
        %5919 = vmatpush2.msra.mxu0 0.0
        %5920 = vmatprep.subr.mxu0 0.0
        %5921 = vmatpush2.msra.mxu0 0.0
        %5922 = vmatprep.subr.mxu0 0.0
        %5923 = vmatpush2.msra.mxu0 0.0
        %5924 = vmatprep.subr.mxu0 0.0
        %5925 = vmatpush2.msra.mxu0 0.0
        %5926 = vmatprep.mubr.f32.mxu0 0.0
        %5927 = vmatmul.mubr.f32.gmra.mxu0 %v5718
        %v5928 = vpop.f32.mrf.mxu0
        %v5929 = vadd.f32 0.0, %v5928
        %v5930 = vpop.f32.mrf.mxu0
        %v5931 = vadd.f32 0.0, %v5930
        %5932 = vdwg.mxu0
        %5933 = vmatprep.subr.mxu0 0.0
        %5934 = vmatpush1.msra.mxu0 0.0
        %5935 = vmatprep.subr.mxu0 0.0
        %5936 = vmatpush1.msra.mxu0 0.0
        %5937 = vmatprep.subr.mxu0 0.0
        %5938 = vmatpush1.msra.mxu0 0.0
        %5939 = vmatprep.subr.mxu0 0.0
        %5940 = vmatpush1.msra.mxu0 0.0
        %5941 = vmatprep.subr.mxu0 0.0
        %5942 = vmatpush1.msra.mxu0 0.0
        %5943 = vmatprep.subr.mxu0 0.0
        %5944 = vmatpush1.msra.mxu0 0.0
        %5945 = vmatprep.subr.mxu0 0.0
        %5946 = vmatpush1.msra.mxu0 0.0
        %5947 = vmatprep.subr.mxu0 0.0
        %5948 = vmatpush1.msra.mxu0 0.0
        %5949 = vmatprep.subr.mxu0 0.0
        %5950 = vmatpush1.msra.mxu0 0.0
        %5951 = vmatprep.subr.mxu0 0.0
        %5952 = vmatpush1.msra.mxu0 0.0
        %5953 = vmatprep.subr.mxu0 0.0
        %5954 = vmatpush1.msra.mxu0 0.0
        %5955 = vmatprep.subr.mxu0 0.0
        %5956 = vmatpush1.msra.mxu0 0.0
        %5957 = vmatprep.subr.mxu0 0.0
        %5958 = vmatpush1.msra.mxu0 0.0
        %5959 = vmatprep.subr.mxu0 0.0
        %5960 = vmatpush1.msra.mxu0 0.0
        %5961 = vmatprep.subr.mxu0 0.0
        %5962 = vmatpush1.msra.mxu0 0.0
        %5963 = vmatprep.subr.mxu0 %v5705
        %5964 = vmatpush1.msra.mxu0 %v5704
        %5965 = vmatprep.subr.mxu0 0.0
        %5966 = vmatpush2.msra.mxu0 0.0
        %5967 = vmatprep.subr.mxu0 0.0
        %5968 = vmatpush2.msra.mxu0 0.0
        %5969 = vmatprep.subr.mxu0 0.0
        %5970 = vmatpush2.msra.mxu0 0.0
        %5971 = vmatprep.subr.mxu0 0.0
        %5972 = vmatpush2.msra.mxu0 0.0
        %5973 = vmatprep.subr.mxu0 0.0
        %5974 = vmatpush2.msra.mxu0 0.0
        %5975 = vmatprep.subr.mxu0 0.0
        %5976 = vmatpush2.msra.mxu0 0.0
        %5977 = vmatprep.subr.mxu0 0.0
        %5978 = vmatpush2.msra.mxu0 0.0
        %5979 = vmatprep.subr.mxu0 0.0
        %5980 = vmatpush2.msra.mxu0 0.0
        %5981 = vmatprep.subr.mxu0 0.0
        %5982 = vmatpush2.msra.mxu0 0.0
        %5983 = vmatprep.subr.mxu0 0.0
        %5984 = vmatpush2.msra.mxu0 0.0
        %5985 = vmatprep.subr.mxu0 0.0
        %5986 = vmatpush2.msra.mxu0 0.0
        %5987 = vmatprep.subr.mxu0 0.0
        %5988 = vmatpush2.msra.mxu0 0.0
        %5989 = vmatprep.subr.mxu0 0.0
        %5990 = vmatpush2.msra.mxu0 0.0
        %5991 = vmatprep.subr.mxu0 0.0
        %5992 = vmatpush2.msra.mxu0 0.0
        %5993 = vmatprep.subr.mxu0 0.0
        %5994 = vmatpush2.msra.mxu0 0.0
        %5995 = vmatprep.subr.mxu0 0.0
        %5996 = vmatpush2.msra.mxu0 0.0
        %5997 = vmatprep.mubr.f32.mxu0 0.0
        %5998 = vmatmul.mubr.f32.gmra.mxu0 %v5718
        %v5999 = vpop.f32.mrf.mxu0
        %v6000 = vadd.f32 0.0, %v5999
        %v6001 = vpop.f32.mrf.mxu0
        %v6002 = vadd.f32 0.0, %v6001
        %6003 = vdwg.mxu0
        %6004 = vmatprep.subr.mxu0 0.0
        %6005 = vmatpush1.msra.mxu0 0.0
        %6006 = vmatprep.subr.mxu0 0.0
        %6007 = vmatpush1.msra.mxu0 0.0
        %6008 = vmatprep.subr.mxu0 0.0
        %6009 = vmatpush1.msra.mxu0 0.0
        %6010 = vmatprep.subr.mxu0 0.0
        %6011 = vmatpush1.msra.mxu0 0.0
        %6012 = vmatprep.subr.mxu0 0.0
        %6013 = vmatpush1.msra.mxu0 0.0
        %6014 = vmatprep.subr.mxu0 0.0
        %6015 = vmatpush1.msra.mxu0 0.0
        %6016 = vmatprep.subr.mxu0 0.0
        %6017 = vmatpush1.msra.mxu0 0.0
        %6018 = vmatprep.subr.mxu0 0.0
        %6019 = vmatpush1.msra.mxu0 0.0
        %6020 = vmatprep.subr.mxu0 0.0
        %6021 = vmatpush1.msra.mxu0 0.0
        %6022 = vmatprep.subr.mxu0 0.0
        %6023 = vmatpush1.msra.mxu0 0.0
        %6024 = vmatprep.subr.mxu0 0.0
        %6025 = vmatpush1.msra.mxu0 0.0
        %6026 = vmatprep.subr.mxu0 0.0
        %6027 = vmatpush1.msra.mxu0 0.0
        %6028 = vmatprep.subr.mxu0 0.0
        %6029 = vmatpush1.msra.mxu0 0.0
        %6030 = vmatprep.subr.mxu0 0.0
        %6031 = vmatpush1.msra.mxu0 0.0
        %6032 = vmatprep.subr.mxu0 0.0
        %6033 = vmatpush1.msra.mxu0 0.0
        %6034 = vmatprep.subr.mxu0 %v5697
        %6035 = vmatpush1.msra.mxu0 %v5706
        %6036 = vmatprep.subr.mxu0 0.0
        %6037 = vmatpush2.msra.mxu0 0.0
        %6038 = vmatprep.subr.mxu0 0.0
        %6039 = vmatpush2.msra.mxu0 0.0
        %6040 = vmatprep.subr.mxu0 0.0
        %6041 = vmatpush2.msra.mxu0 0.0
        %6042 = vmatprep.subr.mxu0 0.0
        %6043 = vmatpush2.msra.mxu0 0.0
        %6044 = vmatprep.subr.mxu0 0.0
        %6045 = vmatpush2.msra.mxu0 0.0
        %6046 = vmatprep.subr.mxu0 0.0
        %6047 = vmatpush2.msra.mxu0 0.0
        %6048 = vmatprep.subr.mxu0 0.0
        %6049 = vmatpush2.msra.mxu0 0.0
        %6050 = vmatprep.subr.mxu0 0.0
        %6051 = vmatpush2.msra.mxu0 0.0
        %6052 = vmatprep.subr.mxu0 0.0
        %6053 = vmatpush2.msra.mxu0 0.0
        %6054 = vmatprep.subr.mxu0 0.0
        %6055 = vmatpush2.msra.mxu0 0.0
        %6056 = vmatprep.subr.mxu0 0.0
        %6057 = vmatpush2.msra.mxu0 0.0
        %6058 = vmatprep.subr.mxu0 0.0
        %6059 = vmatpush2.msra.mxu0 0.0
        %6060 = vmatprep.subr.mxu0 0.0
        %6061 = vmatpush2.msra.mxu0 0.0
        %6062 = vmatprep.subr.mxu0 0.0
        %6063 = vmatpush2.msra.mxu0 0.0
        %6064 = vmatprep.subr.mxu0 0.0
        %6065 = vmatpush2.msra.mxu0 0.0
        %6066 = vmatprep.subr.mxu0 0.0
        %6067 = vmatpush2.msra.mxu0 0.0
        %6068 = vmatprep.mubr.f32.mxu0 0.0
        %6069 = vmatmul.mubr.f32.gmra.mxu0 %v5718
        %v6070 = vpop.f32.mrf.mxu0
        %v6071 = vadd.f32 0.0, %v6070
        %v6072 = vpop.f32.mrf.mxu0
        %v6073 = vadd.f32 0.0, %v6072
        %6074 = vdwg.mxu0
        %v6075 = vadd.f32 %v5666, %v5787
        %v6076 = vadd.f32 %v5667, %v5789
        %v6077 = vadd.f32 %v5668, %v5858
        %v6078 = vadd.f32 %v5669, %v5860
        %v6079 = vadd.f32 %v5670, %v5929
        %v6080 = vadd.f32 %v5671, %v5931
        %v6081 = vadd.f32 %v5672, %v6000
        %v6082 = vadd.f32 %v5673, %v6002
        %v6083 = vadd.f32 %v5674, %v6071
        %v6084 = vadd.f32 %v5675, %v6073
        %s6085 = scalar_lea.vmem %s3, 32
        %v6086 = vld [vmem:[%s6085] sm:$0xff]
        %6087 = vrot.lane.b32.xlu0 %v4488, 93
        %v6088 = vpop.permute.xlu0 %6087
        %6089 = vrot.lane.b32.xlu0 %v4489, 93
        %v6090 = vpop.permute.xlu0 %6089
        %6091 = vrot.lane.b32.xlu0 %v4490, 93
        %v6092 = vpop.permute.xlu0 %6091
        %6093 = vrot.lane.b32.xlu0 %v4491, 93
        %v6094 = vpop.permute.xlu0 %6093
        %6095 = vrot.lane.b32.xlu0 %v4492, 93
        %v6096 = vpop.permute.xlu0 %6095
        %6097 = vrot.lane.b32.xlu0 %v4493, 93
        %v6098 = vpop.permute.xlu0 %6097
        %6099 = vrot.lane.b32.xlu0 %v4494, 93
        %v6100 = vpop.permute.xlu0 %6099
        %6101 = vrot.lane.b32.xlu0 %v4495, 93
        %v6102 = vpop.permute.xlu0 %6101
        %6103 = vrot.lane.b32.xlu0 %v4496, 93
        %v6104 = vpop.permute.xlu0 %6103
        %6105 = vrot.lane.b32.xlu0 %v4497, 93
        %v6106 = vpop.permute.xlu0 %6105
        %v6107 = vsel %vm2080, %v6088, %v6090
        %v6108 = vsel %vm2080, %v6090, %v6092
        %v6109 = vsel %vm2080, %v6092, %v6094
        %v6110 = vsel %vm2080, %v6094, %v6096
        %v6111 = vsel %vm2080, %v6096, %v6098
        %v6112 = vsel %vm2080, %v6098, %v6100
        %v6113 = vsel %vm2080, %v6100, %v6102
        %v6114 = vsel %vm2080, %v6102, %v6104
        %v6115 = vsel %vm2080, %v6104, %v6106
        %v6127 = vsel %vm4550, %v6086, 0
        %6129 = vmatprep.subr.mxu0 0.0
        %6130 = vmatpush1.msra.mxu0 0.0
        %6131 = vmatprep.subr.mxu0 0.0
        %6132 = vmatpush1.msra.mxu0 0.0
        %6133 = vmatprep.subr.mxu0 0.0
        %6134 = vmatpush1.msra.mxu0 0.0
        %6135 = vmatprep.subr.mxu0 0.0
        %6136 = vmatpush1.msra.mxu0 0.0
        %6137 = vmatprep.subr.mxu0 0.0
        %6138 = vmatpush1.msra.mxu0 0.0
        %6139 = vmatprep.subr.mxu0 0.0
        %6140 = vmatpush1.msra.mxu0 0.0
        %6141 = vmatprep.subr.mxu0 0.0
        %6142 = vmatpush1.msra.mxu0 0.0
        %6143 = vmatprep.subr.mxu0 0.0
        %6144 = vmatpush1.msra.mxu0 0.0
        %6145 = vmatprep.subr.mxu0 0.0
        %6146 = vmatpush1.msra.mxu0 0.0
        %6147 = vmatprep.subr.mxu0 0.0
        %6148 = vmatpush1.msra.mxu0 0.0
        %6149 = vmatprep.subr.mxu0 0.0
        %6150 = vmatpush1.msra.mxu0 0.0
        %6151 = vmatprep.subr.mxu0 0.0
        %6152 = vmatpush1.msra.mxu0 0.0
        %6153 = vmatprep.subr.mxu0 0.0
        %6154 = vmatpush1.msra.mxu0 0.0
        %6155 = vmatprep.subr.mxu0 0.0
        %6156 = vmatpush1.msra.mxu0 0.0
        %6157 = vmatprep.subr.mxu0 0.0
        %6158 = vmatpush1.msra.mxu0 0.0
        %6159 = vmatprep.subr.mxu0 %v6108
        %6160 = vmatpush1.msra.mxu0 %v6107
        %6161 = vmatprep.subr.mxu0 0.0
        %6162 = vmatpush2.msra.mxu0 0.0
        %6163 = vmatprep.subr.mxu0 0.0
        %6164 = vmatpush2.msra.mxu0 0.0
        %6165 = vmatprep.subr.mxu0 0.0
        %6166 = vmatpush2.msra.mxu0 0.0
        %6167 = vmatprep.subr.mxu0 0.0
        %6168 = vmatpush2.msra.mxu0 0.0
        %6169 = vmatprep.subr.mxu0 0.0
        %6170 = vmatpush2.msra.mxu0 0.0
        %6171 = vmatprep.subr.mxu0 0.0
        %6172 = vmatpush2.msra.mxu0 0.0
        %6173 = vmatprep.subr.mxu0 0.0
        %6174 = vmatpush2.msra.mxu0 0.0
        %6175 = vmatprep.subr.mxu0 0.0
        %6176 = vmatpush2.msra.mxu0 0.0
        %6177 = vmatprep.subr.mxu0 0.0
        %6178 = vmatpush2.msra.mxu0 0.0
        %6179 = vmatprep.subr.mxu0 0.0
        %6180 = vmatpush2.msra.mxu0 0.0
        %6181 = vmatprep.subr.mxu0 0.0
        %6182 = vmatpush2.msra.mxu0 0.0
        %6183 = vmatprep.subr.mxu0 0.0
        %6184 = vmatpush2.msra.mxu0 0.0
        %6185 = vmatprep.subr.mxu0 0.0
        %6186 = vmatpush2.msra.mxu0 0.0
        %6187 = vmatprep.subr.mxu0 0.0
        %6188 = vmatpush2.msra.mxu0 0.0
        %6189 = vmatprep.subr.mxu0 0.0
        %6190 = vmatpush2.msra.mxu0 0.0
        %6191 = vmatprep.subr.mxu0 0.0
        %6192 = vmatpush2.msra.mxu0 0.0
        %6193 = vmatprep.mubr.f32.mxu0 0.0
        %6194 = vmatmul.mubr.f32.gmra.mxu0 %v6127
        %v6195 = vpop.f32.mrf.mxu0
        %v6196 = vadd.f32 0.0, %v6195
        %v6197 = vpop.f32.mrf.mxu0
        %v6198 = vadd.f32 0.0, %v6197
        %6199 = vdwg.mxu0
        %6200 = vmatprep.subr.mxu0 0.0
        %6201 = vmatpush1.msra.mxu0 0.0
        %6202 = vmatprep.subr.mxu0 0.0
        %6203 = vmatpush1.msra.mxu0 0.0
        %6204 = vmatprep.subr.mxu0 0.0
        %6205 = vmatpush1.msra.mxu0 0.0
        %6206 = vmatprep.subr.mxu0 0.0
        %6207 = vmatpush1.msra.mxu0 0.0
        %6208 = vmatprep.subr.mxu0 0.0
        %6209 = vmatpush1.msra.mxu0 0.0
        %6210 = vmatprep.subr.mxu0 0.0
        %6211 = vmatpush1.msra.mxu0 0.0
        %6212 = vmatprep.subr.mxu0 0.0
        %6213 = vmatpush1.msra.mxu0 0.0
        %6214 = vmatprep.subr.mxu0 0.0
        %6215 = vmatpush1.msra.mxu0 0.0
        %6216 = vmatprep.subr.mxu0 0.0
        %6217 = vmatpush1.msra.mxu0 0.0
        %6218 = vmatprep.subr.mxu0 0.0
        %6219 = vmatpush1.msra.mxu0 0.0
        %6220 = vmatprep.subr.mxu0 0.0
        %6221 = vmatpush1.msra.mxu0 0.0
        %6222 = vmatprep.subr.mxu0 0.0
        %6223 = vmatpush1.msra.mxu0 0.0
        %6224 = vmatprep.subr.mxu0 0.0
        %6225 = vmatpush1.msra.mxu0 0.0
        %6226 = vmatprep.subr.mxu0 0.0
        %6227 = vmatpush1.msra.mxu0 0.0
        %6228 = vmatprep.subr.mxu0 0.0
        %6229 = vmatpush1.msra.mxu0 0.0
        %6230 = vmatprep.subr.mxu0 %v6110
        %6231 = vmatpush1.msra.mxu0 %v6109
        %6232 = vmatprep.subr.mxu0 0.0
        %6233 = vmatpush2.msra.mxu0 0.0
        %6234 = vmatprep.subr.mxu0 0.0
        %6235 = vmatpush2.msra.mxu0 0.0
        %6236 = vmatprep.subr.mxu0 0.0
        %6237 = vmatpush2.msra.mxu0 0.0
        %6238 = vmatprep.subr.mxu0 0.0
        %6239 = vmatpush2.msra.mxu0 0.0
        %6240 = vmatprep.subr.mxu0 0.0
        %6241 = vmatpush2.msra.mxu0 0.0
        %6242 = vmatprep.subr.mxu0 0.0
        %6243 = vmatpush2.msra.mxu0 0.0
        %6244 = vmatprep.subr.mxu0 0.0
        %6245 = vmatpush2.msra.mxu0 0.0
        %6246 = vmatprep.subr.mxu0 0.0
        %6247 = vmatpush2.msra.mxu0 0.0
        %6248 = vmatprep.subr.mxu0 0.0
        %6249 = vmatpush2.msra.mxu0 0.0
        %6250 = vmatprep.subr.mxu0 0.0
        %6251 = vmatpush2.msra.mxu0 0.0
        %6252 = vmatprep.subr.mxu0 0.0
        %6253 = vmatpush2.msra.mxu0 0.0
        %6254 = vmatprep.subr.mxu0 0.0
        %6255 = vmatpush2.msra.mxu0 0.0
        %6256 = vmatprep.subr.mxu0 0.0
        %6257 = vmatpush2.msra.mxu0 0.0
        %6258 = vmatprep.subr.mxu0 0.0
        %6259 = vmatpush2.msra.mxu0 0.0
        %6260 = vmatprep.subr.mxu0 0.0
        %6261 = vmatpush2.msra.mxu0 0.0
        %6262 = vmatprep.subr.mxu0 0.0
        %6263 = vmatpush2.msra.mxu0 0.0
        %6264 = vmatprep.mubr.f32.mxu0 0.0
        %6265 = vmatmul.mubr.f32.gmra.mxu0 %v6127
        %v6266 = vpop.f32.mrf.mxu0
        %v6267 = vadd.f32 0.0, %v6266
        %v6268 = vpop.f32.mrf.mxu0
        %v6269 = vadd.f32 0.0, %v6268
        %6270 = vdwg.mxu0
        %6271 = vmatprep.subr.mxu0 0.0
        %6272 = vmatpush1.msra.mxu0 0.0
        %6273 = vmatprep.subr.mxu0 0.0
        %6274 = vmatpush1.msra.mxu0 0.0
        %6275 = vmatprep.subr.mxu0 0.0
        %6276 = vmatpush1.msra.mxu0 0.0
        %6277 = vmatprep.subr.mxu0 0.0
        %6278 = vmatpush1.msra.mxu0 0.0
        %6279 = vmatprep.subr.mxu0 0.0
        %6280 = vmatpush1.msra.mxu0 0.0
        %6281 = vmatprep.subr.mxu0 0.0
        %6282 = vmatpush1.msra.mxu0 0.0
        %6283 = vmatprep.subr.mxu0 0.0
        %6284 = vmatpush1.msra.mxu0 0.0
        %6285 = vmatprep.subr.mxu0 0.0
        %6286 = vmatpush1.msra.mxu0 0.0
        %6287 = vmatprep.subr.mxu0 0.0
        %6288 = vmatpush1.msra.mxu0 0.0
        %6289 = vmatprep.subr.mxu0 0.0
        %6290 = vmatpush1.msra.mxu0 0.0
        %6291 = vmatprep.subr.mxu0 0.0
        %6292 = vmatpush1.msra.mxu0 0.0
        %6293 = vmatprep.subr.mxu0 0.0
        %6294 = vmatpush1.msra.mxu0 0.0
        %6295 = vmatprep.subr.mxu0 0.0
        %6296 = vmatpush1.msra.mxu0 0.0
        %6297 = vmatprep.subr.mxu0 0.0
        %6298 = vmatpush1.msra.mxu0 0.0
        %6299 = vmatprep.subr.mxu0 0.0
        %6300 = vmatpush1.msra.mxu0 0.0
        %6301 = vmatprep.subr.mxu0 %v6112
        %6302 = vmatpush1.msra.mxu0 %v6111
        %6303 = vmatprep.subr.mxu0 0.0
        %6304 = vmatpush2.msra.mxu0 0.0
        %6305 = vmatprep.subr.mxu0 0.0
        %6306 = vmatpush2.msra.mxu0 0.0
        %6307 = vmatprep.subr.mxu0 0.0
        %6308 = vmatpush2.msra.mxu0 0.0
        %6309 = vmatprep.subr.mxu0 0.0
        %6310 = vmatpush2.msra.mxu0 0.0
        %6311 = vmatprep.subr.mxu0 0.0
        %6312 = vmatpush2.msra.mxu0 0.0
        %6313 = vmatprep.subr.mxu0 0.0
        %6314 = vmatpush2.msra.mxu0 0.0
        %6315 = vmatprep.subr.mxu0 0.0
        %6316 = vmatpush2.msra.mxu0 0.0
        %6317 = vmatprep.subr.mxu0 0.0
        %6318 = vmatpush2.msra.mxu0 0.0
        %6319 = vmatprep.subr.mxu0 0.0
        %6320 = vmatpush2.msra.mxu0 0.0
        %6321 = vmatprep.subr.mxu0 0.0
        %6322 = vmatpush2.msra.mxu0 0.0
        %6323 = vmatprep.subr.mxu0 0.0
        %6324 = vmatpush2.msra.mxu0 0.0
        %6325 = vmatprep.subr.mxu0 0.0
        %6326 = vmatpush2.msra.mxu0 0.0
        %6327 = vmatprep.subr.mxu0 0.0
        %6328 = vmatpush2.msra.mxu0 0.0
        %6329 = vmatprep.subr.mxu0 0.0
        %6330 = vmatpush2.msra.mxu0 0.0
        %6331 = vmatprep.subr.mxu0 0.0
        %6332 = vmatpush2.msra.mxu0 0.0
        %6333 = vmatprep.subr.mxu0 0.0
        %6334 = vmatpush2.msra.mxu0 0.0
        %6335 = vmatprep.mubr.f32.mxu0 0.0
        %6336 = vmatmul.mubr.f32.gmra.mxu0 %v6127
        %v6337 = vpop.f32.mrf.mxu0
        %v6338 = vadd.f32 0.0, %v6337
        %v6339 = vpop.f32.mrf.mxu0
        %v6340 = vadd.f32 0.0, %v6339
        %6341 = vdwg.mxu0
        %6342 = vmatprep.subr.mxu0 0.0
        %6343 = vmatpush1.msra.mxu0 0.0
        %6344 = vmatprep.subr.mxu0 0.0
        %6345 = vmatpush1.msra.mxu0 0.0
        %6346 = vmatprep.subr.mxu0 0.0
        %6347 = vmatpush1.msra.mxu0 0.0
        %6348 = vmatprep.subr.mxu0 0.0
        %6349 = vmatpush1.msra.mxu0 0.0
        %6350 = vmatprep.subr.mxu0 0.0
        %6351 = vmatpush1.msra.mxu0 0.0
        %6352 = vmatprep.subr.mxu0 0.0
        %6353 = vmatpush1.msra.mxu0 0.0
        %6354 = vmatprep.subr.mxu0 0.0
        %6355 = vmatpush1.msra.mxu0 0.0
        %6356 = vmatprep.subr.mxu0 0.0
        %6357 = vmatpush1.msra.mxu0 0.0
        %6358 = vmatprep.subr.mxu0 0.0
        %6359 = vmatpush1.msra.mxu0 0.0
        %6360 = vmatprep.subr.mxu0 0.0
        %6361 = vmatpush1.msra.mxu0 0.0
        %6362 = vmatprep.subr.mxu0 0.0
        %6363 = vmatpush1.msra.mxu0 0.0
        %6364 = vmatprep.subr.mxu0 0.0
        %6365 = vmatpush1.msra.mxu0 0.0
        %6366 = vmatprep.subr.mxu0 0.0
        %6367 = vmatpush1.msra.mxu0 0.0
        %6368 = vmatprep.subr.mxu0 0.0
        %6369 = vmatpush1.msra.mxu0 0.0
        %6370 = vmatprep.subr.mxu0 0.0
        %6371 = vmatpush1.msra.mxu0 0.0
        %6372 = vmatprep.subr.mxu0 %v6114
        %6373 = vmatpush1.msra.mxu0 %v6113
        %6374 = vmatprep.subr.mxu0 0.0
        %6375 = vmatpush2.msra.mxu0 0.0
        %6376 = vmatprep.subr.mxu0 0.0
        %6377 = vmatpush2.msra.mxu0 0.0
        %6378 = vmatprep.subr.mxu0 0.0
        %6379 = vmatpush2.msra.mxu0 0.0
        %6380 = vmatprep.subr.mxu0 0.0
        %6381 = vmatpush2.msra.mxu0 0.0
        %6382 = vmatprep.subr.mxu0 0.0
        %6383 = vmatpush2.msra.mxu0 0.0
        %6384 = vmatprep.subr.mxu0 0.0
        %6385 = vmatpush2.msra.mxu0 0.0
        %6386 = vmatprep.subr.mxu0 0.0
        %6387 = vmatpush2.msra.mxu0 0.0
        %6388 = vmatprep.subr.mxu0 0.0
        %6389 = vmatpush2.msra.mxu0 0.0
        %6390 = vmatprep.subr.mxu0 0.0
        %6391 = vmatpush2.msra.mxu0 0.0
        %6392 = vmatprep.subr.mxu0 0.0
        %6393 = vmatpush2.msra.mxu0 0.0
        %6394 = vmatprep.subr.mxu0 0.0
        %6395 = vmatpush2.msra.mxu0 0.0
        %6396 = vmatprep.subr.mxu0 0.0
        %6397 = vmatpush2.msra.mxu0 0.0
        %6398 = vmatprep.subr.mxu0 0.0
        %6399 = vmatpush2.msra.mxu0 0.0
        %6400 = vmatprep.subr.mxu0 0.0
        %6401 = vmatpush2.msra.mxu0 0.0
        %6402 = vmatprep.subr.mxu0 0.0
        %6403 = vmatpush2.msra.mxu0 0.0
        %6404 = vmatprep.subr.mxu0 0.0
        %6405 = vmatpush2.msra.mxu0 0.0
        %6406 = vmatprep.mubr.f32.mxu0 0.0
        %6407 = vmatmul.mubr.f32.gmra.mxu0 %v6127
        %v6408 = vpop.f32.mrf.mxu0
        %v6409 = vadd.f32 0.0, %v6408
        %v6410 = vpop.f32.mrf.mxu0
        %v6411 = vadd.f32 0.0, %v6410
        %6412 = vdwg.mxu0
        %6413 = vmatprep.subr.mxu0 0.0
        %6414 = vmatpush1.msra.mxu0 0.0
        %6415 = vmatprep.subr.mxu0 0.0
        %6416 = vmatpush1.msra.mxu0 0.0
        %6417 = vmatprep.subr.mxu0 0.0
        %6418 = vmatpush1.msra.mxu0 0.0
        %6419 = vmatprep.subr.mxu0 0.0
        %6420 = vmatpush1.msra.mxu0 0.0
        %6421 = vmatprep.subr.mxu0 0.0
        %6422 = vmatpush1.msra.mxu0 0.0
        %6423 = vmatprep.subr.mxu0 0.0
        %6424 = vmatpush1.msra.mxu0 0.0
        %6425 = vmatprep.subr.mxu0 0.0
        %6426 = vmatpush1.msra.mxu0 0.0
        %6427 = vmatprep.subr.mxu0 0.0
        %6428 = vmatpush1.msra.mxu0 0.0
        %6429 = vmatprep.subr.mxu0 0.0
        %6430 = vmatpush1.msra.mxu0 0.0
        %6431 = vmatprep.subr.mxu0 0.0
        %6432 = vmatpush1.msra.mxu0 0.0
        %6433 = vmatprep.subr.mxu0 0.0
        %6434 = vmatpush1.msra.mxu0 0.0
        %6435 = vmatprep.subr.mxu0 0.0
        %6436 = vmatpush1.msra.mxu0 0.0
        %6437 = vmatprep.subr.mxu0 0.0
        %6438 = vmatpush1.msra.mxu0 0.0
        %6439 = vmatprep.subr.mxu0 0.0
        %6440 = vmatpush1.msra.mxu0 0.0
        %6441 = vmatprep.subr.mxu0 0.0
        %6442 = vmatpush1.msra.mxu0 0.0
        %6443 = vmatprep.subr.mxu0 %v6106
        %6444 = vmatpush1.msra.mxu0 %v6115
        %6445 = vmatprep.subr.mxu0 0.0
        %6446 = vmatpush2.msra.mxu0 0.0
        %6447 = vmatprep.subr.mxu0 0.0
        %6448 = vmatpush2.msra.mxu0 0.0
        %6449 = vmatprep.subr.mxu0 0.0
        %6450 = vmatpush2.msra.mxu0 0.0
        %6451 = vmatprep.subr.mxu0 0.0
        %6452 = vmatpush2.msra.mxu0 0.0
        %6453 = vmatprep.subr.mxu0 0.0
        %6454 = vmatpush2.msra.mxu0 0.0
        %6455 = vmatprep.subr.mxu0 0.0
        %6456 = vmatpush2.msra.mxu0 0.0
        %6457 = vmatprep.subr.mxu0 0.0
        %6458 = vmatpush2.msra.mxu0 0.0
        %6459 = vmatprep.subr.mxu0 0.0
        %6460 = vmatpush2.msra.mxu0 0.0
        %6461 = vmatprep.subr.mxu0 0.0
        %6462 = vmatpush2.msra.mxu0 0.0
        %6463 = vmatprep.subr.mxu0 0.0
        %6464 = vmatpush2.msra.mxu0 0.0
        %6465 = vmatprep.subr.mxu0 0.0
        %6466 = vmatpush2.msra.mxu0 0.0
        %6467 = vmatprep.subr.mxu0 0.0
        %6468 = vmatpush2.msra.mxu0 0.0
        %6469 = vmatprep.subr.mxu0 0.0
        %6470 = vmatpush2.msra.mxu0 0.0
        %6471 = vmatprep.subr.mxu0 0.0
        %6472 = vmatpush2.msra.mxu0 0.0
        %6473 = vmatprep.subr.mxu0 0.0
        %6474 = vmatpush2.msra.mxu0 0.0
        %6475 = vmatprep.subr.mxu0 0.0
        %6476 = vmatpush2.msra.mxu0 0.0
        %6477 = vmatprep.mubr.f32.mxu0 0.0
        %6478 = vmatmul.mubr.f32.gmra.mxu0 %v6127
        %v6479 = vpop.f32.mrf.mxu0
        %v6480 = vadd.f32 0.0, %v6479
        %v6481 = vpop.f32.mrf.mxu0
        %v6482 = vadd.f32 0.0, %v6481
        %6483 = vdwg.mxu0
        %v6484 = vadd.f32 %v6075, %v6196
        %v6485 = vadd.f32 %v6076, %v6198
        %v6486 = vadd.f32 %v6077, %v6267
        %v6487 = vadd.f32 %v6078, %v6269
        %v6488 = vadd.f32 %v6079, %v6338
        %v6489 = vadd.f32 %v6080, %v6340
        %v6490 = vadd.f32 %v6081, %v6409
        %v6491 = vadd.f32 %v6082, %v6411
        %v6492 = vadd.f32 %v6083, %v6480
        %v6493 = vadd.f32 %v6084, %v6482
        %s6494 = scalar_lea.vmem %s3, 40
        %v6495 = vld [vmem:[%s6494] sm:$0xff]
        %6496 = vrot.lane.b32.xlu0 %v4488, 92
        %v6497 = vpop.permute.xlu0 %6496
        %6498 = vrot.lane.b32.xlu0 %v4489, 92
        %v6499 = vpop.permute.xlu0 %6498
        %6500 = vrot.lane.b32.xlu0 %v4490, 92
        %v6501 = vpop.permute.xlu0 %6500
        %6502 = vrot.lane.b32.xlu0 %v4491, 92
        %v6503 = vpop.permute.xlu0 %6502
        %6504 = vrot.lane.b32.xlu0 %v4492, 92
        %v6505 = vpop.permute.xlu0 %6504
        %6506 = vrot.lane.b32.xlu0 %v4493, 92
        %v6507 = vpop.permute.xlu0 %6506
        %6508 = vrot.lane.b32.xlu0 %v4494, 92
        %v6509 = vpop.permute.xlu0 %6508
        %6510 = vrot.lane.b32.xlu0 %v4495, 92
        %v6511 = vpop.permute.xlu0 %6510
        %6512 = vrot.lane.b32.xlu0 %v4496, 92
        %v6513 = vpop.permute.xlu0 %6512
        %6514 = vrot.lane.b32.xlu0 %v4497, 92
        %v6515 = vpop.permute.xlu0 %6514
        %v6516 = vsel %vm2539, %v6497, %v6499
        %v6517 = vsel %vm2539, %v6499, %v6501
        %v6518 = vsel %vm2539, %v6501, %v6503
        %v6519 = vsel %vm2539, %v6503, %v6505
        %v6520 = vsel %vm2539, %v6505, %v6507
        %v6521 = vsel %vm2539, %v6507, %v6509
        %v6522 = vsel %vm2539, %v6509, %v6511
        %v6523 = vsel %vm2539, %v6511, %v6513
        %v6524 = vsel %vm2539, %v6513, %v6515
        %v6536 = vsel %vm4550, %v6495, 0
        %6538 = vmatprep.subr.mxu0 0.0
        %6539 = vmatpush1.msra.mxu0 0.0
        %6540 = vmatprep.subr.mxu0 0.0
        %6541 = vmatpush1.msra.mxu0 0.0
        %6542 = vmatprep.subr.mxu0 0.0
        %6543 = vmatpush1.msra.mxu0 0.0
        %6544 = vmatprep.subr.mxu0 0.0
        %6545 = vmatpush1.msra.mxu0 0.0
        %6546 = vmatprep.subr.mxu0 0.0
        %6547 = vmatpush1.msra.mxu0 0.0
        %6548 = vmatprep.subr.mxu0 0.0
        %6549 = vmatpush1.msra.mxu0 0.0
        %6550 = vmatprep.subr.mxu0 0.0
        %6551 = vmatpush1.msra.mxu0 0.0
        %6552 = vmatprep.subr.mxu0 0.0
        %6553 = vmatpush1.msra.mxu0 0.0
        %6554 = vmatprep.subr.mxu0 0.0
        %6555 = vmatpush1.msra.mxu0 0.0
        %6556 = vmatprep.subr.mxu0 0.0
        %6557 = vmatpush1.msra.mxu0 0.0
        %6558 = vmatprep.subr.mxu0 0.0
        %6559 = vmatpush1.msra.mxu0 0.0
        %6560 = vmatprep.subr.mxu0 0.0
        %6561 = vmatpush1.msra.mxu0 0.0
        %6562 = vmatprep.subr.mxu0 0.0
        %6563 = vmatpush1.msra.mxu0 0.0
        %6564 = vmatprep.subr.mxu0 0.0
        %6565 = vmatpush1.msra.mxu0 0.0
        %6566 = vmatprep.subr.mxu0 0.0
        %6567 = vmatpush1.msra.mxu0 0.0
        %6568 = vmatprep.subr.mxu0 %v6517
        %6569 = vmatpush1.msra.mxu0 %v6516
        %6570 = vmatprep.subr.mxu0 0.0
        %6571 = vmatpush2.msra.mxu0 0.0
        %6572 = vmatprep.subr.mxu0 0.0
        %6573 = vmatpush2.msra.mxu0 0.0
        %6574 = vmatprep.subr.mxu0 0.0
        %6575 = vmatpush2.msra.mxu0 0.0
        %6576 = vmatprep.subr.mxu0 0.0
        %6577 = vmatpush2.msra.mxu0 0.0
        %6578 = vmatprep.subr.mxu0 0.0
        %6579 = vmatpush2.msra.mxu0 0.0
        %6580 = vmatprep.subr.mxu0 0.0
        %6581 = vmatpush2.msra.mxu0 0.0
        %6582 = vmatprep.subr.mxu0 0.0
        %6583 = vmatpush2.msra.mxu0 0.0
        %6584 = vmatprep.subr.mxu0 0.0
        %6585 = vmatpush2.msra.mxu0 0.0
        %6586 = vmatprep.subr.mxu0 0.0
        %6587 = vmatpush2.msra.mxu0 0.0
        %6588 = vmatprep.subr.mxu0 0.0
        %6589 = vmatpush2.msra.mxu0 0.0
        %6590 = vmatprep.subr.mxu0 0.0
        %6591 = vmatpush2.msra.mxu0 0.0
        %6592 = vmatprep.subr.mxu0 0.0
        %6593 = vmatpush2.msra.mxu0 0.0
        %6594 = vmatprep.subr.mxu0 0.0
        %6595 = vmatpush2.msra.mxu0 0.0
        %6596 = vmatprep.subr.mxu0 0.0
        %6597 = vmatpush2.msra.mxu0 0.0
        %6598 = vmatprep.subr.mxu0 0.0
        %6599 = vmatpush2.msra.mxu0 0.0
        %6600 = vmatprep.subr.mxu0 0.0
        %6601 = vmatpush2.msra.mxu0 0.0
        %6602 = vmatprep.mubr.f32.mxu0 0.0
        %6603 = vmatmul.mubr.f32.gmra.mxu0 %v6536
        %v6604 = vpop.f32.mrf.mxu0
        %v6605 = vadd.f32 0.0, %v6604
        %v6606 = vpop.f32.mrf.mxu0
        %v6607 = vadd.f32 0.0, %v6606
        %6608 = vdwg.mxu0
        %6609 = vmatprep.subr.mxu0 0.0
        %6610 = vmatpush1.msra.mxu0 0.0
        %6611 = vmatprep.subr.mxu0 0.0
        %6612 = vmatpush1.msra.mxu0 0.0
        %6613 = vmatprep.subr.mxu0 0.0
        %6614 = vmatpush1.msra.mxu0 0.0
        %6615 = vmatprep.subr.mxu0 0.0
        %6616 = vmatpush1.msra.mxu0 0.0
        %6617 = vmatprep.subr.mxu0 0.0
        %6618 = vmatpush1.msra.mxu0 0.0
        %6619 = vmatprep.subr.mxu0 0.0
        %6620 = vmatpush1.msra.mxu0 0.0
        %6621 = vmatprep.subr.mxu0 0.0
        %6622 = vmatpush1.msra.mxu0 0.0
        %6623 = vmatprep.subr.mxu0 0.0
        %6624 = vmatpush1.msra.mxu0 0.0
        %6625 = vmatprep.subr.mxu0 0.0
        %6626 = vmatpush1.msra.mxu0 0.0
        %6627 = vmatprep.subr.mxu0 0.0
        %6628 = vmatpush1.msra.mxu0 0.0
        %6629 = vmatprep.subr.mxu0 0.0
        %6630 = vmatpush1.msra.mxu0 0.0
        %6631 = vmatprep.subr.mxu0 0.0
        %6632 = vmatpush1.msra.mxu0 0.0
        %6633 = vmatprep.subr.mxu0 0.0
        %6634 = vmatpush1.msra.mxu0 0.0
        %6635 = vmatprep.subr.mxu0 0.0
        %6636 = vmatpush1.msra.mxu0 0.0
        %6637 = vmatprep.subr.mxu0 0.0
        %6638 = vmatpush1.msra.mxu0 0.0
        %6639 = vmatprep.subr.mxu0 %v6519
        %6640 = vmatpush1.msra.mxu0 %v6518
        %6641 = vmatprep.subr.mxu0 0.0
        %6642 = vmatpush2.msra.mxu0 0.0
        %6643 = vmatprep.subr.mxu0 0.0
        %6644 = vmatpush2.msra.mxu0 0.0
        %6645 = vmatprep.subr.mxu0 0.0
        %6646 = vmatpush2.msra.mxu0 0.0
        %6647 = vmatprep.subr.mxu0 0.0
        %6648 = vmatpush2.msra.mxu0 0.0
        %6649 = vmatprep.subr.mxu0 0.0
        %6650 = vmatpush2.msra.mxu0 0.0
        %6651 = vmatprep.subr.mxu0 0.0
        %6652 = vmatpush2.msra.mxu0 0.0
        %6653 = vmatprep.subr.mxu0 0.0
        %6654 = vmatpush2.msra.mxu0 0.0
        %6655 = vmatprep.subr.mxu0 0.0
        %6656 = vmatpush2.msra.mxu0 0.0
        %6657 = vmatprep.subr.mxu0 0.0
        %6658 = vmatpush2.msra.mxu0 0.0
        %6659 = vmatprep.subr.mxu0 0.0
        %6660 = vmatpush2.msra.mxu0 0.0
        %6661 = vmatprep.subr.mxu0 0.0
        %6662 = vmatpush2.msra.mxu0 0.0
        %6663 = vmatprep.subr.mxu0 0.0
        %6664 = vmatpush2.msra.mxu0 0.0
        %6665 = vmatprep.subr.mxu0 0.0
        %6666 = vmatpush2.msra.mxu0 0.0
        %6667 = vmatprep.subr.mxu0 0.0
        %6668 = vmatpush2.msra.mxu0 0.0
        %6669 = vmatprep.subr.mxu0 0.0
        %6670 = vmatpush2.msra.mxu0 0.0
        %6671 = vmatprep.subr.mxu0 0.0
        %6672 = vmatpush2.msra.mxu0 0.0
        %6673 = vmatprep.mubr.f32.mxu0 0.0
        %6674 = vmatmul.mubr.f32.gmra.mxu0 %v6536
        %v6675 = vpop.f32.mrf.mxu0
        %v6676 = vadd.f32 0.0, %v6675
        %v6677 = vpop.f32.mrf.mxu0
        %v6678 = vadd.f32 0.0, %v6677
        %6679 = vdwg.mxu0
        %6680 = vmatprep.subr.mxu0 0.0
        %6681 = vmatpush1.msra.mxu0 0.0
        %6682 = vmatprep.subr.mxu0 0.0
        %6683 = vmatpush1.msra.mxu0 0.0
        %6684 = vmatprep.subr.mxu0 0.0
        %6685 = vmatpush1.msra.mxu0 0.0
        %6686 = vmatprep.subr.mxu0 0.0
        %6687 = vmatpush1.msra.mxu0 0.0
        %6688 = vmatprep.subr.mxu0 0.0
        %6689 = vmatpush1.msra.mxu0 0.0
        %6690 = vmatprep.subr.mxu0 0.0
        %6691 = vmatpush1.msra.mxu0 0.0
        %6692 = vmatprep.subr.mxu0 0.0
        %6693 = vmatpush1.msra.mxu0 0.0
        %6694 = vmatprep.subr.mxu0 0.0
        %6695 = vmatpush1.msra.mxu0 0.0
        %6696 = vmatprep.subr.mxu0 0.0
        %6697 = vmatpush1.msra.mxu0 0.0
        %6698 = vmatprep.subr.mxu0 0.0
        %6699 = vmatpush1.msra.mxu0 0.0
        %6700 = vmatprep.subr.mxu0 0.0
        %6701 = vmatpush1.msra.mxu0 0.0
        %6702 = vmatprep.subr.mxu0 0.0
        %6703 = vmatpush1.msra.mxu0 0.0
        %6704 = vmatprep.subr.mxu0 0.0
        %6705 = vmatpush1.msra.mxu0 0.0
        %6706 = vmatprep.subr.mxu0 0.0
        %6707 = vmatpush1.msra.mxu0 0.0
        %6708 = vmatprep.subr.mxu0 0.0
        %6709 = vmatpush1.msra.mxu0 0.0
        %6710 = vmatprep.subr.mxu0 %v6521
        %6711 = vmatpush1.msra.mxu0 %v6520
        %6712 = vmatprep.subr.mxu0 0.0
        %6713 = vmatpush2.msra.mxu0 0.0
        %6714 = vmatprep.subr.mxu0 0.0
        %6715 = vmatpush2.msra.mxu0 0.0
        %6716 = vmatprep.subr.mxu0 0.0
        %6717 = vmatpush2.msra.mxu0 0.0
        %6718 = vmatprep.subr.mxu0 0.0
        %6719 = vmatpush2.msra.mxu0 0.0
        %6720 = vmatprep.subr.mxu0 0.0
        %6721 = vmatpush2.msra.mxu0 0.0
        %6722 = vmatprep.subr.mxu0 0.0
        %6723 = vmatpush2.msra.mxu0 0.0
        %6724 = vmatprep.subr.mxu0 0.0
        %6725 = vmatpush2.msra.mxu0 0.0
        %6726 = vmatprep.subr.mxu0 0.0
        %6727 = vmatpush2.msra.mxu0 0.0
        %6728 = vmatprep.subr.mxu0 0.0
        %6729 = vmatpush2.msra.mxu0 0.0
        %6730 = vmatprep.subr.mxu0 0.0
        %6731 = vmatpush2.msra.mxu0 0.0
        %6732 = vmatprep.subr.mxu0 0.0
        %6733 = vmatpush2.msra.mxu0 0.0
        %6734 = vmatprep.subr.mxu0 0.0
        %6735 = vmatpush2.msra.mxu0 0.0
        %6736 = vmatprep.subr.mxu0 0.0
        %6737 = vmatpush2.msra.mxu0 0.0
        %6738 = vmatprep.subr.mxu0 0.0
        %6739 = vmatpush2.msra.mxu0 0.0
        %6740 = vmatprep.subr.mxu0 0.0
        %6741 = vmatpush2.msra.mxu0 0.0
        %6742 = vmatprep.subr.mxu0 0.0
        %6743 = vmatpush2.msra.mxu0 0.0
        %6744 = vmatprep.mubr.f32.mxu0 0.0
        %6745 = vmatmul.mubr.f32.gmra.mxu0 %v6536
        %v6746 = vpop.f32.mrf.mxu0
        %v6747 = vadd.f32 0.0, %v6746
        %v6748 = vpop.f32.mrf.mxu0
        %v6749 = vadd.f32 0.0, %v6748
        %6750 = vdwg.mxu0
        %6751 = vmatprep.subr.mxu0 0.0
        %6752 = vmatpush1.msra.mxu0 0.0
        %6753 = vmatprep.subr.mxu0 0.0
        %6754 = vmatpush1.msra.mxu0 0.0
        %6755 = vmatprep.subr.mxu0 0.0
        %6756 = vmatpush1.msra.mxu0 0.0
        %6757 = vmatprep.subr.mxu0 0.0
        %6758 = vmatpush1.msra.mxu0 0.0
        %6759 = vmatprep.subr.mxu0 0.0
        %6760 = vmatpush1.msra.mxu0 0.0
        %6761 = vmatprep.subr.mxu0 0.0
        %6762 = vmatpush1.msra.mxu0 0.0
        %6763 = vmatprep.subr.mxu0 0.0
        %6764 = vmatpush1.msra.mxu0 0.0
        %6765 = vmatprep.subr.mxu0 0.0
        %6766 = vmatpush1.msra.mxu0 0.0
        %6767 = vmatprep.subr.mxu0 0.0
        %6768 = vmatpush1.msra.mxu0 0.0
        %6769 = vmatprep.subr.mxu0 0.0
        %6770 = vmatpush1.msra.mxu0 0.0
        %6771 = vmatprep.subr.mxu0 0.0
        %6772 = vmatpush1.msra.mxu0 0.0
        %6773 = vmatprep.subr.mxu0 0.0
        %6774 = vmatpush1.msra.mxu0 0.0
        %6775 = vmatprep.subr.mxu0 0.0
        %6776 = vmatpush1.msra.mxu0 0.0
        %6777 = vmatprep.subr.mxu0 0.0
        %6778 = vmatpush1.msra.mxu0 0.0
        %6779 = vmatprep.subr.mxu0 0.0
        %6780 = vmatpush1.msra.mxu0 0.0
        %6781 = vmatprep.subr.mxu0 %v6523
        %6782 = vmatpush1.msra.mxu0 %v6522
        %6783 = vmatprep.subr.mxu0 0.0
        %6784 = vmatpush2.msra.mxu0 0.0
        %6785 = vmatprep.subr.mxu0 0.0
        %6786 = vmatpush2.msra.mxu0 0.0
        %6787 = vmatprep.subr.mxu0 0.0
        %6788 = vmatpush2.msra.mxu0 0.0
        %6789 = vmatprep.subr.mxu0 0.0
        %6790 = vmatpush2.msra.mxu0 0.0
        %6791 = vmatprep.subr.mxu0 0.0
        %6792 = vmatpush2.msra.mxu0 0.0
        %6793 = vmatprep.subr.mxu0 0.0
        %6794 = vmatpush2.msra.mxu0 0.0
        %6795 = vmatprep.subr.mxu0 0.0
        %6796 = vmatpush2.msra.mxu0 0.0
        %6797 = vmatprep.subr.mxu0 0.0
        %6798 = vmatpush2.msra.mxu0 0.0
        %6799 = vmatprep.subr.mxu0 0.0
        %6800 = vmatpush2.msra.mxu0 0.0
        %6801 = vmatprep.subr.mxu0 0.0
        %6802 = vmatpush2.msra.mxu0 0.0
        %6803 = vmatprep.subr.mxu0 0.0
        %6804 = vmatpush2.msra.mxu0 0.0
        %6805 = vmatprep.subr.mxu0 0.0
        %6806 = vmatpush2.msra.mxu0 0.0
        %6807 = vmatprep.subr.mxu0 0.0
        %6808 = vmatpush2.msra.mxu0 0.0
        %6809 = vmatprep.subr.mxu0 0.0
        %6810 = vmatpush2.msra.mxu0 0.0
        %6811 = vmatprep.subr.mxu0 0.0
        %6812 = vmatpush2.msra.mxu0 0.0
        %6813 = vmatprep.subr.mxu0 0.0
        %6814 = vmatpush2.msra.mxu0 0.0
        %6815 = vmatprep.mubr.f32.mxu0 0.0
        %6816 = vmatmul.mubr.f32.gmra.mxu0 %v6536
        %v6817 = vpop.f32.mrf.mxu0
        %v6818 = vadd.f32 0.0, %v6817
        %v6819 = vpop.f32.mrf.mxu0
        %v6820 = vadd.f32 0.0, %v6819
        %6821 = vdwg.mxu0
        %6822 = vmatprep.subr.mxu0 0.0
        %6823 = vmatpush1.msra.mxu0 0.0
        %6824 = vmatprep.subr.mxu0 0.0
        %6825 = vmatpush1.msra.mxu0 0.0
        %6826 = vmatprep.subr.mxu0 0.0
        %6827 = vmatpush1.msra.mxu0 0.0
        %6828 = vmatprep.subr.mxu0 0.0
        %6829 = vmatpush1.msra.mxu0 0.0
        %6830 = vmatprep.subr.mxu0 0.0
        %6831 = vmatpush1.msra.mxu0 0.0
        %6832 = vmatprep.subr.mxu0 0.0
        %6833 = vmatpush1.msra.mxu0 0.0
        %6834 = vmatprep.subr.mxu0 0.0
        %6835 = vmatpush1.msra.mxu0 0.0
        %6836 = vmatprep.subr.mxu0 0.0
        %6837 = vmatpush1.msra.mxu0 0.0
        %6838 = vmatprep.subr.mxu0 0.0
        %6839 = vmatpush1.msra.mxu0 0.0
        %6840 = vmatprep.subr.mxu0 0.0
        %6841 = vmatpush1.msra.mxu0 0.0
        %6842 = vmatprep.subr.mxu0 0.0
        %6843 = vmatpush1.msra.mxu0 0.0
        %6844 = vmatprep.subr.mxu0 0.0
        %6845 = vmatpush1.msra.mxu0 0.0
        %6846 = vmatprep.subr.mxu0 0.0
        %6847 = vmatpush1.msra.mxu0 0.0
        %6848 = vmatprep.subr.mxu0 0.0
        %6849 = vmatpush1.msra.mxu0 0.0
        %6850 = vmatprep.subr.mxu0 0.0
        %6851 = vmatpush1.msra.mxu0 0.0
        %6852 = vmatprep.subr.mxu0 %v6515
        %6853 = vmatpush1.msra.mxu0 %v6524
        %6854 = vmatprep.subr.mxu0 0.0
        %6855 = vmatpush2.msra.mxu0 0.0
        %6856 = vmatprep.subr.mxu0 0.0
        %6857 = vmatpush2.msra.mxu0 0.0
        %6858 = vmatprep.subr.mxu0 0.0
        %6859 = vmatpush2.msra.mxu0 0.0
        %6860 = vmatprep.subr.mxu0 0.0
        %6861 = vmatpush2.msra.mxu0 0.0
        %6862 = vmatprep.subr.mxu0 0.0
        %6863 = vmatpush2.msra.mxu0 0.0
        %6864 = vmatprep.subr.mxu0 0.0
        %6865 = vmatpush2.msra.mxu0 0.0
        %6866 = vmatprep.subr.mxu0 0.0
        %6867 = vmatpush2.msra.mxu0 0.0
        %6868 = vmatprep.subr.mxu0 0.0
        %6869 = vmatpush2.msra.mxu0 0.0
        %6870 = vmatprep.subr.mxu0 0.0
        %6871 = vmatpush2.msra.mxu0 0.0
        %6872 = vmatprep.subr.mxu0 0.0
        %6873 = vmatpush2.msra.mxu0 0.0
        %6874 = vmatprep.subr.mxu0 0.0
        %6875 = vmatpush2.msra.mxu0 0.0
        %6876 = vmatprep.subr.mxu0 0.0
        %6877 = vmatpush2.msra.mxu0 0.0
        %6878 = vmatprep.subr.mxu0 0.0
        %6879 = vmatpush2.msra.mxu0 0.0
        %6880 = vmatprep.subr.mxu0 0.0
        %6881 = vmatpush2.msra.mxu0 0.0
        %6882 = vmatprep.subr.mxu0 0.0
        %6883 = vmatpush2.msra.mxu0 0.0
        %6884 = vmatprep.subr.mxu0 0.0
        %6885 = vmatpush2.msra.mxu0 0.0
        %6886 = vmatprep.mubr.f32.mxu0 0.0
        %6887 = vmatmul.mubr.f32.gmra.mxu0 %v6536
        %v6888 = vpop.f32.mrf.mxu0
        %v6889 = vadd.f32 0.0, %v6888
        %v6890 = vpop.f32.mrf.mxu0
        %v6891 = vadd.f32 0.0, %v6890
        %6892 = vdwg.mxu0
        %v6893 = vadd.f32 %v6484, %v6605
        %v6894 = vadd.f32 %v6485, %v6607
        %v6895 = vadd.f32 %v6486, %v6676
        %v6896 = vadd.f32 %v6487, %v6678
        %v6897 = vadd.f32 %v6488, %v6747
        %v6898 = vadd.f32 %v6489, %v6749
        %v6899 = vadd.f32 %v6490, %v6818
        %v6900 = vadd.f32 %v6491, %v6820
        %v6901 = vadd.f32 %v6492, %v6889
        %v6902 = vadd.f32 %v6493, %v6891
        %s6903 = scalar_lea.vmem %s3, 48
        %v6904 = vld [vmem:[%s6903] sm:$0xff]
        %6905 = vrot.lane.b32.xlu0 %v4488, 60
        %v6906 = vpop.permute.xlu0 %6905
        %6907 = vrot.lane.b32.xlu0 %v4489, 60
        %v6908 = vpop.permute.xlu0 %6907
        %6909 = vrot.lane.b32.xlu0 %v4490, 60
        %v6910 = vpop.permute.xlu0 %6909
        %6911 = vrot.lane.b32.xlu0 %v4491, 60
        %v6912 = vpop.permute.xlu0 %6911
        %6913 = vrot.lane.b32.xlu0 %v4492, 60
        %v6914 = vpop.permute.xlu0 %6913
        %6915 = vrot.lane.b32.xlu0 %v4493, 60
        %v6916 = vpop.permute.xlu0 %6915
        %6917 = vrot.lane.b32.xlu0 %v4494, 60
        %v6918 = vpop.permute.xlu0 %6917
        %6919 = vrot.lane.b32.xlu0 %v4495, 60
        %v6920 = vpop.permute.xlu0 %6919
        %6921 = vrot.lane.b32.xlu0 %v4496, 60
        %v6922 = vpop.permute.xlu0 %6921
        %6923 = vrot.lane.b32.xlu0 %v4497, 60
        %v6924 = vpop.permute.xlu0 %6923
        %v6925 = vsel %vm2998, %v6906, %v6908
        %v6926 = vsel %vm2998, %v6908, %v6910
        %v6927 = vsel %vm2998, %v6910, %v6912
        %v6928 = vsel %vm2998, %v6912, %v6914
        %v6929 = vsel %vm2998, %v6914, %v6916
        %v6930 = vsel %vm2998, %v6916, %v6918
        %v6931 = vsel %vm2998, %v6918, %v6920
        %v6932 = vsel %vm2998, %v6920, %v6922
        %v6933 = vsel %vm2998, %v6922, %v6924
        %v6945 = vsel %vm4550, %v6904, 0
        %6947 = vmatprep.subr.mxu0 0.0
        %6948 = vmatpush1.msra.mxu0 0.0
        %6949 = vmatprep.subr.mxu0 0.0
        %6950 = vmatpush1.msra.mxu0 0.0
        %6951 = vmatprep.subr.mxu0 0.0
        %6952 = vmatpush1.msra.mxu0 0.0
        %6953 = vmatprep.subr.mxu0 0.0
        %6954 = vmatpush1.msra.mxu0 0.0
        %6955 = vmatprep.subr.mxu0 0.0
        %6956 = vmatpush1.msra.mxu0 0.0
        %6957 = vmatprep.subr.mxu0 0.0
        %6958 = vmatpush1.msra.mxu0 0.0
        %6959 = vmatprep.subr.mxu0 0.0
        %6960 = vmatpush1.msra.mxu0 0.0
        %6961 = vmatprep.subr.mxu0 0.0
        %6962 = vmatpush1.msra.mxu0 0.0
        %6963 = vmatprep.subr.mxu0 0.0
        %6964 = vmatpush1.msra.mxu0 0.0
        %6965 = vmatprep.subr.mxu0 0.0
        %6966 = vmatpush1.msra.mxu0 0.0
        %6967 = vmatprep.subr.mxu0 0.0
        %6968 = vmatpush1.msra.mxu0 0.0
        %6969 = vmatprep.subr.mxu0 0.0
        %6970 = vmatpush1.msra.mxu0 0.0
        %6971 = vmatprep.subr.mxu0 0.0
        %6972 = vmatpush1.msra.mxu0 0.0
        %6973 = vmatprep.subr.mxu0 0.0
        %6974 = vmatpush1.msra.mxu0 0.0
        %6975 = vmatprep.subr.mxu0 0.0
        %6976 = vmatpush1.msra.mxu0 0.0
        %6977 = vmatprep.subr.mxu0 %v6926
        %6978 = vmatpush1.msra.mxu0 %v6925
        %6979 = vmatprep.subr.mxu0 0.0
        %6980 = vmatpush2.msra.mxu0 0.0
        %6981 = vmatprep.subr.mxu0 0.0
        %6982 = vmatpush2.msra.mxu0 0.0
        %6983 = vmatprep.subr.mxu0 0.0
        %6984 = vmatpush2.msra.mxu0 0.0
        %6985 = vmatprep.subr.mxu0 0.0
        %6986 = vmatpush2.msra.mxu0 0.0
        %6987 = vmatprep.subr.mxu0 0.0
        %6988 = vmatpush2.msra.mxu0 0.0
        %6989 = vmatprep.subr.mxu0 0.0
        %6990 = vmatpush2.msra.mxu0 0.0
        %6991 = vmatprep.subr.mxu0 0.0
        %6992 = vmatpush2.msra.mxu0 0.0
        %6993 = vmatprep.subr.mxu0 0.0
        %6994 = vmatpush2.msra.mxu0 0.0
        %6995 = vmatprep.subr.mxu0 0.0
        %6996 = vmatpush2.msra.mxu0 0.0
        %6997 = vmatprep.subr.mxu0 0.0
        %6998 = vmatpush2.msra.mxu0 0.0
        %6999 = vmatprep.subr.mxu0 0.0
        %7000 = vmatpush2.msra.mxu0 0.0
        %7001 = vmatprep.subr.mxu0 0.0
        %7002 = vmatpush2.msra.mxu0 0.0
        %7003 = vmatprep.subr.mxu0 0.0
        %7004 = vmatpush2.msra.mxu0 0.0
        %7005 = vmatprep.subr.mxu0 0.0
        %7006 = vmatpush2.msra.mxu0 0.0
        %7007 = vmatprep.subr.mxu0 0.0
        %7008 = vmatpush2.msra.mxu0 0.0
        %7009 = vmatprep.subr.mxu0 0.0
        %7010 = vmatpush2.msra.mxu0 0.0
        %7011 = vmatprep.mubr.f32.mxu0 0.0
        %7012 = vmatmul.mubr.f32.gmra.mxu0 %v6945
        %v7013 = vpop.f32.mrf.mxu0
        %v7014 = vadd.f32 0.0, %v7013
        %v7015 = vpop.f32.mrf.mxu0
        %v7016 = vadd.f32 0.0, %v7015
        %7017 = vdwg.mxu0
        %7018 = vmatprep.subr.mxu0 0.0
        %7019 = vmatpush1.msra.mxu0 0.0
        %7020 = vmatprep.subr.mxu0 0.0
        %7021 = vmatpush1.msra.mxu0 0.0
        %7022 = vmatprep.subr.mxu0 0.0
        %7023 = vmatpush1.msra.mxu0 0.0
        %7024 = vmatprep.subr.mxu0 0.0
        %7025 = vmatpush1.msra.mxu0 0.0
        %7026 = vmatprep.subr.mxu0 0.0
        %7027 = vmatpush1.msra.mxu0 0.0
        %7028 = vmatprep.subr.mxu0 0.0
        %7029 = vmatpush1.msra.mxu0 0.0
        %7030 = vmatprep.subr.mxu0 0.0
        %7031 = vmatpush1.msra.mxu0 0.0
        %7032 = vmatprep.subr.mxu0 0.0
        %7033 = vmatpush1.msra.mxu0 0.0
        %7034 = vmatprep.subr.mxu0 0.0
        %7035 = vmatpush1.msra.mxu0 0.0
        %7036 = vmatprep.subr.mxu0 0.0
        %7037 = vmatpush1.msra.mxu0 0.0
        %7038 = vmatprep.subr.mxu0 0.0
        %7039 = vmatpush1.msra.mxu0 0.0
        %7040 = vmatprep.subr.mxu0 0.0
        %7041 = vmatpush1.msra.mxu0 0.0
        %7042 = vmatprep.subr.mxu0 0.0
        %7043 = vmatpush1.msra.mxu0 0.0
        %7044 = vmatprep.subr.mxu0 0.0
        %7045 = vmatpush1.msra.mxu0 0.0
        %7046 = vmatprep.subr.mxu0 0.0
        %7047 = vmatpush1.msra.mxu0 0.0
        %7048 = vmatprep.subr.mxu0 %v6928
        %7049 = vmatpush1.msra.mxu0 %v6927
        %7050 = vmatprep.subr.mxu0 0.0
        %7051 = vmatpush2.msra.mxu0 0.0
        %7052 = vmatprep.subr.mxu0 0.0
        %7053 = vmatpush2.msra.mxu0 0.0
        %7054 = vmatprep.subr.mxu0 0.0
        %7055 = vmatpush2.msra.mxu0 0.0
        %7056 = vmatprep.subr.mxu0 0.0
        %7057 = vmatpush2.msra.mxu0 0.0
        %7058 = vmatprep.subr.mxu0 0.0
        %7059 = vmatpush2.msra.mxu0 0.0
        %7060 = vmatprep.subr.mxu0 0.0
        %7061 = vmatpush2.msra.mxu0 0.0
        %7062 = vmatprep.subr.mxu0 0.0
        %7063 = vmatpush2.msra.mxu0 0.0
        %7064 = vmatprep.subr.mxu0 0.0
        %7065 = vmatpush2.msra.mxu0 0.0
        %7066 = vmatprep.subr.mxu0 0.0
        %7067 = vmatpush2.msra.mxu0 0.0
        %7068 = vmatprep.subr.mxu0 0.0
        %7069 = vmatpush2.msra.mxu0 0.0
        %7070 = vmatprep.subr.mxu0 0.0
        %7071 = vmatpush2.msra.mxu0 0.0
        %7072 = vmatprep.subr.mxu0 0.0
        %7073 = vmatpush2.msra.mxu0 0.0
        %7074 = vmatprep.subr.mxu0 0.0
        %7075 = vmatpush2.msra.mxu0 0.0
        %7076 = vmatprep.subr.mxu0 0.0
        %7077 = vmatpush2.msra.mxu0 0.0
        %7078 = vmatprep.subr.mxu0 0.0
        %7079 = vmatpush2.msra.mxu0 0.0
        %7080 = vmatprep.subr.mxu0 0.0
        %7081 = vmatpush2.msra.mxu0 0.0
        %7082 = vmatprep.mubr.f32.mxu0 0.0
        %7083 = vmatmul.mubr.f32.gmra.mxu0 %v6945
        %v7084 = vpop.f32.mrf.mxu0
        %v7085 = vadd.f32 0.0, %v7084
        %v7086 = vpop.f32.mrf.mxu0
        %v7087 = vadd.f32 0.0, %v7086
        %7088 = vdwg.mxu0
        %7089 = vmatprep.subr.mxu0 0.0
        %7090 = vmatpush1.msra.mxu0 0.0
        %7091 = vmatprep.subr.mxu0 0.0
        %7092 = vmatpush1.msra.mxu0 0.0
        %7093 = vmatprep.subr.mxu0 0.0
        %7094 = vmatpush1.msra.mxu0 0.0
        %7095 = vmatprep.subr.mxu0 0.0
        %7096 = vmatpush1.msra.mxu0 0.0
        %7097 = vmatprep.subr.mxu0 0.0
        %7098 = vmatpush1.msra.mxu0 0.0
        %7099 = vmatprep.subr.mxu0 0.0
        %7100 = vmatpush1.msra.mxu0 0.0
        %7101 = vmatprep.subr.mxu0 0.0
        %7102 = vmatpush1.msra.mxu0 0.0
        %7103 = vmatprep.subr.mxu0 0.0
        %7104 = vmatpush1.msra.mxu0 0.0
        %7105 = vmatprep.subr.mxu0 0.0
        %7106 = vmatpush1.msra.mxu0 0.0
        %7107 = vmatprep.subr.mxu0 0.0
        %7108 = vmatpush1.msra.mxu0 0.0
        %7109 = vmatprep.subr.mxu0 0.0
        %7110 = vmatpush1.msra.mxu0 0.0
        %7111 = vmatprep.subr.mxu0 0.0
        %7112 = vmatpush1.msra.mxu0 0.0
        %7113 = vmatprep.subr.mxu0 0.0
        %7114 = vmatpush1.msra.mxu0 0.0
        %7115 = vmatprep.subr.mxu0 0.0
        %7116 = vmatpush1.msra.mxu0 0.0
        %7117 = vmatprep.subr.mxu0 0.0
        %7118 = vmatpush1.msra.mxu0 0.0
        %7119 = vmatprep.subr.mxu0 %v6930
        %7120 = vmatpush1.msra.mxu0 %v6929
        %7121 = vmatprep.subr.mxu0 0.0
        %7122 = vmatpush2.msra.mxu0 0.0
        %7123 = vmatprep.subr.mxu0 0.0
        %7124 = vmatpush2.msra.mxu0 0.0
        %7125 = vmatprep.subr.mxu0 0.0
        %7126 = vmatpush2.msra.mxu0 0.0
        %7127 = vmatprep.subr.mxu0 0.0
        %7128 = vmatpush2.msra.mxu0 0.0
        %7129 = vmatprep.subr.mxu0 0.0
        %7130 = vmatpush2.msra.mxu0 0.0
        %7131 = vmatprep.subr.mxu0 0.0
        %7132 = vmatpush2.msra.mxu0 0.0
        %7133 = vmatprep.subr.mxu0 0.0
        %7134 = vmatpush2.msra.mxu0 0.0
        %7135 = vmatprep.subr.mxu0 0.0
        %7136 = vmatpush2.msra.mxu0 0.0
        %7137 = vmatprep.subr.mxu0 0.0
        %7138 = vmatpush2.msra.mxu0 0.0
        %7139 = vmatprep.subr.mxu0 0.0
        %7140 = vmatpush2.msra.mxu0 0.0
        %7141 = vmatprep.subr.mxu0 0.0
        %7142 = vmatpush2.msra.mxu0 0.0
        %7143 = vmatprep.subr.mxu0 0.0
        %7144 = vmatpush2.msra.mxu0 0.0
        %7145 = vmatprep.subr.mxu0 0.0
        %7146 = vmatpush2.msra.mxu0 0.0
        %7147 = vmatprep.subr.mxu0 0.0
        %7148 = vmatpush2.msra.mxu0 0.0
        %7149 = vmatprep.subr.mxu0 0.0
        %7150 = vmatpush2.msra.mxu0 0.0
        %7151 = vmatprep.subr.mxu0 0.0
        %7152 = vmatpush2.msra.mxu0 0.0
        %7153 = vmatprep.mubr.f32.mxu0 0.0
        %7154 = vmatmul.mubr.f32.gmra.mxu0 %v6945
        %v7155 = vpop.f32.mrf.mxu0
        %v7156 = vadd.f32 0.0, %v7155
        %v7157 = vpop.f32.mrf.mxu0
        %v7158 = vadd.f32 0.0, %v7157
        %7159 = vdwg.mxu0
        %7160 = vmatprep.subr.mxu0 0.0
        %7161 = vmatpush1.msra.mxu0 0.0
        %7162 = vmatprep.subr.mxu0 0.0
        %7163 = vmatpush1.msra.mxu0 0.0
        %7164 = vmatprep.subr.mxu0 0.0
        %7165 = vmatpush1.msra.mxu0 0.0
        %7166 = vmatprep.subr.mxu0 0.0
        %7167 = vmatpush1.msra.mxu0 0.0
        %7168 = vmatprep.subr.mxu0 0.0
        %7169 = vmatpush1.msra.mxu0 0.0
        %7170 = vmatprep.subr.mxu0 0.0
        %7171 = vmatpush1.msra.mxu0 0.0
        %7172 = vmatprep.subr.mxu0 0.0
        %7173 = vmatpush1.msra.mxu0 0.0
        %7174 = vmatprep.subr.mxu0 0.0
        %7175 = vmatpush1.msra.mxu0 0.0
        %7176 = vmatprep.subr.mxu0 0.0
        %7177 = vmatpush1.msra.mxu0 0.0
        %7178 = vmatprep.subr.mxu0 0.0
        %7179 = vmatpush1.msra.mxu0 0.0
        %7180 = vmatprep.subr.mxu0 0.0
        %7181 = vmatpush1.msra.mxu0 0.0
        %7182 = vmatprep.subr.mxu0 0.0
        %7183 = vmatpush1.msra.mxu0 0.0
        %7184 = vmatprep.subr.mxu0 0.0
        %7185 = vmatpush1.msra.mxu0 0.0
        %7186 = vmatprep.subr.mxu0 0.0
        %7187 = vmatpush1.msra.mxu0 0.0
        %7188 = vmatprep.subr.mxu0 0.0
        %7189 = vmatpush1.msra.mxu0 0.0
        %7190 = vmatprep.subr.mxu0 %v6932
        %7191 = vmatpush1.msra.mxu0 %v6931
        %7192 = vmatprep.subr.mxu0 0.0
        %7193 = vmatpush2.msra.mxu0 0.0
        %7194 = vmatprep.subr.mxu0 0.0
        %7195 = vmatpush2.msra.mxu0 0.0
        %7196 = vmatprep.subr.mxu0 0.0
        %7197 = vmatpush2.msra.mxu0 0.0
        %7198 = vmatprep.subr.mxu0 0.0
        %7199 = vmatpush2.msra.mxu0 0.0
        %7200 = vmatprep.subr.mxu0 0.0
        %7201 = vmatpush2.msra.mxu0 0.0
        %7202 = vmatprep.subr.mxu0 0.0
        %7203 = vmatpush2.msra.mxu0 0.0
        %7204 = vmatprep.subr.mxu0 0.0
        %7205 = vmatpush2.msra.mxu0 0.0
        %7206 = vmatprep.subr.mxu0 0.0
        %7207 = vmatpush2.msra.mxu0 0.0
        %7208 = vmatprep.subr.mxu0 0.0
        %7209 = vmatpush2.msra.mxu0 0.0
        %7210 = vmatprep.subr.mxu0 0.0
        %7211 = vmatpush2.msra.mxu0 0.0
        %7212 = vmatprep.subr.mxu0 0.0
        %7213 = vmatpush2.msra.mxu0 0.0
        %7214 = vmatprep.subr.mxu0 0.0
        %7215 = vmatpush2.msra.mxu0 0.0
        %7216 = vmatprep.subr.mxu0 0.0
        %7217 = vmatpush2.msra.mxu0 0.0
        %7218 = vmatprep.subr.mxu0 0.0
        %7219 = vmatpush2.msra.mxu0 0.0
        %7220 = vmatprep.subr.mxu0 0.0
        %7221 = vmatpush2.msra.mxu0 0.0
        %7222 = vmatprep.subr.mxu0 0.0
        %7223 = vmatpush2.msra.mxu0 0.0
        %7224 = vmatprep.mubr.f32.mxu0 0.0
        %7225 = vmatmul.mubr.f32.gmra.mxu0 %v6945
        %v7226 = vpop.f32.mrf.mxu0
        %v7227 = vadd.f32 0.0, %v7226
        %v7228 = vpop.f32.mrf.mxu0
        %v7229 = vadd.f32 0.0, %v7228
        %7230 = vdwg.mxu0
        %7231 = vmatprep.subr.mxu0 0.0
        %7232 = vmatpush1.msra.mxu0 0.0
        %7233 = vmatprep.subr.mxu0 0.0
        %7234 = vmatpush1.msra.mxu0 0.0
        %7235 = vmatprep.subr.mxu0 0.0
        %7236 = vmatpush1.msra.mxu0 0.0
        %7237 = vmatprep.subr.mxu0 0.0
        %7238 = vmatpush1.msra.mxu0 0.0
        %7239 = vmatprep.subr.mxu0 0.0
        %7240 = vmatpush1.msra.mxu0 0.0
        %7241 = vmatprep.subr.mxu0 0.0
        %7242 = vmatpush1.msra.mxu0 0.0
        %7243 = vmatprep.subr.mxu0 0.0
        %7244 = vmatpush1.msra.mxu0 0.0
        %7245 = vmatprep.subr.mxu0 0.0
        %7246 = vmatpush1.msra.mxu0 0.0
        %7247 = vmatprep.subr.mxu0 0.0
        %7248 = vmatpush1.msra.mxu0 0.0
        %7249 = vmatprep.subr.mxu0 0.0
        %7250 = vmatpush1.msra.mxu0 0.0
        %7251 = vmatprep.subr.mxu0 0.0
        %7252 = vmatpush1.msra.mxu0 0.0
        %7253 = vmatprep.subr.mxu0 0.0
        %7254 = vmatpush1.msra.mxu0 0.0
        %7255 = vmatprep.subr.mxu0 0.0
        %7256 = vmatpush1.msra.mxu0 0.0
        %7257 = vmatprep.subr.mxu0 0.0
        %7258 = vmatpush1.msra.mxu0 0.0
        %7259 = vmatprep.subr.mxu0 0.0
        %7260 = vmatpush1.msra.mxu0 0.0
        %7261 = vmatprep.subr.mxu0 %v6924
        %7262 = vmatpush1.msra.mxu0 %v6933
        %7263 = vmatprep.subr.mxu0 0.0
        %7264 = vmatpush2.msra.mxu0 0.0
        %7265 = vmatprep.subr.mxu0 0.0
        %7266 = vmatpush2.msra.mxu0 0.0
        %7267 = vmatprep.subr.mxu0 0.0
        %7268 = vmatpush2.msra.mxu0 0.0
        %7269 = vmatprep.subr.mxu0 0.0
        %7270 = vmatpush2.msra.mxu0 0.0
        %7271 = vmatprep.subr.mxu0 0.0
        %7272 = vmatpush2.msra.mxu0 0.0
        %7273 = vmatprep.subr.mxu0 0.0
        %7274 = vmatpush2.msra.mxu0 0.0
        %7275 = vmatprep.subr.mxu0 0.0
        %7276 = vmatpush2.msra.mxu0 0.0
        %7277 = vmatprep.subr.mxu0 0.0
        %7278 = vmatpush2.msra.mxu0 0.0
        %7279 = vmatprep.subr.mxu0 0.0
        %7280 = vmatpush2.msra.mxu0 0.0
        %7281 = vmatprep.subr.mxu0 0.0
        %7282 = vmatpush2.msra.mxu0 0.0
        %7283 = vmatprep.subr.mxu0 0.0
        %7284 = vmatpush2.msra.mxu0 0.0
        %7285 = vmatprep.subr.mxu0 0.0
        %7286 = vmatpush2.msra.mxu0 0.0
        %7287 = vmatprep.subr.mxu0 0.0
        %7288 = vmatpush2.msra.mxu0 0.0
        %7289 = vmatprep.subr.mxu0 0.0
        %7290 = vmatpush2.msra.mxu0 0.0
        %7291 = vmatprep.subr.mxu0 0.0
        %7292 = vmatpush2.msra.mxu0 0.0
        %7293 = vmatprep.subr.mxu0 0.0
        %7294 = vmatpush2.msra.mxu0 0.0
        %7295 = vmatprep.mubr.f32.mxu0 0.0
        %7296 = vmatmul.mubr.f32.gmra.mxu0 %v6945
        %v7297 = vpop.f32.mrf.mxu0
        %v7298 = vadd.f32 0.0, %v7297
        %v7299 = vpop.f32.mrf.mxu0
        %v7300 = vadd.f32 0.0, %v7299
        %7301 = vdwg.mxu0
        %v7302 = vadd.f32 %v6893, %v7014
        %v7303 = vadd.f32 %v6894, %v7016
        %v7304 = vadd.f32 %v6895, %v7085
        %v7305 = vadd.f32 %v6896, %v7087
        %v7306 = vadd.f32 %v6897, %v7156
        %v7307 = vadd.f32 %v6898, %v7158
        %v7308 = vadd.f32 %v6899, %v7227
        %v7309 = vadd.f32 %v6900, %v7229
        %v7310 = vadd.f32 %v6901, %v7298
        %v7311 = vadd.f32 %v6902, %v7300
        %s7312 = scalar_lea.vmem %s3, 56
        %v7313 = vld [vmem:[%s7312] sm:$0xff]
        %7314 = vrot.lane.b32.xlu0 %v4488, 59
        %v7315 = vpop.permute.xlu0 %7314
        %7316 = vrot.lane.b32.xlu0 %v4489, 59
        %v7317 = vpop.permute.xlu0 %7316
        %7318 = vrot.lane.b32.xlu0 %v4490, 59
        %v7319 = vpop.permute.xlu0 %7318
        %7320 = vrot.lane.b32.xlu0 %v4491, 59
        %v7321 = vpop.permute.xlu0 %7320
        %7322 = vrot.lane.b32.xlu0 %v4492, 59
        %v7323 = vpop.permute.xlu0 %7322
        %7324 = vrot.lane.b32.xlu0 %v4493, 59
        %v7325 = vpop.permute.xlu0 %7324
        %7326 = vrot.lane.b32.xlu0 %v4494, 59
        %v7327 = vpop.permute.xlu0 %7326
        %7328 = vrot.lane.b32.xlu0 %v4495, 59
        %v7329 = vpop.permute.xlu0 %7328
        %7330 = vrot.lane.b32.xlu0 %v4496, 59
        %v7331 = vpop.permute.xlu0 %7330
        %7332 = vrot.lane.b32.xlu0 %v4497, 59
        %v7333 = vpop.permute.xlu0 %7332
        %v7334 = vsel %vm3457, %v7315, %v7317
        %v7335 = vsel %vm3457, %v7317, %v7319
        %v7336 = vsel %vm3457, %v7319, %v7321
        %v7337 = vsel %vm3457, %v7321, %v7323
        %v7338 = vsel %vm3457, %v7323, %v7325
        %v7339 = vsel %vm3457, %v7325, %v7327
        %v7340 = vsel %vm3457, %v7327, %v7329
        %v7341 = vsel %vm3457, %v7329, %v7331
        %v7342 = vsel %vm3457, %v7331, %v7333
        %v7354 = vsel %vm4550, %v7313, 0
        %7356 = vmatprep.subr.mxu0 0.0
        %7357 = vmatpush1.msra.mxu0 0.0
        %7358 = vmatprep.subr.mxu0 0.0
        %7359 = vmatpush1.msra.mxu0 0.0
        %7360 = vmatprep.subr.mxu0 0.0
        %7361 = vmatpush1.msra.mxu0 0.0
        %7362 = vmatprep.subr.mxu0 0.0
        %7363 = vmatpush1.msra.mxu0 0.0
        %7364 = vmatprep.subr.mxu0 0.0
        %7365 = vmatpush1.msra.mxu0 0.0
        %7366 = vmatprep.subr.mxu0 0.0
        %7367 = vmatpush1.msra.mxu0 0.0
        %7368 = vmatprep.subr.mxu0 0.0
        %7369 = vmatpush1.msra.mxu0 0.0
        %7370 = vmatprep.subr.mxu0 0.0
        %7371 = vmatpush1.msra.mxu0 0.0
        %7372 = vmatprep.subr.mxu0 0.0
        %7373 = vmatpush1.msra.mxu0 0.0
        %7374 = vmatprep.subr.mxu0 0.0
        %7375 = vmatpush1.msra.mxu0 0.0
        %7376 = vmatprep.subr.mxu0 0.0
        %7377 = vmatpush1.msra.mxu0 0.0
        %7378 = vmatprep.subr.mxu0 0.0
        %7379 = vmatpush1.msra.mxu0 0.0
        %7380 = vmatprep.subr.mxu0 0.0
        %7381 = vmatpush1.msra.mxu0 0.0
        %7382 = vmatprep.subr.mxu0 0.0
        %7383 = vmatpush1.msra.mxu0 0.0
        %7384 = vmatprep.subr.mxu0 0.0
        %7385 = vmatpush1.msra.mxu0 0.0
        %7386 = vmatprep.subr.mxu0 %v7335
        %7387 = vmatpush1.msra.mxu0 %v7334
        %7388 = vmatprep.subr.mxu0 0.0
        %7389 = vmatpush2.msra.mxu0 0.0
        %7390 = vmatprep.subr.mxu0 0.0
        %7391 = vmatpush2.msra.mxu0 0.0
        %7392 = vmatprep.subr.mxu0 0.0
        %7393 = vmatpush2.msra.mxu0 0.0
        %7394 = vmatprep.subr.mxu0 0.0
        %7395 = vmatpush2.msra.mxu0 0.0
        %7396 = vmatprep.subr.mxu0 0.0
        %7397 = vmatpush2.msra.mxu0 0.0
        %7398 = vmatprep.subr.mxu0 0.0
        %7399 = vmatpush2.msra.mxu0 0.0
        %7400 = vmatprep.subr.mxu0 0.0
        %7401 = vmatpush2.msra.mxu0 0.0
        %7402 = vmatprep.subr.mxu0 0.0
        %7403 = vmatpush2.msra.mxu0 0.0
        %7404 = vmatprep.subr.mxu0 0.0
        %7405 = vmatpush2.msra.mxu0 0.0
        %7406 = vmatprep.subr.mxu0 0.0
        %7407 = vmatpush2.msra.mxu0 0.0
        %7408 = vmatprep.subr.mxu0 0.0
        %7409 = vmatpush2.msra.mxu0 0.0
        %7410 = vmatprep.subr.mxu0 0.0
        %7411 = vmatpush2.msra.mxu0 0.0
        %7412 = vmatprep.subr.mxu0 0.0
        %7413 = vmatpush2.msra.mxu0 0.0
        %7414 = vmatprep.subr.mxu0 0.0
        %7415 = vmatpush2.msra.mxu0 0.0
        %7416 = vmatprep.subr.mxu0 0.0
        %7417 = vmatpush2.msra.mxu0 0.0
        %7418 = vmatprep.subr.mxu0 0.0
        %7419 = vmatpush2.msra.mxu0 0.0
        %7420 = vmatprep.mubr.f32.mxu0 0.0
        %7421 = vmatmul.mubr.f32.gmra.mxu0 %v7354
        %v7422 = vpop.f32.mrf.mxu0
        %v7423 = vadd.f32 0.0, %v7422
        %v7424 = vpop.f32.mrf.mxu0
        %v7425 = vadd.f32 0.0, %v7424
        %7426 = vdwg.mxu0
        %7427 = vmatprep.subr.mxu0 0.0
        %7428 = vmatpush1.msra.mxu0 0.0
        %7429 = vmatprep.subr.mxu0 0.0
        %7430 = vmatpush1.msra.mxu0 0.0
        %7431 = vmatprep.subr.mxu0 0.0
        %7432 = vmatpush1.msra.mxu0 0.0
        %7433 = vmatprep.subr.mxu0 0.0
        %7434 = vmatpush1.msra.mxu0 0.0
        %7435 = vmatprep.subr.mxu0 0.0
        %7436 = vmatpush1.msra.mxu0 0.0
        %7437 = vmatprep.subr.mxu0 0.0
        %7438 = vmatpush1.msra.mxu0 0.0
        %7439 = vmatprep.subr.mxu0 0.0
        %7440 = vmatpush1.msra.mxu0 0.0
        %7441 = vmatprep.subr.mxu0 0.0
        %7442 = vmatpush1.msra.mxu0 0.0
        %7443 = vmatprep.subr.mxu0 0.0
        %7444 = vmatpush1.msra.mxu0 0.0
        %7445 = vmatprep.subr.mxu0 0.0
        %7446 = vmatpush1.msra.mxu0 0.0
        %7447 = vmatprep.subr.mxu0 0.0
        %7448 = vmatpush1.msra.mxu0 0.0
        %7449 = vmatprep.subr.mxu0 0.0
        %7450 = vmatpush1.msra.mxu0 0.0
        %7451 = vmatprep.subr.mxu0 0.0
        %7452 = vmatpush1.msra.mxu0 0.0
        %7453 = vmatprep.subr.mxu0 0.0
        %7454 = vmatpush1.msra.mxu0 0.0
        %7455 = vmatprep.subr.mxu0 0.0
        %7456 = vmatpush1.msra.mxu0 0.0
        %7457 = vmatprep.subr.mxu0 %v7337
        %7458 = vmatpush1.msra.mxu0 %v7336
        %7459 = vmatprep.subr.mxu0 0.0
        %7460 = vmatpush2.msra.mxu0 0.0
        %7461 = vmatprep.subr.mxu0 0.0
        %7462 = vmatpush2.msra.mxu0 0.0
        %7463 = vmatprep.subr.mxu0 0.0
        %7464 = vmatpush2.msra.mxu0 0.0
        %7465 = vmatprep.subr.mxu0 0.0
        %7466 = vmatpush2.msra.mxu0 0.0
        %7467 = vmatprep.subr.mxu0 0.0
        %7468 = vmatpush2.msra.mxu0 0.0
        %7469 = vmatprep.subr.mxu0 0.0
        %7470 = vmatpush2.msra.mxu0 0.0
        %7471 = vmatprep.subr.mxu0 0.0
        %7472 = vmatpush2.msra.mxu0 0.0
        %7473 = vmatprep.subr.mxu0 0.0
        %7474 = vmatpush2.msra.mxu0 0.0
        %7475 = vmatprep.subr.mxu0 0.0
        %7476 = vmatpush2.msra.mxu0 0.0
        %7477 = vmatprep.subr.mxu0 0.0
        %7478 = vmatpush2.msra.mxu0 0.0
        %7479 = vmatprep.subr.mxu0 0.0
        %7480 = vmatpush2.msra.mxu0 0.0
        %7481 = vmatprep.subr.mxu0 0.0
        %7482 = vmatpush2.msra.mxu0 0.0
        %7483 = vmatprep.subr.mxu0 0.0
        %7484 = vmatpush2.msra.mxu0 0.0
        %7485 = vmatprep.subr.mxu0 0.0
        %7486 = vmatpush2.msra.mxu0 0.0
        %7487 = vmatprep.subr.mxu0 0.0
        %7488 = vmatpush2.msra.mxu0 0.0
        %7489 = vmatprep.subr.mxu0 0.0
        %7490 = vmatpush2.msra.mxu0 0.0
        %7491 = vmatprep.mubr.f32.mxu0 0.0
        %7492 = vmatmul.mubr.f32.gmra.mxu0 %v7354
        %v7493 = vpop.f32.mrf.mxu0
        %v7494 = vadd.f32 0.0, %v7493
        %v7495 = vpop.f32.mrf.mxu0
        %v7496 = vadd.f32 0.0, %v7495
        %7497 = vdwg.mxu0
        %7498 = vmatprep.subr.mxu0 0.0
        %7499 = vmatpush1.msra.mxu0 0.0
        %7500 = vmatprep.subr.mxu0 0.0
        %7501 = vmatpush1.msra.mxu0 0.0
        %7502 = vmatprep.subr.mxu0 0.0
        %7503 = vmatpush1.msra.mxu0 0.0
        %7504 = vmatprep.subr.mxu0 0.0
        %7505 = vmatpush1.msra.mxu0 0.0
        %7506 = vmatprep.subr.mxu0 0.0
        %7507 = vmatpush1.msra.mxu0 0.0
        %7508 = vmatprep.subr.mxu0 0.0
        %7509 = vmatpush1.msra.mxu0 0.0
        %7510 = vmatprep.subr.mxu0 0.0
        %7511 = vmatpush1.msra.mxu0 0.0
        %7512 = vmatprep.subr.mxu0 0.0
        %7513 = vmatpush1.msra.mxu0 0.0
        %7514 = vmatprep.subr.mxu0 0.0
        %7515 = vmatpush1.msra.mxu0 0.0
        %7516 = vmatprep.subr.mxu0 0.0
        %7517 = vmatpush1.msra.mxu0 0.0
        %7518 = vmatprep.subr.mxu0 0.0
        %7519 = vmatpush1.msra.mxu0 0.0
        %7520 = vmatprep.subr.mxu0 0.0
        %7521 = vmatpush1.msra.mxu0 0.0
        %7522 = vmatprep.subr.mxu0 0.0
        %7523 = vmatpush1.msra.mxu0 0.0
        %7524 = vmatprep.subr.mxu0 0.0
        %7525 = vmatpush1.msra.mxu0 0.0
        %7526 = vmatprep.subr.mxu0 0.0
        %7527 = vmatpush1.msra.mxu0 0.0
        %7528 = vmatprep.subr.mxu0 %v7339
        %7529 = vmatpush1.msra.mxu0 %v7338
        %7530 = vmatprep.subr.mxu0 0.0
        %7531 = vmatpush2.msra.mxu0 0.0
        %7532 = vmatprep.subr.mxu0 0.0
        %7533 = vmatpush2.msra.mxu0 0.0
        %7534 = vmatprep.subr.mxu0 0.0
        %7535 = vmatpush2.msra.mxu0 0.0
        %7536 = vmatprep.subr.mxu0 0.0
        %7537 = vmatpush2.msra.mxu0 0.0
        %7538 = vmatprep.subr.mxu0 0.0
        %7539 = vmatpush2.msra.mxu0 0.0
        %7540 = vmatprep.subr.mxu0 0.0
        %7541 = vmatpush2.msra.mxu0 0.0
        %7542 = vmatprep.subr.mxu0 0.0
        %7543 = vmatpush2.msra.mxu0 0.0
        %7544 = vmatprep.subr.mxu0 0.0
        %7545 = vmatpush2.msra.mxu0 0.0
        %7546 = vmatprep.subr.mxu0 0.0
        %7547 = vmatpush2.msra.mxu0 0.0
        %7548 = vmatprep.subr.mxu0 0.0
        %7549 = vmatpush2.msra.mxu0 0.0
        %7550 = vmatprep.subr.mxu0 0.0
        %7551 = vmatpush2.msra.mxu0 0.0
        %7552 = vmatprep.subr.mxu0 0.0
        %7553 = vmatpush2.msra.mxu0 0.0
        %7554 = vmatprep.subr.mxu0 0.0
        %7555 = vmatpush2.msra.mxu0 0.0
        %7556 = vmatprep.subr.mxu0 0.0
        %7557 = vmatpush2.msra.mxu0 0.0
        %7558 = vmatprep.subr.mxu0 0.0
        %7559 = vmatpush2.msra.mxu0 0.0
        %7560 = vmatprep.subr.mxu0 0.0
        %7561 = vmatpush2.msra.mxu0 0.0
        %7562 = vmatprep.mubr.f32.mxu0 0.0
        %7563 = vmatmul.mubr.f32.gmra.mxu0 %v7354
        %v7564 = vpop.f32.mrf.mxu0
        %v7565 = vadd.f32 0.0, %v7564
        %v7566 = vpop.f32.mrf.mxu0
        %v7567 = vadd.f32 0.0, %v7566
        %7568 = vdwg.mxu0
        %7569 = vmatprep.subr.mxu0 0.0
        %7570 = vmatpush1.msra.mxu0 0.0
        %7571 = vmatprep.subr.mxu0 0.0
        %7572 = vmatpush1.msra.mxu0 0.0
        %7573 = vmatprep.subr.mxu0 0.0
        %7574 = vmatpush1.msra.mxu0 0.0
        %7575 = vmatprep.subr.mxu0 0.0
        %7576 = vmatpush1.msra.mxu0 0.0
        %7577 = vmatprep.subr.mxu0 0.0
        %7578 = vmatpush1.msra.mxu0 0.0
        %7579 = vmatprep.subr.mxu0 0.0
        %7580 = vmatpush1.msra.mxu0 0.0
        %7581 = vmatprep.subr.mxu0 0.0
        %7582 = vmatpush1.msra.mxu0 0.0
        %7583 = vmatprep.subr.mxu0 0.0
        %7584 = vmatpush1.msra.mxu0 0.0
        %7585 = vmatprep.subr.mxu0 0.0
        %7586 = vmatpush1.msra.mxu0 0.0
        %7587 = vmatprep.subr.mxu0 0.0
        %7588 = vmatpush1.msra.mxu0 0.0
        %7589 = vmatprep.subr.mxu0 0.0
        %7590 = vmatpush1.msra.mxu0 0.0
        %7591 = vmatprep.subr.mxu0 0.0
        %7592 = vmatpush1.msra.mxu0 0.0
        %7593 = vmatprep.subr.mxu0 0.0
        %7594 = vmatpush1.msra.mxu0 0.0
        %7595 = vmatprep.subr.mxu0 0.0
        %7596 = vmatpush1.msra.mxu0 0.0
        %7597 = vmatprep.subr.mxu0 0.0
        %7598 = vmatpush1.msra.mxu0 0.0
        %7599 = vmatprep.subr.mxu0 %v7341
        %7600 = vmatpush1.msra.mxu0 %v7340
        %7601 = vmatprep.subr.mxu0 0.0
        %7602 = vmatpush2.msra.mxu0 0.0
        %7603 = vmatprep.subr.mxu0 0.0
        %7604 = vmatpush2.msra.mxu0 0.0
        %7605 = vmatprep.subr.mxu0 0.0
        %7606 = vmatpush2.msra.mxu0 0.0
        %7607 = vmatprep.subr.mxu0 0.0
        %7608 = vmatpush2.msra.mxu0 0.0
        %7609 = vmatprep.subr.mxu0 0.0
        %7610 = vmatpush2.msra.mxu0 0.0
        %7611 = vmatprep.subr.mxu0 0.0
        %7612 = vmatpush2.msra.mxu0 0.0
        %7613 = vmatprep.subr.mxu0 0.0
        %7614 = vmatpush2.msra.mxu0 0.0
        %7615 = vmatprep.subr.mxu0 0.0
        %7616 = vmatpush2.msra.mxu0 0.0
        %7617 = vmatprep.subr.mxu0 0.0
        %7618 = vmatpush2.msra.mxu0 0.0
        %7619 = vmatprep.subr.mxu0 0.0
        %7620 = vmatpush2.msra.mxu0 0.0
        %7621 = vmatprep.subr.mxu0 0.0
        %7622 = vmatpush2.msra.mxu0 0.0
        %7623 = vmatprep.subr.mxu0 0.0
        %7624 = vmatpush2.msra.mxu0 0.0
        %7625 = vmatprep.subr.mxu0 0.0
        %7626 = vmatpush2.msra.mxu0 0.0
        %7627 = vmatprep.subr.mxu0 0.0
        %7628 = vmatpush2.msra.mxu0 0.0
        %7629 = vmatprep.subr.mxu0 0.0
        %7630 = vmatpush2.msra.mxu0 0.0
        %7631 = vmatprep.subr.mxu0 0.0
        %7632 = vmatpush2.msra.mxu0 0.0
        %7633 = vmatprep.mubr.f32.mxu0 0.0
        %7634 = vmatmul.mubr.f32.gmra.mxu0 %v7354
        %v7635 = vpop.f32.mrf.mxu0
        %v7636 = vadd.f32 0.0, %v7635
        %v7637 = vpop.f32.mrf.mxu0
        %v7638 = vadd.f32 0.0, %v7637
        %7639 = vdwg.mxu0
        %7640 = vmatprep.subr.mxu0 0.0
        %7641 = vmatpush1.msra.mxu0 0.0
        %7642 = vmatprep.subr.mxu0 0.0
        %7643 = vmatpush1.msra.mxu0 0.0
        %7644 = vmatprep.subr.mxu0 0.0
        %7645 = vmatpush1.msra.mxu0 0.0
        %7646 = vmatprep.subr.mxu0 0.0
        %7647 = vmatpush1.msra.mxu0 0.0
        %7648 = vmatprep.subr.mxu0 0.0
        %7649 = vmatpush1.msra.mxu0 0.0
        %7650 = vmatprep.subr.mxu0 0.0
        %7651 = vmatpush1.msra.mxu0 0.0
        %7652 = vmatprep.subr.mxu0 0.0
        %7653 = vmatpush1.msra.mxu0 0.0
        %7654 = vmatprep.subr.mxu0 0.0
        %7655 = vmatpush1.msra.mxu0 0.0
        %7656 = vmatprep.subr.mxu0 0.0
        %7657 = vmatpush1.msra.mxu0 0.0
        %7658 = vmatprep.subr.mxu0 0.0
        %7659 = vmatpush1.msra.mxu0 0.0
        %7660 = vmatprep.subr.mxu0 0.0
        %7661 = vmatpush1.msra.mxu0 0.0
        %7662 = vmatprep.subr.mxu0 0.0
        %7663 = vmatpush1.msra.mxu0 0.0
        %7664 = vmatprep.subr.mxu0 0.0
        %7665 = vmatpush1.msra.mxu0 0.0
        %7666 = vmatprep.subr.mxu0 0.0
        %7667 = vmatpush1.msra.mxu0 0.0
        %7668 = vmatprep.subr.mxu0 0.0
        %7669 = vmatpush1.msra.mxu0 0.0
        %7670 = vmatprep.subr.mxu0 %v7333
        %7671 = vmatpush1.msra.mxu0 %v7342
        %7672 = vmatprep.subr.mxu0 0.0
        %7673 = vmatpush2.msra.mxu0 0.0
        %7674 = vmatprep.subr.mxu0 0.0
        %7675 = vmatpush2.msra.mxu0 0.0
        %7676 = vmatprep.subr.mxu0 0.0
        %7677 = vmatpush2.msra.mxu0 0.0
        %7678 = vmatprep.subr.mxu0 0.0
        %7679 = vmatpush2.msra.mxu0 0.0
        %7680 = vmatprep.subr.mxu0 0.0
        %7681 = vmatpush2.msra.mxu0 0.0
        %7682 = vmatprep.subr.mxu0 0.0
        %7683 = vmatpush2.msra.mxu0 0.0
        %7684 = vmatprep.subr.mxu0 0.0
        %7685 = vmatpush2.msra.mxu0 0.0
        %7686 = vmatprep.subr.mxu0 0.0
        %7687 = vmatpush2.msra.mxu0 0.0
        %7688 = vmatprep.subr.mxu0 0.0
        %7689 = vmatpush2.msra.mxu0 0.0
        %7690 = vmatprep.subr.mxu0 0.0
        %7691 = vmatpush2.msra.mxu0 0.0
        %7692 = vmatprep.subr.mxu0 0.0
        %7693 = vmatpush2.msra.mxu0 0.0
        %7694 = vmatprep.subr.mxu0 0.0
        %7695 = vmatpush2.msra.mxu0 0.0
        %7696 = vmatprep.subr.mxu0 0.0
        %7697 = vmatpush2.msra.mxu0 0.0
        %7698 = vmatprep.subr.mxu0 0.0
        %7699 = vmatpush2.msra.mxu0 0.0
        %7700 = vmatprep.subr.mxu0 0.0
        %7701 = vmatpush2.msra.mxu0 0.0
        %7702 = vmatprep.subr.mxu0 0.0
        %7703 = vmatpush2.msra.mxu0 0.0
        %7704 = vmatprep.mubr.f32.mxu0 0.0
        %7705 = vmatmul.mubr.f32.gmra.mxu0 %v7354
        %v7706 = vpop.f32.mrf.mxu0
        %v7707 = vadd.f32 0.0, %v7706
        %v7708 = vpop.f32.mrf.mxu0
        %v7709 = vadd.f32 0.0, %v7708
        %7710 = vdwg.mxu0
        %v7711 = vadd.f32 %v7302, %v7423
        %v7712 = vadd.f32 %v7303, %v7425
        %v7713 = vadd.f32 %v7304, %v7494
        %v7714 = vadd.f32 %v7305, %v7496
        %v7715 = vadd.f32 %v7306, %v7565
        %v7716 = vadd.f32 %v7307, %v7567
        %v7717 = vadd.f32 %v7308, %v7636
        %v7718 = vadd.f32 %v7309, %v7638
        %v7719 = vadd.f32 %v7310, %v7707
        %v7720 = vadd.f32 %v7311, %v7709
        %s7721 = scalar_lea.vmem %s3, 64
        %v7722 = vld [vmem:[%s7721] sm:$0xff]
        %7723 = vrot.lane.b32.xlu0 %v4488, 58
        %v7724 = vpop.permute.xlu0 %7723
        %7725 = vrot.lane.b32.xlu0 %v4489, 58
        %v7726 = vpop.permute.xlu0 %7725
        %7727 = vrot.lane.b32.xlu0 %v4490, 58
        %v7728 = vpop.permute.xlu0 %7727
        %7729 = vrot.lane.b32.xlu0 %v4491, 58
        %v7730 = vpop.permute.xlu0 %7729
        %7731 = vrot.lane.b32.xlu0 %v4492, 58
        %v7732 = vpop.permute.xlu0 %7731
        %7733 = vrot.lane.b32.xlu0 %v4493, 58
        %v7734 = vpop.permute.xlu0 %7733
        %7735 = vrot.lane.b32.xlu0 %v4494, 58
        %v7736 = vpop.permute.xlu0 %7735
        %7737 = vrot.lane.b32.xlu0 %v4495, 58
        %v7738 = vpop.permute.xlu0 %7737
        %7739 = vrot.lane.b32.xlu0 %v4496, 58
        %v7740 = vpop.permute.xlu0 %7739
        %7741 = vrot.lane.b32.xlu0 %v4497, 58
        %v7742 = vpop.permute.xlu0 %7741
        %v7743 = vsel %vm3916, %v7724, %v7726
        %v7744 = vsel %vm3916, %v7726, %v7728
        %v7745 = vsel %vm3916, %v7728, %v7730
        %v7746 = vsel %vm3916, %v7730, %v7732
        %v7747 = vsel %vm3916, %v7732, %v7734
        %v7748 = vsel %vm3916, %v7734, %v7736
        %v7749 = vsel %vm3916, %v7736, %v7738
        %v7750 = vsel %vm3916, %v7738, %v7740
        %v7751 = vsel %vm3916, %v7740, %v7742
        %v7763 = vsel %vm4550, %v7722, 0
        %7765 = vmatprep.subr.mxu0 0.0
        %7766 = vmatpush1.msra.mxu0 0.0
        %7767 = vmatprep.subr.mxu0 0.0
        %7768 = vmatpush1.msra.mxu0 0.0
        %7769 = vmatprep.subr.mxu0 0.0
        %7770 = vmatpush1.msra.mxu0 0.0
        %7771 = vmatprep.subr.mxu0 0.0
        %7772 = vmatpush1.msra.mxu0 0.0
        %7773 = vmatprep.subr.mxu0 0.0
        %7774 = vmatpush1.msra.mxu0 0.0
        %7775 = vmatprep.subr.mxu0 0.0
        %7776 = vmatpush1.msra.mxu0 0.0
        %7777 = vmatprep.subr.mxu0 0.0
        %7778 = vmatpush1.msra.mxu0 0.0
        %7779 = vmatprep.subr.mxu0 0.0
        %7780 = vmatpush1.msra.mxu0 0.0
        %7781 = vmatprep.subr.mxu0 0.0
        %7782 = vmatpush1.msra.mxu0 0.0
        %7783 = vmatprep.subr.mxu0 0.0
        %7784 = vmatpush1.msra.mxu0 0.0
        %7785 = vmatprep.subr.mxu0 0.0
        %7786 = vmatpush1.msra.mxu0 0.0
        %7787 = vmatprep.subr.mxu0 0.0
        %7788 = vmatpush1.msra.mxu0 0.0
        %7789 = vmatprep.subr.mxu0 0.0
        %7790 = vmatpush1.msra.mxu0 0.0
        %7791 = vmatprep.subr.mxu0 0.0
        %7792 = vmatpush1.msra.mxu0 0.0
        %7793 = vmatprep.subr.mxu0 0.0
        %7794 = vmatpush1.msra.mxu0 0.0
        %7795 = vmatprep.subr.mxu0 %v7744
        %7796 = vmatpush1.msra.mxu0 %v7743
        %7797 = vmatprep.subr.mxu0 0.0
        %7798 = vmatpush2.msra.mxu0 0.0
        %7799 = vmatprep.subr.mxu0 0.0
        %7800 = vmatpush2.msra.mxu0 0.0
        %7801 = vmatprep.subr.mxu0 0.0
        %7802 = vmatpush2.msra.mxu0 0.0
        %7803 = vmatprep.subr.mxu0 0.0
        %7804 = vmatpush2.msra.mxu0 0.0
        %7805 = vmatprep.subr.mxu0 0.0
        %7806 = vmatpush2.msra.mxu0 0.0
        %7807 = vmatprep.subr.mxu0 0.0
        %7808 = vmatpush2.msra.mxu0 0.0
        %7809 = vmatprep.subr.mxu0 0.0
        %7810 = vmatpush2.msra.mxu0 0.0
        %7811 = vmatprep.subr.mxu0 0.0
        %7812 = vmatpush2.msra.mxu0 0.0
        %7813 = vmatprep.subr.mxu0 0.0
        %7814 = vmatpush2.msra.mxu0 0.0
        %7815 = vmatprep.subr.mxu0 0.0
        %7816 = vmatpush2.msra.mxu0 0.0
        %7817 = vmatprep.subr.mxu0 0.0
        %7818 = vmatpush2.msra.mxu0 0.0
        %7819 = vmatprep.subr.mxu0 0.0
        %7820 = vmatpush2.msra.mxu0 0.0
        %7821 = vmatprep.subr.mxu0 0.0
        %7822 = vmatpush2.msra.mxu0 0.0
        %7823 = vmatprep.subr.mxu0 0.0
        %7824 = vmatpush2.msra.mxu0 0.0
        %7825 = vmatprep.subr.mxu0 0.0
        %7826 = vmatpush2.msra.mxu0 0.0
        %7827 = vmatprep.subr.mxu0 0.0
        %7828 = vmatpush2.msra.mxu0 0.0
        %7829 = vmatprep.mubr.f32.mxu0 0.0
        %7830 = vmatmul.mubr.f32.gmra.mxu0 %v7763
        %v7831 = vpop.f32.mrf.mxu0
        %v7832 = vadd.f32 0.0, %v7831
        %v7833 = vpop.f32.mrf.mxu0
        %v7834 = vadd.f32 0.0, %v7833
        %7835 = vdwg.mxu0
        %7836 = vmatprep.subr.mxu0 0.0
        %7837 = vmatpush1.msra.mxu0 0.0
        %7838 = vmatprep.subr.mxu0 0.0
        %7839 = vmatpush1.msra.mxu0 0.0
        %7840 = vmatprep.subr.mxu0 0.0
        %7841 = vmatpush1.msra.mxu0 0.0
        %7842 = vmatprep.subr.mxu0 0.0
        %7843 = vmatpush1.msra.mxu0 0.0
        %7844 = vmatprep.subr.mxu0 0.0
        %7845 = vmatpush1.msra.mxu0 0.0
        %7846 = vmatprep.subr.mxu0 0.0
        %7847 = vmatpush1.msra.mxu0 0.0
        %7848 = vmatprep.subr.mxu0 0.0
        %7849 = vmatpush1.msra.mxu0 0.0
        %7850 = vmatprep.subr.mxu0 0.0
        %7851 = vmatpush1.msra.mxu0 0.0
        %7852 = vmatprep.subr.mxu0 0.0
        %7853 = vmatpush1.msra.mxu0 0.0
        %7854 = vmatprep.subr.mxu0 0.0
        %7855 = vmatpush1.msra.mxu0 0.0
        %7856 = vmatprep.subr.mxu0 0.0
        %7857 = vmatpush1.msra.mxu0 0.0
        %7858 = vmatprep.subr.mxu0 0.0
        %7859 = vmatpush1.msra.mxu0 0.0
        %7860 = vmatprep.subr.mxu0 0.0
        %7861 = vmatpush1.msra.mxu0 0.0
        %7862 = vmatprep.subr.mxu0 0.0
        %7863 = vmatpush1.msra.mxu0 0.0
        %7864 = vmatprep.subr.mxu0 0.0
        %7865 = vmatpush1.msra.mxu0 0.0
        %7866 = vmatprep.subr.mxu0 %v7746
        %7867 = vmatpush1.msra.mxu0 %v7745
        %7868 = vmatprep.subr.mxu0 0.0
        %7869 = vmatpush2.msra.mxu0 0.0
        %7870 = vmatprep.subr.mxu0 0.0
        %7871 = vmatpush2.msra.mxu0 0.0
        %7872 = vmatprep.subr.mxu0 0.0
        %7873 = vmatpush2.msra.mxu0 0.0
        %7874 = vmatprep.subr.mxu0 0.0
        %7875 = vmatpush2.msra.mxu0 0.0
        %7876 = vmatprep.subr.mxu0 0.0
        %7877 = vmatpush2.msra.mxu0 0.0
        %7878 = vmatprep.subr.mxu0 0.0
        %7879 = vmatpush2.msra.mxu0 0.0
        %7880 = vmatprep.subr.mxu0 0.0
        %7881 = vmatpush2.msra.mxu0 0.0
        %7882 = vmatprep.subr.mxu0 0.0
        %7883 = vmatpush2.msra.mxu0 0.0
        %7884 = vmatprep.subr.mxu0 0.0
        %7885 = vmatpush2.msra.mxu0 0.0
        %7886 = vmatprep.subr.mxu0 0.0
        %7887 = vmatpush2.msra.mxu0 0.0
        %7888 = vmatprep.subr.mxu0 0.0
        %7889 = vmatpush2.msra.mxu0 0.0
        %7890 = vmatprep.subr.mxu0 0.0
        %7891 = vmatpush2.msra.mxu0 0.0
        %7892 = vmatprep.subr.mxu0 0.0
        %7893 = vmatpush2.msra.mxu0 0.0
        %7894 = vmatprep.subr.mxu0 0.0
        %7895 = vmatpush2.msra.mxu0 0.0
        %7896 = vmatprep.subr.mxu0 0.0
        %7897 = vmatpush2.msra.mxu0 0.0
        %7898 = vmatprep.subr.mxu0 0.0
        %7899 = vmatpush2.msra.mxu0 0.0
        %7900 = vmatprep.mubr.f32.mxu0 0.0
        %7901 = vmatmul.mubr.f32.gmra.mxu0 %v7763
        %v7902 = vpop.f32.mrf.mxu0
        %v7903 = vadd.f32 0.0, %v7902
        %v7904 = vpop.f32.mrf.mxu0
        %v7905 = vadd.f32 0.0, %v7904
        %7906 = vdwg.mxu0
        %7907 = vmatprep.subr.mxu0 0.0
        %7908 = vmatpush1.msra.mxu0 0.0
        %7909 = vmatprep.subr.mxu0 0.0
        %7910 = vmatpush1.msra.mxu0 0.0
        %7911 = vmatprep.subr.mxu0 0.0
        %7912 = vmatpush1.msra.mxu0 0.0
        %7913 = vmatprep.subr.mxu0 0.0
        %7914 = vmatpush1.msra.mxu0 0.0
        %7915 = vmatprep.subr.mxu0 0.0
        %7916 = vmatpush1.msra.mxu0 0.0
        %7917 = vmatprep.subr.mxu0 0.0
        %7918 = vmatpush1.msra.mxu0 0.0
        %7919 = vmatprep.subr.mxu0 0.0
        %7920 = vmatpush1.msra.mxu0 0.0
        %7921 = vmatprep.subr.mxu0 0.0
        %7922 = vmatpush1.msra.mxu0 0.0
        %7923 = vmatprep.subr.mxu0 0.0
        %7924 = vmatpush1.msra.mxu0 0.0
        %7925 = vmatprep.subr.mxu0 0.0
        %7926 = vmatpush1.msra.mxu0 0.0
        %7927 = vmatprep.subr.mxu0 0.0
        %7928 = vmatpush1.msra.mxu0 0.0
        %7929 = vmatprep.subr.mxu0 0.0
        %7930 = vmatpush1.msra.mxu0 0.0
        %7931 = vmatprep.subr.mxu0 0.0
        %7932 = vmatpush1.msra.mxu0 0.0
        %7933 = vmatprep.subr.mxu0 0.0
        %7934 = vmatpush1.msra.mxu0 0.0
        %7935 = vmatprep.subr.mxu0 0.0
        %7936 = vmatpush1.msra.mxu0 0.0
        %7937 = vmatprep.subr.mxu0 %v7748
        %7938 = vmatpush1.msra.mxu0 %v7747
        %7939 = vmatprep.subr.mxu0 0.0
        %7940 = vmatpush2.msra.mxu0 0.0
        %7941 = vmatprep.subr.mxu0 0.0
        %7942 = vmatpush2.msra.mxu0 0.0
        %7943 = vmatprep.subr.mxu0 0.0
        %7944 = vmatpush2.msra.mxu0 0.0
        %7945 = vmatprep.subr.mxu0 0.0
        %7946 = vmatpush2.msra.mxu0 0.0
        %7947 = vmatprep.subr.mxu0 0.0
        %7948 = vmatpush2.msra.mxu0 0.0
        %7949 = vmatprep.subr.mxu0 0.0
        %7950 = vmatpush2.msra.mxu0 0.0
        %7951 = vmatprep.subr.mxu0 0.0
        %7952 = vmatpush2.msra.mxu0 0.0
        %7953 = vmatprep.subr.mxu0 0.0
        %7954 = vmatpush2.msra.mxu0 0.0
        %7955 = vmatprep.subr.mxu0 0.0
        %7956 = vmatpush2.msra.mxu0 0.0
        %7957 = vmatprep.subr.mxu0 0.0
        %7958 = vmatpush2.msra.mxu0 0.0
        %7959 = vmatprep.subr.mxu0 0.0
        %7960 = vmatpush2.msra.mxu0 0.0
        %7961 = vmatprep.subr.mxu0 0.0
        %7962 = vmatpush2.msra.mxu0 0.0
        %7963 = vmatprep.subr.mxu0 0.0
        %7964 = vmatpush2.msra.mxu0 0.0
        %7965 = vmatprep.subr.mxu0 0.0
        %7966 = vmatpush2.msra.mxu0 0.0
        %7967 = vmatprep.subr.mxu0 0.0
        %7968 = vmatpush2.msra.mxu0 0.0
        %7969 = vmatprep.subr.mxu0 0.0
        %7970 = vmatpush2.msra.mxu0 0.0
        %7971 = vmatprep.mubr.f32.mxu0 0.0
        %7972 = vmatmul.mubr.f32.gmra.mxu0 %v7763
        %v7973 = vpop.f32.mrf.mxu0
        %v7974 = vadd.f32 0.0, %v7973
        %v7975 = vpop.f32.mrf.mxu0
        %v7976 = vadd.f32 0.0, %v7975
        %7977 = vdwg.mxu0
        %7978 = vmatprep.subr.mxu0 0.0
        %7979 = vmatpush1.msra.mxu0 0.0
        %7980 = vmatprep.subr.mxu0 0.0
        %7981 = vmatpush1.msra.mxu0 0.0
        %7982 = vmatprep.subr.mxu0 0.0
        %7983 = vmatpush1.msra.mxu0 0.0
        %7984 = vmatprep.subr.mxu0 0.0
        %7985 = vmatpush1.msra.mxu0 0.0
        %7986 = vmatprep.subr.mxu0 0.0
        %7987 = vmatpush1.msra.mxu0 0.0
        %7988 = vmatprep.subr.mxu0 0.0
        %7989 = vmatpush1.msra.mxu0 0.0
        %7990 = vmatprep.subr.mxu0 0.0
        %7991 = vmatpush1.msra.mxu0 0.0
        %7992 = vmatprep.subr.mxu0 0.0
        %7993 = vmatpush1.msra.mxu0 0.0
        %7994 = vmatprep.subr.mxu0 0.0
        %7995 = vmatpush1.msra.mxu0 0.0
        %7996 = vmatprep.subr.mxu0 0.0
        %7997 = vmatpush1.msra.mxu0 0.0
        %7998 = vmatprep.subr.mxu0 0.0
        %7999 = vmatpush1.msra.mxu0 0.0
        %8000 = vmatprep.subr.mxu0 0.0
        %8001 = vmatpush1.msra.mxu0 0.0
        %8002 = vmatprep.subr.mxu0 0.0
        %8003 = vmatpush1.msra.mxu0 0.0
        %8004 = vmatprep.subr.mxu0 0.0
        %8005 = vmatpush1.msra.mxu0 0.0
        %8006 = vmatprep.subr.mxu0 0.0
        %8007 = vmatpush1.msra.mxu0 0.0
        %8008 = vmatprep.subr.mxu0 %v7750
        %8009 = vmatpush1.msra.mxu0 %v7749
        %8010 = vmatprep.subr.mxu0 0.0
        %8011 = vmatpush2.msra.mxu0 0.0
        %8012 = vmatprep.subr.mxu0 0.0
        %8013 = vmatpush2.msra.mxu0 0.0
        %8014 = vmatprep.subr.mxu0 0.0
        %8015 = vmatpush2.msra.mxu0 0.0
        %8016 = vmatprep.subr.mxu0 0.0
        %8017 = vmatpush2.msra.mxu0 0.0
        %8018 = vmatprep.subr.mxu0 0.0
        %8019 = vmatpush2.msra.mxu0 0.0
        %8020 = vmatprep.subr.mxu0 0.0
        %8021 = vmatpush2.msra.mxu0 0.0
        %8022 = vmatprep.subr.mxu0 0.0
        %8023 = vmatpush2.msra.mxu0 0.0
        %8024 = vmatprep.subr.mxu0 0.0
        %8025 = vmatpush2.msra.mxu0 0.0
        %8026 = vmatprep.subr.mxu0 0.0
        %8027 = vmatpush2.msra.mxu0 0.0
        %8028 = vmatprep.subr.mxu0 0.0
        %8029 = vmatpush2.msra.mxu0 0.0
        %8030 = vmatprep.subr.mxu0 0.0
        %8031 = vmatpush2.msra.mxu0 0.0
        %8032 = vmatprep.subr.mxu0 0.0
        %8033 = vmatpush2.msra.mxu0 0.0
        %8034 = vmatprep.subr.mxu0 0.0
        %8035 = vmatpush2.msra.mxu0 0.0
        %8036 = vmatprep.subr.mxu0 0.0
        %8037 = vmatpush2.msra.mxu0 0.0
        %8038 = vmatprep.subr.mxu0 0.0
        %8039 = vmatpush2.msra.mxu0 0.0
        %8040 = vmatprep.subr.mxu0 0.0
        %8041 = vmatpush2.msra.mxu0 0.0
        %8042 = vmatprep.mubr.f32.mxu0 0.0
        %8043 = vmatmul.mubr.f32.gmra.mxu0 %v7763
        %v8044 = vpop.f32.mrf.mxu0
        %v8045 = vadd.f32 0.0, %v8044
        %v8046 = vpop.f32.mrf.mxu0
        %v8047 = vadd.f32 0.0, %v8046
        %8048 = vdwg.mxu0
        %8049 = vmatprep.subr.mxu0 0.0
        %8050 = vmatpush1.msra.mxu0 0.0
        %8051 = vmatprep.subr.mxu0 0.0
        %8052 = vmatpush1.msra.mxu0 0.0
        %8053 = vmatprep.subr.mxu0 0.0
        %8054 = vmatpush1.msra.mxu0 0.0
        %8055 = vmatprep.subr.mxu0 0.0
        %8056 = vmatpush1.msra.mxu0 0.0
        %8057 = vmatprep.subr.mxu0 0.0
        %8058 = vmatpush1.msra.mxu0 0.0
        %8059 = vmatprep.subr.mxu0 0.0
        %8060 = vmatpush1.msra.mxu0 0.0
        %8061 = vmatprep.subr.mxu0 0.0
        %8062 = vmatpush1.msra.mxu0 0.0
        %8063 = vmatprep.subr.mxu0 0.0
        %8064 = vmatpush1.msra.mxu0 0.0
        %8065 = vmatprep.subr.mxu0 0.0
        %8066 = vmatpush1.msra.mxu0 0.0
        %8067 = vmatprep.subr.mxu0 0.0
        %8068 = vmatpush1.msra.mxu0 0.0
        %8069 = vmatprep.subr.mxu0 0.0
        %8070 = vmatpush1.msra.mxu0 0.0
        %8071 = vmatprep.subr.mxu0 0.0
        %8072 = vmatpush1.msra.mxu0 0.0
        %8073 = vmatprep.subr.mxu0 0.0
        %8074 = vmatpush1.msra.mxu0 0.0
        %8075 = vmatprep.subr.mxu0 0.0
        %8076 = vmatpush1.msra.mxu0 0.0
        %8077 = vmatprep.subr.mxu0 0.0
        %8078 = vmatpush1.msra.mxu0 0.0
        %8079 = vmatprep.subr.mxu0 %v7742
        %8080 = vmatpush1.msra.mxu0 %v7751
        %8081 = vmatprep.subr.mxu0 0.0
        %8082 = vmatpush2.msra.mxu0 0.0
        %8083 = vmatprep.subr.mxu0 0.0
        %8084 = vmatpush2.msra.mxu0 0.0
        %8085 = vmatprep.subr.mxu0 0.0
        %8086 = vmatpush2.msra.mxu0 0.0
        %8087 = vmatprep.subr.mxu0 0.0
        %8088 = vmatpush2.msra.mxu0 0.0
        %8089 = vmatprep.subr.mxu0 0.0
        %8090 = vmatpush2.msra.mxu0 0.0
        %8091 = vmatprep.subr.mxu0 0.0
        %8092 = vmatpush2.msra.mxu0 0.0
        %8093 = vmatprep.subr.mxu0 0.0
        %8094 = vmatpush2.msra.mxu0 0.0
        %8095 = vmatprep.subr.mxu0 0.0
        %8096 = vmatpush2.msra.mxu0 0.0
        %8097 = vmatprep.subr.mxu0 0.0
        %8098 = vmatpush2.msra.mxu0 0.0
        %8099 = vmatprep.subr.mxu0 0.0
        %8100 = vmatpush2.msra.mxu0 0.0
        %8101 = vmatprep.subr.mxu0 0.0
        %8102 = vmatpush2.msra.mxu0 0.0
        %8103 = vmatprep.subr.mxu0 0.0
        %8104 = vmatpush2.msra.mxu0 0.0
        %8105 = vmatprep.subr.mxu0 0.0
        %8106 = vmatpush2.msra.mxu0 0.0
        %8107 = vmatprep.subr.mxu0 0.0
        %8108 = vmatpush2.msra.mxu0 0.0
        %8109 = vmatprep.subr.mxu0 0.0
        %8110 = vmatpush2.msra.mxu0 0.0
        %8111 = vmatprep.subr.mxu0 0.0
        %8112 = vmatpush2.msra.mxu0 0.0
        %8113 = vmatprep.mubr.f32.mxu0 0.0
        %8114 = vmatmul.mubr.f32.gmra.mxu0 %v7763
        %v8115 = vpop.f32.mrf.mxu0
        %v8116 = vadd.f32 0.0, %v8115
        %v8117 = vpop.f32.mrf.mxu0
        %v8118 = vadd.f32 0.0, %v8117
        %8119 = vdwg.mxu0
        %v8120 = vadd.f32 %v7711, %v7832
        %v8121 = vadd.f32 %v7712, %v7834
        %v8122 = vadd.f32 %v7713, %v7903
        %v8123 = vadd.f32 %v7714, %v7905
        %v8124 = vadd.f32 %v7715, %v7974
        %v8125 = vadd.f32 %v7716, %v7976
        %v8126 = vadd.f32 %v7717, %v8045
        %v8127 = vadd.f32 %v7718, %v8047
        %v8128 = vadd.f32 %v7719, %v8116
        %v8129 = vadd.f32 %v7720, %v8118
        %v8130 = vld [vmem:[%s4] sm:$0xff]
        %8132 = vset.pattern.permute.xlu0 0
        %8133 = vperm.xlu0 %8132, %v8130
        %v8134 = vpop.permute.xlu0 %8133
        %v8136 = vadd.f32 %v8120, %v8134
        %v8137 = vadd.f32 %v8121, %v8134
        %v8138 = vadd.f32 %v8122, %v8134
        %v8139 = vadd.f32 %v8123, %v8134
        %v8140 = vadd.f32 %v8124, %v8134
        %v8141 = vadd.f32 %v8125, %v8134
        %v8142 = vadd.f32 %v8126, %v8134
        %v8143 = vadd.f32 %v8127, %v8134
        %v8144 = vadd.f32 %v8128, %v8134
        %v8145 = vadd.f32 %v8129, %v8134
        %v8146 = vmax.f32 %v8136, 0.0
        %v8147 = vmax.f32 %v8137, 0.0
        %v8148 = vmax.f32 %v8138, 0.0
        %v8149 = vmax.f32 %v8139, 0.0
        %v8150 = vmax.f32 %v8140, 0.0
        %v8151 = vmax.f32 %v8141, 0.0
        %v8152 = vmax.f32 %v8142, 0.0
        %v8153 = vmax.f32 %v8143, 0.0
        %v8154 = vmax.f32 %v8144, 0.0
        %v8155 = vmax.f32 %v8145, 0.0
        %8156 = vst [vmem:[%s244] sm:$0xff] %v8146
        %8157 = vst [vmem:[%s244 + $0x8] sm:$0xff] %v8147
        %8158 = vst [vmem:[%s244 + $0x10] sm:$0xff] %v8148
        %8159 = vst [vmem:[%s244 + $0x18] sm:$0xff] %v8149
        %8160 = vst [vmem:[%s244 + $0x20] sm:$0xff] %v8150
        %8161 = vst [vmem:[%s244 + $0x28] sm:$0xff] %v8151
        %8162 = vst [vmem:[%s244 + $0x30] sm:$0xff] %v8152
        %8163 = vst [vmem:[%s244 + $0x38] sm:$0xff] %v8153
        %8164 = vst [vmem:[%s244 + $0x40] sm:$0xff] %v8154
        %vm8165 = vcmask 31744
        %8166 = vst.msk [vmem:[%s244 + $0x48] sm:$0xff] %vm8165, %v8155
        %s8167 = sand.u32 %s159, 1
        %s8168 = scalar_lea.sflag [#allocation4], %s8167
        %s8169 = sand.u32 %s159, 1
        %s8170 = smul.addr %s8169, 80
        %s8171 = scalar_lea.vmem [#allocation3], %s8170
        // Predicated region
        $region45: #{tpu_custom_call.1} parent=43 // pred_check
          %p8172 = pneg %p169
        $region46: #{tpu_custom_call.1} parent=43 // pred_check_branch
          %8174 = sbr.rel (%p8172) target = $region48
        $region47: #{tpu_custom_call.1} parent=43 // pred_region
          %s8176 = ssub.s32 1280, 1280
          %8177 = vsyncadd %s8168, %s8176
          %s8178 = smul.addr %s20, 10
          %s8179 = smul.addr %s8178, 128
          %s8180 = scalar_lea.hbm %s6, %s8179
          %s8182 = sshll.u32 %s8171, 4
          %s8183 = int_to_ptr.vmem [resolvable:$true] %s8182
          %8185 = dma.vmem_to_hbm [thread:$0]  %s8183, 1280, %s8180, %s8168
        $region48: #{tpu_custom_call.1} parent=43 // pred_fallthru
          _
      $region44: #{tpu_custom_call.1} parent=5 // pred_fallthru
        _
      %p8186 = scmp.le.s32.totalorder 2, %s15
      // Predicated region
      $region49: #{tpu_custom_call.1} parent=5 // pred_check
        %p8187 = pneg %p8186
      $region50: #{tpu_custom_call.1} parent=5 // pred_check_branch
        %8189 = sbr.rel (%p8187) target = $region52
      $region51: #{tpu_custom_call.1} parent=5 // pred_region
        %s8190 = ssub.s32 %s15, 2
        // Predicated region
        $region53: #{tpu_custom_call.1} parent=51 // pred_check
          %p8191 = pneg %p175
        $region54: #{tpu_custom_call.1} parent=51 // pred_check_branch
          %8193 = sbr.rel (%p8191) target = $region56
        $region55: #{tpu_custom_call.1} parent=51 // pred_region
          %s8194 = sand.u32 %s160, 1
          %s8195 = scalar_lea.sflag [#allocation4], %s8194
          %s8196 = sand.u32 %s160, 1
          %s8197 = smul.addr %s8196, 80
          %s8198 = scalar_lea.vmem [#allocation3], %s8197
          %8199 = dma.done %s8195, 1280
        $region56: #{tpu_custom_call.1} parent=51 // pred_fallthru
          _
      $region52: #{tpu_custom_call.1} parent=5 // pred_fallthru
        _
    $region6: #{tpu_custom_call.1} parent=1 // loop_footer
      %s19 = sadd.s32 1, %s15
    $region7: #{tpu_custom_call.1} parent=1 // loop_footer_branch
      %14 = sbr.rel target = $region3
    $region8: #{tpu_custom_call.1} parent=1 // loop_exit
      _
    %8200 = vsyncpa [#allocation4], 1
    %s8201 = scalar_lea.sflag [#allocation4], 1
    %8202 = vsyncpa %s8201, 1

</llo_original>
